<compile_context>
chip_gen: v6e
topology: v6e:2x2x1
jax: 0.10.0
libtpu: 0.0.40
codegen_flags: <defaults>
</compile_context>

<pallas_src>
import functools

import jax
import jax.numpy as jnp
from jax.experimental import pallas as pl
from jax.experimental.pallas import tpu as pltpu

D_MODEL = 32
N_HEAD = 4
D_HEAD = D_MODEL // N_HEAD          # 8
DIM_FF = 64
NUM_LAYERS = 2
EPS = 1e-5

# ---- packed-parameter layout ----------------------------------------------
# qkv_w slab : (2*3*N_HEAD, D_MODEL, D_HEAD)   index = att*12 + proj*4 + head
#              (att: 0=self, 1=cross; proj: 0=Q (pre-scaled), 1=K, 2=V)
# out_w slab : (2*N_HEAD, D_HEAD, D_MODEL)     index = att*4 + head
# ff_w1      : (D_MODEL, DIM_FF)
# ff_w2      : (DIM_FF, D_MODEL)
# vec slab   : (NUM_VEC_ROWS, DIM_FF)  -- biases + LayerNorm params, row layout:
QKV_ATT_STRIDE = 3 * N_HEAD          # 12
ROW_SA_BOUT = 24
ROW_CA_BOUT = 25
ROW_FF_B1 = 26
ROW_FF_B2 = 27
ROW_LN_BASE = 28                     # ln1_g, ln1_b, ln2_g, ln2_b, ln3_g, ln3_b
NUM_VEC_ROWS = 34


def _dot(a, b):
    """(m,k) @ (k,n) on the MXU, f32 accumulate."""
    return jax.lax.dot_general(a, b, (((1,), (0,)), ((), ())),
                               preferred_element_type=jnp.float32)


def _dot_nt(a, b):
    """(m,k) @ (n,k)^T  -> (m,n) without materializing a transpose."""
    return jax.lax.dot_general(a, b, (((1,), (1,)), ((), ())),
                               preferred_element_type=jnp.float32)


def fused_decoder_kernel(num_layers, tgt_ref, mem_ref,
                         qkv_w_ref, out_w_ref, ff_w1_ref, ff_w2_ref, vec_ref,
                         out_ref):
    x = tgt_ref[0]        # (S_t, D)
    m = mem_ref[0]        # (S_m, D)

    def vrow(row, width):
        # (1, width) slice of the bias/LN vector slab (static indices).
        return vec_ref[pl.ds(row, 1), pl.ds(0, width)]

    def layernorm(y, g_row, b_row):
        g = vrow(g_row, D_MODEL)
        b = vrow(b_row, D_MODEL)
        mu = jnp.mean(y, axis=-1, keepdims=True)
        var = jnp.mean((y - mu) ** 2, axis=-1, keepdims=True)
        return (y - mu) * jax.lax.rsqrt(var + EPS) * g + b

    def mha(q_in, kv_in, att, bout_row):
        # Per-head weights indexed on leading slab dims; no lane-slicing of
        # activations, no head concatenate (output projections are summed).
        acc = jnp.zeros((q_in.shape[0], D_MODEL), jnp.float32)
        for h in range(N_HEAD):
            iq = att * QKV_ATT_STRIDE + 0 * N_HEAD + h
            ik = att * QKV_ATT_STRIDE + 1 * N_HEAD + h
            iv = att * QKV_ATT_STRIDE + 2 * N_HEAD + h
            qh = _dot(q_in, qkv_w_ref[iq]) + vrow(iq, D_HEAD)   # scale folded in
            kh = _dot(kv_in, qkv_w_ref[ik]) + vrow(ik, D_HEAD)
            vh = _dot(kv_in, qkv_w_ref[iv]) + vrow(iv, D_HEAD)
            s = _dot_nt(qh, kh)                                 # (Sq, Sk)
            s = s - jnp.max(s, axis=-1, keepdims=True)
            p = jnp.exp(s)
            p = p * pl.reciprocal(jnp.sum(p, axis=-1, keepdims=True), approx=True)
            oh = _dot(p, vh)                                    # (Sq, Dh)
            acc = acc + _dot(oh, out_w_ref[att * N_HEAD + h])   # (Sq, D)
        return acc + vrow(bout_row, D_MODEL)

    # clones() deep-copies one layer => identical params; static unroll keeps x
    # resident in VMEM/vregs across all layers.
    for _ in range(num_layers):
        # self-attention block (post-norm)
        x = layernorm(x + mha(x, x, 0, ROW_SA_BOUT), ROW_LN_BASE + 0, ROW_LN_BASE + 1)
        # cross-attention with encoder memory
        x = layernorm(x + mha(x, m, 1, ROW_CA_BOUT), ROW_LN_BASE + 2, ROW_LN_BASE + 3)
        # feed-forward: Linear -> ReLU -> Linear
        hdn = jnp.maximum(_dot(x, ff_w1_ref[...]) + vrow(ROW_FF_B1, DIM_FF), 0.0)
        ff = _dot(hdn, ff_w2_ref[...]) + vrow(ROW_FF_B2, D_MODEL)
        x = layernorm(x + ff, ROW_LN_BASE + 4, ROW_LN_BASE + 5)

    out_ref[0] = x


def pack_params(params):
    """Pack the logical parameter dict into the 5 kernel slabs."""
    D, H, Dh, F = D_MODEL, N_HEAD, D_HEAD, DIM_FF
    scale = 1.0 / (Dh ** 0.5)

    vec = jnp.zeros((NUM_VEC_ROWS, F), jnp.float32)
    qkv_tiles = []
    out_tiles = []
    for ai, pfx in enumerate(("sa", "ca")):
        w_in = params[f"{pfx}_win"]             # (D, 3D), columns [Wq|Wk|Wv]
        b_in = params[f"{pfx}_bin"].reshape(-1)  # (3D,)
        for proj in range(3):
            wp = w_in[:, proj * D:(proj + 1) * D]
            bp = b_in[proj * D:(proj + 1) * D]
            if proj == 0:                        # fold softmax scale into Q
                wp = wp * scale
                bp = bp * scale
            for h in range(H):
                qkv_tiles.append(wp[:, h * Dh:(h + 1) * Dh])
                row = ai * QKV_ATT_STRIDE + proj * H + h
                vec = vec.at[row, :Dh].set(bp[h * Dh:(h + 1) * Dh])
        w_out = params[f"{pfx}_wout"]            # (D, D), applied as cat @ Wout
        for h in range(H):
            out_tiles.append(w_out[h * Dh:(h + 1) * Dh, :])
        vec = vec.at[ROW_SA_BOUT + ai, :D].set(params[f"{pfx}_bout"].reshape(-1))

    qkv_w = jnp.stack(qkv_tiles, axis=0)         # (24, D, Dh)
    out_w = jnp.stack(out_tiles, axis=0)         # (8, Dh, D)

    vec = vec.at[ROW_FF_B1, :F].set(params["ff_b1"].reshape(-1))
    vec = vec.at[ROW_FF_B2, :D].set(params["ff_b2"].reshape(-1))
    for i, name in enumerate(("ln1_g", "ln1_b", "ln2_g", "ln2_b", "ln3_g", "ln3_b")):
        vec = vec.at[ROW_LN_BASE + i, :D].set(params[name].reshape(-1))

    return qkv_w, out_w, params["ff_w1"], params["ff_w2"], vec


def custom_decoder(tgt, memory, params, num_layers=NUM_LAYERS):
    """Full CustomDecoder forward in a single fused Pallas call."""
    B, S_t, D = tgt.shape
    _, S_m, _ = memory.shape
    qkv_w, out_w, ff_w1, ff_w2, vec = pack_params(params)

    in_specs = [
        pl.BlockSpec((1, S_t, D), lambda b: (b, 0, 0)),     # tgt
        pl.BlockSpec((1, S_m, D), lambda b: (b, 0, 0)),     # memory
        pl.BlockSpec(qkv_w.shape, lambda b: (0, 0, 0)),     # per-head QKV weights
        pl.BlockSpec(out_w.shape, lambda b: (0, 0, 0)),     # per-head out-proj weights
        pl.BlockSpec(ff_w1.shape, lambda b: (0, 0)),        # FFN W1
        pl.BlockSpec(ff_w2.shape, lambda b: (0, 0)),        # FFN W2
        pl.BlockSpec(vec.shape, lambda b: (0, 0)),          # biases + LN params
    ]

    return pl.pallas_call(
        functools.partial(fused_decoder_kernel, num_layers),
        out_shape=jax.ShapeDtypeStruct((B, S_t, D), jnp.float32),
        grid_spec=pltpu.PrefetchScalarGridSpec(
            num_scalar_prefetch=0,
            grid=(B,),
            in_specs=in_specs,
            out_specs=pl.BlockSpec((1, S_t, D), lambda b: (b, 0, 0)),
        ),
        compiler_params=pltpu.CompilerParams(
            dimension_semantics=("parallel",)),
    )(tgt, memory, qkv_w, out_w, ff_w1, ff_w2, vec)


def init_params(key, d_model=D_MODEL, dim_ff=DIM_FF):
    ks = jax.random.split(key, 8)
    scale = 0.05
    return {
        "sa_win": scale * jax.random.normal(ks[0], (d_model, 3 * d_model), jnp.float32),
        "sa_bin": jnp.zeros((1, 3 * d_model), jnp.float32),
        "sa_wout": scale * jax.random.normal(ks[1], (d_model, d_model), jnp.float32),
        "sa_bout": jnp.zeros((1, d_model), jnp.float32),
        "ca_win": scale * jax.random.normal(ks[2], (d_model, 3 * d_model), jnp.float32),
        "ca_bin": jnp.zeros((1, 3 * d_model), jnp.float32),
        "ca_wout": scale * jax.random.normal(ks[3], (d_model, d_model), jnp.float32),
        "ca_bout": jnp.zeros((1, d_model), jnp.float32),
        "ff_w1": scale * jax.random.normal(ks[4], (d_model, dim_ff), jnp.float32),
        "ff_b1": jnp.zeros((1, dim_ff), jnp.float32),
        "ff_w2": scale * jax.random.normal(ks[5], (dim_ff, d_model), jnp.float32),
        "ff_b2": jnp.zeros((1, d_model), jnp.float32),
        "ln1_g": jnp.ones((1, d_model), jnp.float32),
        "ln1_b": jnp.zeros((1, d_model), jnp.float32),
        "ln2_g": jnp.ones((1, d_model), jnp.float32),
        "ln2_b": jnp.zeros((1, d_model), jnp.float32),
        "ln3_g": jnp.ones((1, d_model), jnp.float32),
        "ln3_b": jnp.zeros((1, d_model), jnp.float32),
    }


if __name__ == "__main__":
    key = jax.random.PRNGKey(0)
    k_tgt, k_mem, k_par = jax.random.split(key, 3)

    B, S_T, S_M = 2, 8, 8
    tgt = jax.random.normal(k_tgt, (B, S_T, D_MODEL), jnp.float32)
    memory = jax.random.normal(k_mem, (B, S_M, D_MODEL), jnp.float32)
    params = init_params(k_par)

    out = custom_decoder(tgt, memory, params, num_layers=NUM_LAYERS)
    out = jax.block_until_ready(out)
    assert out.shape == (B, S_T, D_MODEL)
    assert bool(jnp.all(jnp.isfinite(out)))
    print("KERNEL_OK")
</pallas_src>

<mosaic_0001>
module attributes {stable_mosaic.version = 11 : i64} {
  func.func @fused_decoder_kernel(%arg0: i32, %arg1: memref<1x8x32xf32, #tpu.memory_space<vmem>>, %arg2: memref<1x8x32xf32, #tpu.memory_space<vmem>>, %arg3: memref<24x32x8xf32, #tpu.memory_space<vmem>>, %arg4: memref<8x8x32xf32, #tpu.memory_space<vmem>>, %arg5: memref<32x64xf32, #tpu.memory_space<vmem>>, %arg6: memref<64x32xf32, #tpu.memory_space<vmem>>, %arg7: memref<34x64xf32, #tpu.memory_space<vmem>>, %arg8: memref<1x8x32xf32, #tpu.memory_space<vmem>>) attributes {dimension_semantics = [#tpu.dimension_semantics<parallel>], iteration_bounds = array<i64: 2>, scalar_prefetch = 0 : i64, scratch_operands = 0 : i64, tpu.core_type = #tpu.core_type<tc>, window_params = [{transform_indices = @transform_0, window_bounds = array<i64: 1, 8, 32>}, {transform_indices = @transform_1, window_bounds = array<i64: 1, 8, 32>}, {pipeline_mode = #tpu.pipeline_mode<synchronous>, transform_indices = @transform_2, window_bounds = array<i64: 24, 32, 8>}, {pipeline_mode = #tpu.pipeline_mode<synchronous>, transform_indices = @transform_3, window_bounds = array<i64: 8, 8, 32>}, {pipeline_mode = #tpu.pipeline_mode<synchronous>, transform_indices = @transform_4, window_bounds = array<i64: 32, 64>}, {pipeline_mode = #tpu.pipeline_mode<synchronous>, transform_indices = @transform_5, window_bounds = array<i64: 64, 32>}, {pipeline_mode = #tpu.pipeline_mode<synchronous>, transform_indices = @transform_6, window_bounds = array<i64: 34, 64>}, {transform_indices = @transform_7, window_bounds = array<i64: 1, 8, 32>}]} {
    %c0 = arith.constant 0 : index
    %c0_0 = arith.constant 0 : index
    %c0_1 = arith.constant 0 : index
    %0 = vector.load %arg1[%c0, %c0_0, %c0_1] : memref<1x8x32xf32, #tpu.memory_space<vmem>>, vector<1x8x32xf32>
    %1 = vector.shape_cast %0 : vector<1x8x32xf32> to vector<8x32xf32>
    %c0_2 = arith.constant 0 : index
    %c0_3 = arith.constant 0 : index
    %c0_4 = arith.constant 0 : index
    %2 = vector.load %arg2[%c0_2, %c0_3, %c0_4] : memref<1x8x32xf32, #tpu.memory_space<vmem>>, vector<1x8x32xf32>
    %3 = vector.shape_cast %2 : vector<1x8x32xf32> to vector<8x32xf32>
    %cst = arith.constant 0.000000e+00 : f32
    %4 = vector.broadcast %cst : f32 to vector<8x32xf32>
    %c0_5 = arith.constant 0 : index
    %c0_6 = arith.constant 0 : index
    %c0_7 = arith.constant 0 : index
    %5 = vector.load %arg3[%c0_5, %c0_6, %c0_7] : memref<24x32x8xf32, #tpu.memory_space<vmem>>, vector<1x32x8xf32>
    %6 = vector.shape_cast %5 : vector<1x32x8xf32> to vector<32x8xf32>
    %cst_8 = arith.constant dense<0.000000e+00> : vector<8x8xf32>
    %7 = tpu.matmul %1, %6, %cst_8 {dimension_numbers = #tpu.dot_dimension_numbers<[1], [0], [0], [1], [0, 0, 1, 1], [], []>} : vector<8x32xf32>, vector<32x8xf32>, vector<8x8xf32> -> vector<8x8xf32>
    %c0_9 = arith.constant 0 : index
    %c0_10 = arith.constant 0 : index
    %8 = vector.load %arg7[%c0_9, %c0_10] : memref<34x64xf32, #tpu.memory_space<vmem>>, vector<1x8xf32>
    %9 = vector.broadcast %8 : vector<1x8xf32> to vector<8x8xf32>
    %10 = arith.addf %7, %9 : vector<8x8xf32>
    %c4 = arith.constant 4 : index
    %c0_11 = arith.constant 0 : index
    %c0_12 = arith.constant 0 : index
    %11 = vector.load %arg3[%c4, %c0_11, %c0_12] : memref<24x32x8xf32, #tpu.memory_space<vmem>>, vector<1x32x8xf32>
    %12 = vector.shape_cast %11 : vector<1x32x8xf32> to vector<32x8xf32>
    %cst_13 = arith.constant dense<0.000000e+00> : vector<8x8xf32>
    %13 = tpu.matmul %1, %12, %cst_13 {dimension_numbers = #tpu.dot_dimension_numbers<[1], [0], [0], [1], [0, 0, 1, 1], [], []>} : vector<8x32xf32>, vector<32x8xf32>, vector<8x8xf32> -> vector<8x8xf32>
    %c4_14 = arith.constant 4 : index
    %c0_15 = arith.constant 0 : index
    %14 = vector.load %arg7[%c4_14, %c0_15] : memref<34x64xf32, #tpu.memory_space<vmem>>, vector<1x8xf32>
    %15 = vector.broadcast %14 : vector<1x8xf32> to vector<8x8xf32>
    %16 = arith.addf %13, %15 : vector<8x8xf32>
    %c8 = arith.constant 8 : index
    %c0_16 = arith.constant 0 : index
    %c0_17 = arith.constant 0 : index
    %17 = vector.load %arg3[%c8, %c0_16, %c0_17] : memref<24x32x8xf32, #tpu.memory_space<vmem>>, vector<1x32x8xf32>
    %18 = vector.shape_cast %17 : vector<1x32x8xf32> to vector<32x8xf32>
    %cst_18 = arith.constant dense<0.000000e+00> : vector<8x8xf32>
    %19 = tpu.matmul %1, %18, %cst_18 {dimension_numbers = #tpu.dot_dimension_numbers<[1], [0], [0], [1], [0, 0, 1, 1], [], []>} : vector<8x32xf32>, vector<32x8xf32>, vector<8x8xf32> -> vector<8x8xf32>
    %c8_19 = arith.constant 8 : index
    %c0_20 = arith.constant 0 : index
    %20 = vector.load %arg7[%c8_19, %c0_20] : memref<34x64xf32, #tpu.memory_space<vmem>>, vector<1x8xf32>
    %21 = vector.broadcast %20 : vector<1x8xf32> to vector<8x8xf32>
    %22 = arith.addf %19, %21 : vector<8x8xf32>
    %cst_21 = arith.constant dense<0.000000e+00> : vector<8x8xf32>
    %23 = tpu.matmul %10, %16, %cst_21 {dimension_numbers = #tpu.dot_dimension_numbers<[1], [1], [0], [0], [0, 0, 1, 0], [], []>} : vector<8x8xf32>, vector<8x8xf32>, vector<8x8xf32> -> vector<8x8xf32>
    %cst_22 = arith.constant dense<0xFF800000> : vector<8xf32>
    %24 = vector.multi_reduction <maximumf>, %23, %cst_22 [1] : vector<8x8xf32> to vector<8xf32>
    %25 = vector.shape_cast %24 : vector<8xf32> to vector<8x1xf32>
    %26 = vector.broadcast %25 : vector<8x1xf32> to vector<8x8xf32>
    %27 = arith.subf %23, %26 : vector<8x8xf32>
    %28 = math.exp %27 : vector<8x8xf32>
    %cst_23 = arith.constant dense<0.000000e+00> : vector<8xf32>
    %29 = vector.multi_reduction <add>, %28, %cst_23 [1] : vector<8x8xf32> to vector<8xf32>
    %30 = vector.shape_cast %29 : vector<8xf32> to vector<8x1xf32>
    %31 = tpu.reciprocal %30 {approx = true} : vector<8x1xf32> -> vector<8x1xf32>
    %32 = vector.broadcast %31 : vector<8x1xf32> to vector<8x8xf32>
    %33 = arith.mulf %28, %32 : vector<8x8xf32>
    %cst_24 = arith.constant dense<0.000000e+00> : vector<8x8xf32>
    %34 = tpu.matmul %33, %22, %cst_24 {dimension_numbers = #tpu.dot_dimension_numbers<[1], [0], [0], [1], [0, 0, 1, 1], [], []>} : vector<8x8xf32>, vector<8x8xf32>, vector<8x8xf32> -> vector<8x8xf32>
    %c0_25 = arith.constant 0 : index
    %c0_26 = arith.constant 0 : index
    %c0_27 = arith.constant 0 : index
    %35 = vector.load %arg4[%c0_25, %c0_26, %c0_27] : memref<8x8x32xf32, #tpu.memory_space<vmem>>, vector<1x8x32xf32>
    %36 = vector.shape_cast %35 : vector<1x8x32xf32> to vector<8x32xf32>
    %cst_28 = arith.constant dense<0.000000e+00> : vector<8x32xf32>
    %37 = tpu.matmul %34, %36, %cst_28 {dimension_numbers = #tpu.dot_dimension_numbers<[1], [0], [0], [1], [0, 0, 1, 1], [], []>} : vector<8x8xf32>, vector<8x32xf32>, vector<8x32xf32> -> vector<8x32xf32>
    %38 = arith.addf %4, %37 : vector<8x32xf32>
    %c1 = arith.constant 1 : index
    %c0_29 = arith.constant 0 : index
    %c0_30 = arith.constant 0 : index
    %39 = vector.load %arg3[%c1, %c0_29, %c0_30] : memref<24x32x8xf32, #tpu.memory_space<vmem>>, vector<1x32x8xf32>
    %40 = vector.shape_cast %39 : vector<1x32x8xf32> to vector<32x8xf32>
    %cst_31 = arith.constant dense<0.000000e+00> : vector<8x8xf32>
    %41 = tpu.matmul %1, %40, %cst_31 {dimension_numbers = #tpu.dot_dimension_numbers<[1], [0], [0], [1], [0, 0, 1, 1], [], []>} : vector<8x32xf32>, vector<32x8xf32>, vector<8x8xf32> -> vector<8x8xf32>
    %c1_32 = arith.constant 1 : index
    %c0_33 = arith.constant 0 : index
    %42 = vector.load %arg7[%c1_32, %c0_33] : memref<34x64xf32, #tpu.memory_space<vmem>>, vector<1x8xf32>
    %43 = vector.broadcast %42 : vector<1x8xf32> to vector<8x8xf32>
    %44 = arith.addf %41, %43 : vector<8x8xf32>
    %c5 = arith.constant 5 : index
    %c0_34 = arith.constant 0 : index
    %c0_35 = arith.constant 0 : index
    %45 = vector.load %arg3[%c5, %c0_34, %c0_35] : memref<24x32x8xf32, #tpu.memory_space<vmem>>, vector<1x32x8xf32>
    %46 = vector.shape_cast %45 : vector<1x32x8xf32> to vector<32x8xf32>
    %cst_36 = arith.constant dense<0.000000e+00> : vector<8x8xf32>
    %47 = tpu.matmul %1, %46, %cst_36 {dimension_numbers = #tpu.dot_dimension_numbers<[1], [0], [0], [1], [0, 0, 1, 1], [], []>} : vector<8x32xf32>, vector<32x8xf32>, vector<8x8xf32> -> vector<8x8xf32>
    %c5_37 = arith.constant 5 : index
    %c0_38 = arith.constant 0 : index
    %48 = vector.load %arg7[%c5_37, %c0_38] : memref<34x64xf32, #tpu.memory_space<vmem>>, vector<1x8xf32>
    %49 = vector.broadcast %48 : vector<1x8xf32> to vector<8x8xf32>
    %50 = arith.addf %47, %49 : vector<8x8xf32>
    %c9 = arith.constant 9 : index
    %c0_39 = arith.constant 0 : index
    %c0_40 = arith.constant 0 : index
    %51 = vector.load %arg3[%c9, %c0_39, %c0_40] : memref<24x32x8xf32, #tpu.memory_space<vmem>>, vector<1x32x8xf32>
    %52 = vector.shape_cast %51 : vector<1x32x8xf32> to vector<32x8xf32>
    %cst_41 = arith.constant dense<0.000000e+00> : vector<8x8xf32>
    %53 = tpu.matmul %1, %52, %cst_41 {dimension_numbers = #tpu.dot_dimension_numbers<[1], [0], [0], [1], [0, 0, 1, 1], [], []>} : vector<8x32xf32>, vector<32x8xf32>, vector<8x8xf32> -> vector<8x8xf32>
    %c9_42 = arith.constant 9 : index
    %c0_43 = arith.constant 0 : index
    %54 = vector.load %arg7[%c9_42, %c0_43] : memref<34x64xf32, #tpu.memory_space<vmem>>, vector<1x8xf32>
    %55 = vector.broadcast %54 : vector<1x8xf32> to vector<8x8xf32>
    %56 = arith.addf %53, %55 : vector<8x8xf32>
    %cst_44 = arith.constant dense<0.000000e+00> : vector<8x8xf32>
    %57 = tpu.matmul %44, %50, %cst_44 {dimension_numbers = #tpu.dot_dimension_numbers<[1], [1], [0], [0], [0, 0, 1, 0], [], []>} : vector<8x8xf32>, vector<8x8xf32>, vector<8x8xf32> -> vector<8x8xf32>
    %cst_45 = arith.constant dense<0xFF800000> : vector<8xf32>
    %58 = vector.multi_reduction <maximumf>, %57, %cst_45 [1] : vector<8x8xf32> to vector<8xf32>
    %59 = vector.shape_cast %58 : vector<8xf32> to vector<8x1xf32>
    %60 = vector.broadcast %59 : vector<8x1xf32> to vector<8x8xf32>
    %61 = arith.subf %57, %60 : vector<8x8xf32>
    %62 = math.exp %61 : vector<8x8xf32>
    %cst_46 = arith.constant dense<0.000000e+00> : vector<8xf32>
    %63 = vector.multi_reduction <add>, %62, %cst_46 [1] : vector<8x8xf32> to vector<8xf32>
    %64 = vector.shape_cast %63 : vector<8xf32> to vector<8x1xf32>
    %65 = tpu.reciprocal %64 {approx = true} : vector<8x1xf32> -> vector<8x1xf32>
    %66 = vector.broadcast %65 : vector<8x1xf32> to vector<8x8xf32>
    %67 = arith.mulf %62, %66 : vector<8x8xf32>
    %cst_47 = arith.constant dense<0.000000e+00> : vector<8x8xf32>
    %68 = tpu.matmul %67, %56, %cst_47 {dimension_numbers = #tpu.dot_dimension_numbers<[1], [0], [0], [1], [0, 0, 1, 1], [], []>} : vector<8x8xf32>, vector<8x8xf32>, vector<8x8xf32> -> vector<8x8xf32>
    %c1_48 = arith.constant 1 : index
    %c0_49 = arith.constant 0 : index
    %c0_50 = arith.constant 0 : index
    %69 = vector.load %arg4[%c1_48, %c0_49, %c0_50] : memref<8x8x32xf32, #tpu.memory_space<vmem>>, vector<1x8x32xf32>
    %70 = vector.shape_cast %69 : vector<1x8x32xf32> to vector<8x32xf32>
    %cst_51 = arith.constant dense<0.000000e+00> : vector<8x32xf32>
    %71 = tpu.matmul %68, %70, %cst_51 {dimension_numbers = #tpu.dot_dimension_numbers<[1], [0], [0], [1], [0, 0, 1, 1], [], []>} : vector<8x8xf32>, vector<8x32xf32>, vector<8x32xf32> -> vector<8x32xf32>
    %72 = arith.addf %38, %71 : vector<8x32xf32>
    %c2 = arith.constant 2 : index
    %c0_52 = arith.constant 0 : index
    %c0_53 = arith.constant 0 : index
    %73 = vector.load %arg3[%c2, %c0_52, %c0_53] : memref<24x32x8xf32, #tpu.memory_space<vmem>>, vector<1x32x8xf32>
    %74 = vector.shape_cast %73 : vector<1x32x8xf32> to vector<32x8xf32>
    %cst_54 = arith.constant dense<0.000000e+00> : vector<8x8xf32>
    %75 = tpu.matmul %1, %74, %cst_54 {dimension_numbers = #tpu.dot_dimension_numbers<[1], [0], [0], [1], [0, 0, 1, 1], [], []>} : vector<8x32xf32>, vector<32x8xf32>, vector<8x8xf32> -> vector<8x8xf32>
    %c2_55 = arith.constant 2 : index
    %c0_56 = arith.constant 0 : index
    %76 = vector.load %arg7[%c2_55, %c0_56] : memref<34x64xf32, #tpu.memory_space<vmem>>, vector<1x8xf32>
    %77 = vector.broadcast %76 : vector<1x8xf32> to vector<8x8xf32>
    %78 = arith.addf %75, %77 : vector<8x8xf32>
    %c6 = arith.constant 6 : index
    %c0_57 = arith.constant 0 : index
    %c0_58 = arith.constant 0 : index
    %79 = vector.load %arg3[%c6, %c0_57, %c0_58] : memref<24x32x8xf32, #tpu.memory_space<vmem>>, vector<1x32x8xf32>
    %80 = vector.shape_cast %79 : vector<1x32x8xf32> to vector<32x8xf32>
    %cst_59 = arith.constant dense<0.000000e+00> : vector<8x8xf32>
    %81 = tpu.matmul %1, %80, %cst_59 {dimension_numbers = #tpu.dot_dimension_numbers<[1], [0], [0], [1], [0, 0, 1, 1], [], []>} : vector<8x32xf32>, vector<32x8xf32>, vector<8x8xf32> -> vector<8x8xf32>
    %c6_60 = arith.constant 6 : index
    %c0_61 = arith.constant 0 : index
    %82 = vector.load %arg7[%c6_60, %c0_61] : memref<34x64xf32, #tpu.memory_space<vmem>>, vector<1x8xf32>
    %83 = vector.broadcast %82 : vector<1x8xf32> to vector<8x8xf32>
    %84 = arith.addf %81, %83 : vector<8x8xf32>
    %c10 = arith.constant 10 : index
    %c0_62 = arith.constant 0 : index
    %c0_63 = arith.constant 0 : index
    %85 = vector.load %arg3[%c10, %c0_62, %c0_63] : memref<24x32x8xf32, #tpu.memory_space<vmem>>, vector<1x32x8xf32>
    %86 = vector.shape_cast %85 : vector<1x32x8xf32> to vector<32x8xf32>
    %cst_64 = arith.constant dense<0.000000e+00> : vector<8x8xf32>
    %87 = tpu.matmul %1, %86, %cst_64 {dimension_numbers = #tpu.dot_dimension_numbers<[1], [0], [0], [1], [0, 0, 1, 1], [], []>} : vector<8x32xf32>, vector<32x8xf32>, vector<8x8xf32> -> vector<8x8xf32>
    %c10_65 = arith.constant 10 : index
    %c0_66 = arith.constant 0 : index
    %88 = vector.load %arg7[%c10_65, %c0_66] : memref<34x64xf32, #tpu.memory_space<vmem>>, vector<1x8xf32>
    %89 = vector.broadcast %88 : vector<1x8xf32> to vector<8x8xf32>
    %90 = arith.addf %87, %89 : vector<8x8xf32>
    %cst_67 = arith.constant dense<0.000000e+00> : vector<8x8xf32>
    %91 = tpu.matmul %78, %84, %cst_67 {dimension_numbers = #tpu.dot_dimension_numbers<[1], [1], [0], [0], [0, 0, 1, 0], [], []>} : vector<8x8xf32>, vector<8x8xf32>, vector<8x8xf32> -> vector<8x8xf32>
    %cst_68 = arith.constant dense<0xFF800000> : vector<8xf32>
    %92 = vector.multi_reduction <maximumf>, %91, %cst_68 [1] : vector<8x8xf32> to vector<8xf32>
    %93 = vector.shape_cast %92 : vector<8xf32> to vector<8x1xf32>
    %94 = vector.broadcast %93 : vector<8x1xf32> to vector<8x8xf32>
    %95 = arith.subf %91, %94 : vector<8x8xf32>
    %96 = math.exp %95 : vector<8x8xf32>
    %cst_69 = arith.constant dense<0.000000e+00> : vector<8xf32>
    %97 = vector.multi_reduction <add>, %96, %cst_69 [1] : vector<8x8xf32> to vector<8xf32>
    %98 = vector.shape_cast %97 : vector<8xf32> to vector<8x1xf32>
    %99 = tpu.reciprocal %98 {approx = true} : vector<8x1xf32> -> vector<8x1xf32>
    %100 = vector.broadcast %99 : vector<8x1xf32> to vector<8x8xf32>
    %101 = arith.mulf %96, %100 : vector<8x8xf32>
    %cst_70 = arith.constant dense<0.000000e+00> : vector<8x8xf32>
    %102 = tpu.matmul %101, %90, %cst_70 {dimension_numbers = #tpu.dot_dimension_numbers<[1], [0], [0], [1], [0, 0, 1, 1], [], []>} : vector<8x8xf32>, vector<8x8xf32>, vector<8x8xf32> -> vector<8x8xf32>
    %c2_71 = arith.constant 2 : index
    %c0_72 = arith.constant 0 : index
    %c0_73 = arith.constant 0 : index
    %103 = vector.load %arg4[%c2_71, %c0_72, %c0_73] : memref<8x8x32xf32, #tpu.memory_space<vmem>>, vector<1x8x32xf32>
    %104 = vector.shape_cast %103 : vector<1x8x32xf32> to vector<8x32xf32>
    %cst_74 = arith.constant dense<0.000000e+00> : vector<8x32xf32>
    %105 = tpu.matmul %102, %104, %cst_74 {dimension_numbers = #tpu.dot_dimension_numbers<[1], [0], [0], [1], [0, 0, 1, 1], [], []>} : vector<8x8xf32>, vector<8x32xf32>, vector<8x32xf32> -> vector<8x32xf32>
    %106 = arith.addf %72, %105 : vector<8x32xf32>
    %c3 = arith.constant 3 : index
    %c0_75 = arith.constant 0 : index
    %c0_76 = arith.constant 0 : index
    %107 = vector.load %arg3[%c3, %c0_75, %c0_76] : memref<24x32x8xf32, #tpu.memory_space<vmem>>, vector<1x32x8xf32>
    %108 = vector.shape_cast %107 : vector<1x32x8xf32> to vector<32x8xf32>
    %cst_77 = arith.constant dense<0.000000e+00> : vector<8x8xf32>
    %109 = tpu.matmul %1, %108, %cst_77 {dimension_numbers = #tpu.dot_dimension_numbers<[1], [0], [0], [1], [0, 0, 1, 1], [], []>} : vector<8x32xf32>, vector<32x8xf32>, vector<8x8xf32> -> vector<8x8xf32>
    %c3_78 = arith.constant 3 : index
    %c0_79 = arith.constant 0 : index
    %110 = vector.load %arg7[%c3_78, %c0_79] : memref<34x64xf32, #tpu.memory_space<vmem>>, vector<1x8xf32>
    %111 = vector.broadcast %110 : vector<1x8xf32> to vector<8x8xf32>
    %112 = arith.addf %109, %111 : vector<8x8xf32>
    %c7 = arith.constant 7 : index
    %c0_80 = arith.constant 0 : index
    %c0_81 = arith.constant 0 : index
    %113 = vector.load %arg3[%c7, %c0_80, %c0_81] : memref<24x32x8xf32, #tpu.memory_space<vmem>>, vector<1x32x8xf32>
    %114 = vector.shape_cast %113 : vector<1x32x8xf32> to vector<32x8xf32>
    %cst_82 = arith.constant dense<0.000000e+00> : vector<8x8xf32>
    %115 = tpu.matmul %1, %114, %cst_82 {dimension_numbers = #tpu.dot_dimension_numbers<[1], [0], [0], [1], [0, 0, 1, 1], [], []>} : vector<8x32xf32>, vector<32x8xf32>, vector<8x8xf32> -> vector<8x8xf32>
    %c7_83 = arith.constant 7 : index
    %c0_84 = arith.constant 0 : index
    %116 = vector.load %arg7[%c7_83, %c0_84] : memref<34x64xf32, #tpu.memory_space<vmem>>, vector<1x8xf32>
    %117 = vector.broadcast %116 : vector<1x8xf32> to vector<8x8xf32>
    %118 = arith.addf %115, %117 : vector<8x8xf32>
    %c11 = arith.constant 11 : index
    %c0_85 = arith.constant 0 : index
    %c0_86 = arith.constant 0 : index
    %119 = vector.load %arg3[%c11, %c0_85, %c0_86] : memref<24x32x8xf32, #tpu.memory_space<vmem>>, vector<1x32x8xf32>
    %120 = vector.shape_cast %119 : vector<1x32x8xf32> to vector<32x8xf32>
    %cst_87 = arith.constant dense<0.000000e+00> : vector<8x8xf32>
    %121 = tpu.matmul %1, %120, %cst_87 {dimension_numbers = #tpu.dot_dimension_numbers<[1], [0], [0], [1], [0, 0, 1, 1], [], []>} : vector<8x32xf32>, vector<32x8xf32>, vector<8x8xf32> -> vector<8x8xf32>
    %c11_88 = arith.constant 11 : index
    %c0_89 = arith.constant 0 : index
    %122 = vector.load %arg7[%c11_88, %c0_89] : memref<34x64xf32, #tpu.memory_space<vmem>>, vector<1x8xf32>
    %123 = vector.broadcast %122 : vector<1x8xf32> to vector<8x8xf32>
    %124 = arith.addf %121, %123 : vector<8x8xf32>
    %cst_90 = arith.constant dense<0.000000e+00> : vector<8x8xf32>
    %125 = tpu.matmul %112, %118, %cst_90 {dimension_numbers = #tpu.dot_dimension_numbers<[1], [1], [0], [0], [0, 0, 1, 0], [], []>} : vector<8x8xf32>, vector<8x8xf32>, vector<8x8xf32> -> vector<8x8xf32>
    %cst_91 = arith.constant dense<0xFF800000> : vector<8xf32>
    %126 = vector.multi_reduction <maximumf>, %125, %cst_91 [1] : vector<8x8xf32> to vector<8xf32>
    %127 = vector.shape_cast %126 : vector<8xf32> to vector<8x1xf32>
    %128 = vector.broadcast %127 : vector<8x1xf32> to vector<8x8xf32>
    %129 = arith.subf %125, %128 : vector<8x8xf32>
    %130 = math.exp %129 : vector<8x8xf32>
    %cst_92 = arith.constant dense<0.000000e+00> : vector<8xf32>
    %131 = vector.multi_reduction <add>, %130, %cst_92 [1] : vector<8x8xf32> to vector<8xf32>
    %132 = vector.shape_cast %131 : vector<8xf32> to vector<8x1xf32>
    %133 = tpu.reciprocal %132 {approx = true} : vector<8x1xf32> -> vector<8x1xf32>
    %134 = vector.broadcast %133 : vector<8x1xf32> to vector<8x8xf32>
    %135 = arith.mulf %130, %134 : vector<8x8xf32>
    %cst_93 = arith.constant dense<0.000000e+00> : vector<8x8xf32>
    %136 = tpu.matmul %135, %124, %cst_93 {dimension_numbers = #tpu.dot_dimension_numbers<[1], [0], [0], [1], [0, 0, 1, 1], [], []>} : vector<8x8xf32>, vector<8x8xf32>, vector<8x8xf32> -> vector<8x8xf32>
    %c3_94 = arith.constant 3 : index
    %c0_95 = arith.constant 0 : index
    %c0_96 = arith.constant 0 : index
    %137 = vector.load %arg4[%c3_94, %c0_95, %c0_96] : memref<8x8x32xf32, #tpu.memory_space<vmem>>, vector<1x8x32xf32>
    %138 = vector.shape_cast %137 : vector<1x8x32xf32> to vector<8x32xf32>
    %cst_97 = arith.constant dense<0.000000e+00> : vector<8x32xf32>
    %139 = tpu.matmul %136, %138, %cst_97 {dimension_numbers = #tpu.dot_dimension_numbers<[1], [0], [0], [1], [0, 0, 1, 1], [], []>} : vector<8x8xf32>, vector<8x32xf32>, vector<8x32xf32> -> vector<8x32xf32>
    %140 = arith.addf %106, %139 : vector<8x32xf32>
    %c24 = arith.constant 24 : index
    %c0_98 = arith.constant 0 : index
    %141 = vector.load %arg7[%c24, %c0_98] : memref<34x64xf32, #tpu.memory_space<vmem>>, vector<1x32xf32>
    %142 = vector.broadcast %141 : vector<1x32xf32> to vector<8x32xf32>
    %143 = arith.addf %140, %142 : vector<8x32xf32>
    %144 = arith.addf %1, %143 : vector<8x32xf32>
    %c28 = arith.constant 28 : index
    %c0_99 = arith.constant 0 : index
    %145 = vector.load %arg7[%c28, %c0_99] : memref<34x64xf32, #tpu.memory_space<vmem>>, vector<1x32xf32>
    %c29 = arith.constant 29 : index
    %c0_100 = arith.constant 0 : index
    %146 = vector.load %arg7[%c29, %c0_100] : memref<34x64xf32, #tpu.memory_space<vmem>>, vector<1x32xf32>
    %cst_101 = arith.constant dense<0.000000e+00> : vector<8xf32>
    %147 = vector.multi_reduction <add>, %144, %cst_101 [1] : vector<8x32xf32> to vector<8xf32>
    %148 = vector.shape_cast %147 : vector<8xf32> to vector<8x1xf32>
    %cst_102 = arith.constant 3.200000e+01 : f32
    %149 = vector.broadcast %cst_102 : f32 to vector<8x1xf32>
    %150 = arith.divf %148, %149 : vector<8x1xf32>
    %151 = vector.broadcast %150 : vector<8x1xf32> to vector<8x32xf32>
    %152 = arith.subf %144, %151 : vector<8x32xf32>
    %153 = arith.mulf %152, %152 : vector<8x32xf32>
    %cst_103 = arith.constant dense<0.000000e+00> : vector<8xf32>
    %154 = vector.multi_reduction <add>, %153, %cst_103 [1] : vector<8x32xf32> to vector<8xf32>
    %155 = vector.shape_cast %154 : vector<8xf32> to vector<8x1xf32>
    %cst_104 = arith.constant 3.200000e+01 : f32
    %156 = vector.broadcast %cst_104 : f32 to vector<8x1xf32>
    %157 = arith.divf %155, %156 : vector<8x1xf32>
    %158 = vector.broadcast %150 : vector<8x1xf32> to vector<8x32xf32>
    %159 = arith.subf %144, %158 : vector<8x32xf32>
    %cst_105 = arith.constant 9.99999974E-6 : f32
    %160 = vector.broadcast %cst_105 : f32 to vector<8x1xf32>
    %161 = arith.addf %157, %160 : vector<8x1xf32>
    %162 = math.rsqrt %161 : vector<8x1xf32>
    %163 = vector.broadcast %162 : vector<8x1xf32> to vector<8x32xf32>
    %164 = arith.mulf %159, %163 : vector<8x32xf32>
    %165 = vector.broadcast %145 : vector<1x32xf32> to vector<8x32xf32>
    %166 = arith.mulf %164, %165 : vector<8x32xf32>
    %167 = vector.broadcast %146 : vector<1x32xf32> to vector<8x32xf32>
    %168 = arith.addf %166, %167 : vector<8x32xf32>
    %cst_106 = arith.constant 0.000000e+00 : f32
    %169 = vector.broadcast %cst_106 : f32 to vector<8x32xf32>
    %c12 = arith.constant 12 : index
    %c0_107 = arith.constant 0 : index
    %c0_108 = arith.constant 0 : index
    %170 = vector.load %arg3[%c12, %c0_107, %c0_108] : memref<24x32x8xf32, #tpu.memory_space<vmem>>, vector<1x32x8xf32>
    %171 = vector.shape_cast %170 : vector<1x32x8xf32> to vector<32x8xf32>
    %cst_109 = arith.constant dense<0.000000e+00> : vector<8x8xf32>
    %172 = tpu.matmul %168, %171, %cst_109 {dimension_numbers = #tpu.dot_dimension_numbers<[1], [0], [0], [1], [0, 0, 1, 1], [], []>} : vector<8x32xf32>, vector<32x8xf32>, vector<8x8xf32> -> vector<8x8xf32>
    %c12_110 = arith.constant 12 : index
    %c0_111 = arith.constant 0 : index
    %173 = vector.load %arg7[%c12_110, %c0_111] : memref<34x64xf32, #tpu.memory_space<vmem>>, vector<1x8xf32>
    %174 = vector.broadcast %173 : vector<1x8xf32> to vector<8x8xf32>
    %175 = arith.addf %172, %174 : vector<8x8xf32>
    %c16 = arith.constant 16 : index
    %c0_112 = arith.constant 0 : index
    %c0_113 = arith.constant 0 : index
    %176 = vector.load %arg3[%c16, %c0_112, %c0_113] : memref<24x32x8xf32, #tpu.memory_space<vmem>>, vector<1x32x8xf32>
    %177 = vector.shape_cast %176 : vector<1x32x8xf32> to vector<32x8xf32>
    %cst_114 = arith.constant dense<0.000000e+00> : vector<8x8xf32>
    %178 = tpu.matmul %3, %177, %cst_114 {dimension_numbers = #tpu.dot_dimension_numbers<[1], [0], [0], [1], [0, 0, 1, 1], [], []>} : vector<8x32xf32>, vector<32x8xf32>, vector<8x8xf32> -> vector<8x8xf32>
    %c16_115 = arith.constant 16 : index
    %c0_116 = arith.constant 0 : index
    %179 = vector.load %arg7[%c16_115, %c0_116] : memref<34x64xf32, #tpu.memory_space<vmem>>, vector<1x8xf32>
    %180 = vector.broadcast %179 : vector<1x8xf32> to vector<8x8xf32>
    %181 = arith.addf %178, %180 : vector<8x8xf32>
    %c20 = arith.constant 20 : index
    %c0_117 = arith.constant 0 : index
    %c0_118 = arith.constant 0 : index
    %182 = vector.load %arg3[%c20, %c0_117, %c0_118] : memref<24x32x8xf32, #tpu.memory_space<vmem>>, vector<1x32x8xf32>
    %183 = vector.shape_cast %182 : vector<1x32x8xf32> to vector<32x8xf32>
    %cst_119 = arith.constant dense<0.000000e+00> : vector<8x8xf32>
    %184 = tpu.matmul %3, %183, %cst_119 {dimension_numbers = #tpu.dot_dimension_numbers<[1], [0], [0], [1], [0, 0, 1, 1], [], []>} : vector<8x32xf32>, vector<32x8xf32>, vector<8x8xf32> -> vector<8x8xf32>
    %c20_120 = arith.constant 20 : index
    %c0_121 = arith.constant 0 : index
    %185 = vector.load %arg7[%c20_120, %c0_121] : memref<34x64xf32, #tpu.memory_space<vmem>>, vector<1x8xf32>
    %186 = vector.broadcast %185 : vector<1x8xf32> to vector<8x8xf32>
    %187 = arith.addf %184, %186 : vector<8x8xf32>
    %cst_122 = arith.constant dense<0.000000e+00> : vector<8x8xf32>
    %188 = tpu.matmul %175, %181, %cst_122 {dimension_numbers = #tpu.dot_dimension_numbers<[1], [1], [0], [0], [0, 0, 1, 0], [], []>} : vector<8x8xf32>, vector<8x8xf32>, vector<8x8xf32> -> vector<8x8xf32>
    %cst_123 = arith.constant dense<0xFF800000> : vector<8xf32>
    %189 = vector.multi_reduction <maximumf>, %188, %cst_123 [1] : vector<8x8xf32> to vector<8xf32>
    %190 = vector.shape_cast %189 : vector<8xf32> to vector<8x1xf32>
    %191 = vector.broadcast %190 : vector<8x1xf32> to vector<8x8xf32>
    %192 = arith.subf %188, %191 : vector<8x8xf32>
    %193 = math.exp %192 : vector<8x8xf32>
    %cst_124 = arith.constant dense<0.000000e+00> : vector<8xf32>
    %194 = vector.multi_reduction <add>, %193, %cst_124 [1] : vector<8x8xf32> to vector<8xf32>
    %195 = vector.shape_cast %194 : vector<8xf32> to vector<8x1xf32>
    %196 = tpu.reciprocal %195 {approx = true} : vector<8x1xf32> -> vector<8x1xf32>
    %197 = vector.broadcast %196 : vector<8x1xf32> to vector<8x8xf32>
    %198 = arith.mulf %193, %197 : vector<8x8xf32>
    %cst_125 = arith.constant dense<0.000000e+00> : vector<8x8xf32>
    %199 = tpu.matmul %198, %187, %cst_125 {dimension_numbers = #tpu.dot_dimension_numbers<[1], [0], [0], [1], [0, 0, 1, 1], [], []>} : vector<8x8xf32>, vector<8x8xf32>, vector<8x8xf32> -> vector<8x8xf32>
    %c4_126 = arith.constant 4 : index
    %c0_127 = arith.constant 0 : index
    %c0_128 = arith.constant 0 : index
    %200 = vector.load %arg4[%c4_126, %c0_127, %c0_128] : memref<8x8x32xf32, #tpu.memory_space<vmem>>, vector<1x8x32xf32>
    %201 = vector.shape_cast %200 : vector<1x8x32xf32> to vector<8x32xf32>
    %cst_129 = arith.constant dense<0.000000e+00> : vector<8x32xf32>
    %202 = tpu.matmul %199, %201, %cst_129 {dimension_numbers = #tpu.dot_dimension_numbers<[1], [0], [0], [1], [0, 0, 1, 1], [], []>} : vector<8x8xf32>, vector<8x32xf32>, vector<8x32xf32> -> vector<8x32xf32>
    %203 = arith.addf %169, %202 : vector<8x32xf32>
    %c13 = arith.constant 13 : index
    %c0_130 = arith.constant 0 : index
    %c0_131 = arith.constant 0 : index
    %204 = vector.load %arg3[%c13, %c0_130, %c0_131] : memref<24x32x8xf32, #tpu.memory_space<vmem>>, vector<1x32x8xf32>
    %205 = vector.shape_cast %204 : vector<1x32x8xf32> to vector<32x8xf32>
    %cst_132 = arith.constant dense<0.000000e+00> : vector<8x8xf32>
    %206 = tpu.matmul %168, %205, %cst_132 {dimension_numbers = #tpu.dot_dimension_numbers<[1], [0], [0], [1], [0, 0, 1, 1], [], []>} : vector<8x32xf32>, vector<32x8xf32>, vector<8x8xf32> -> vector<8x8xf32>
    %c13_133 = arith.constant 13 : index
    %c0_134 = arith.constant 0 : index
    %207 = vector.load %arg7[%c13_133, %c0_134] : memref<34x64xf32, #tpu.memory_space<vmem>>, vector<1x8xf32>
    %208 = vector.broadcast %207 : vector<1x8xf32> to vector<8x8xf32>
    %209 = arith.addf %206, %208 : vector<8x8xf32>
    %c17 = arith.constant 17 : index
    %c0_135 = arith.constant 0 : index
    %c0_136 = arith.constant 0 : index
    %210 = vector.load %arg3[%c17, %c0_135, %c0_136] : memref<24x32x8xf32, #tpu.memory_space<vmem>>, vector<1x32x8xf32>
    %211 = vector.shape_cast %210 : vector<1x32x8xf32> to vector<32x8xf32>
    %cst_137 = arith.constant dense<0.000000e+00> : vector<8x8xf32>
    %212 = tpu.matmul %3, %211, %cst_137 {dimension_numbers = #tpu.dot_dimension_numbers<[1], [0], [0], [1], [0, 0, 1, 1], [], []>} : vector<8x32xf32>, vector<32x8xf32>, vector<8x8xf32> -> vector<8x8xf32>
    %c17_138 = arith.constant 17 : index
    %c0_139 = arith.constant 0 : index
    %213 = vector.load %arg7[%c17_138, %c0_139] : memref<34x64xf32, #tpu.memory_space<vmem>>, vector<1x8xf32>
    %214 = vector.broadcast %213 : vector<1x8xf32> to vector<8x8xf32>
    %215 = arith.addf %212, %214 : vector<8x8xf32>
    %c21 = arith.constant 21 : index
    %c0_140 = arith.constant 0 : index
    %c0_141 = arith.constant 0 : index
    %216 = vector.load %arg3[%c21, %c0_140, %c0_141] : memref<24x32x8xf32, #tpu.memory_space<vmem>>, vector<1x32x8xf32>
    %217 = vector.shape_cast %216 : vector<1x32x8xf32> to vector<32x8xf32>
    %cst_142 = arith.constant dense<0.000000e+00> : vector<8x8xf32>
    %218 = tpu.matmul %3, %217, %cst_142 {dimension_numbers = #tpu.dot_dimension_numbers<[1], [0], [0], [1], [0, 0, 1, 1], [], []>} : vector<8x32xf32>, vector<32x8xf32>, vector<8x8xf32> -> vector<8x8xf32>
    %c21_143 = arith.constant 21 : index
    %c0_144 = arith.constant 0 : index
    %219 = vector.load %arg7[%c21_143, %c0_144] : memref<34x64xf32, #tpu.memory_space<vmem>>, vector<1x8xf32>
    %220 = vector.broadcast %219 : vector<1x8xf32> to vector<8x8xf32>
    %221 = arith.addf %218, %220 : vector<8x8xf32>
    %cst_145 = arith.constant dense<0.000000e+00> : vector<8x8xf32>
    %222 = tpu.matmul %209, %215, %cst_145 {dimension_numbers = #tpu.dot_dimension_numbers<[1], [1], [0], [0], [0, 0, 1, 0], [], []>} : vector<8x8xf32>, vector<8x8xf32>, vector<8x8xf32> -> vector<8x8xf32>
    %cst_146 = arith.constant dense<0xFF800000> : vector<8xf32>
    %223 = vector.multi_reduction <maximumf>, %222, %cst_146 [1] : vector<8x8xf32> to vector<8xf32>
    %224 = vector.shape_cast %223 : vector<8xf32> to vector<8x1xf32>
    %225 = vector.broadcast %224 : vector<8x1xf32> to vector<8x8xf32>
    %226 = arith.subf %222, %225 : vector<8x8xf32>
    %227 = math.exp %226 : vector<8x8xf32>
    %cst_147 = arith.constant dense<0.000000e+00> : vector<8xf32>
    %228 = vector.multi_reduction <add>, %227, %cst_147 [1] : vector<8x8xf32> to vector<8xf32>
    %229 = vector.shape_cast %228 : vector<8xf32> to vector<8x1xf32>
    %230 = tpu.reciprocal %229 {approx = true} : vector<8x1xf32> -> vector<8x1xf32>
    %231 = vector.broadcast %230 : vector<8x1xf32> to vector<8x8xf32>
    %232 = arith.mulf %227, %231 : vector<8x8xf32>
    %cst_148 = arith.constant dense<0.000000e+00> : vector<8x8xf32>
    %233 = tpu.matmul %232, %221, %cst_148 {dimension_numbers = #tpu.dot_dimension_numbers<[1], [0], [0], [1], [0, 0, 1, 1], [], []>} : vector<8x8xf32>, vector<8x8xf32>, vector<8x8xf32> -> vector<8x8xf32>
    %c5_149 = arith.constant 5 : index
    %c0_150 = arith.constant 0 : index
    %c0_151 = arith.constant 0 : index
    %234 = vector.load %arg4[%c5_149, %c0_150, %c0_151] : memref<8x8x32xf32, #tpu.memory_space<vmem>>, vector<1x8x32xf32>
    %235 = vector.shape_cast %234 : vector<1x8x32xf32> to vector<8x32xf32>
    %cst_152 = arith.constant dense<0.000000e+00> : vector<8x32xf32>
    %236 = tpu.matmul %233, %235, %cst_152 {dimension_numbers = #tpu.dot_dimension_numbers<[1], [0], [0], [1], [0, 0, 1, 1], [], []>} : vector<8x8xf32>, vector<8x32xf32>, vector<8x32xf32> -> vector<8x32xf32>
    %237 = arith.addf %203, %236 : vector<8x32xf32>
    %c14 = arith.constant 14 : index
    %c0_153 = arith.constant 0 : index
    %c0_154 = arith.constant 0 : index
    %238 = vector.load %arg3[%c14, %c0_153, %c0_154] : memref<24x32x8xf32, #tpu.memory_space<vmem>>, vector<1x32x8xf32>
    %239 = vector.shape_cast %238 : vector<1x32x8xf32> to vector<32x8xf32>
    %cst_155 = arith.constant dense<0.000000e+00> : vector<8x8xf32>
    %240 = tpu.matmul %168, %239, %cst_155 {dimension_numbers = #tpu.dot_dimension_numbers<[1], [0], [0], [1], [0, 0, 1, 1], [], []>} : vector<8x32xf32>, vector<32x8xf32>, vector<8x8xf32> -> vector<8x8xf32>
    %c14_156 = arith.constant 14 : index
    %c0_157 = arith.constant 0 : index
    %241 = vector.load %arg7[%c14_156, %c0_157] : memref<34x64xf32, #tpu.memory_space<vmem>>, vector<1x8xf32>
    %242 = vector.broadcast %241 : vector<1x8xf32> to vector<8x8xf32>
    %243 = arith.addf %240, %242 : vector<8x8xf32>
    %c18 = arith.constant 18 : index
    %c0_158 = arith.constant 0 : index
    %c0_159 = arith.constant 0 : index
    %244 = vector.load %arg3[%c18, %c0_158, %c0_159] : memref<24x32x8xf32, #tpu.memory_space<vmem>>, vector<1x32x8xf32>
    %245 = vector.shape_cast %244 : vector<1x32x8xf32> to vector<32x8xf32>
    %cst_160 = arith.constant dense<0.000000e+00> : vector<8x8xf32>
    %246 = tpu.matmul %3, %245, %cst_160 {dimension_numbers = #tpu.dot_dimension_numbers<[1], [0], [0], [1], [0, 0, 1, 1], [], []>} : vector<8x32xf32>, vector<32x8xf32>, vector<8x8xf32> -> vector<8x8xf32>
    %c18_161 = arith.constant 18 : index
    %c0_162 = arith.constant 0 : index
    %247 = vector.load %arg7[%c18_161, %c0_162] : memref<34x64xf32, #tpu.memory_space<vmem>>, vector<1x8xf32>
    %248 = vector.broadcast %247 : vector<1x8xf32> to vector<8x8xf32>
    %249 = arith.addf %246, %248 : vector<8x8xf32>
    %c22 = arith.constant 22 : index
    %c0_163 = arith.constant 0 : index
    %c0_164 = arith.constant 0 : index
    %250 = vector.load %arg3[%c22, %c0_163, %c0_164] : memref<24x32x8xf32, #tpu.memory_space<vmem>>, vector<1x32x8xf32>
    %251 = vector.shape_cast %250 : vector<1x32x8xf32> to vector<32x8xf32>
    %cst_165 = arith.constant dense<0.000000e+00> : vector<8x8xf32>
    %252 = tpu.matmul %3, %251, %cst_165 {dimension_numbers = #tpu.dot_dimension_numbers<[1], [0], [0], [1], [0, 0, 1, 1], [], []>} : vector<8x32xf32>, vector<32x8xf32>, vector<8x8xf32> -> vector<8x8xf32>
    %c22_166 = arith.constant 22 : index
    %c0_167 = arith.constant 0 : index
    %253 = vector.load %arg7[%c22_166, %c0_167] : memref<34x64xf32, #tpu.memory_space<vmem>>, vector<1x8xf32>
    %254 = vector.broadcast %253 : vector<1x8xf32> to vector<8x8xf32>
    %255 = arith.addf %252, %254 : vector<8x8xf32>
    %cst_168 = arith.constant dense<0.000000e+00> : vector<8x8xf32>
    %256 = tpu.matmul %243, %249, %cst_168 {dimension_numbers = #tpu.dot_dimension_numbers<[1], [1], [0], [0], [0, 0, 1, 0], [], []>} : vector<8x8xf32>, vector<8x8xf32>, vector<8x8xf32> -> vector<8x8xf32>
    %cst_169 = arith.constant dense<0xFF800000> : vector<8xf32>
    %257 = vector.multi_reduction <maximumf>, %256, %cst_169 [1] : vector<8x8xf32> to vector<8xf32>
    %258 = vector.shape_cast %257 : vector<8xf32> to vector<8x1xf32>
    %259 = vector.broadcast %258 : vector<8x1xf32> to vector<8x8xf32>
    %260 = arith.subf %256, %259 : vector<8x8xf32>
    %261 = math.exp %260 : vector<8x8xf32>
    %cst_170 = arith.constant dense<0.000000e+00> : vector<8xf32>
    %262 = vector.multi_reduction <add>, %261, %cst_170 [1] : vector<8x8xf32> to vector<8xf32>
    %263 = vector.shape_cast %262 : vector<8xf32> to vector<8x1xf32>
    %264 = tpu.reciprocal %263 {approx = true} : vector<8x1xf32> -> vector<8x1xf32>
    %265 = vector.broadcast %264 : vector<8x1xf32> to vector<8x8xf32>
    %266 = arith.mulf %261, %265 : vector<8x8xf32>
    %cst_171 = arith.constant dense<0.000000e+00> : vector<8x8xf32>
    %267 = tpu.matmul %266, %255, %cst_171 {dimension_numbers = #tpu.dot_dimension_numbers<[1], [0], [0], [1], [0, 0, 1, 1], [], []>} : vector<8x8xf32>, vector<8x8xf32>, vector<8x8xf32> -> vector<8x8xf32>
    %c6_172 = arith.constant 6 : index
    %c0_173 = arith.constant 0 : index
    %c0_174 = arith.constant 0 : index
    %268 = vector.load %arg4[%c6_172, %c0_173, %c0_174] : memref<8x8x32xf32, #tpu.memory_space<vmem>>, vector<1x8x32xf32>
    %269 = vector.shape_cast %268 : vector<1x8x32xf32> to vector<8x32xf32>
    %cst_175 = arith.constant dense<0.000000e+00> : vector<8x32xf32>
    %270 = tpu.matmul %267, %269, %cst_175 {dimension_numbers = #tpu.dot_dimension_numbers<[1], [0], [0], [1], [0, 0, 1, 1], [], []>} : vector<8x8xf32>, vector<8x32xf32>, vector<8x32xf32> -> vector<8x32xf32>
    %271 = arith.addf %237, %270 : vector<8x32xf32>
    %c15 = arith.constant 15 : index
    %c0_176 = arith.constant 0 : index
    %c0_177 = arith.constant 0 : index
    %272 = vector.load %arg3[%c15, %c0_176, %c0_177] : memref<24x32x8xf32, #tpu.memory_space<vmem>>, vector<1x32x8xf32>
    %273 = vector.shape_cast %272 : vector<1x32x8xf32> to vector<32x8xf32>
    %cst_178 = arith.constant dense<0.000000e+00> : vector<8x8xf32>
    %274 = tpu.matmul %168, %273, %cst_178 {dimension_numbers = #tpu.dot_dimension_numbers<[1], [0], [0], [1], [0, 0, 1, 1], [], []>} : vector<8x32xf32>, vector<32x8xf32>, vector<8x8xf32> -> vector<8x8xf32>
    %c15_179 = arith.constant 15 : index
    %c0_180 = arith.constant 0 : index
    %275 = vector.load %arg7[%c15_179, %c0_180] : memref<34x64xf32, #tpu.memory_space<vmem>>, vector<1x8xf32>
    %276 = vector.broadcast %275 : vector<1x8xf32> to vector<8x8xf32>
    %277 = arith.addf %274, %276 : vector<8x8xf32>
    %c19 = arith.constant 19 : index
    %c0_181 = arith.constant 0 : index
    %c0_182 = arith.constant 0 : index
    %278 = vector.load %arg3[%c19, %c0_181, %c0_182] : memref<24x32x8xf32, #tpu.memory_space<vmem>>, vector<1x32x8xf32>
    %279 = vector.shape_cast %278 : vector<1x32x8xf32> to vector<32x8xf32>
    %cst_183 = arith.constant dense<0.000000e+00> : vector<8x8xf32>
    %280 = tpu.matmul %3, %279, %cst_183 {dimension_numbers = #tpu.dot_dimension_numbers<[1], [0], [0], [1], [0, 0, 1, 1], [], []>} : vector<8x32xf32>, vector<32x8xf32>, vector<8x8xf32> -> vector<8x8xf32>
    %c19_184 = arith.constant 19 : index
    %c0_185 = arith.constant 0 : index
    %281 = vector.load %arg7[%c19_184, %c0_185] : memref<34x64xf32, #tpu.memory_space<vmem>>, vector<1x8xf32>
    %282 = vector.broadcast %281 : vector<1x8xf32> to vector<8x8xf32>
    %283 = arith.addf %280, %282 : vector<8x8xf32>
    %c23 = arith.constant 23 : index
    %c0_186 = arith.constant 0 : index
    %c0_187 = arith.constant 0 : index
    %284 = vector.load %arg3[%c23, %c0_186, %c0_187] : memref<24x32x8xf32, #tpu.memory_space<vmem>>, vector<1x32x8xf32>
    %285 = vector.shape_cast %284 : vector<1x32x8xf32> to vector<32x8xf32>
    %cst_188 = arith.constant dense<0.000000e+00> : vector<8x8xf32>
    %286 = tpu.matmul %3, %285, %cst_188 {dimension_numbers = #tpu.dot_dimension_numbers<[1], [0], [0], [1], [0, 0, 1, 1], [], []>} : vector<8x32xf32>, vector<32x8xf32>, vector<8x8xf32> -> vector<8x8xf32>
    %c23_189 = arith.constant 23 : index
    %c0_190 = arith.constant 0 : index
    %287 = vector.load %arg7[%c23_189, %c0_190] : memref<34x64xf32, #tpu.memory_space<vmem>>, vector<1x8xf32>
    %288 = vector.broadcast %287 : vector<1x8xf32> to vector<8x8xf32>
    %289 = arith.addf %286, %288 : vector<8x8xf32>
    %cst_191 = arith.constant dense<0.000000e+00> : vector<8x8xf32>
    %290 = tpu.matmul %277, %283, %cst_191 {dimension_numbers = #tpu.dot_dimension_numbers<[1], [1], [0], [0], [0, 0, 1, 0], [], []>} : vector<8x8xf32>, vector<8x8xf32>, vector<8x8xf32> -> vector<8x8xf32>
    %cst_192 = arith.constant dense<0xFF800000> : vector<8xf32>
    %291 = vector.multi_reduction <maximumf>, %290, %cst_192 [1] : vector<8x8xf32> to vector<8xf32>
    %292 = vector.shape_cast %291 : vector<8xf32> to vector<8x1xf32>
    %293 = vector.broadcast %292 : vector<8x1xf32> to vector<8x8xf32>
    %294 = arith.subf %290, %293 : vector<8x8xf32>
    %295 = math.exp %294 : vector<8x8xf32>
    %cst_193 = arith.constant dense<0.000000e+00> : vector<8xf32>
    %296 = vector.multi_reduction <add>, %295, %cst_193 [1] : vector<8x8xf32> to vector<8xf32>
    %297 = vector.shape_cast %296 : vector<8xf32> to vector<8x1xf32>
    %298 = tpu.reciprocal %297 {approx = true} : vector<8x1xf32> -> vector<8x1xf32>
    %299 = vector.broadcast %298 : vector<8x1xf32> to vector<8x8xf32>
    %300 = arith.mulf %295, %299 : vector<8x8xf32>
    %cst_194 = arith.constant dense<0.000000e+00> : vector<8x8xf32>
    %301 = tpu.matmul %300, %289, %cst_194 {dimension_numbers = #tpu.dot_dimension_numbers<[1], [0], [0], [1], [0, 0, 1, 1], [], []>} : vector<8x8xf32>, vector<8x8xf32>, vector<8x8xf32> -> vector<8x8xf32>
    %c7_195 = arith.constant 7 : index
    %c0_196 = arith.constant 0 : index
    %c0_197 = arith.constant 0 : index
    %302 = vector.load %arg4[%c7_195, %c0_196, %c0_197] : memref<8x8x32xf32, #tpu.memory_space<vmem>>, vector<1x8x32xf32>
    %303 = vector.shape_cast %302 : vector<1x8x32xf32> to vector<8x32xf32>
    %cst_198 = arith.constant dense<0.000000e+00> : vector<8x32xf32>
    %304 = tpu.matmul %301, %303, %cst_198 {dimension_numbers = #tpu.dot_dimension_numbers<[1], [0], [0], [1], [0, 0, 1, 1], [], []>} : vector<8x8xf32>, vector<8x32xf32>, vector<8x32xf32> -> vector<8x32xf32>
    %305 = arith.addf %271, %304 : vector<8x32xf32>
    %c25 = arith.constant 25 : index
    %c0_199 = arith.constant 0 : index
    %306 = vector.load %arg7[%c25, %c0_199] : memref<34x64xf32, #tpu.memory_space<vmem>>, vector<1x32xf32>
    %307 = vector.broadcast %306 : vector<1x32xf32> to vector<8x32xf32>
    %308 = arith.addf %305, %307 : vector<8x32xf32>
    %309 = arith.addf %168, %308 : vector<8x32xf32>
    %c30 = arith.constant 30 : index
    %c0_200 = arith.constant 0 : index
    %310 = vector.load %arg7[%c30, %c0_200] : memref<34x64xf32, #tpu.memory_space<vmem>>, vector<1x32xf32>
    %c31 = arith.constant 31 : index
    %c0_201 = arith.constant 0 : index
    %311 = vector.load %arg7[%c31, %c0_201] : memref<34x64xf32, #tpu.memory_space<vmem>>, vector<1x32xf32>
    %cst_202 = arith.constant dense<0.000000e+00> : vector<8xf32>
    %312 = vector.multi_reduction <add>, %309, %cst_202 [1] : vector<8x32xf32> to vector<8xf32>
    %313 = vector.shape_cast %312 : vector<8xf32> to vector<8x1xf32>
    %cst_203 = arith.constant 3.200000e+01 : f32
    %314 = vector.broadcast %cst_203 : f32 to vector<8x1xf32>
    %315 = arith.divf %313, %314 : vector<8x1xf32>
    %316 = vector.broadcast %315 : vector<8x1xf32> to vector<8x32xf32>
    %317 = arith.subf %309, %316 : vector<8x32xf32>
    %318 = arith.mulf %317, %317 : vector<8x32xf32>
    %cst_204 = arith.constant dense<0.000000e+00> : vector<8xf32>
    %319 = vector.multi_reduction <add>, %318, %cst_204 [1] : vector<8x32xf32> to vector<8xf32>
    %320 = vector.shape_cast %319 : vector<8xf32> to vector<8x1xf32>
    %cst_205 = arith.constant 3.200000e+01 : f32
    %321 = vector.broadcast %cst_205 : f32 to vector<8x1xf32>
    %322 = arith.divf %320, %321 : vector<8x1xf32>
    %323 = vector.broadcast %315 : vector<8x1xf32> to vector<8x32xf32>
    %324 = arith.subf %309, %323 : vector<8x32xf32>
    %cst_206 = arith.constant 9.99999974E-6 : f32
    %325 = vector.broadcast %cst_206 : f32 to vector<8x1xf32>
    %326 = arith.addf %322, %325 : vector<8x1xf32>
    %327 = math.rsqrt %326 : vector<8x1xf32>
    %328 = vector.broadcast %327 : vector<8x1xf32> to vector<8x32xf32>
    %329 = arith.mulf %324, %328 : vector<8x32xf32>
    %330 = vector.broadcast %310 : vector<1x32xf32> to vector<8x32xf32>
    %331 = arith.mulf %329, %330 : vector<8x32xf32>
    %332 = vector.broadcast %311 : vector<1x32xf32> to vector<8x32xf32>
    %333 = arith.addf %331, %332 : vector<8x32xf32>
    %c0_207 = arith.constant 0 : index
    %c0_208 = arith.constant 0 : index
    %334 = vector.load %arg5[%c0_207, %c0_208] : memref<32x64xf32, #tpu.memory_space<vmem>>, vector<32x64xf32>
    %cst_209 = arith.constant dense<0.000000e+00> : vector<8x64xf32>
    %335 = tpu.matmul %333, %334, %cst_209 {dimension_numbers = #tpu.dot_dimension_numbers<[1], [0], [0], [1], [0, 0, 1, 1], [], []>} : vector<8x32xf32>, vector<32x64xf32>, vector<8x64xf32> -> vector<8x64xf32>
    %c26 = arith.constant 26 : index
    %c0_210 = arith.constant 0 : index
    %336 = vector.load %arg7[%c26, %c0_210] : memref<34x64xf32, #tpu.memory_space<vmem>>, vector<1x64xf32>
    %337 = vector.broadcast %336 : vector<1x64xf32> to vector<8x64xf32>
    %338 = arith.addf %335, %337 : vector<8x64xf32>
    %cst_211 = arith.constant 0.000000e+00 : f32
    %339 = vector.broadcast %cst_211 : f32 to vector<8x64xf32>
    %340 = arith.maximumf %338, %339 : vector<8x64xf32>
    %c0_212 = arith.constant 0 : index
    %c0_213 = arith.constant 0 : index
    %341 = vector.load %arg6[%c0_212, %c0_213] : memref<64x32xf32, #tpu.memory_space<vmem>>, vector<64x32xf32>
    %cst_214 = arith.constant dense<0.000000e+00> : vector<8x32xf32>
    %342 = tpu.matmul %340, %341, %cst_214 {dimension_numbers = #tpu.dot_dimension_numbers<[1], [0], [0], [1], [0, 0, 1, 1], [], []>} : vector<8x64xf32>, vector<64x32xf32>, vector<8x32xf32> -> vector<8x32xf32>
    %c27 = arith.constant 27 : index
    %c0_215 = arith.constant 0 : index
    %343 = vector.load %arg7[%c27, %c0_215] : memref<34x64xf32, #tpu.memory_space<vmem>>, vector<1x32xf32>
    %344 = vector.broadcast %343 : vector<1x32xf32> to vector<8x32xf32>
    %345 = arith.addf %342, %344 : vector<8x32xf32>
    %346 = arith.addf %333, %345 : vector<8x32xf32>
    %c32 = arith.constant 32 : index
    %c0_216 = arith.constant 0 : index
    %347 = vector.load %arg7[%c32, %c0_216] : memref<34x64xf32, #tpu.memory_space<vmem>>, vector<1x32xf32>
    %c33 = arith.constant 33 : index
    %c0_217 = arith.constant 0 : index
    %348 = vector.load %arg7[%c33, %c0_217] : memref<34x64xf32, #tpu.memory_space<vmem>>, vector<1x32xf32>
    %cst_218 = arith.constant dense<0.000000e+00> : vector<8xf32>
    %349 = vector.multi_reduction <add>, %346, %cst_218 [1] : vector<8x32xf32> to vector<8xf32>
    %350 = vector.shape_cast %349 : vector<8xf32> to vector<8x1xf32>
    %cst_219 = arith.constant 3.200000e+01 : f32
    %351 = vector.broadcast %cst_219 : f32 to vector<8x1xf32>
    %352 = arith.divf %350, %351 : vector<8x1xf32>
    %353 = vector.broadcast %352 : vector<8x1xf32> to vector<8x32xf32>
    %354 = arith.subf %346, %353 : vector<8x32xf32>
    %355 = arith.mulf %354, %354 : vector<8x32xf32>
    %cst_220 = arith.constant dense<0.000000e+00> : vector<8xf32>
    %356 = vector.multi_reduction <add>, %355, %cst_220 [1] : vector<8x32xf32> to vector<8xf32>
    %357 = vector.shape_cast %356 : vector<8xf32> to vector<8x1xf32>
    %cst_221 = arith.constant 3.200000e+01 : f32
    %358 = vector.broadcast %cst_221 : f32 to vector<8x1xf32>
    %359 = arith.divf %357, %358 : vector<8x1xf32>
    %360 = vector.broadcast %352 : vector<8x1xf32> to vector<8x32xf32>
    %361 = arith.subf %346, %360 : vector<8x32xf32>
    %cst_222 = arith.constant 9.99999974E-6 : f32
    %362 = vector.broadcast %cst_222 : f32 to vector<8x1xf32>
    %363 = arith.addf %359, %362 : vector<8x1xf32>
    %364 = math.rsqrt %363 : vector<8x1xf32>
    %365 = vector.broadcast %364 : vector<8x1xf32> to vector<8x32xf32>
    %366 = arith.mulf %361, %365 : vector<8x32xf32>
    %367 = vector.broadcast %347 : vector<1x32xf32> to vector<8x32xf32>
    %368 = arith.mulf %366, %367 : vector<8x32xf32>
    %369 = vector.broadcast %348 : vector<1x32xf32> to vector<8x32xf32>
    %370 = arith.addf %368, %369 : vector<8x32xf32>
    %cst_223 = arith.constant 0.000000e+00 : f32
    %371 = vector.broadcast %cst_223 : f32 to vector<8x32xf32>
    %c0_224 = arith.constant 0 : index
    %c0_225 = arith.constant 0 : index
    %c0_226 = arith.constant 0 : index
    %372 = vector.load %arg3[%c0_224, %c0_225, %c0_226] : memref<24x32x8xf32, #tpu.memory_space<vmem>>, vector<1x32x8xf32>
    %373 = vector.shape_cast %372 : vector<1x32x8xf32> to vector<32x8xf32>
    %cst_227 = arith.constant dense<0.000000e+00> : vector<8x8xf32>
    %374 = tpu.matmul %370, %373, %cst_227 {dimension_numbers = #tpu.dot_dimension_numbers<[1], [0], [0], [1], [0, 0, 1, 1], [], []>} : vector<8x32xf32>, vector<32x8xf32>, vector<8x8xf32> -> vector<8x8xf32>
    %c0_228 = arith.constant 0 : index
    %c0_229 = arith.constant 0 : index
    %375 = vector.load %arg7[%c0_228, %c0_229] : memref<34x64xf32, #tpu.memory_space<vmem>>, vector<1x8xf32>
    %376 = vector.broadcast %375 : vector<1x8xf32> to vector<8x8xf32>
    %377 = arith.addf %374, %376 : vector<8x8xf32>
    %c4_230 = arith.constant 4 : index
    %c0_231 = arith.constant 0 : index
    %c0_232 = arith.constant 0 : index
    %378 = vector.load %arg3[%c4_230, %c0_231, %c0_232] : memref<24x32x8xf32, #tpu.memory_space<vmem>>, vector<1x32x8xf32>
    %379 = vector.shape_cast %378 : vector<1x32x8xf32> to vector<32x8xf32>
    %cst_233 = arith.constant dense<0.000000e+00> : vector<8x8xf32>
    %380 = tpu.matmul %370, %379, %cst_233 {dimension_numbers = #tpu.dot_dimension_numbers<[1], [0], [0], [1], [0, 0, 1, 1], [], []>} : vector<8x32xf32>, vector<32x8xf32>, vector<8x8xf32> -> vector<8x8xf32>
    %c4_234 = arith.constant 4 : index
    %c0_235 = arith.constant 0 : index
    %381 = vector.load %arg7[%c4_234, %c0_235] : memref<34x64xf32, #tpu.memory_space<vmem>>, vector<1x8xf32>
    %382 = vector.broadcast %381 : vector<1x8xf32> to vector<8x8xf32>
    %383 = arith.addf %380, %382 : vector<8x8xf32>
    %c8_236 = arith.constant 8 : index
    %c0_237 = arith.constant 0 : index
    %c0_238 = arith.constant 0 : index
    %384 = vector.load %arg3[%c8_236, %c0_237, %c0_238] : memref<24x32x8xf32, #tpu.memory_space<vmem>>, vector<1x32x8xf32>
    %385 = vector.shape_cast %384 : vector<1x32x8xf32> to vector<32x8xf32>
    %cst_239 = arith.constant dense<0.000000e+00> : vector<8x8xf32>
    %386 = tpu.matmul %370, %385, %cst_239 {dimension_numbers = #tpu.dot_dimension_numbers<[1], [0], [0], [1], [0, 0, 1, 1], [], []>} : vector<8x32xf32>, vector<32x8xf32>, vector<8x8xf32> -> vector<8x8xf32>
    %c8_240 = arith.constant 8 : index
    %c0_241 = arith.constant 0 : index
    %387 = vector.load %arg7[%c8_240, %c0_241] : memref<34x64xf32, #tpu.memory_space<vmem>>, vector<1x8xf32>
    %388 = vector.broadcast %387 : vector<1x8xf32> to vector<8x8xf32>
    %389 = arith.addf %386, %388 : vector<8x8xf32>
    %cst_242 = arith.constant dense<0.000000e+00> : vector<8x8xf32>
    %390 = tpu.matmul %377, %383, %cst_242 {dimension_numbers = #tpu.dot_dimension_numbers<[1], [1], [0], [0], [0, 0, 1, 0], [], []>} : vector<8x8xf32>, vector<8x8xf32>, vector<8x8xf32> -> vector<8x8xf32>
    %cst_243 = arith.constant dense<0xFF800000> : vector<8xf32>
    %391 = vector.multi_reduction <maximumf>, %390, %cst_243 [1] : vector<8x8xf32> to vector<8xf32>
    %392 = vector.shape_cast %391 : vector<8xf32> to vector<8x1xf32>
    %393 = vector.broadcast %392 : vector<8x1xf32> to vector<8x8xf32>
    %394 = arith.subf %390, %393 : vector<8x8xf32>
    %395 = math.exp %394 : vector<8x8xf32>
    %cst_244 = arith.constant dense<0.000000e+00> : vector<8xf32>
    %396 = vector.multi_reduction <add>, %395, %cst_244 [1] : vector<8x8xf32> to vector<8xf32>
    %397 = vector.shape_cast %396 : vector<8xf32> to vector<8x1xf32>
    %398 = tpu.reciprocal %397 {approx = true} : vector<8x1xf32> -> vector<8x1xf32>
    %399 = vector.broadcast %398 : vector<8x1xf32> to vector<8x8xf32>
    %400 = arith.mulf %395, %399 : vector<8x8xf32>
    %cst_245 = arith.constant dense<0.000000e+00> : vector<8x8xf32>
    %401 = tpu.matmul %400, %389, %cst_245 {dimension_numbers = #tpu.dot_dimension_numbers<[1], [0], [0], [1], [0, 0, 1, 1], [], []>} : vector<8x8xf32>, vector<8x8xf32>, vector<8x8xf32> -> vector<8x8xf32>
    %c0_246 = arith.constant 0 : index
    %c0_247 = arith.constant 0 : index
    %c0_248 = arith.constant 0 : index
    %402 = vector.load %arg4[%c0_246, %c0_247, %c0_248] : memref<8x8x32xf32, #tpu.memory_space<vmem>>, vector<1x8x32xf32>
    %403 = vector.shape_cast %402 : vector<1x8x32xf32> to vector<8x32xf32>
    %cst_249 = arith.constant dense<0.000000e+00> : vector<8x32xf32>
    %404 = tpu.matmul %401, %403, %cst_249 {dimension_numbers = #tpu.dot_dimension_numbers<[1], [0], [0], [1], [0, 0, 1, 1], [], []>} : vector<8x8xf32>, vector<8x32xf32>, vector<8x32xf32> -> vector<8x32xf32>
    %405 = arith.addf %371, %404 : vector<8x32xf32>
    %c1_250 = arith.constant 1 : index
    %c0_251 = arith.constant 0 : index
    %c0_252 = arith.constant 0 : index
    %406 = vector.load %arg3[%c1_250, %c0_251, %c0_252] : memref<24x32x8xf32, #tpu.memory_space<vmem>>, vector<1x32x8xf32>
    %407 = vector.shape_cast %406 : vector<1x32x8xf32> to vector<32x8xf32>
    %cst_253 = arith.constant dense<0.000000e+00> : vector<8x8xf32>
    %408 = tpu.matmul %370, %407, %cst_253 {dimension_numbers = #tpu.dot_dimension_numbers<[1], [0], [0], [1], [0, 0, 1, 1], [], []>} : vector<8x32xf32>, vector<32x8xf32>, vector<8x8xf32> -> vector<8x8xf32>
    %c1_254 = arith.constant 1 : index
    %c0_255 = arith.constant 0 : index
    %409 = vector.load %arg7[%c1_254, %c0_255] : memref<34x64xf32, #tpu.memory_space<vmem>>, vector<1x8xf32>
    %410 = vector.broadcast %409 : vector<1x8xf32> to vector<8x8xf32>
    %411 = arith.addf %408, %410 : vector<8x8xf32>
    %c5_256 = arith.constant 5 : index
    %c0_257 = arith.constant 0 : index
    %c0_258 = arith.constant 0 : index
    %412 = vector.load %arg3[%c5_256, %c0_257, %c0_258] : memref<24x32x8xf32, #tpu.memory_space<vmem>>, vector<1x32x8xf32>
    %413 = vector.shape_cast %412 : vector<1x32x8xf32> to vector<32x8xf32>
    %cst_259 = arith.constant dense<0.000000e+00> : vector<8x8xf32>
    %414 = tpu.matmul %370, %413, %cst_259 {dimension_numbers = #tpu.dot_dimension_numbers<[1], [0], [0], [1], [0, 0, 1, 1], [], []>} : vector<8x32xf32>, vector<32x8xf32>, vector<8x8xf32> -> vector<8x8xf32>
    %c5_260 = arith.constant 5 : index
    %c0_261 = arith.constant 0 : index
    %415 = vector.load %arg7[%c5_260, %c0_261] : memref<34x64xf32, #tpu.memory_space<vmem>>, vector<1x8xf32>
    %416 = vector.broadcast %415 : vector<1x8xf32> to vector<8x8xf32>
    %417 = arith.addf %414, %416 : vector<8x8xf32>
    %c9_262 = arith.constant 9 : index
    %c0_263 = arith.constant 0 : index
    %c0_264 = arith.constant 0 : index
    %418 = vector.load %arg3[%c9_262, %c0_263, %c0_264] : memref<24x32x8xf32, #tpu.memory_space<vmem>>, vector<1x32x8xf32>
    %419 = vector.shape_cast %418 : vector<1x32x8xf32> to vector<32x8xf32>
    %cst_265 = arith.constant dense<0.000000e+00> : vector<8x8xf32>
    %420 = tpu.matmul %370, %419, %cst_265 {dimension_numbers = #tpu.dot_dimension_numbers<[1], [0], [0], [1], [0, 0, 1, 1], [], []>} : vector<8x32xf32>, vector<32x8xf32>, vector<8x8xf32> -> vector<8x8xf32>
    %c9_266 = arith.constant 9 : index
    %c0_267 = arith.constant 0 : index
    %421 = vector.load %arg7[%c9_266, %c0_267] : memref<34x64xf32, #tpu.memory_space<vmem>>, vector<1x8xf32>
    %422 = vector.broadcast %421 : vector<1x8xf32> to vector<8x8xf32>
    %423 = arith.addf %420, %422 : vector<8x8xf32>
    %cst_268 = arith.constant dense<0.000000e+00> : vector<8x8xf32>
    %424 = tpu.matmul %411, %417, %cst_268 {dimension_numbers = #tpu.dot_dimension_numbers<[1], [1], [0], [0], [0, 0, 1, 0], [], []>} : vector<8x8xf32>, vector<8x8xf32>, vector<8x8xf32> -> vector<8x8xf32>
    %cst_269 = arith.constant dense<0xFF800000> : vector<8xf32>
    %425 = vector.multi_reduction <maximumf>, %424, %cst_269 [1] : vector<8x8xf32> to vector<8xf32>
    %426 = vector.shape_cast %425 : vector<8xf32> to vector<8x1xf32>
    %427 = vector.broadcast %426 : vector<8x1xf32> to vector<8x8xf32>
    %428 = arith.subf %424, %427 : vector<8x8xf32>
    %429 = math.exp %428 : vector<8x8xf32>
    %cst_270 = arith.constant dense<0.000000e+00> : vector<8xf32>
    %430 = vector.multi_reduction <add>, %429, %cst_270 [1] : vector<8x8xf32> to vector<8xf32>
    %431 = vector.shape_cast %430 : vector<8xf32> to vector<8x1xf32>
    %432 = tpu.reciprocal %431 {approx = true} : vector<8x1xf32> -> vector<8x1xf32>
    %433 = vector.broadcast %432 : vector<8x1xf32> to vector<8x8xf32>
    %434 = arith.mulf %429, %433 : vector<8x8xf32>
    %cst_271 = arith.constant dense<0.000000e+00> : vector<8x8xf32>
    %435 = tpu.matmul %434, %423, %cst_271 {dimension_numbers = #tpu.dot_dimension_numbers<[1], [0], [0], [1], [0, 0, 1, 1], [], []>} : vector<8x8xf32>, vector<8x8xf32>, vector<8x8xf32> -> vector<8x8xf32>
    %c1_272 = arith.constant 1 : index
    %c0_273 = arith.constant 0 : index
    %c0_274 = arith.constant 0 : index
    %436 = vector.load %arg4[%c1_272, %c0_273, %c0_274] : memref<8x8x32xf32, #tpu.memory_space<vmem>>, vector<1x8x32xf32>
    %437 = vector.shape_cast %436 : vector<1x8x32xf32> to vector<8x32xf32>
    %cst_275 = arith.constant dense<0.000000e+00> : vector<8x32xf32>
    %438 = tpu.matmul %435, %437, %cst_275 {dimension_numbers = #tpu.dot_dimension_numbers<[1], [0], [0], [1], [0, 0, 1, 1], [], []>} : vector<8x8xf32>, vector<8x32xf32>, vector<8x32xf32> -> vector<8x32xf32>
    %439 = arith.addf %405, %438 : vector<8x32xf32>
    %c2_276 = arith.constant 2 : index
    %c0_277 = arith.constant 0 : index
    %c0_278 = arith.constant 0 : index
    %440 = vector.load %arg3[%c2_276, %c0_277, %c0_278] : memref<24x32x8xf32, #tpu.memory_space<vmem>>, vector<1x32x8xf32>
    %441 = vector.shape_cast %440 : vector<1x32x8xf32> to vector<32x8xf32>
    %cst_279 = arith.constant dense<0.000000e+00> : vector<8x8xf32>
    %442 = tpu.matmul %370, %441, %cst_279 {dimension_numbers = #tpu.dot_dimension_numbers<[1], [0], [0], [1], [0, 0, 1, 1], [], []>} : vector<8x32xf32>, vector<32x8xf32>, vector<8x8xf32> -> vector<8x8xf32>
    %c2_280 = arith.constant 2 : index
    %c0_281 = arith.constant 0 : index
    %443 = vector.load %arg7[%c2_280, %c0_281] : memref<34x64xf32, #tpu.memory_space<vmem>>, vector<1x8xf32>
    %444 = vector.broadcast %443 : vector<1x8xf32> to vector<8x8xf32>
    %445 = arith.addf %442, %444 : vector<8x8xf32>
    %c6_282 = arith.constant 6 : index
    %c0_283 = arith.constant 0 : index
    %c0_284 = arith.constant 0 : index
    %446 = vector.load %arg3[%c6_282, %c0_283, %c0_284] : memref<24x32x8xf32, #tpu.memory_space<vmem>>, vector<1x32x8xf32>
    %447 = vector.shape_cast %446 : vector<1x32x8xf32> to vector<32x8xf32>
    %cst_285 = arith.constant dense<0.000000e+00> : vector<8x8xf32>
    %448 = tpu.matmul %370, %447, %cst_285 {dimension_numbers = #tpu.dot_dimension_numbers<[1], [0], [0], [1], [0, 0, 1, 1], [], []>} : vector<8x32xf32>, vector<32x8xf32>, vector<8x8xf32> -> vector<8x8xf32>
    %c6_286 = arith.constant 6 : index
    %c0_287 = arith.constant 0 : index
    %449 = vector.load %arg7[%c6_286, %c0_287] : memref<34x64xf32, #tpu.memory_space<vmem>>, vector<1x8xf32>
    %450 = vector.broadcast %449 : vector<1x8xf32> to vector<8x8xf32>
    %451 = arith.addf %448, %450 : vector<8x8xf32>
    %c10_288 = arith.constant 10 : index
    %c0_289 = arith.constant 0 : index
    %c0_290 = arith.constant 0 : index
    %452 = vector.load %arg3[%c10_288, %c0_289, %c0_290] : memref<24x32x8xf32, #tpu.memory_space<vmem>>, vector<1x32x8xf32>
    %453 = vector.shape_cast %452 : vector<1x32x8xf32> to vector<32x8xf32>
    %cst_291 = arith.constant dense<0.000000e+00> : vector<8x8xf32>
    %454 = tpu.matmul %370, %453, %cst_291 {dimension_numbers = #tpu.dot_dimension_numbers<[1], [0], [0], [1], [0, 0, 1, 1], [], []>} : vector<8x32xf32>, vector<32x8xf32>, vector<8x8xf32> -> vector<8x8xf32>
    %c10_292 = arith.constant 10 : index
    %c0_293 = arith.constant 0 : index
    %455 = vector.load %arg7[%c10_292, %c0_293] : memref<34x64xf32, #tpu.memory_space<vmem>>, vector<1x8xf32>
    %456 = vector.broadcast %455 : vector<1x8xf32> to vector<8x8xf32>
    %457 = arith.addf %454, %456 : vector<8x8xf32>
    %cst_294 = arith.constant dense<0.000000e+00> : vector<8x8xf32>
    %458 = tpu.matmul %445, %451, %cst_294 {dimension_numbers = #tpu.dot_dimension_numbers<[1], [1], [0], [0], [0, 0, 1, 0], [], []>} : vector<8x8xf32>, vector<8x8xf32>, vector<8x8xf32> -> vector<8x8xf32>
    %cst_295 = arith.constant dense<0xFF800000> : vector<8xf32>
    %459 = vector.multi_reduction <maximumf>, %458, %cst_295 [1] : vector<8x8xf32> to vector<8xf32>
    %460 = vector.shape_cast %459 : vector<8xf32> to vector<8x1xf32>
    %461 = vector.broadcast %460 : vector<8x1xf32> to vector<8x8xf32>
    %462 = arith.subf %458, %461 : vector<8x8xf32>
    %463 = math.exp %462 : vector<8x8xf32>
    %cst_296 = arith.constant dense<0.000000e+00> : vector<8xf32>
    %464 = vector.multi_reduction <add>, %463, %cst_296 [1] : vector<8x8xf32> to vector<8xf32>
    %465 = vector.shape_cast %464 : vector<8xf32> to vector<8x1xf32>
    %466 = tpu.reciprocal %465 {approx = true} : vector<8x1xf32> -> vector<8x1xf32>
    %467 = vector.broadcast %466 : vector<8x1xf32> to vector<8x8xf32>
    %468 = arith.mulf %463, %467 : vector<8x8xf32>
    %cst_297 = arith.constant dense<0.000000e+00> : vector<8x8xf32>
    %469 = tpu.matmul %468, %457, %cst_297 {dimension_numbers = #tpu.dot_dimension_numbers<[1], [0], [0], [1], [0, 0, 1, 1], [], []>} : vector<8x8xf32>, vector<8x8xf32>, vector<8x8xf32> -> vector<8x8xf32>
    %c2_298 = arith.constant 2 : index
    %c0_299 = arith.constant 0 : index
    %c0_300 = arith.constant 0 : index
    %470 = vector.load %arg4[%c2_298, %c0_299, %c0_300] : memref<8x8x32xf32, #tpu.memory_space<vmem>>, vector<1x8x32xf32>
    %471 = vector.shape_cast %470 : vector<1x8x32xf32> to vector<8x32xf32>
    %cst_301 = arith.constant dense<0.000000e+00> : vector<8x32xf32>
    %472 = tpu.matmul %469, %471, %cst_301 {dimension_numbers = #tpu.dot_dimension_numbers<[1], [0], [0], [1], [0, 0, 1, 1], [], []>} : vector<8x8xf32>, vector<8x32xf32>, vector<8x32xf32> -> vector<8x32xf32>
    %473 = arith.addf %439, %472 : vector<8x32xf32>
    %c3_302 = arith.constant 3 : index
    %c0_303 = arith.constant 0 : index
    %c0_304 = arith.constant 0 : index
    %474 = vector.load %arg3[%c3_302, %c0_303, %c0_304] : memref<24x32x8xf32, #tpu.memory_space<vmem>>, vector<1x32x8xf32>
    %475 = vector.shape_cast %474 : vector<1x32x8xf32> to vector<32x8xf32>
    %cst_305 = arith.constant dense<0.000000e+00> : vector<8x8xf32>
    %476 = tpu.matmul %370, %475, %cst_305 {dimension_numbers = #tpu.dot_dimension_numbers<[1], [0], [0], [1], [0, 0, 1, 1], [], []>} : vector<8x32xf32>, vector<32x8xf32>, vector<8x8xf32> -> vector<8x8xf32>
    %c3_306 = arith.constant 3 : index
    %c0_307 = arith.constant 0 : index
    %477 = vector.load %arg7[%c3_306, %c0_307] : memref<34x64xf32, #tpu.memory_space<vmem>>, vector<1x8xf32>
    %478 = vector.broadcast %477 : vector<1x8xf32> to vector<8x8xf32>
    %479 = arith.addf %476, %478 : vector<8x8xf32>
    %c7_308 = arith.constant 7 : index
    %c0_309 = arith.constant 0 : index
    %c0_310 = arith.constant 0 : index
    %480 = vector.load %arg3[%c7_308, %c0_309, %c0_310] : memref<24x32x8xf32, #tpu.memory_space<vmem>>, vector<1x32x8xf32>
    %481 = vector.shape_cast %480 : vector<1x32x8xf32> to vector<32x8xf32>
    %cst_311 = arith.constant dense<0.000000e+00> : vector<8x8xf32>
    %482 = tpu.matmul %370, %481, %cst_311 {dimension_numbers = #tpu.dot_dimension_numbers<[1], [0], [0], [1], [0, 0, 1, 1], [], []>} : vector<8x32xf32>, vector<32x8xf32>, vector<8x8xf32> -> vector<8x8xf32>
    %c7_312 = arith.constant 7 : index
    %c0_313 = arith.constant 0 : index
    %483 = vector.load %arg7[%c7_312, %c0_313] : memref<34x64xf32, #tpu.memory_space<vmem>>, vector<1x8xf32>
    %484 = vector.broadcast %483 : vector<1x8xf32> to vector<8x8xf32>
    %485 = arith.addf %482, %484 : vector<8x8xf32>
    %c11_314 = arith.constant 11 : index
    %c0_315 = arith.constant 0 : index
    %c0_316 = arith.constant 0 : index
    %486 = vector.load %arg3[%c11_314, %c0_315, %c0_316] : memref<24x32x8xf32, #tpu.memory_space<vmem>>, vector<1x32x8xf32>
    %487 = vector.shape_cast %486 : vector<1x32x8xf32> to vector<32x8xf32>
    %cst_317 = arith.constant dense<0.000000e+00> : vector<8x8xf32>
    %488 = tpu.matmul %370, %487, %cst_317 {dimension_numbers = #tpu.dot_dimension_numbers<[1], [0], [0], [1], [0, 0, 1, 1], [], []>} : vector<8x32xf32>, vector<32x8xf32>, vector<8x8xf32> -> vector<8x8xf32>
    %c11_318 = arith.constant 11 : index
    %c0_319 = arith.constant 0 : index
    %489 = vector.load %arg7[%c11_318, %c0_319] : memref<34x64xf32, #tpu.memory_space<vmem>>, vector<1x8xf32>
    %490 = vector.broadcast %489 : vector<1x8xf32> to vector<8x8xf32>
    %491 = arith.addf %488, %490 : vector<8x8xf32>
    %cst_320 = arith.constant dense<0.000000e+00> : vector<8x8xf32>
    %492 = tpu.matmul %479, %485, %cst_320 {dimension_numbers = #tpu.dot_dimension_numbers<[1], [1], [0], [0], [0, 0, 1, 0], [], []>} : vector<8x8xf32>, vector<8x8xf32>, vector<8x8xf32> -> vector<8x8xf32>
    %cst_321 = arith.constant dense<0xFF800000> : vector<8xf32>
    %493 = vector.multi_reduction <maximumf>, %492, %cst_321 [1] : vector<8x8xf32> to vector<8xf32>
    %494 = vector.shape_cast %493 : vector<8xf32> to vector<8x1xf32>
    %495 = vector.broadcast %494 : vector<8x1xf32> to vector<8x8xf32>
    %496 = arith.subf %492, %495 : vector<8x8xf32>
    %497 = math.exp %496 : vector<8x8xf32>
    %cst_322 = arith.constant dense<0.000000e+00> : vector<8xf32>
    %498 = vector.multi_reduction <add>, %497, %cst_322 [1] : vector<8x8xf32> to vector<8xf32>
    %499 = vector.shape_cast %498 : vector<8xf32> to vector<8x1xf32>
    %500 = tpu.reciprocal %499 {approx = true} : vector<8x1xf32> -> vector<8x1xf32>
    %501 = vector.broadcast %500 : vector<8x1xf32> to vector<8x8xf32>
    %502 = arith.mulf %497, %501 : vector<8x8xf32>
    %cst_323 = arith.constant dense<0.000000e+00> : vector<8x8xf32>
    %503 = tpu.matmul %502, %491, %cst_323 {dimension_numbers = #tpu.dot_dimension_numbers<[1], [0], [0], [1], [0, 0, 1, 1], [], []>} : vector<8x8xf32>, vector<8x8xf32>, vector<8x8xf32> -> vector<8x8xf32>
    %c3_324 = arith.constant 3 : index
    %c0_325 = arith.constant 0 : index
    %c0_326 = arith.constant 0 : index
    %504 = vector.load %arg4[%c3_324, %c0_325, %c0_326] : memref<8x8x32xf32, #tpu.memory_space<vmem>>, vector<1x8x32xf32>
    %505 = vector.shape_cast %504 : vector<1x8x32xf32> to vector<8x32xf32>
    %cst_327 = arith.constant dense<0.000000e+00> : vector<8x32xf32>
    %506 = tpu.matmul %503, %505, %cst_327 {dimension_numbers = #tpu.dot_dimension_numbers<[1], [0], [0], [1], [0, 0, 1, 1], [], []>} : vector<8x8xf32>, vector<8x32xf32>, vector<8x32xf32> -> vector<8x32xf32>
    %507 = arith.addf %473, %506 : vector<8x32xf32>
    %c24_328 = arith.constant 24 : index
    %c0_329 = arith.constant 0 : index
    %508 = vector.load %arg7[%c24_328, %c0_329] : memref<34x64xf32, #tpu.memory_space<vmem>>, vector<1x32xf32>
    %509 = vector.broadcast %508 : vector<1x32xf32> to vector<8x32xf32>
    %510 = arith.addf %507, %509 : vector<8x32xf32>
    %511 = arith.addf %370, %510 : vector<8x32xf32>
    %c28_330 = arith.constant 28 : index
    %c0_331 = arith.constant 0 : index
    %512 = vector.load %arg7[%c28_330, %c0_331] : memref<34x64xf32, #tpu.memory_space<vmem>>, vector<1x32xf32>
    %c29_332 = arith.constant 29 : index
    %c0_333 = arith.constant 0 : index
    %513 = vector.load %arg7[%c29_332, %c0_333] : memref<34x64xf32, #tpu.memory_space<vmem>>, vector<1x32xf32>
    %cst_334 = arith.constant dense<0.000000e+00> : vector<8xf32>
    %514 = vector.multi_reduction <add>, %511, %cst_334 [1] : vector<8x32xf32> to vector<8xf32>
    %515 = vector.shape_cast %514 : vector<8xf32> to vector<8x1xf32>
    %cst_335 = arith.constant 3.200000e+01 : f32
    %516 = vector.broadcast %cst_335 : f32 to vector<8x1xf32>
    %517 = arith.divf %515, %516 : vector<8x1xf32>
    %518 = vector.broadcast %517 : vector<8x1xf32> to vector<8x32xf32>
    %519 = arith.subf %511, %518 : vector<8x32xf32>
    %520 = arith.mulf %519, %519 : vector<8x32xf32>
    %cst_336 = arith.constant dense<0.000000e+00> : vector<8xf32>
    %521 = vector.multi_reduction <add>, %520, %cst_336 [1] : vector<8x32xf32> to vector<8xf32>
    %522 = vector.shape_cast %521 : vector<8xf32> to vector<8x1xf32>
    %cst_337 = arith.constant 3.200000e+01 : f32
    %523 = vector.broadcast %cst_337 : f32 to vector<8x1xf32>
    %524 = arith.divf %522, %523 : vector<8x1xf32>
    %525 = vector.broadcast %517 : vector<8x1xf32> to vector<8x32xf32>
    %526 = arith.subf %511, %525 : vector<8x32xf32>
    %cst_338 = arith.constant 9.99999974E-6 : f32
    %527 = vector.broadcast %cst_338 : f32 to vector<8x1xf32>
    %528 = arith.addf %524, %527 : vector<8x1xf32>
    %529 = math.rsqrt %528 : vector<8x1xf32>
    %530 = vector.broadcast %529 : vector<8x1xf32> to vector<8x32xf32>
    %531 = arith.mulf %526, %530 : vector<8x32xf32>
    %532 = vector.broadcast %512 : vector<1x32xf32> to vector<8x32xf32>
    %533 = arith.mulf %531, %532 : vector<8x32xf32>
    %534 = vector.broadcast %513 : vector<1x32xf32> to vector<8x32xf32>
    %535 = arith.addf %533, %534 : vector<8x32xf32>
    %cst_339 = arith.constant 0.000000e+00 : f32
    %536 = vector.broadcast %cst_339 : f32 to vector<8x32xf32>
    %c12_340 = arith.constant 12 : index
    %c0_341 = arith.constant 0 : index
    %c0_342 = arith.constant 0 : index
    %537 = vector.load %arg3[%c12_340, %c0_341, %c0_342] : memref<24x32x8xf32, #tpu.memory_space<vmem>>, vector<1x32x8xf32>
    %538 = vector.shape_cast %537 : vector<1x32x8xf32> to vector<32x8xf32>
    %cst_343 = arith.constant dense<0.000000e+00> : vector<8x8xf32>
    %539 = tpu.matmul %535, %538, %cst_343 {dimension_numbers = #tpu.dot_dimension_numbers<[1], [0], [0], [1], [0, 0, 1, 1], [], []>} : vector<8x32xf32>, vector<32x8xf32>, vector<8x8xf32> -> vector<8x8xf32>
    %c12_344 = arith.constant 12 : index
    %c0_345 = arith.constant 0 : index
    %540 = vector.load %arg7[%c12_344, %c0_345] : memref<34x64xf32, #tpu.memory_space<vmem>>, vector<1x8xf32>
    %541 = vector.broadcast %540 : vector<1x8xf32> to vector<8x8xf32>
    %542 = arith.addf %539, %541 : vector<8x8xf32>
    %c16_346 = arith.constant 16 : index
    %c0_347 = arith.constant 0 : index
    %c0_348 = arith.constant 0 : index
    %543 = vector.load %arg3[%c16_346, %c0_347, %c0_348] : memref<24x32x8xf32, #tpu.memory_space<vmem>>, vector<1x32x8xf32>
    %544 = vector.shape_cast %543 : vector<1x32x8xf32> to vector<32x8xf32>
    %cst_349 = arith.constant dense<0.000000e+00> : vector<8x8xf32>
    %545 = tpu.matmul %3, %544, %cst_349 {dimension_numbers = #tpu.dot_dimension_numbers<[1], [0], [0], [1], [0, 0, 1, 1], [], []>} : vector<8x32xf32>, vector<32x8xf32>, vector<8x8xf32> -> vector<8x8xf32>
    %c16_350 = arith.constant 16 : index
    %c0_351 = arith.constant 0 : index
    %546 = vector.load %arg7[%c16_350, %c0_351] : memref<34x64xf32, #tpu.memory_space<vmem>>, vector<1x8xf32>
    %547 = vector.broadcast %546 : vector<1x8xf32> to vector<8x8xf32>
    %548 = arith.addf %545, %547 : vector<8x8xf32>
    %c20_352 = arith.constant 20 : index
    %c0_353 = arith.constant 0 : index
    %c0_354 = arith.constant 0 : index
    %549 = vector.load %arg3[%c20_352, %c0_353, %c0_354] : memref<24x32x8xf32, #tpu.memory_space<vmem>>, vector<1x32x8xf32>
    %550 = vector.shape_cast %549 : vector<1x32x8xf32> to vector<32x8xf32>
    %cst_355 = arith.constant dense<0.000000e+00> : vector<8x8xf32>
    %551 = tpu.matmul %3, %550, %cst_355 {dimension_numbers = #tpu.dot_dimension_numbers<[1], [0], [0], [1], [0, 0, 1, 1], [], []>} : vector<8x32xf32>, vector<32x8xf32>, vector<8x8xf32> -> vector<8x8xf32>
    %c20_356 = arith.constant 20 : index
    %c0_357 = arith.constant 0 : index
    %552 = vector.load %arg7[%c20_356, %c0_357] : memref<34x64xf32, #tpu.memory_space<vmem>>, vector<1x8xf32>
    %553 = vector.broadcast %552 : vector<1x8xf32> to vector<8x8xf32>
    %554 = arith.addf %551, %553 : vector<8x8xf32>
    %cst_358 = arith.constant dense<0.000000e+00> : vector<8x8xf32>
    %555 = tpu.matmul %542, %548, %cst_358 {dimension_numbers = #tpu.dot_dimension_numbers<[1], [1], [0], [0], [0, 0, 1, 0], [], []>} : vector<8x8xf32>, vector<8x8xf32>, vector<8x8xf32> -> vector<8x8xf32>
    %cst_359 = arith.constant dense<0xFF800000> : vector<8xf32>
    %556 = vector.multi_reduction <maximumf>, %555, %cst_359 [1] : vector<8x8xf32> to vector<8xf32>
    %557 = vector.shape_cast %556 : vector<8xf32> to vector<8x1xf32>
    %558 = vector.broadcast %557 : vector<8x1xf32> to vector<8x8xf32>
    %559 = arith.subf %555, %558 : vector<8x8xf32>
    %560 = math.exp %559 : vector<8x8xf32>
    %cst_360 = arith.constant dense<0.000000e+00> : vector<8xf32>
    %561 = vector.multi_reduction <add>, %560, %cst_360 [1] : vector<8x8xf32> to vector<8xf32>
    %562 = vector.shape_cast %561 : vector<8xf32> to vector<8x1xf32>
    %563 = tpu.reciprocal %562 {approx = true} : vector<8x1xf32> -> vector<8x1xf32>
    %564 = vector.broadcast %563 : vector<8x1xf32> to vector<8x8xf32>
    %565 = arith.mulf %560, %564 : vector<8x8xf32>
    %cst_361 = arith.constant dense<0.000000e+00> : vector<8x8xf32>
    %566 = tpu.matmul %565, %554, %cst_361 {dimension_numbers = #tpu.dot_dimension_numbers<[1], [0], [0], [1], [0, 0, 1, 1], [], []>} : vector<8x8xf32>, vector<8x8xf32>, vector<8x8xf32> -> vector<8x8xf32>
    %c4_362 = arith.constant 4 : index
    %c0_363 = arith.constant 0 : index
    %c0_364 = arith.constant 0 : index
    %567 = vector.load %arg4[%c4_362, %c0_363, %c0_364] : memref<8x8x32xf32, #tpu.memory_space<vmem>>, vector<1x8x32xf32>
    %568 = vector.shape_cast %567 : vector<1x8x32xf32> to vector<8x32xf32>
    %cst_365 = arith.constant dense<0.000000e+00> : vector<8x32xf32>
    %569 = tpu.matmul %566, %568, %cst_365 {dimension_numbers = #tpu.dot_dimension_numbers<[1], [0], [0], [1], [0, 0, 1, 1], [], []>} : vector<8x8xf32>, vector<8x32xf32>, vector<8x32xf32> -> vector<8x32xf32>
    %570 = arith.addf %536, %569 : vector<8x32xf32>
    %c13_366 = arith.constant 13 : index
    %c0_367 = arith.constant 0 : index
    %c0_368 = arith.constant 0 : index
    %571 = vector.load %arg3[%c13_366, %c0_367, %c0_368] : memref<24x32x8xf32, #tpu.memory_space<vmem>>, vector<1x32x8xf32>
    %572 = vector.shape_cast %571 : vector<1x32x8xf32> to vector<32x8xf32>
    %cst_369 = arith.constant dense<0.000000e+00> : vector<8x8xf32>
    %573 = tpu.matmul %535, %572, %cst_369 {dimension_numbers = #tpu.dot_dimension_numbers<[1], [0], [0], [1], [0, 0, 1, 1], [], []>} : vector<8x32xf32>, vector<32x8xf32>, vector<8x8xf32> -> vector<8x8xf32>
    %c13_370 = arith.constant 13 : index
    %c0_371 = arith.constant 0 : index
    %574 = vector.load %arg7[%c13_370, %c0_371] : memref<34x64xf32, #tpu.memory_space<vmem>>, vector<1x8xf32>
    %575 = vector.broadcast %574 : vector<1x8xf32> to vector<8x8xf32>
    %576 = arith.addf %573, %575 : vector<8x8xf32>
    %c17_372 = arith.constant 17 : index
    %c0_373 = arith.constant 0 : index
    %c0_374 = arith.constant 0 : index
    %577 = vector.load %arg3[%c17_372, %c0_373, %c0_374] : memref<24x32x8xf32, #tpu.memory_space<vmem>>, vector<1x32x8xf32>
    %578 = vector.shape_cast %577 : vector<1x32x8xf32> to vector<32x8xf32>
    %cst_375 = arith.constant dense<0.000000e+00> : vector<8x8xf32>
    %579 = tpu.matmul %3, %578, %cst_375 {dimension_numbers = #tpu.dot_dimension_numbers<[1], [0], [0], [1], [0, 0, 1, 1], [], []>} : vector<8x32xf32>, vector<32x8xf32>, vector<8x8xf32> -> vector<8x8xf32>
    %c17_376 = arith.constant 17 : index
    %c0_377 = arith.constant 0 : index
    %580 = vector.load %arg7[%c17_376, %c0_377] : memref<34x64xf32, #tpu.memory_space<vmem>>, vector<1x8xf32>
    %581 = vector.broadcast %580 : vector<1x8xf32> to vector<8x8xf32>
    %582 = arith.addf %579, %581 : vector<8x8xf32>
    %c21_378 = arith.constant 21 : index
    %c0_379 = arith.constant 0 : index
    %c0_380 = arith.constant 0 : index
    %583 = vector.load %arg3[%c21_378, %c0_379, %c0_380] : memref<24x32x8xf32, #tpu.memory_space<vmem>>, vector<1x32x8xf32>
    %584 = vector.shape_cast %583 : vector<1x32x8xf32> to vector<32x8xf32>
    %cst_381 = arith.constant dense<0.000000e+00> : vector<8x8xf32>
    %585 = tpu.matmul %3, %584, %cst_381 {dimension_numbers = #tpu.dot_dimension_numbers<[1], [0], [0], [1], [0, 0, 1, 1], [], []>} : vector<8x32xf32>, vector<32x8xf32>, vector<8x8xf32> -> vector<8x8xf32>
    %c21_382 = arith.constant 21 : index
    %c0_383 = arith.constant 0 : index
    %586 = vector.load %arg7[%c21_382, %c0_383] : memref<34x64xf32, #tpu.memory_space<vmem>>, vector<1x8xf32>
    %587 = vector.broadcast %586 : vector<1x8xf32> to vector<8x8xf32>
    %588 = arith.addf %585, %587 : vector<8x8xf32>
    %cst_384 = arith.constant dense<0.000000e+00> : vector<8x8xf32>
    %589 = tpu.matmul %576, %582, %cst_384 {dimension_numbers = #tpu.dot_dimension_numbers<[1], [1], [0], [0], [0, 0, 1, 0], [], []>} : vector<8x8xf32>, vector<8x8xf32>, vector<8x8xf32> -> vector<8x8xf32>
    %cst_385 = arith.constant dense<0xFF800000> : vector<8xf32>
    %590 = vector.multi_reduction <maximumf>, %589, %cst_385 [1] : vector<8x8xf32> to vector<8xf32>
    %591 = vector.shape_cast %590 : vector<8xf32> to vector<8x1xf32>
    %592 = vector.broadcast %591 : vector<8x1xf32> to vector<8x8xf32>
    %593 = arith.subf %589, %592 : vector<8x8xf32>
    %594 = math.exp %593 : vector<8x8xf32>
    %cst_386 = arith.constant dense<0.000000e+00> : vector<8xf32>
    %595 = vector.multi_reduction <add>, %594, %cst_386 [1] : vector<8x8xf32> to vector<8xf32>
    %596 = vector.shape_cast %595 : vector<8xf32> to vector<8x1xf32>
    %597 = tpu.reciprocal %596 {approx = true} : vector<8x1xf32> -> vector<8x1xf32>
    %598 = vector.broadcast %597 : vector<8x1xf32> to vector<8x8xf32>
    %599 = arith.mulf %594, %598 : vector<8x8xf32>
    %cst_387 = arith.constant dense<0.000000e+00> : vector<8x8xf32>
    %600 = tpu.matmul %599, %588, %cst_387 {dimension_numbers = #tpu.dot_dimension_numbers<[1], [0], [0], [1], [0, 0, 1, 1], [], []>} : vector<8x8xf32>, vector<8x8xf32>, vector<8x8xf32> -> vector<8x8xf32>
    %c5_388 = arith.constant 5 : index
    %c0_389 = arith.constant 0 : index
    %c0_390 = arith.constant 0 : index
    %601 = vector.load %arg4[%c5_388, %c0_389, %c0_390] : memref<8x8x32xf32, #tpu.memory_space<vmem>>, vector<1x8x32xf32>
    %602 = vector.shape_cast %601 : vector<1x8x32xf32> to vector<8x32xf32>
    %cst_391 = arith.constant dense<0.000000e+00> : vector<8x32xf32>
    %603 = tpu.matmul %600, %602, %cst_391 {dimension_numbers = #tpu.dot_dimension_numbers<[1], [0], [0], [1], [0, 0, 1, 1], [], []>} : vector<8x8xf32>, vector<8x32xf32>, vector<8x32xf32> -> vector<8x32xf32>
    %604 = arith.addf %570, %603 : vector<8x32xf32>
    %c14_392 = arith.constant 14 : index
    %c0_393 = arith.constant 0 : index
    %c0_394 = arith.constant 0 : index
    %605 = vector.load %arg3[%c14_392, %c0_393, %c0_394] : memref<24x32x8xf32, #tpu.memory_space<vmem>>, vector<1x32x8xf32>
    %606 = vector.shape_cast %605 : vector<1x32x8xf32> to vector<32x8xf32>
    %cst_395 = arith.constant dense<0.000000e+00> : vector<8x8xf32>
    %607 = tpu.matmul %535, %606, %cst_395 {dimension_numbers = #tpu.dot_dimension_numbers<[1], [0], [0], [1], [0, 0, 1, 1], [], []>} : vector<8x32xf32>, vector<32x8xf32>, vector<8x8xf32> -> vector<8x8xf32>
    %c14_396 = arith.constant 14 : index
    %c0_397 = arith.constant 0 : index
    %608 = vector.load %arg7[%c14_396, %c0_397] : memref<34x64xf32, #tpu.memory_space<vmem>>, vector<1x8xf32>
    %609 = vector.broadcast %608 : vector<1x8xf32> to vector<8x8xf32>
    %610 = arith.addf %607, %609 : vector<8x8xf32>
    %c18_398 = arith.constant 18 : index
    %c0_399 = arith.constant 0 : index
    %c0_400 = arith.constant 0 : index
    %611 = vector.load %arg3[%c18_398, %c0_399, %c0_400] : memref<24x32x8xf32, #tpu.memory_space<vmem>>, vector<1x32x8xf32>
    %612 = vector.shape_cast %611 : vector<1x32x8xf32> to vector<32x8xf32>
    %cst_401 = arith.constant dense<0.000000e+00> : vector<8x8xf32>
    %613 = tpu.matmul %3, %612, %cst_401 {dimension_numbers = #tpu.dot_dimension_numbers<[1], [0], [0], [1], [0, 0, 1, 1], [], []>} : vector<8x32xf32>, vector<32x8xf32>, vector<8x8xf32> -> vector<8x8xf32>
    %c18_402 = arith.constant 18 : index
    %c0_403 = arith.constant 0 : index
    %614 = vector.load %arg7[%c18_402, %c0_403] : memref<34x64xf32, #tpu.memory_space<vmem>>, vector<1x8xf32>
    %615 = vector.broadcast %614 : vector<1x8xf32> to vector<8x8xf32>
    %616 = arith.addf %613, %615 : vector<8x8xf32>
    %c22_404 = arith.constant 22 : index
    %c0_405 = arith.constant 0 : index
    %c0_406 = arith.constant 0 : index
    %617 = vector.load %arg3[%c22_404, %c0_405, %c0_406] : memref<24x32x8xf32, #tpu.memory_space<vmem>>, vector<1x32x8xf32>
    %618 = vector.shape_cast %617 : vector<1x32x8xf32> to vector<32x8xf32>
    %cst_407 = arith.constant dense<0.000000e+00> : vector<8x8xf32>
    %619 = tpu.matmul %3, %618, %cst_407 {dimension_numbers = #tpu.dot_dimension_numbers<[1], [0], [0], [1], [0, 0, 1, 1], [], []>} : vector<8x32xf32>, vector<32x8xf32>, vector<8x8xf32> -> vector<8x8xf32>
    %c22_408 = arith.constant 22 : index
    %c0_409 = arith.constant 0 : index
    %620 = vector.load %arg7[%c22_408, %c0_409] : memref<34x64xf32, #tpu.memory_space<vmem>>, vector<1x8xf32>
    %621 = vector.broadcast %620 : vector<1x8xf32> to vector<8x8xf32>
    %622 = arith.addf %619, %621 : vector<8x8xf32>
    %cst_410 = arith.constant dense<0.000000e+00> : vector<8x8xf32>
    %623 = tpu.matmul %610, %616, %cst_410 {dimension_numbers = #tpu.dot_dimension_numbers<[1], [1], [0], [0], [0, 0, 1, 0], [], []>} : vector<8x8xf32>, vector<8x8xf32>, vector<8x8xf32> -> vector<8x8xf32>
    %cst_411 = arith.constant dense<0xFF800000> : vector<8xf32>
    %624 = vector.multi_reduction <maximumf>, %623, %cst_411 [1] : vector<8x8xf32> to vector<8xf32>
    %625 = vector.shape_cast %624 : vector<8xf32> to vector<8x1xf32>
    %626 = vector.broadcast %625 : vector<8x1xf32> to vector<8x8xf32>
    %627 = arith.subf %623, %626 : vector<8x8xf32>
    %628 = math.exp %627 : vector<8x8xf32>
    %cst_412 = arith.constant dense<0.000000e+00> : vector<8xf32>
    %629 = vector.multi_reduction <add>, %628, %cst_412 [1] : vector<8x8xf32> to vector<8xf32>
    %630 = vector.shape_cast %629 : vector<8xf32> to vector<8x1xf32>
    %631 = tpu.reciprocal %630 {approx = true} : vector<8x1xf32> -> vector<8x1xf32>
    %632 = vector.broadcast %631 : vector<8x1xf32> to vector<8x8xf32>
    %633 = arith.mulf %628, %632 : vector<8x8xf32>
    %cst_413 = arith.constant dense<0.000000e+00> : vector<8x8xf32>
    %634 = tpu.matmul %633, %622, %cst_413 {dimension_numbers = #tpu.dot_dimension_numbers<[1], [0], [0], [1], [0, 0, 1, 1], [], []>} : vector<8x8xf32>, vector<8x8xf32>, vector<8x8xf32> -> vector<8x8xf32>
    %c6_414 = arith.constant 6 : index
    %c0_415 = arith.constant 0 : index
    %c0_416 = arith.constant 0 : index
    %635 = vector.load %arg4[%c6_414, %c0_415, %c0_416] : memref<8x8x32xf32, #tpu.memory_space<vmem>>, vector<1x8x32xf32>
    %636 = vector.shape_cast %635 : vector<1x8x32xf32> to vector<8x32xf32>
    %cst_417 = arith.constant dense<0.000000e+00> : vector<8x32xf32>
    %637 = tpu.matmul %634, %636, %cst_417 {dimension_numbers = #tpu.dot_dimension_numbers<[1], [0], [0], [1], [0, 0, 1, 1], [], []>} : vector<8x8xf32>, vector<8x32xf32>, vector<8x32xf32> -> vector<8x32xf32>
    %638 = arith.addf %604, %637 : vector<8x32xf32>
    %c15_418 = arith.constant 15 : index
    %c0_419 = arith.constant 0 : index
    %c0_420 = arith.constant 0 : index
    %639 = vector.load %arg3[%c15_418, %c0_419, %c0_420] : memref<24x32x8xf32, #tpu.memory_space<vmem>>, vector<1x32x8xf32>
    %640 = vector.shape_cast %639 : vector<1x32x8xf32> to vector<32x8xf32>
    %cst_421 = arith.constant dense<0.000000e+00> : vector<8x8xf32>
    %641 = tpu.matmul %535, %640, %cst_421 {dimension_numbers = #tpu.dot_dimension_numbers<[1], [0], [0], [1], [0, 0, 1, 1], [], []>} : vector<8x32xf32>, vector<32x8xf32>, vector<8x8xf32> -> vector<8x8xf32>
    %c15_422 = arith.constant 15 : index
    %c0_423 = arith.constant 0 : index
    %642 = vector.load %arg7[%c15_422, %c0_423] : memref<34x64xf32, #tpu.memory_space<vmem>>, vector<1x8xf32>
    %643 = vector.broadcast %642 : vector<1x8xf32> to vector<8x8xf32>
    %644 = arith.addf %641, %643 : vector<8x8xf32>
    %c19_424 = arith.constant 19 : index
    %c0_425 = arith.constant 0 : index
    %c0_426 = arith.constant 0 : index
    %645 = vector.load %arg3[%c19_424, %c0_425, %c0_426] : memref<24x32x8xf32, #tpu.memory_space<vmem>>, vector<1x32x8xf32>
    %646 = vector.shape_cast %645 : vector<1x32x8xf32> to vector<32x8xf32>
    %cst_427 = arith.constant dense<0.000000e+00> : vector<8x8xf32>
    %647 = tpu.matmul %3, %646, %cst_427 {dimension_numbers = #tpu.dot_dimension_numbers<[1], [0], [0], [1], [0, 0, 1, 1], [], []>} : vector<8x32xf32>, vector<32x8xf32>, vector<8x8xf32> -> vector<8x8xf32>
    %c19_428 = arith.constant 19 : index
    %c0_429 = arith.constant 0 : index
    %648 = vector.load %arg7[%c19_428, %c0_429] : memref<34x64xf32, #tpu.memory_space<vmem>>, vector<1x8xf32>
    %649 = vector.broadcast %648 : vector<1x8xf32> to vector<8x8xf32>
    %650 = arith.addf %647, %649 : vector<8x8xf32>
    %c23_430 = arith.constant 23 : index
    %c0_431 = arith.constant 0 : index
    %c0_432 = arith.constant 0 : index
    %651 = vector.load %arg3[%c23_430, %c0_431, %c0_432] : memref<24x32x8xf32, #tpu.memory_space<vmem>>, vector<1x32x8xf32>
    %652 = vector.shape_cast %651 : vector<1x32x8xf32> to vector<32x8xf32>
    %cst_433 = arith.constant dense<0.000000e+00> : vector<8x8xf32>
    %653 = tpu.matmul %3, %652, %cst_433 {dimension_numbers = #tpu.dot_dimension_numbers<[1], [0], [0], [1], [0, 0, 1, 1], [], []>} : vector<8x32xf32>, vector<32x8xf32>, vector<8x8xf32> -> vector<8x8xf32>
    %c23_434 = arith.constant 23 : index
    %c0_435 = arith.constant 0 : index
    %654 = vector.load %arg7[%c23_434, %c0_435] : memref<34x64xf32, #tpu.memory_space<vmem>>, vector<1x8xf32>
    %655 = vector.broadcast %654 : vector<1x8xf32> to vector<8x8xf32>
    %656 = arith.addf %653, %655 : vector<8x8xf32>
    %cst_436 = arith.constant dense<0.000000e+00> : vector<8x8xf32>
    %657 = tpu.matmul %644, %650, %cst_436 {dimension_numbers = #tpu.dot_dimension_numbers<[1], [1], [0], [0], [0, 0, 1, 0], [], []>} : vector<8x8xf32>, vector<8x8xf32>, vector<8x8xf32> -> vector<8x8xf32>
    %cst_437 = arith.constant dense<0xFF800000> : vector<8xf32>
    %658 = vector.multi_reduction <maximumf>, %657, %cst_437 [1] : vector<8x8xf32> to vector<8xf32>
    %659 = vector.shape_cast %658 : vector<8xf32> to vector<8x1xf32>
    %660 = vector.broadcast %659 : vector<8x1xf32> to vector<8x8xf32>
    %661 = arith.subf %657, %660 : vector<8x8xf32>
    %662 = math.exp %661 : vector<8x8xf32>
    %cst_438 = arith.constant dense<0.000000e+00> : vector<8xf32>
    %663 = vector.multi_reduction <add>, %662, %cst_438 [1] : vector<8x8xf32> to vector<8xf32>
    %664 = vector.shape_cast %663 : vector<8xf32> to vector<8x1xf32>
    %665 = tpu.reciprocal %664 {approx = true} : vector<8x1xf32> -> vector<8x1xf32>
    %666 = vector.broadcast %665 : vector<8x1xf32> to vector<8x8xf32>
    %667 = arith.mulf %662, %666 : vector<8x8xf32>
    %cst_439 = arith.constant dense<0.000000e+00> : vector<8x8xf32>
    %668 = tpu.matmul %667, %656, %cst_439 {dimension_numbers = #tpu.dot_dimension_numbers<[1], [0], [0], [1], [0, 0, 1, 1], [], []>} : vector<8x8xf32>, vector<8x8xf32>, vector<8x8xf32> -> vector<8x8xf32>
    %c7_440 = arith.constant 7 : index
    %c0_441 = arith.constant 0 : index
    %c0_442 = arith.constant 0 : index
    %669 = vector.load %arg4[%c7_440, %c0_441, %c0_442] : memref<8x8x32xf32, #tpu.memory_space<vmem>>, vector<1x8x32xf32>
    %670 = vector.shape_cast %669 : vector<1x8x32xf32> to vector<8x32xf32>
    %cst_443 = arith.constant dense<0.000000e+00> : vector<8x32xf32>
    %671 = tpu.matmul %668, %670, %cst_443 {dimension_numbers = #tpu.dot_dimension_numbers<[1], [0], [0], [1], [0, 0, 1, 1], [], []>} : vector<8x8xf32>, vector<8x32xf32>, vector<8x32xf32> -> vector<8x32xf32>
    %672 = arith.addf %638, %671 : vector<8x32xf32>
    %c25_444 = arith.constant 25 : index
    %c0_445 = arith.constant 0 : index
    %673 = vector.load %arg7[%c25_444, %c0_445] : memref<34x64xf32, #tpu.memory_space<vmem>>, vector<1x32xf32>
    %674 = vector.broadcast %673 : vector<1x32xf32> to vector<8x32xf32>
    %675 = arith.addf %672, %674 : vector<8x32xf32>
    %676 = arith.addf %535, %675 : vector<8x32xf32>
    %c30_446 = arith.constant 30 : index
    %c0_447 = arith.constant 0 : index
    %677 = vector.load %arg7[%c30_446, %c0_447] : memref<34x64xf32, #tpu.memory_space<vmem>>, vector<1x32xf32>
    %c31_448 = arith.constant 31 : index
    %c0_449 = arith.constant 0 : index
    %678 = vector.load %arg7[%c31_448, %c0_449] : memref<34x64xf32, #tpu.memory_space<vmem>>, vector<1x32xf32>
    %cst_450 = arith.constant dense<0.000000e+00> : vector<8xf32>
    %679 = vector.multi_reduction <add>, %676, %cst_450 [1] : vector<8x32xf32> to vector<8xf32>
    %680 = vector.shape_cast %679 : vector<8xf32> to vector<8x1xf32>
    %cst_451 = arith.constant 3.200000e+01 : f32
    %681 = vector.broadcast %cst_451 : f32 to vector<8x1xf32>
    %682 = arith.divf %680, %681 : vector<8x1xf32>
    %683 = vector.broadcast %682 : vector<8x1xf32> to vector<8x32xf32>
    %684 = arith.subf %676, %683 : vector<8x32xf32>
    %685 = arith.mulf %684, %684 : vector<8x32xf32>
    %cst_452 = arith.constant dense<0.000000e+00> : vector<8xf32>
    %686 = vector.multi_reduction <add>, %685, %cst_452 [1] : vector<8x32xf32> to vector<8xf32>
    %687 = vector.shape_cast %686 : vector<8xf32> to vector<8x1xf32>
    %cst_453 = arith.constant 3.200000e+01 : f32
    %688 = vector.broadcast %cst_453 : f32 to vector<8x1xf32>
    %689 = arith.divf %687, %688 : vector<8x1xf32>
    %690 = vector.broadcast %682 : vector<8x1xf32> to vector<8x32xf32>
    %691 = arith.subf %676, %690 : vector<8x32xf32>
    %cst_454 = arith.constant 9.99999974E-6 : f32
    %692 = vector.broadcast %cst_454 : f32 to vector<8x1xf32>
    %693 = arith.addf %689, %692 : vector<8x1xf32>
    %694 = math.rsqrt %693 : vector<8x1xf32>
    %695 = vector.broadcast %694 : vector<8x1xf32> to vector<8x32xf32>
    %696 = arith.mulf %691, %695 : vector<8x32xf32>
    %697 = vector.broadcast %677 : vector<1x32xf32> to vector<8x32xf32>
    %698 = arith.mulf %696, %697 : vector<8x32xf32>
    %699 = vector.broadcast %678 : vector<1x32xf32> to vector<8x32xf32>
    %700 = arith.addf %698, %699 : vector<8x32xf32>
    %c0_455 = arith.constant 0 : index
    %c0_456 = arith.constant 0 : index
    %701 = vector.load %arg5[%c0_455, %c0_456] : memref<32x64xf32, #tpu.memory_space<vmem>>, vector<32x64xf32>
    %cst_457 = arith.constant dense<0.000000e+00> : vector<8x64xf32>
    %702 = tpu.matmul %700, %701, %cst_457 {dimension_numbers = #tpu.dot_dimension_numbers<[1], [0], [0], [1], [0, 0, 1, 1], [], []>} : vector<8x32xf32>, vector<32x64xf32>, vector<8x64xf32> -> vector<8x64xf32>
    %c26_458 = arith.constant 26 : index
    %c0_459 = arith.constant 0 : index
    %703 = vector.load %arg7[%c26_458, %c0_459] : memref<34x64xf32, #tpu.memory_space<vmem>>, vector<1x64xf32>
    %704 = vector.broadcast %703 : vector<1x64xf32> to vector<8x64xf32>
    %705 = arith.addf %702, %704 : vector<8x64xf32>
    %cst_460 = arith.constant 0.000000e+00 : f32
    %706 = vector.broadcast %cst_460 : f32 to vector<8x64xf32>
    %707 = arith.maximumf %705, %706 : vector<8x64xf32>
    %c0_461 = arith.constant 0 : index
    %c0_462 = arith.constant 0 : index
    %708 = vector.load %arg6[%c0_461, %c0_462] : memref<64x32xf32, #tpu.memory_space<vmem>>, vector<64x32xf32>
    %cst_463 = arith.constant dense<0.000000e+00> : vector<8x32xf32>
    %709 = tpu.matmul %707, %708, %cst_463 {dimension_numbers = #tpu.dot_dimension_numbers<[1], [0], [0], [1], [0, 0, 1, 1], [], []>} : vector<8x64xf32>, vector<64x32xf32>, vector<8x32xf32> -> vector<8x32xf32>
    %c27_464 = arith.constant 27 : index
    %c0_465 = arith.constant 0 : index
    %710 = vector.load %arg7[%c27_464, %c0_465] : memref<34x64xf32, #tpu.memory_space<vmem>>, vector<1x32xf32>
    %711 = vector.broadcast %710 : vector<1x32xf32> to vector<8x32xf32>
    %712 = arith.addf %709, %711 : vector<8x32xf32>
    %713 = arith.addf %700, %712 : vector<8x32xf32>
    %c32_466 = arith.constant 32 : index
    %c0_467 = arith.constant 0 : index
    %714 = vector.load %arg7[%c32_466, %c0_467] : memref<34x64xf32, #tpu.memory_space<vmem>>, vector<1x32xf32>
    %c33_468 = arith.constant 33 : index
    %c0_469 = arith.constant 0 : index
    %715 = vector.load %arg7[%c33_468, %c0_469] : memref<34x64xf32, #tpu.memory_space<vmem>>, vector<1x32xf32>
    %cst_470 = arith.constant dense<0.000000e+00> : vector<8xf32>
    %716 = vector.multi_reduction <add>, %713, %cst_470 [1] : vector<8x32xf32> to vector<8xf32>
    %717 = vector.shape_cast %716 : vector<8xf32> to vector<8x1xf32>
    %cst_471 = arith.constant 3.200000e+01 : f32
    %718 = vector.broadcast %cst_471 : f32 to vector<8x1xf32>
    %719 = arith.divf %717, %718 : vector<8x1xf32>
    %720 = vector.broadcast %719 : vector<8x1xf32> to vector<8x32xf32>
    %721 = arith.subf %713, %720 : vector<8x32xf32>
    %722 = arith.mulf %721, %721 : vector<8x32xf32>
    %cst_472 = arith.constant dense<0.000000e+00> : vector<8xf32>
    %723 = vector.multi_reduction <add>, %722, %cst_472 [1] : vector<8x32xf32> to vector<8xf32>
    %724 = vector.shape_cast %723 : vector<8xf32> to vector<8x1xf32>
    %cst_473 = arith.constant 3.200000e+01 : f32
    %725 = vector.broadcast %cst_473 : f32 to vector<8x1xf32>
    %726 = arith.divf %724, %725 : vector<8x1xf32>
    %727 = vector.broadcast %719 : vector<8x1xf32> to vector<8x32xf32>
    %728 = arith.subf %713, %727 : vector<8x32xf32>
    %cst_474 = arith.constant 9.99999974E-6 : f32
    %729 = vector.broadcast %cst_474 : f32 to vector<8x1xf32>
    %730 = arith.addf %726, %729 : vector<8x1xf32>
    %731 = math.rsqrt %730 : vector<8x1xf32>
    %732 = vector.broadcast %731 : vector<8x1xf32> to vector<8x32xf32>
    %733 = arith.mulf %728, %732 : vector<8x32xf32>
    %734 = vector.broadcast %714 : vector<1x32xf32> to vector<8x32xf32>
    %735 = arith.mulf %733, %734 : vector<8x32xf32>
    %736 = vector.broadcast %715 : vector<1x32xf32> to vector<8x32xf32>
    %737 = arith.addf %735, %736 : vector<8x32xf32>
    %c0_475 = arith.constant 0 : index
    %c0_476 = arith.constant 0 : index
    %c0_477 = arith.constant 0 : index
    %738 = vector.load %arg8[%c0_475, %c0_476, %c0_477] : memref<1x8x32xf32, #tpu.memory_space<vmem>>, vector<1x8x32xf32>
    %739 = vector.shape_cast %738 : vector<1x8x32xf32> to vector<8x32xf32>
    %740 = vector.shape_cast %737 : vector<8x32xf32> to vector<1x8x32xf32>
    tpu.vector_store %arg8[%c0_475, %c0_476, %c0_477], %740 {strides = array<i32>} : memref<1x8x32xf32, #tpu.memory_space<vmem>>, vector<1x8x32xf32>,
    return
  }
  func.func @transform_0(%arg0: i32) -> (i32, i32, i32) {
    %c0_i32 = arith.constant 0 : i32
    %c0_i32_0 = arith.constant 0 : i32
    %c0_i32_1 = arith.constant 0 : i32
    return %arg0, %c0_i32, %c0_i32_0 : i32, i32, i32
  }
  func.func @transform_1(%arg0: i32) -> (i32, i32, i32) {
    %c0_i32 = arith.constant 0 : i32
    %c0_i32_0 = arith.constant 0 : i32
    %c0_i32_1 = arith.constant 0 : i32
    return %arg0, %c0_i32, %c0_i32_0 : i32, i32, i32
  }
  func.func @transform_2(%arg0: i32) -> (i32, i32, i32) {
    %c0_i32 = arith.constant 0 : i32
    %c0_i32_0 = arith.constant 0 : i32
    %c0_i32_1 = arith.constant 0 : i32
    %c0_i32_2 = arith.constant 0 : i32
    return %c0_i32, %c0_i32_0, %c0_i32_1 : i32, i32, i32
  }
  func.func @transform_3(%arg0: i32) -> (i32, i32, i32) {
    %c0_i32 = arith.constant 0 : i32
    %c0_i32_0 = arith.constant 0 : i32
    %c0_i32_1 = arith.constant 0 : i32
    %c0_i32_2 = arith.constant 0 : i32
    return %c0_i32, %c0_i32_0, %c0_i32_1 : i32, i32, i32
  }
  func.func @transform_4(%arg0: i32) -> (i32, i32) {
    %c0_i32 = arith.constant 0 : i32
    %c0_i32_0 = arith.constant 0 : i32
    %c0_i32_1 = arith.constant 0 : i32
    return %c0_i32, %c0_i32_0 : i32, i32
  }
  func.func @transform_5(%arg0: i32) -> (i32, i32) {
    %c0_i32 = arith.constant 0 : i32
    %c0_i32_0 = arith.constant 0 : i32
    %c0_i32_1 = arith.constant 0 : i32
    return %c0_i32, %c0_i32_0 : i32, i32
  }
  func.func @transform_6(%arg0: i32) -> (i32, i32) {
    %c0_i32 = arith.constant 0 : i32
    %c0_i32_0 = arith.constant 0 : i32
    %c0_i32_1 = arith.constant 0 : i32
    return %c0_i32, %c0_i32_0 : i32, i32
  }
  func.func @transform_7(%arg0: i32) -> (i32, i32, i32) {
    %c0_i32 = arith.constant 0 : i32
    %c0_i32_0 = arith.constant 0 : i32
    %c0_i32_1 = arith.constant 0 : i32
    return %arg0, %c0_i32, %c0_i32_0 : i32, i32, i32
  }
}

</mosaic_0001>

<llo_original>
// kernel: tpu_custom_call.1
$region0: #{tpu_custom_call.1}
  #allocation0 [shape = 'u32[]', space=smem, size = 0x4, offset = 0x4, fixed_abs, tag = 'smem constant byte address 0x4 - core index']
  #allocation1 [shape = 'u32[144,128]{1,0:T(1,128)}', space=vmem, size = 0x12000, scoped, tag = 'internal scratch']
  %s0 = inlined_call_operand.vmem [shape: f32[2,8,32], index: 0, kind: input, shape index: {}]
  %s1 = inlined_call_operand.vmem [shape: f32[2,8,32], index: 1, kind: input, shape index: {}]
  %s2 = inlined_call_operand.vmem [shape: f32[24,32,8], index: 2, kind: input, shape index: {}]
  %s3 = inlined_call_operand.vmem [shape: f32[8,8,32], index: 3, kind: input, shape index: {}]
  %s4 = inlined_call_operand.vmem [shape: f32[32,64], index: 4, kind: input, shape index: {}]
  %s5 = inlined_call_operand.vmem [shape: f32[64,32], index: 5, kind: input, shape index: {}]
  %s6 = inlined_call_operand.vmem [shape: f32[34,64], index: 6, kind: input, shape index: {}]
  %s7 = inlined_call_operand.hbm [shape: f32[2,8,32], index: 7, kind: output, shape index: {}]
  %s8 = sld [smem:[#allocation0]]
  $region61: #{tpu_custom_call.1} parent=0
    _
  %s10 = ssub.s32 1, %s8
  %s11 = scalar_select 0, %s10, %s8
  $region1: #{tpu_custom_call.1} parent=0
    #allocation2 [shape = 'u8[8192]{0}', space=vmem, size = 0x2000, scoped, tag = 'output window, operand 0']
    #allocation3 [shape = 's32[2]{0}', space=sflag, size = 0x8, scoped, tag = 'scoped memory for tpu_custom_call.1']
    %12 = vsyncpa [#allocation3], 0
    %s13 = scalar_lea.sflag [#allocation3], 1
    %14 = vsyncpa %s13, 0
    loop: start=0, step=1, limit=4
    $region2: #{tpu_custom_call.1} parent=1 // loop_pre_header
      _
    $region3: #{tpu_custom_call.1} parent=1 // loop_header
      %s16 = sphi 0, %s20
      %p17 = scmp.ge.s32.totalorder %s16, 4
      %s26 = sphi 0, %s28
      %s29 = sphi 0, %s26
      %s30 = sphi 0, %s29
      %s46 = sphi 0, %s30
      %s52 = sphi 0, %s54
      %s55 = sphi 0, %s52
      %s56 = sphi 0, %s55
      %s72 = sphi 0, %s56
      %s76 = sphi 0, %s76
      %s78 = sphi 0, %s76
      %s79 = sphi 0, %s78
      %s93 = sphi 0, %s79
      %s97 = sphi 0, %s97
      %s99 = sphi 0, %s97
      %s100 = sphi 0, %s99
      %s114 = sphi 0, %s100
      %s118 = sphi 0, %s118
      %s120 = sphi 0, %s118
      %s121 = sphi 0, %s120
      %s135 = sphi 0, %s121
      %s139 = sphi 0, %s139
      %s141 = sphi 0, %s139
      %s142 = sphi 0, %s141
      %s156 = sphi 0, %s142
      %s160 = sphi 0, %s160
      %s162 = sphi 0, %s160
      %s163 = sphi 0, %s162
      %s177 = sphi 0, %s163
      %s183 = sphi 0, %s185
      %s186 = sphi 0, %s183
      %s187 = sphi 0, %s186
      %s203 = sphi 0, %s187
    $region4: #{tpu_custom_call.1} parent=1 // loop_header_branch
      %19 = sbr.rel (%p17) target = $region8
    $region5: #{tpu_custom_call.1} parent=1 // loop_body
      %s21 = ssub.s32 %s16, 1
      %s22 = ssub.s32 %s16, 2
      %s23 = sadd.s32 %s16, 1
      %s24 = ssub.s32 %s16, %s23
      %p25 = scmp.eq.s32.totalorder %s24, 0
      %s27 = sadd.s32 %s26, 1
      %s28 = scalar_select %p25, %s26, %s27
      %p31 = pneg %p25
      %p32 = scmp.eq.s32.totalorder %s16, 1
      %p33 = por %p31, %p32
      %p34 = scmp.ne.s32.totalorder %s26, %s29
      %p35 = scmp.eq.s32.totalorder %s16, 0
      %p36 = por %p34, %p35
      %p37 = scmp.ne.s32.totalorder %s26, %s29
      %p38 = scmp.eq.s32.totalorder %s21, 1
      %p39 = por %p37, %p38
      %p40 = scmp.ne.s32.totalorder %s29, %s30
      %p41 = scmp.eq.s32.totalorder %s21, 0
      %p42 = por %p40, %p41
      %p43 = scmp.ne.s32.totalorder %s29, %s30
      %p44 = scmp.eq.s32.totalorder %s22, 1
      %p45 = por %p43, %p44
      %p47 = scmp.ne.s32.totalorder %s30, %s46
      %p48 = scmp.eq.s32.totalorder %s22, 0
      %p49 = por %p47, %p48
      %s50 = ssub.s32 %s16, %s23
      %p51 = scmp.eq.s32.totalorder %s50, 0
      %s53 = sadd.s32 %s52, 1
      %s54 = scalar_select %p51, %s52, %s53
      %p57 = pneg %p51
      %p58 = scmp.eq.s32.totalorder %s16, 1
      %p59 = por %p57, %p58
      %p60 = scmp.ne.s32.totalorder %s52, %s55
      %p61 = scmp.eq.s32.totalorder %s16, 0
      %p62 = por %p60, %p61
      %p63 = scmp.ne.s32.totalorder %s52, %s55
      %p64 = scmp.eq.s32.totalorder %s21, 1
      %p65 = por %p63, %p64
      %p66 = scmp.ne.s32.totalorder %s55, %s56
      %p67 = scmp.eq.s32.totalorder %s21, 0
      %p68 = por %p66, %p67
      %p69 = scmp.ne.s32.totalorder %s55, %s56
      %p70 = scmp.eq.s32.totalorder %s22, 1
      %p71 = por %p69, %p70
      %p73 = scmp.ne.s32.totalorder %s56, %s72
      %p74 = scmp.eq.s32.totalorder %s22, 0
      %p75 = por %p73, %p74
      %s77 = sadd.s32 %s76, 1
      %p80 = scmp.eq.s32.totalorder %s16, 1
      %p81 = scmp.ne.s32.totalorder %s76, %s78
      %p82 = scmp.eq.s32.totalorder %s16, 0
      %p83 = por %p81, %p82
      %p84 = scmp.ne.s32.totalorder %s76, %s78
      %p85 = scmp.eq.s32.totalorder %s21, 1
      %p86 = por %p84, %p85
      %p87 = scmp.ne.s32.totalorder %s78, %s79
      %p88 = scmp.eq.s32.totalorder %s21, 0
      %p89 = por %p87, %p88
      %p90 = scmp.ne.s32.totalorder %s78, %s79
      %p91 = scmp.eq.s32.totalorder %s22, 1
      %p92 = por %p90, %p91
      %p94 = scmp.ne.s32.totalorder %s79, %s93
      %p95 = scmp.eq.s32.totalorder %s22, 0
      %p96 = por %p94, %p95
      %s98 = sadd.s32 %s97, 1
      %p101 = scmp.eq.s32.totalorder %s16, 1
      %p102 = scmp.ne.s32.totalorder %s97, %s99
      %p103 = scmp.eq.s32.totalorder %s16, 0
      %p104 = por %p102, %p103
      %p105 = scmp.ne.s32.totalorder %s97, %s99
      %p106 = scmp.eq.s32.totalorder %s21, 1
      %p107 = por %p105, %p106
      %p108 = scmp.ne.s32.totalorder %s99, %s100
      %p109 = scmp.eq.s32.totalorder %s21, 0
      %p110 = por %p108, %p109
      %p111 = scmp.ne.s32.totalorder %s99, %s100
      %p112 = scmp.eq.s32.totalorder %s22, 1
      %p113 = por %p111, %p112
      %p115 = scmp.ne.s32.totalorder %s100, %s114
      %p116 = scmp.eq.s32.totalorder %s22, 0
      %p117 = por %p115, %p116
      %s119 = sadd.s32 %s118, 1
      %p122 = scmp.eq.s32.totalorder %s16, 1
      %p123 = scmp.ne.s32.totalorder %s118, %s120
      %p124 = scmp.eq.s32.totalorder %s16, 0
      %p125 = por %p123, %p124
      %p126 = scmp.ne.s32.totalorder %s118, %s120
      %p127 = scmp.eq.s32.totalorder %s21, 1
      %p128 = por %p126, %p127
      %p129 = scmp.ne.s32.totalorder %s120, %s121
      %p130 = scmp.eq.s32.totalorder %s21, 0
      %p131 = por %p129, %p130
      %p132 = scmp.ne.s32.totalorder %s120, %s121
      %p133 = scmp.eq.s32.totalorder %s22, 1
      %p134 = por %p132, %p133
      %p136 = scmp.ne.s32.totalorder %s121, %s135
      %p137 = scmp.eq.s32.totalorder %s22, 0
      %p138 = por %p136, %p137
      %s140 = sadd.s32 %s139, 1
      %p143 = scmp.eq.s32.totalorder %s16, 1
      %p144 = scmp.ne.s32.totalorder %s139, %s141
      %p145 = scmp.eq.s32.totalorder %s16, 0
      %p146 = por %p144, %p145
      %p147 = scmp.ne.s32.totalorder %s139, %s141
      %p148 = scmp.eq.s32.totalorder %s21, 1
      %p149 = por %p147, %p148
      %p150 = scmp.ne.s32.totalorder %s141, %s142
      %p151 = scmp.eq.s32.totalorder %s21, 0
      %p152 = por %p150, %p151
      %p153 = scmp.ne.s32.totalorder %s141, %s142
      %p154 = scmp.eq.s32.totalorder %s22, 1
      %p155 = por %p153, %p154
      %p157 = scmp.ne.s32.totalorder %s142, %s156
      %p158 = scmp.eq.s32.totalorder %s22, 0
      %p159 = por %p157, %p158
      %s161 = sadd.s32 %s160, 1
      %p164 = scmp.eq.s32.totalorder %s16, 1
      %p165 = scmp.ne.s32.totalorder %s160, %s162
      %p166 = scmp.eq.s32.totalorder %s16, 0
      %p167 = por %p165, %p166
      %p168 = scmp.ne.s32.totalorder %s160, %s162
      %p169 = scmp.eq.s32.totalorder %s21, 1
      %p170 = por %p168, %p169
      %p171 = scmp.ne.s32.totalorder %s162, %s163
      %p172 = scmp.eq.s32.totalorder %s21, 0
      %p173 = por %p171, %p172
      %p174 = scmp.ne.s32.totalorder %s162, %s163
      %p175 = scmp.eq.s32.totalorder %s22, 1
      %p176 = por %p174, %p175
      %p178 = scmp.ne.s32.totalorder %s163, %s177
      %p179 = scmp.eq.s32.totalorder %s22, 0
      %p180 = por %p178, %p179
      %s181 = ssub.s32 %s16, %s23
      %p182 = scmp.eq.s32.totalorder %s181, 0
      %s184 = sadd.s32 %s183, 1
      %s185 = scalar_select %p182, %s183, %s184
      %p188 = pneg %p182
      %p189 = scmp.eq.s32.totalorder %s16, 1
      %p190 = por %p188, %p189
      %p191 = scmp.ne.s32.totalorder %s183, %s186
      %p192 = scmp.eq.s32.totalorder %s16, 0
      %p193 = por %p191, %p192
      %p194 = scmp.ne.s32.totalorder %s183, %s186
      %p195 = scmp.eq.s32.totalorder %s21, 1
      %p196 = por %p194, %p195
      %p197 = scmp.ne.s32.totalorder %s186, %s187
      %p198 = scmp.eq.s32.totalorder %s21, 0
      %p199 = por %p197, %p198
      %p200 = scmp.ne.s32.totalorder %s186, %s187
      %p201 = scmp.eq.s32.totalorder %s22, 1
      %p202 = por %p200, %p201
      %p204 = scmp.ne.s32.totalorder %s187, %s203
      %p205 = scmp.eq.s32.totalorder %s22, 0
      %p206 = por %p204, %p205
      %p207 = scmp.le.s32.totalorder 1, %s16
      %p208 = scmp.lt.s32.totalorder %s16, 3
      %p209 = pnand %p207, %p208
      %p210 = pneg %p209
      // Predicated region
      $region9: #{tpu_custom_call.1} parent=5 // pred_check
        _
      $region10: #{tpu_custom_call.1} parent=5 // pred_check_branch
        %212 = sbr.rel (%p209) target = $region12
      $region11: #{tpu_custom_call.1} parent=5 // pred_region
        %s213 = ssub.s32 %s16, 1
        // Predicated region
        $region13: #{tpu_custom_call.1} parent=11 // pred_check
          %p214 = pneg %p89
        $region14: #{tpu_custom_call.1} parent=11 // pred_check_branch
          %216 = sbr.rel (%p214) target = $region16
        $region15: #{tpu_custom_call.1} parent=11 // pred_region
          _
        $region16: #{tpu_custom_call.1} parent=11 // pred_fallthru
          _
        // Predicated region
        $region17: #{tpu_custom_call.1} parent=11 // pred_check
          %p217 = pneg %p110
        $region18: #{tpu_custom_call.1} parent=11 // pred_check_branch
          %219 = sbr.rel (%p217) target = $region20
        $region19: #{tpu_custom_call.1} parent=11 // pred_region
          _
        $region20: #{tpu_custom_call.1} parent=11 // pred_fallthru
          _
        // Predicated region
        $region21: #{tpu_custom_call.1} parent=11 // pred_check
          %p220 = pneg %p131
        $region22: #{tpu_custom_call.1} parent=11 // pred_check_branch
          %222 = sbr.rel (%p220) target = $region24
        $region23: #{tpu_custom_call.1} parent=11 // pred_region
          _
        $region24: #{tpu_custom_call.1} parent=11 // pred_fallthru
          _
        // Predicated region
        $region25: #{tpu_custom_call.1} parent=11 // pred_check
          %p223 = pneg %p152
        $region26: #{tpu_custom_call.1} parent=11 // pred_check_branch
          %225 = sbr.rel (%p223) target = $region28
        $region27: #{tpu_custom_call.1} parent=11 // pred_region
          _
        $region28: #{tpu_custom_call.1} parent=11 // pred_fallthru
          _
        // Predicated region
        $region29: #{tpu_custom_call.1} parent=11 // pred_check
          %p226 = pneg %p173
        $region30: #{tpu_custom_call.1} parent=11 // pred_check_branch
          %228 = sbr.rel (%p226) target = $region32
        $region31: #{tpu_custom_call.1} parent=11 // pred_region
          _
        $region32: #{tpu_custom_call.1} parent=11 // pred_fallthru
          _
      $region12: #{tpu_custom_call.1} parent=5 // pred_fallthru
        _
      %p229 = scmp.lt.s32.totalorder %s16, 2
      // Predicated region
      $region33: #{tpu_custom_call.1} parent=5 // pred_check
        %p230 = pneg %p229
      $region34: #{tpu_custom_call.1} parent=5 // pred_check_branch
        %232 = sbr.rel (%p230) target = $region36
      $region35: #{tpu_custom_call.1} parent=5 // pred_region
        // Predicated region
        $region37: #{tpu_custom_call.1} parent=35 // pred_check
          %p233 = pneg %p36
        $region38: #{tpu_custom_call.1} parent=35 // pred_check_branch
          %235 = sbr.rel (%p233) target = $region40
        $region39: #{tpu_custom_call.1} parent=35 // pred_region
          %p236 = scmp.lt.s32.totalorder %s16, 1
          %s237 = scalar_select %p236, %s16, 1
          %s238 = smul.addr %s237, 8
          %s239 = scalar_lea.vmem %s0, %s238
        $region40: #{tpu_custom_call.1} parent=35 // pred_fallthru
          _
        // Predicated region
        $region41: #{tpu_custom_call.1} parent=35 // pred_check
          %p240 = pneg %p62
        $region42: #{tpu_custom_call.1} parent=35 // pred_check_branch
          %242 = sbr.rel (%p240) target = $region44
        $region43: #{tpu_custom_call.1} parent=35 // pred_region
          %p243 = scmp.lt.s32.totalorder %s16, 1
          %s244 = scalar_select %p243, %s16, 1
          %s245 = smul.addr %s244, 8
          %s246 = scalar_lea.vmem %s1, %s245
        $region44: #{tpu_custom_call.1} parent=35 // pred_fallthru
          _
      $region36: #{tpu_custom_call.1} parent=5 // pred_fallthru
        _
      %p247 = scmp.le.s32.totalorder 1, %s16
      %p248 = scmp.lt.s32.totalorder %s16, 3
      %p249 = pnand %p247, %p248
      %p250 = pneg %p249
      // Predicated region
      $region45: #{tpu_custom_call.1} parent=5 // pred_check
        _
      $region46: #{tpu_custom_call.1} parent=5 // pred_check_branch
        %252 = sbr.rel (%p249) target = $region48
      $region47: #{tpu_custom_call.1} parent=5 // pred_region
        %s253 = ssub.s32 %s16, 1
        %p254 = scmp.lt.s32.totalorder %s21, 1
        %s255 = scalar_select %p254, %s21, 1
        %s256 = smul.addr %s255, 8
        %s257 = scalar_lea.vmem %s0, %s256
        %p258 = pneg %p42
        %p259 = pneg %p39
        %p260 = scmp.lt.s32.totalorder %s21, 1
        %s261 = scalar_select %p260, %s21, 1
        %s262 = smul.addr %s261, 8
        %s263 = scalar_lea.vmem %s1, %s262
        %p264 = pneg %p68
        %p265 = pneg %p65
        %p266 = pneg %p89
        %p267 = pneg %p86
        %p268 = pneg %p110
        %p269 = pneg %p107
        %p270 = pneg %p131
        %p271 = pneg %p128
        %p272 = pneg %p152
        %p273 = pneg %p149
        %p274 = pneg %p173
        %p275 = pneg %p170
        %p276 = pneg %p199
        %p277 = pneg %p196
        %s278 = sand.u32 %s186, 1
        %s279 = scalar_lea.sflag [#allocation3], %s278
        %s280 = sand.u32 %s186, 1
        %s281 = smul.addr %s280, 8
        %s282 = scalar_lea.vmem [#allocation2], %s281
        %p283 = scmp.lt.s32.totalorder %s21, 1
        %s284 = scalar_select %p283, %s21, 1
        %s285 = smul.addr %s284, 8
        %s286 = scalar_lea.vmem %s0, %s285
        %p287 = scmp.lt.s32.totalorder %s21, 1
        %s288 = scalar_select %p287, %s21, 1
        %s289 = smul.addr %s288, 8
        %s290 = scalar_lea.vmem %s1, %s289
        %v291 = vld [vmem:[%s286] sm:$0xff]
        %v292 = vld [vmem:[%s290] sm:$0xff]
        %v293 = vld [vmem:[%s2] sm:$0xff]
        %v294 = vld [vmem:[%s2 + $0x8] sm:$0xff]
        %v295 = vld [vmem:[%s2 + $0x10] sm:$0xff]
        %v296 = vld [vmem:[%s2 + $0x18] sm:$0xff]
        %v297 = vld [vmem:[%s6] sm:$0x1]
        %v298 = vlaneseq
        %v299 = vshrl.u32 %v298, 7
        %v300 = vsub.s32 0, %v299
        %v301 = vrot.slane %v297, %v300
        %vm302 = vcmask 261120
        %v304 = vsel %vm302, %v291, 0
        %306 = vmatprep.subr.mxu0 0.0
        %307 = vmatpush1.msra.mxu0 0.0
        %308 = vmatprep.subr.mxu0 0.0
        %309 = vmatpush1.msra.mxu0 0.0
        %310 = vmatprep.subr.mxu0 0.0
        %311 = vmatpush1.msra.mxu0 0.0
        %312 = vmatprep.subr.mxu0 0.0
        %313 = vmatpush1.msra.mxu0 0.0
        %314 = vmatprep.subr.mxu0 0.0
        %315 = vmatpush1.msra.mxu0 0.0
        %316 = vmatprep.subr.mxu0 0.0
        %317 = vmatpush1.msra.mxu0 0.0
        %318 = vmatprep.subr.mxu0 0.0
        %319 = vmatpush1.msra.mxu0 0.0
        %320 = vmatprep.subr.mxu0 0.0
        %321 = vmatpush1.msra.mxu0 0.0
        %322 = vmatprep.subr.mxu0 0.0
        %323 = vmatpush1.msra.mxu0 0.0
        %324 = vmatprep.subr.mxu0 0.0
        %325 = vmatpush1.msra.mxu0 0.0
        %326 = vmatprep.subr.mxu0 0.0
        %327 = vmatpush1.msra.mxu0 0.0
        %328 = vmatprep.subr.mxu0 0.0
        %329 = vmatpush1.msra.mxu0 0.0
        %330 = vmatprep.subr.mxu0 0.0
        %331 = vmatpush1.msra.mxu0 %v296
        %332 = vmatprep.subr.mxu0 0.0
        %333 = vmatpush1.msra.mxu0 %v295
        %334 = vmatprep.subr.mxu0 0.0
        %335 = vmatpush1.msra.mxu0 %v294
        %336 = vmatprep.subr.mxu0 0.0
        %337 = vmatpush1.msra.mxu0 %v293
        %338 = vmatprep.subr.mxu0 0.0
        %339 = vmatpush2.msra.mxu0 0.0
        %340 = vmatprep.subr.mxu0 0.0
        %341 = vmatpush2.msra.mxu0 0.0
        %342 = vmatprep.subr.mxu0 0.0
        %343 = vmatpush2.msra.mxu0 0.0
        %344 = vmatprep.subr.mxu0 0.0
        %345 = vmatpush2.msra.mxu0 0.0
        %346 = vmatprep.subr.mxu0 0.0
        %347 = vmatpush2.msra.mxu0 0.0
        %348 = vmatprep.subr.mxu0 0.0
        %349 = vmatpush2.msra.mxu0 0.0
        %350 = vmatprep.subr.mxu0 0.0
        %351 = vmatpush2.msra.mxu0 0.0
        %352 = vmatprep.subr.mxu0 0.0
        %353 = vmatpush2.msra.mxu0 0.0
        %354 = vmatprep.subr.mxu0 0.0
        %355 = vmatpush2.msra.mxu0 0.0
        %356 = vmatprep.subr.mxu0 0.0
        %357 = vmatpush2.msra.mxu0 0.0
        %358 = vmatprep.subr.mxu0 0.0
        %359 = vmatpush2.msra.mxu0 0.0
        %360 = vmatprep.subr.mxu0 0.0
        %361 = vmatpush2.msra.mxu0 0.0
        %362 = vmatprep.subr.mxu0 0.0
        %363 = vmatpush2.msra.mxu0 0.0
        %364 = vmatprep.subr.mxu0 0.0
        %365 = vmatpush2.msra.mxu0 0.0
        %366 = vmatprep.subr.mxu0 0.0
        %367 = vmatpush2.msra.mxu0 0.0
        %368 = vmatprep.subr.mxu0 0.0
        %369 = vmatpush2.msra.mxu0 0.0
        %370 = vmatprep.mubr.f32.mxu0 0.0
        %371 = vmatmul.mubr.f32.gmra.mxu0 %v304
        %v372 = vpop.f32.mrf.mxu0
        %v373 = vadd.f32 %v301, %v372
        %v374 = vpop.f32.mrf.mxu0
        %375 = vdwg.mxu0
        %s376 = scalar_lea.vmem %s2, 128
        %v377 = vld [vmem:[%s376] sm:$0xff]
        %v378 = vld [vmem:[%s376 + $0x8] sm:$0xff]
        %v379 = vld [vmem:[%s376 + $0x10] sm:$0xff]
        %v380 = vld [vmem:[%s376 + $0x18] sm:$0xff]
        %v381 = vld [vmem:[%s6 + $0x4] sm:$0x1]
        %v382 = vlaneseq
        %v383 = vshrl.u32 %v382, 7
        %v384 = vsub.s32 0, %v383
        %v385 = vrot.slane %v381, %v384
        %386 = vmatprep.subr.mxu0 0.0
        %387 = vmatpush1.msra.mxu0 0.0
        %388 = vmatprep.subr.mxu0 0.0
        %389 = vmatpush1.msra.mxu0 0.0
        %390 = vmatprep.subr.mxu0 0.0
        %391 = vmatpush1.msra.mxu0 0.0
        %392 = vmatprep.subr.mxu0 0.0
        %393 = vmatpush1.msra.mxu0 0.0
        %394 = vmatprep.subr.mxu0 0.0
        %395 = vmatpush1.msra.mxu0 0.0
        %396 = vmatprep.subr.mxu0 0.0
        %397 = vmatpush1.msra.mxu0 0.0
        %398 = vmatprep.subr.mxu0 0.0
        %399 = vmatpush1.msra.mxu0 0.0
        %400 = vmatprep.subr.mxu0 0.0
        %401 = vmatpush1.msra.mxu0 0.0
        %402 = vmatprep.subr.mxu0 0.0
        %403 = vmatpush1.msra.mxu0 0.0
        %404 = vmatprep.subr.mxu0 0.0
        %405 = vmatpush1.msra.mxu0 0.0
        %406 = vmatprep.subr.mxu0 0.0
        %407 = vmatpush1.msra.mxu0 0.0
        %408 = vmatprep.subr.mxu0 0.0
        %409 = vmatpush1.msra.mxu0 0.0
        %410 = vmatprep.subr.mxu0 0.0
        %411 = vmatpush1.msra.mxu0 %v380
        %412 = vmatprep.subr.mxu0 0.0
        %413 = vmatpush1.msra.mxu0 %v379
        %414 = vmatprep.subr.mxu0 0.0
        %415 = vmatpush1.msra.mxu0 %v378
        %416 = vmatprep.subr.mxu0 0.0
        %417 = vmatpush1.msra.mxu0 %v377
        %418 = vmatprep.subr.mxu0 0.0
        %419 = vmatpush2.msra.mxu0 0.0
        %420 = vmatprep.subr.mxu0 0.0
        %421 = vmatpush2.msra.mxu0 0.0
        %422 = vmatprep.subr.mxu0 0.0
        %423 = vmatpush2.msra.mxu0 0.0
        %424 = vmatprep.subr.mxu0 0.0
        %425 = vmatpush2.msra.mxu0 0.0
        %426 = vmatprep.subr.mxu0 0.0
        %427 = vmatpush2.msra.mxu0 0.0
        %428 = vmatprep.subr.mxu0 0.0
        %429 = vmatpush2.msra.mxu0 0.0
        %430 = vmatprep.subr.mxu0 0.0
        %431 = vmatpush2.msra.mxu0 0.0
        %432 = vmatprep.subr.mxu0 0.0
        %433 = vmatpush2.msra.mxu0 0.0
        %434 = vmatprep.subr.mxu0 0.0
        %435 = vmatpush2.msra.mxu0 0.0
        %436 = vmatprep.subr.mxu0 0.0
        %437 = vmatpush2.msra.mxu0 0.0
        %438 = vmatprep.subr.mxu0 0.0
        %439 = vmatpush2.msra.mxu0 0.0
        %440 = vmatprep.subr.mxu0 0.0
        %441 = vmatpush2.msra.mxu0 0.0
        %442 = vmatprep.subr.mxu0 0.0
        %443 = vmatpush2.msra.mxu0 0.0
        %444 = vmatprep.subr.mxu0 0.0
        %445 = vmatpush2.msra.mxu0 0.0
        %446 = vmatprep.subr.mxu0 0.0
        %447 = vmatpush2.msra.mxu0 0.0
        %448 = vmatprep.subr.mxu0 0.0
        %449 = vmatpush2.msra.mxu0 0.0
        %450 = vmatprep.mubr.f32.mxu0 0.0
        %451 = vmatmul.mubr.f32.gmra.mxu0 %v304
        %v452 = vpop.f32.mrf.mxu0
        %v453 = vadd.f32 %v385, %v452
        %v454 = vpop.f32.mrf.mxu0
        %455 = vdwg.mxu0
        %s456 = scalar_lea.vmem %s2, 256
        %v457 = vld [vmem:[%s456] sm:$0xff]
        %v458 = vld [vmem:[%s456 + $0x8] sm:$0xff]
        %v459 = vld [vmem:[%s456 + $0x10] sm:$0xff]
        %v460 = vld [vmem:[%s456 + $0x18] sm:$0xff]
        %v461 = vld [vmem:[%s6 + $0x8] sm:$0x1]
        %v462 = vlaneseq
        %v463 = vshrl.u32 %v462, 7
        %v464 = vsub.s32 0, %v463
        %v465 = vrot.slane %v461, %v464
        %466 = vmatprep.subr.mxu0 0.0
        %467 = vmatpush1.msra.mxu0 0.0
        %468 = vmatprep.subr.mxu0 0.0
        %469 = vmatpush1.msra.mxu0 0.0
        %470 = vmatprep.subr.mxu0 0.0
        %471 = vmatpush1.msra.mxu0 0.0
        %472 = vmatprep.subr.mxu0 0.0
        %473 = vmatpush1.msra.mxu0 0.0
        %474 = vmatprep.subr.mxu0 0.0
        %475 = vmatpush1.msra.mxu0 0.0
        %476 = vmatprep.subr.mxu0 0.0
        %477 = vmatpush1.msra.mxu0 0.0
        %478 = vmatprep.subr.mxu0 0.0
        %479 = vmatpush1.msra.mxu0 0.0
        %480 = vmatprep.subr.mxu0 0.0
        %481 = vmatpush1.msra.mxu0 0.0
        %482 = vmatprep.subr.mxu0 0.0
        %483 = vmatpush1.msra.mxu0 0.0
        %484 = vmatprep.subr.mxu0 0.0
        %485 = vmatpush1.msra.mxu0 0.0
        %486 = vmatprep.subr.mxu0 0.0
        %487 = vmatpush1.msra.mxu0 0.0
        %488 = vmatprep.subr.mxu0 0.0
        %489 = vmatpush1.msra.mxu0 0.0
        %490 = vmatprep.subr.mxu0 0.0
        %491 = vmatpush1.msra.mxu0 %v460
        %492 = vmatprep.subr.mxu0 0.0
        %493 = vmatpush1.msra.mxu0 %v459
        %494 = vmatprep.subr.mxu0 0.0
        %495 = vmatpush1.msra.mxu0 %v458
        %496 = vmatprep.subr.mxu0 0.0
        %497 = vmatpush1.msra.mxu0 %v457
        %498 = vmatprep.subr.mxu0 0.0
        %499 = vmatpush2.msra.mxu0 0.0
        %500 = vmatprep.subr.mxu0 0.0
        %501 = vmatpush2.msra.mxu0 0.0
        %502 = vmatprep.subr.mxu0 0.0
        %503 = vmatpush2.msra.mxu0 0.0
        %504 = vmatprep.subr.mxu0 0.0
        %505 = vmatpush2.msra.mxu0 0.0
        %506 = vmatprep.subr.mxu0 0.0
        %507 = vmatpush2.msra.mxu0 0.0
        %508 = vmatprep.subr.mxu0 0.0
        %509 = vmatpush2.msra.mxu0 0.0
        %510 = vmatprep.subr.mxu0 0.0
        %511 = vmatpush2.msra.mxu0 0.0
        %512 = vmatprep.subr.mxu0 0.0
        %513 = vmatpush2.msra.mxu0 0.0
        %514 = vmatprep.subr.mxu0 0.0
        %515 = vmatpush2.msra.mxu0 0.0
        %516 = vmatprep.subr.mxu0 0.0
        %517 = vmatpush2.msra.mxu0 0.0
        %518 = vmatprep.subr.mxu0 0.0
        %519 = vmatpush2.msra.mxu0 0.0
        %520 = vmatprep.subr.mxu0 0.0
        %521 = vmatpush2.msra.mxu0 0.0
        %522 = vmatprep.subr.mxu0 0.0
        %523 = vmatpush2.msra.mxu0 0.0
        %524 = vmatprep.subr.mxu0 0.0
        %525 = vmatpush2.msra.mxu0 0.0
        %526 = vmatprep.subr.mxu0 0.0
        %527 = vmatpush2.msra.mxu0 0.0
        %528 = vmatprep.subr.mxu0 0.0
        %529 = vmatpush2.msra.mxu0 0.0
        %530 = vmatprep.mubr.f32.mxu0 0.0
        %531 = vmatmul.mubr.f32.gmra.mxu0 %v304
        %v532 = vpop.f32.mrf.mxu0
        %v533 = vadd.f32 %v465, %v532
        %v534 = vpop.f32.mrf.mxu0
        %535 = vdwg.mxu0
        %vm536 = vcmask 64512
        %v538 = vsel %vm536, %v373, 0
        %v541 = vsel %vm536, %v453, 0
        %543 = vmatprep.subr.mxu0 0.0
        %544 = vmatpush1.xpose.msra.mxu0 0.0
        %545 = vmatprep.subr.mxu0 0.0
        %546 = vmatpush1.xpose.msra.mxu0 0.0
        %547 = vmatprep.subr.mxu0 0.0
        %548 = vmatpush1.xpose.msra.mxu0 0.0
        %549 = vmatprep.subr.mxu0 0.0
        %550 = vmatpush1.xpose.msra.mxu0 0.0
        %551 = vmatprep.subr.mxu0 0.0
        %552 = vmatpush1.xpose.msra.mxu0 0.0
        %553 = vmatprep.subr.mxu0 0.0
        %554 = vmatpush1.xpose.msra.mxu0 0.0
        %555 = vmatprep.subr.mxu0 0.0
        %556 = vmatpush1.xpose.msra.mxu0 0.0
        %557 = vmatprep.subr.mxu0 0.0
        %558 = vmatpush1.xpose.msra.mxu0 0.0
        %559 = vmatprep.subr.mxu0 0.0
        %560 = vmatpush1.xpose.msra.mxu0 0.0
        %561 = vmatprep.subr.mxu0 0.0
        %562 = vmatpush1.xpose.msra.mxu0 0.0
        %563 = vmatprep.subr.mxu0 0.0
        %564 = vmatpush1.xpose.msra.mxu0 0.0
        %565 = vmatprep.subr.mxu0 0.0
        %566 = vmatpush1.xpose.msra.mxu0 0.0
        %567 = vmatprep.subr.mxu0 0.0
        %568 = vmatpush1.xpose.msra.mxu0 0.0
        %569 = vmatprep.subr.mxu0 0.0
        %570 = vmatpush1.xpose.msra.mxu0 0.0
        %571 = vmatprep.subr.mxu0 0.0
        %572 = vmatpush1.xpose.msra.mxu0 0.0
        %573 = vmatprep.subr.mxu0 0.0
        %574 = vmatpush1.xpose.msra.mxu0 %v541
        %575 = vmatprep.subr.mxu0 0.0
        %576 = vmatpush2.xpose.msra.mxu0 0.0
        %577 = vmatprep.subr.mxu0 0.0
        %578 = vmatpush2.xpose.msra.mxu0 0.0
        %579 = vmatprep.subr.mxu0 0.0
        %580 = vmatpush2.xpose.msra.mxu0 0.0
        %581 = vmatprep.subr.mxu0 0.0
        %582 = vmatpush2.xpose.msra.mxu0 0.0
        %583 = vmatprep.subr.mxu0 0.0
        %584 = vmatpush2.xpose.msra.mxu0 0.0
        %585 = vmatprep.subr.mxu0 0.0
        %586 = vmatpush2.xpose.msra.mxu0 0.0
        %587 = vmatprep.subr.mxu0 0.0
        %588 = vmatpush2.xpose.msra.mxu0 0.0
        %589 = vmatprep.subr.mxu0 0.0
        %590 = vmatpush2.xpose.msra.mxu0 0.0
        %591 = vmatprep.subr.mxu0 0.0
        %592 = vmatpush2.xpose.msra.mxu0 0.0
        %593 = vmatprep.subr.mxu0 0.0
        %594 = vmatpush2.xpose.msra.mxu0 0.0
        %595 = vmatprep.subr.mxu0 0.0
        %596 = vmatpush2.xpose.msra.mxu0 0.0
        %597 = vmatprep.subr.mxu0 0.0
        %598 = vmatpush2.xpose.msra.mxu0 0.0
        %599 = vmatprep.subr.mxu0 0.0
        %600 = vmatpush2.xpose.msra.mxu0 0.0
        %601 = vmatprep.subr.mxu0 0.0
        %602 = vmatpush2.xpose.msra.mxu0 0.0
        %603 = vmatprep.subr.mxu0 0.0
        %604 = vmatpush2.xpose.msra.mxu0 0.0
        %605 = vmatprep.subr.mxu0 0.0
        %606 = vmatpush2.xpose.msra.mxu0 0.0
        %607 = vmatprep.mubr.f32.mxu0 0.0
        %608 = vmatmul.mubr.f32.gmra.mxu0 %v538
        %v609 = vpop.f32.mrf.mxu0
        %v610 = vadd.f32 0.0, %v609
        %v611 = vpop.f32.mrf.mxu0
        %612 = vdwg.mxu0
        %v613 = vsel %vm536, %v610, -inf
        %614 = vmax.xlane.f32.xlu0 %v613
        %v615 = vpop.xlane.xlu0 %614
        %v616 = vsub.f32 %v610, %v615
        %v617 = vmul.f32 %v616, 1.442695
        %v618 = vpow.pop %v617
        %v619 = vsel %vm536, %v618, 0.0
        %620 = vadd.xlane.f32.xlu0 %v619
        %v621 = vpop.xlane.xlu0 %620
        %v622 = vrcp.pop %v621
        %v623 = vmul.f32 %v618, %v622
        %v625 = vsel %vm536, %v623, 0
        %627 = vmatprep.subr.mxu0 0.0
        %628 = vmatpush1.msra.mxu0 0.0
        %629 = vmatprep.subr.mxu0 0.0
        %630 = vmatpush1.msra.mxu0 0.0
        %631 = vmatprep.subr.mxu0 0.0
        %632 = vmatpush1.msra.mxu0 0.0
        %633 = vmatprep.subr.mxu0 0.0
        %634 = vmatpush1.msra.mxu0 0.0
        %635 = vmatprep.subr.mxu0 0.0
        %636 = vmatpush1.msra.mxu0 0.0
        %637 = vmatprep.subr.mxu0 0.0
        %638 = vmatpush1.msra.mxu0 0.0
        %639 = vmatprep.subr.mxu0 0.0
        %640 = vmatpush1.msra.mxu0 0.0
        %641 = vmatprep.subr.mxu0 0.0
        %642 = vmatpush1.msra.mxu0 0.0
        %643 = vmatprep.subr.mxu0 0.0
        %644 = vmatpush1.msra.mxu0 0.0
        %645 = vmatprep.subr.mxu0 0.0
        %646 = vmatpush1.msra.mxu0 0.0
        %647 = vmatprep.subr.mxu0 0.0
        %648 = vmatpush1.msra.mxu0 0.0
        %649 = vmatprep.subr.mxu0 0.0
        %650 = vmatpush1.msra.mxu0 0.0
        %651 = vmatprep.subr.mxu0 0.0
        %652 = vmatpush1.msra.mxu0 0.0
        %653 = vmatprep.subr.mxu0 0.0
        %654 = vmatpush1.msra.mxu0 0.0
        %655 = vmatprep.subr.mxu0 0.0
        %656 = vmatpush1.msra.mxu0 0.0
        %657 = vmatprep.subr.mxu0 0.0
        %658 = vmatpush1.msra.mxu0 %v533
        %659 = vmatprep.subr.mxu0 0.0
        %660 = vmatpush2.msra.mxu0 0.0
        %661 = vmatprep.subr.mxu0 0.0
        %662 = vmatpush2.msra.mxu0 0.0
        %663 = vmatprep.subr.mxu0 0.0
        %664 = vmatpush2.msra.mxu0 0.0
        %665 = vmatprep.subr.mxu0 0.0
        %666 = vmatpush2.msra.mxu0 0.0
        %667 = vmatprep.subr.mxu0 0.0
        %668 = vmatpush2.msra.mxu0 0.0
        %669 = vmatprep.subr.mxu0 0.0
        %670 = vmatpush2.msra.mxu0 0.0
        %671 = vmatprep.subr.mxu0 0.0
        %672 = vmatpush2.msra.mxu0 0.0
        %673 = vmatprep.subr.mxu0 0.0
        %674 = vmatpush2.msra.mxu0 0.0
        %675 = vmatprep.subr.mxu0 0.0
        %676 = vmatpush2.msra.mxu0 0.0
        %677 = vmatprep.subr.mxu0 0.0
        %678 = vmatpush2.msra.mxu0 0.0
        %679 = vmatprep.subr.mxu0 0.0
        %680 = vmatpush2.msra.mxu0 0.0
        %681 = vmatprep.subr.mxu0 0.0
        %682 = vmatpush2.msra.mxu0 0.0
        %683 = vmatprep.subr.mxu0 0.0
        %684 = vmatpush2.msra.mxu0 0.0
        %685 = vmatprep.subr.mxu0 0.0
        %686 = vmatpush2.msra.mxu0 0.0
        %687 = vmatprep.subr.mxu0 0.0
        %688 = vmatpush2.msra.mxu0 0.0
        %689 = vmatprep.subr.mxu0 0.0
        %690 = vmatpush2.msra.mxu0 0.0
        %691 = vmatprep.mubr.f32.mxu0 0.0
        %692 = vmatmul.mubr.f32.gmra.mxu0 %v625
        %v693 = vpop.f32.mrf.mxu0
        %v694 = vadd.f32 0.0, %v693
        %v695 = vpop.f32.mrf.mxu0
        %696 = vdwg.mxu0
        %v697 = vld [vmem:[%s3] sm:$0xff]
        %s698 = scalar_lea.vmem %s2, 32
        %v699 = vld [vmem:[%s698] sm:$0xff]
        %v700 = vld [vmem:[%s698 + $0x8] sm:$0xff]
        %v701 = vld [vmem:[%s698 + $0x10] sm:$0xff]
        %v702 = vld [vmem:[%s698 + $0x18] sm:$0xff]
        %v703 = vld [vmem:[%s6 + $0x1] sm:$0x1]
        %v704 = vlaneseq
        %v705 = vshrl.u32 %v704, 7
        %v706 = vsub.s32 0, %v705
        %v707 = vrot.slane %v703, %v706
        %708 = vmatprep.subr.mxu0 0.0
        %709 = vmatpush1.msra.mxu0 0.0
        %710 = vmatprep.subr.mxu0 0.0
        %711 = vmatpush1.msra.mxu0 0.0
        %712 = vmatprep.subr.mxu0 0.0
        %713 = vmatpush1.msra.mxu0 0.0
        %714 = vmatprep.subr.mxu0 0.0
        %715 = vmatpush1.msra.mxu0 0.0
        %716 = vmatprep.subr.mxu0 0.0
        %717 = vmatpush1.msra.mxu0 0.0
        %718 = vmatprep.subr.mxu0 0.0
        %719 = vmatpush1.msra.mxu0 0.0
        %720 = vmatprep.subr.mxu0 0.0
        %721 = vmatpush1.msra.mxu0 0.0
        %722 = vmatprep.subr.mxu0 0.0
        %723 = vmatpush1.msra.mxu0 0.0
        %724 = vmatprep.subr.mxu0 0.0
        %725 = vmatpush1.msra.mxu0 0.0
        %726 = vmatprep.subr.mxu0 0.0
        %727 = vmatpush1.msra.mxu0 0.0
        %728 = vmatprep.subr.mxu0 0.0
        %729 = vmatpush1.msra.mxu0 0.0
        %730 = vmatprep.subr.mxu0 0.0
        %731 = vmatpush1.msra.mxu0 0.0
        %732 = vmatprep.subr.mxu0 0.0
        %733 = vmatpush1.msra.mxu0 %v702
        %734 = vmatprep.subr.mxu0 0.0
        %735 = vmatpush1.msra.mxu0 %v701
        %736 = vmatprep.subr.mxu0 0.0
        %737 = vmatpush1.msra.mxu0 %v700
        %738 = vmatprep.subr.mxu0 0.0
        %739 = vmatpush1.msra.mxu0 %v699
        %740 = vmatprep.subr.mxu0 0.0
        %741 = vmatpush2.msra.mxu0 0.0
        %742 = vmatprep.subr.mxu0 0.0
        %743 = vmatpush2.msra.mxu0 0.0
        %744 = vmatprep.subr.mxu0 0.0
        %745 = vmatpush2.msra.mxu0 0.0
        %746 = vmatprep.subr.mxu0 0.0
        %747 = vmatpush2.msra.mxu0 0.0
        %748 = vmatprep.subr.mxu0 0.0
        %749 = vmatpush2.msra.mxu0 0.0
        %750 = vmatprep.subr.mxu0 0.0
        %751 = vmatpush2.msra.mxu0 0.0
        %752 = vmatprep.subr.mxu0 0.0
        %753 = vmatpush2.msra.mxu0 0.0
        %754 = vmatprep.subr.mxu0 0.0
        %755 = vmatpush2.msra.mxu0 0.0
        %756 = vmatprep.subr.mxu0 0.0
        %757 = vmatpush2.msra.mxu0 0.0
        %758 = vmatprep.subr.mxu0 0.0
        %759 = vmatpush2.msra.mxu0 0.0
        %760 = vmatprep.subr.mxu0 0.0
        %761 = vmatpush2.msra.mxu0 0.0
        %762 = vmatprep.subr.mxu0 0.0
        %763 = vmatpush2.msra.mxu0 0.0
        %764 = vmatprep.subr.mxu0 0.0
        %765 = vmatpush2.msra.mxu0 0.0
        %766 = vmatprep.subr.mxu0 0.0
        %767 = vmatpush2.msra.mxu0 0.0
        %768 = vmatprep.subr.mxu0 0.0
        %769 = vmatpush2.msra.mxu0 0.0
        %770 = vmatprep.subr.mxu0 0.0
        %771 = vmatpush2.msra.mxu0 0.0
        %772 = vmatprep.mubr.f32.mxu0 0.0
        %773 = vmatmul.mubr.f32.gmra.mxu0 %v304
        %v774 = vpop.f32.mrf.mxu0
        %v775 = vadd.f32 %v707, %v774
        %v776 = vpop.f32.mrf.mxu0
        %777 = vdwg.mxu0
        %s778 = scalar_lea.vmem %s2, 160
        %v779 = vld [vmem:[%s778] sm:$0xff]
        %v780 = vld [vmem:[%s778 + $0x8] sm:$0xff]
        %v781 = vld [vmem:[%s778 + $0x10] sm:$0xff]
        %v782 = vld [vmem:[%s778 + $0x18] sm:$0xff]
        %v783 = vld [vmem:[%s6 + $0x5] sm:$0x1]
        %v784 = vlaneseq
        %v785 = vshrl.u32 %v784, 7
        %v786 = vsub.s32 0, %v785
        %v787 = vrot.slane %v783, %v786
        %788 = vmatprep.subr.mxu0 0.0
        %789 = vmatpush1.msra.mxu0 0.0
        %790 = vmatprep.subr.mxu0 0.0
        %791 = vmatpush1.msra.mxu0 0.0
        %792 = vmatprep.subr.mxu0 0.0
        %793 = vmatpush1.msra.mxu0 0.0
        %794 = vmatprep.subr.mxu0 0.0
        %795 = vmatpush1.msra.mxu0 0.0
        %796 = vmatprep.subr.mxu0 0.0
        %797 = vmatpush1.msra.mxu0 0.0
        %798 = vmatprep.subr.mxu0 0.0
        %799 = vmatpush1.msra.mxu0 0.0
        %800 = vmatprep.subr.mxu0 0.0
        %801 = vmatpush1.msra.mxu0 0.0
        %802 = vmatprep.subr.mxu0 0.0
        %803 = vmatpush1.msra.mxu0 0.0
        %804 = vmatprep.subr.mxu0 0.0
        %805 = vmatpush1.msra.mxu0 0.0
        %806 = vmatprep.subr.mxu0 0.0
        %807 = vmatpush1.msra.mxu0 0.0
        %808 = vmatprep.subr.mxu0 0.0
        %809 = vmatpush1.msra.mxu0 0.0
        %810 = vmatprep.subr.mxu0 0.0
        %811 = vmatpush1.msra.mxu0 0.0
        %812 = vmatprep.subr.mxu0 0.0
        %813 = vmatpush1.msra.mxu0 %v782
        %814 = vmatprep.subr.mxu0 0.0
        %815 = vmatpush1.msra.mxu0 %v781
        %816 = vmatprep.subr.mxu0 0.0
        %817 = vmatpush1.msra.mxu0 %v780
        %818 = vmatprep.subr.mxu0 0.0
        %819 = vmatpush1.msra.mxu0 %v779
        %820 = vmatprep.subr.mxu0 0.0
        %821 = vmatpush2.msra.mxu0 0.0
        %822 = vmatprep.subr.mxu0 0.0
        %823 = vmatpush2.msra.mxu0 0.0
        %824 = vmatprep.subr.mxu0 0.0
        %825 = vmatpush2.msra.mxu0 0.0
        %826 = vmatprep.subr.mxu0 0.0
        %827 = vmatpush2.msra.mxu0 0.0
        %828 = vmatprep.subr.mxu0 0.0
        %829 = vmatpush2.msra.mxu0 0.0
        %830 = vmatprep.subr.mxu0 0.0
        %831 = vmatpush2.msra.mxu0 0.0
        %832 = vmatprep.subr.mxu0 0.0
        %833 = vmatpush2.msra.mxu0 0.0
        %834 = vmatprep.subr.mxu0 0.0
        %835 = vmatpush2.msra.mxu0 0.0
        %836 = vmatprep.subr.mxu0 0.0
        %837 = vmatpush2.msra.mxu0 0.0
        %838 = vmatprep.subr.mxu0 0.0
        %839 = vmatpush2.msra.mxu0 0.0
        %840 = vmatprep.subr.mxu0 0.0
        %841 = vmatpush2.msra.mxu0 0.0
        %842 = vmatprep.subr.mxu0 0.0
        %843 = vmatpush2.msra.mxu0 0.0
        %844 = vmatprep.subr.mxu0 0.0
        %845 = vmatpush2.msra.mxu0 0.0
        %846 = vmatprep.subr.mxu0 0.0
        %847 = vmatpush2.msra.mxu0 0.0
        %848 = vmatprep.subr.mxu0 0.0
        %849 = vmatpush2.msra.mxu0 0.0
        %850 = vmatprep.subr.mxu0 0.0
        %851 = vmatpush2.msra.mxu0 0.0
        %852 = vmatprep.mubr.f32.mxu0 0.0
        %853 = vmatmul.mubr.f32.gmra.mxu0 %v304
        %v854 = vpop.f32.mrf.mxu0
        %v855 = vadd.f32 %v787, %v854
        %v856 = vpop.f32.mrf.mxu0
        %857 = vdwg.mxu0
        %s858 = scalar_lea.vmem %s2, 288
        %v859 = vld [vmem:[%s858] sm:$0xff]
        %v860 = vld [vmem:[%s858 + $0x8] sm:$0xff]
        %v861 = vld [vmem:[%s858 + $0x10] sm:$0xff]
        %v862 = vld [vmem:[%s858 + $0x18] sm:$0xff]
        %v863 = vld [vmem:[%s6 + $0x9] sm:$0x1]
        %v864 = vlaneseq
        %v865 = vshrl.u32 %v864, 7
        %v866 = vsub.s32 0, %v865
        %v867 = vrot.slane %v863, %v866
        %868 = vmatprep.subr.mxu0 0.0
        %869 = vmatpush1.msra.mxu0 0.0
        %870 = vmatprep.subr.mxu0 0.0
        %871 = vmatpush1.msra.mxu0 0.0
        %872 = vmatprep.subr.mxu0 0.0
        %873 = vmatpush1.msra.mxu0 0.0
        %874 = vmatprep.subr.mxu0 0.0
        %875 = vmatpush1.msra.mxu0 0.0
        %876 = vmatprep.subr.mxu0 0.0
        %877 = vmatpush1.msra.mxu0 0.0
        %878 = vmatprep.subr.mxu0 0.0
        %879 = vmatpush1.msra.mxu0 0.0
        %880 = vmatprep.subr.mxu0 0.0
        %881 = vmatpush1.msra.mxu0 0.0
        %882 = vmatprep.subr.mxu0 0.0
        %883 = vmatpush1.msra.mxu0 0.0
        %884 = vmatprep.subr.mxu0 0.0
        %885 = vmatpush1.msra.mxu0 0.0
        %886 = vmatprep.subr.mxu0 0.0
        %887 = vmatpush1.msra.mxu0 0.0
        %888 = vmatprep.subr.mxu0 0.0
        %889 = vmatpush1.msra.mxu0 0.0
        %890 = vmatprep.subr.mxu0 0.0
        %891 = vmatpush1.msra.mxu0 0.0
        %892 = vmatprep.subr.mxu0 0.0
        %893 = vmatpush1.msra.mxu0 %v862
        %894 = vmatprep.subr.mxu0 0.0
        %895 = vmatpush1.msra.mxu0 %v861
        %896 = vmatprep.subr.mxu0 0.0
        %897 = vmatpush1.msra.mxu0 %v860
        %898 = vmatprep.subr.mxu0 0.0
        %899 = vmatpush1.msra.mxu0 %v859
        %900 = vmatprep.subr.mxu0 0.0
        %901 = vmatpush2.msra.mxu0 0.0
        %902 = vmatprep.subr.mxu0 0.0
        %903 = vmatpush2.msra.mxu0 0.0
        %904 = vmatprep.subr.mxu0 0.0
        %905 = vmatpush2.msra.mxu0 0.0
        %906 = vmatprep.subr.mxu0 0.0
        %907 = vmatpush2.msra.mxu0 0.0
        %908 = vmatprep.subr.mxu0 0.0
        %909 = vmatpush2.msra.mxu0 0.0
        %910 = vmatprep.subr.mxu0 0.0
        %911 = vmatpush2.msra.mxu0 0.0
        %912 = vmatprep.subr.mxu0 0.0
        %913 = vmatpush2.msra.mxu0 0.0
        %914 = vmatprep.subr.mxu0 0.0
        %915 = vmatpush2.msra.mxu0 0.0
        %916 = vmatprep.subr.mxu0 0.0
        %917 = vmatpush2.msra.mxu0 0.0
        %918 = vmatprep.subr.mxu0 0.0
        %919 = vmatpush2.msra.mxu0 0.0
        %920 = vmatprep.subr.mxu0 0.0
        %921 = vmatpush2.msra.mxu0 0.0
        %922 = vmatprep.subr.mxu0 0.0
        %923 = vmatpush2.msra.mxu0 0.0
        %924 = vmatprep.subr.mxu0 0.0
        %925 = vmatpush2.msra.mxu0 0.0
        %926 = vmatprep.subr.mxu0 0.0
        %927 = vmatpush2.msra.mxu0 0.0
        %928 = vmatprep.subr.mxu0 0.0
        %929 = vmatpush2.msra.mxu0 0.0
        %930 = vmatprep.subr.mxu0 0.0
        %931 = vmatpush2.msra.mxu0 0.0
        %932 = vmatprep.mubr.f32.mxu0 0.0
        %933 = vmatmul.mubr.f32.gmra.mxu0 %v304
        %v934 = vpop.f32.mrf.mxu0
        %v935 = vadd.f32 %v867, %v934
        %v936 = vpop.f32.mrf.mxu0
        %937 = vdwg.mxu0
        %v939 = vsel %vm536, %v775, 0
        %v942 = vsel %vm536, %v855, 0
        %944 = vmatprep.subr.mxu0 0.0
        %945 = vmatpush1.xpose.msra.mxu0 0.0
        %946 = vmatprep.subr.mxu0 0.0
        %947 = vmatpush1.xpose.msra.mxu0 0.0
        %948 = vmatprep.subr.mxu0 0.0
        %949 = vmatpush1.xpose.msra.mxu0 0.0
        %950 = vmatprep.subr.mxu0 0.0
        %951 = vmatpush1.xpose.msra.mxu0 0.0
        %952 = vmatprep.subr.mxu0 0.0
        %953 = vmatpush1.xpose.msra.mxu0 0.0
        %954 = vmatprep.subr.mxu0 0.0
        %955 = vmatpush1.xpose.msra.mxu0 0.0
        %956 = vmatprep.subr.mxu0 0.0
        %957 = vmatpush1.xpose.msra.mxu0 0.0
        %958 = vmatprep.subr.mxu0 0.0
        %959 = vmatpush1.xpose.msra.mxu0 0.0
        %960 = vmatprep.subr.mxu0 0.0
        %961 = vmatpush1.xpose.msra.mxu0 0.0
        %962 = vmatprep.subr.mxu0 0.0
        %963 = vmatpush1.xpose.msra.mxu0 0.0
        %964 = vmatprep.subr.mxu0 0.0
        %965 = vmatpush1.xpose.msra.mxu0 0.0
        %966 = vmatprep.subr.mxu0 0.0
        %967 = vmatpush1.xpose.msra.mxu0 0.0
        %968 = vmatprep.subr.mxu0 0.0
        %969 = vmatpush1.xpose.msra.mxu0 0.0
        %970 = vmatprep.subr.mxu0 0.0
        %971 = vmatpush1.xpose.msra.mxu0 0.0
        %972 = vmatprep.subr.mxu0 0.0
        %973 = vmatpush1.xpose.msra.mxu0 0.0
        %974 = vmatprep.subr.mxu0 0.0
        %975 = vmatpush1.xpose.msra.mxu0 %v942
        %976 = vmatprep.subr.mxu0 0.0
        %977 = vmatpush2.xpose.msra.mxu0 0.0
        %978 = vmatprep.subr.mxu0 0.0
        %979 = vmatpush2.xpose.msra.mxu0 0.0
        %980 = vmatprep.subr.mxu0 0.0
        %981 = vmatpush2.xpose.msra.mxu0 0.0
        %982 = vmatprep.subr.mxu0 0.0
        %983 = vmatpush2.xpose.msra.mxu0 0.0
        %984 = vmatprep.subr.mxu0 0.0
        %985 = vmatpush2.xpose.msra.mxu0 0.0
        %986 = vmatprep.subr.mxu0 0.0
        %987 = vmatpush2.xpose.msra.mxu0 0.0
        %988 = vmatprep.subr.mxu0 0.0
        %989 = vmatpush2.xpose.msra.mxu0 0.0
        %990 = vmatprep.subr.mxu0 0.0
        %991 = vmatpush2.xpose.msra.mxu0 0.0
        %992 = vmatprep.subr.mxu0 0.0
        %993 = vmatpush2.xpose.msra.mxu0 0.0
        %994 = vmatprep.subr.mxu0 0.0
        %995 = vmatpush2.xpose.msra.mxu0 0.0
        %996 = vmatprep.subr.mxu0 0.0
        %997 = vmatpush2.xpose.msra.mxu0 0.0
        %998 = vmatprep.subr.mxu0 0.0
        %999 = vmatpush2.xpose.msra.mxu0 0.0
        %1000 = vmatprep.subr.mxu0 0.0
        %1001 = vmatpush2.xpose.msra.mxu0 0.0
        %1002 = vmatprep.subr.mxu0 0.0
        %1003 = vmatpush2.xpose.msra.mxu0 0.0
        %1004 = vmatprep.subr.mxu0 0.0
        %1005 = vmatpush2.xpose.msra.mxu0 0.0
        %1006 = vmatprep.subr.mxu0 0.0
        %1007 = vmatpush2.xpose.msra.mxu0 0.0
        %1008 = vmatprep.mubr.f32.mxu0 0.0
        %1009 = vmatmul.mubr.f32.gmra.mxu0 %v939
        %v1010 = vpop.f32.mrf.mxu0
        %v1011 = vadd.f32 0.0, %v1010
        %v1012 = vpop.f32.mrf.mxu0
        %1013 = vdwg.mxu0
        %v1014 = vsel %vm536, %v1011, -inf
        %1015 = vmax.xlane.f32.xlu0 %v1014
        %v1016 = vpop.xlane.xlu0 %1015
        %v1017 = vsub.f32 %v1011, %v1016
        %v1018 = vmul.f32 %v1017, 1.442695
        %v1019 = vpow.pop %v1018
        %v1020 = vsel %vm536, %v1019, 0.0
        %1021 = vadd.xlane.f32.xlu0 %v1020
        %v1022 = vpop.xlane.xlu0 %1021
        %v1023 = vrcp.pop %v1022
        %v1024 = vmul.f32 %v1019, %v1023
        %v1026 = vsel %vm536, %v1024, 0
        %1028 = vmatprep.subr.mxu0 0.0
        %1029 = vmatpush1.msra.mxu0 0.0
        %1030 = vmatprep.subr.mxu0 0.0
        %1031 = vmatpush1.msra.mxu0 0.0
        %1032 = vmatprep.subr.mxu0 0.0
        %1033 = vmatpush1.msra.mxu0 0.0
        %1034 = vmatprep.subr.mxu0 0.0
        %1035 = vmatpush1.msra.mxu0 0.0
        %1036 = vmatprep.subr.mxu0 0.0
        %1037 = vmatpush1.msra.mxu0 0.0
        %1038 = vmatprep.subr.mxu0 0.0
        %1039 = vmatpush1.msra.mxu0 0.0
        %1040 = vmatprep.subr.mxu0 0.0
        %1041 = vmatpush1.msra.mxu0 0.0
        %1042 = vmatprep.subr.mxu0 0.0
        %1043 = vmatpush1.msra.mxu0 0.0
        %1044 = vmatprep.subr.mxu0 0.0
        %1045 = vmatpush1.msra.mxu0 0.0
        %1046 = vmatprep.subr.mxu0 0.0
        %1047 = vmatpush1.msra.mxu0 0.0
        %1048 = vmatprep.subr.mxu0 0.0
        %1049 = vmatpush1.msra.mxu0 0.0
        %1050 = vmatprep.subr.mxu0 0.0
        %1051 = vmatpush1.msra.mxu0 0.0
        %1052 = vmatprep.subr.mxu0 0.0
        %1053 = vmatpush1.msra.mxu0 0.0
        %1054 = vmatprep.subr.mxu0 0.0
        %1055 = vmatpush1.msra.mxu0 0.0
        %1056 = vmatprep.subr.mxu0 0.0
        %1057 = vmatpush1.msra.mxu0 0.0
        %1058 = vmatprep.subr.mxu0 0.0
        %1059 = vmatpush1.msra.mxu0 %v935
        %1060 = vmatprep.subr.mxu0 0.0
        %1061 = vmatpush2.msra.mxu0 0.0
        %1062 = vmatprep.subr.mxu0 0.0
        %1063 = vmatpush2.msra.mxu0 0.0
        %1064 = vmatprep.subr.mxu0 0.0
        %1065 = vmatpush2.msra.mxu0 0.0
        %1066 = vmatprep.subr.mxu0 0.0
        %1067 = vmatpush2.msra.mxu0 0.0
        %1068 = vmatprep.subr.mxu0 0.0
        %1069 = vmatpush2.msra.mxu0 0.0
        %1070 = vmatprep.subr.mxu0 0.0
        %1071 = vmatpush2.msra.mxu0 0.0
        %1072 = vmatprep.subr.mxu0 0.0
        %1073 = vmatpush2.msra.mxu0 0.0
        %1074 = vmatprep.subr.mxu0 0.0
        %1075 = vmatpush2.msra.mxu0 0.0
        %1076 = vmatprep.subr.mxu0 0.0
        %1077 = vmatpush2.msra.mxu0 0.0
        %1078 = vmatprep.subr.mxu0 0.0
        %1079 = vmatpush2.msra.mxu0 0.0
        %1080 = vmatprep.subr.mxu0 0.0
        %1081 = vmatpush2.msra.mxu0 0.0
        %1082 = vmatprep.subr.mxu0 0.0
        %1083 = vmatpush2.msra.mxu0 0.0
        %1084 = vmatprep.subr.mxu0 0.0
        %1085 = vmatpush2.msra.mxu0 0.0
        %1086 = vmatprep.subr.mxu0 0.0
        %1087 = vmatpush2.msra.mxu0 0.0
        %1088 = vmatprep.subr.mxu0 0.0
        %1089 = vmatpush2.msra.mxu0 0.0
        %1090 = vmatprep.subr.mxu0 0.0
        %1091 = vmatpush2.msra.mxu0 0.0
        %1092 = vmatprep.mubr.f32.mxu0 0.0
        %1093 = vmatmul.mubr.f32.gmra.mxu0 %v1026
        %v1094 = vpop.f32.mrf.mxu0
        %v1095 = vadd.f32 0.0, %v1094
        %v1096 = vpop.f32.mrf.mxu0
        %1097 = vdwg.mxu0
        %s1098 = scalar_lea.vmem %s3, 8
        %v1099 = vld [vmem:[%s1098] sm:$0xff]
        %v1101 = vsel %vm536, %v1095, 0
        %1103 = vmatprep.subr.mxu0 0.0
        %1104 = vmatpush1.msra.mxu0 0.0
        %1105 = vmatprep.subr.mxu0 0.0
        %1106 = vmatpush1.msra.mxu0 0.0
        %1107 = vmatprep.subr.mxu0 0.0
        %1108 = vmatpush1.msra.mxu0 0.0
        %1109 = vmatprep.subr.mxu0 0.0
        %1110 = vmatpush1.msra.mxu0 0.0
        %1111 = vmatprep.subr.mxu0 0.0
        %1112 = vmatpush1.msra.mxu0 0.0
        %1113 = vmatprep.subr.mxu0 0.0
        %1114 = vmatpush1.msra.mxu0 0.0
        %1115 = vmatprep.subr.mxu0 0.0
        %1116 = vmatpush1.msra.mxu0 0.0
        %1117 = vmatprep.subr.mxu0 0.0
        %1118 = vmatpush1.msra.mxu0 0.0
        %1119 = vmatprep.subr.mxu0 0.0
        %1120 = vmatpush1.msra.mxu0 0.0
        %1121 = vmatprep.subr.mxu0 0.0
        %1122 = vmatpush1.msra.mxu0 0.0
        %1123 = vmatprep.subr.mxu0 0.0
        %1124 = vmatpush1.msra.mxu0 0.0
        %1125 = vmatprep.subr.mxu0 0.0
        %1126 = vmatpush1.msra.mxu0 0.0
        %1127 = vmatprep.subr.mxu0 0.0
        %1128 = vmatpush1.msra.mxu0 0.0
        %1129 = vmatprep.subr.mxu0 0.0
        %1130 = vmatpush1.msra.mxu0 0.0
        %1131 = vmatprep.subr.mxu0 0.0
        %1132 = vmatpush1.msra.mxu0 0.0
        %1133 = vmatprep.subr.mxu0 0.0
        %1134 = vmatpush1.msra.mxu0 %v1099
        %1135 = vmatprep.subr.mxu0 0.0
        %1136 = vmatpush2.msra.mxu0 0.0
        %1137 = vmatprep.subr.mxu0 0.0
        %1138 = vmatpush2.msra.mxu0 0.0
        %1139 = vmatprep.subr.mxu0 0.0
        %1140 = vmatpush2.msra.mxu0 0.0
        %1141 = vmatprep.subr.mxu0 0.0
        %1142 = vmatpush2.msra.mxu0 0.0
        %1143 = vmatprep.subr.mxu0 0.0
        %1144 = vmatpush2.msra.mxu0 0.0
        %1145 = vmatprep.subr.mxu0 0.0
        %1146 = vmatpush2.msra.mxu0 0.0
        %1147 = vmatprep.subr.mxu0 0.0
        %1148 = vmatpush2.msra.mxu0 0.0
        %1149 = vmatprep.subr.mxu0 0.0
        %1150 = vmatpush2.msra.mxu0 0.0
        %1151 = vmatprep.subr.mxu0 0.0
        %1152 = vmatpush2.msra.mxu0 0.0
        %1153 = vmatprep.subr.mxu0 0.0
        %1154 = vmatpush2.msra.mxu0 0.0
        %1155 = vmatprep.subr.mxu0 0.0
        %1156 = vmatpush2.msra.mxu0 0.0
        %1157 = vmatprep.subr.mxu0 0.0
        %1158 = vmatpush2.msra.mxu0 0.0
        %1159 = vmatprep.subr.mxu0 0.0
        %1160 = vmatpush2.msra.mxu0 0.0
        %1161 = vmatprep.subr.mxu0 0.0
        %1162 = vmatpush2.msra.mxu0 0.0
        %1163 = vmatprep.subr.mxu0 0.0
        %1164 = vmatpush2.msra.mxu0 0.0
        %1165 = vmatprep.subr.mxu0 0.0
        %1166 = vmatpush2.msra.mxu0 0.0
        %1167 = vmatprep.mubr.f32.mxu0 0.0
        %1168 = vmatmul.mubr.f32.gmra.mxu0 %v1101
        %v1169 = vpop.f32.mrf.mxu0
        %v1170 = vadd.f32 0.0, %v1169
        %v1171 = vpop.f32.mrf.mxu0
        %1172 = vdwg.mxu0
        %v1174 = vsel %vm536, %v694, 0
        %1176 = vmatprep.subr.mxu0 0.0
        %1177 = vmatpush1.msra.mxu0 0.0
        %1178 = vmatprep.subr.mxu0 0.0
        %1179 = vmatpush1.msra.mxu0 0.0
        %1180 = vmatprep.subr.mxu0 0.0
        %1181 = vmatpush1.msra.mxu0 0.0
        %1182 = vmatprep.subr.mxu0 0.0
        %1183 = vmatpush1.msra.mxu0 0.0
        %1184 = vmatprep.subr.mxu0 0.0
        %1185 = vmatpush1.msra.mxu0 0.0
        %1186 = vmatprep.subr.mxu0 0.0
        %1187 = vmatpush1.msra.mxu0 0.0
        %1188 = vmatprep.subr.mxu0 0.0
        %1189 = vmatpush1.msra.mxu0 0.0
        %1190 = vmatprep.subr.mxu0 0.0
        %1191 = vmatpush1.msra.mxu0 0.0
        %1192 = vmatprep.subr.mxu0 0.0
        %1193 = vmatpush1.msra.mxu0 0.0
        %1194 = vmatprep.subr.mxu0 0.0
        %1195 = vmatpush1.msra.mxu0 0.0
        %1196 = vmatprep.subr.mxu0 0.0
        %1197 = vmatpush1.msra.mxu0 0.0
        %1198 = vmatprep.subr.mxu0 0.0
        %1199 = vmatpush1.msra.mxu0 0.0
        %1200 = vmatprep.subr.mxu0 0.0
        %1201 = vmatpush1.msra.mxu0 0.0
        %1202 = vmatprep.subr.mxu0 0.0
        %1203 = vmatpush1.msra.mxu0 0.0
        %1204 = vmatprep.subr.mxu0 0.0
        %1205 = vmatpush1.msra.mxu0 0.0
        %1206 = vmatprep.subr.mxu0 0.0
        %1207 = vmatpush1.msra.mxu0 %v697
        %1208 = vmatprep.subr.mxu0 0.0
        %1209 = vmatpush2.msra.mxu0 0.0
        %1210 = vmatprep.subr.mxu0 0.0
        %1211 = vmatpush2.msra.mxu0 0.0
        %1212 = vmatprep.subr.mxu0 0.0
        %1213 = vmatpush2.msra.mxu0 0.0
        %1214 = vmatprep.subr.mxu0 0.0
        %1215 = vmatpush2.msra.mxu0 0.0
        %1216 = vmatprep.subr.mxu0 0.0
        %1217 = vmatpush2.msra.mxu0 0.0
        %1218 = vmatprep.subr.mxu0 0.0
        %1219 = vmatpush2.msra.mxu0 0.0
        %1220 = vmatprep.subr.mxu0 0.0
        %1221 = vmatpush2.msra.mxu0 0.0
        %1222 = vmatprep.subr.mxu0 0.0
        %1223 = vmatpush2.msra.mxu0 0.0
        %1224 = vmatprep.subr.mxu0 0.0
        %1225 = vmatpush2.msra.mxu0 0.0
        %1226 = vmatprep.subr.mxu0 0.0
        %1227 = vmatpush2.msra.mxu0 0.0
        %1228 = vmatprep.subr.mxu0 0.0
        %1229 = vmatpush2.msra.mxu0 0.0
        %1230 = vmatprep.subr.mxu0 0.0
        %1231 = vmatpush2.msra.mxu0 0.0
        %1232 = vmatprep.subr.mxu0 0.0
        %1233 = vmatpush2.msra.mxu0 0.0
        %1234 = vmatprep.subr.mxu0 0.0
        %1235 = vmatpush2.msra.mxu0 0.0
        %1236 = vmatprep.subr.mxu0 0.0
        %1237 = vmatpush2.msra.mxu0 0.0
        %1238 = vmatprep.subr.mxu0 0.0
        %1239 = vmatpush2.msra.mxu0 0.0
        %1240 = vmatprep.mubr.f32.mxu0 0.0
        %1241 = vmatmul.mubr.f32.gmra.mxu0 %v1174
        %v1242 = vpop.f32.mrf.mxu0
        %v1243 = vadd.f32 %v1170, %v1242
        %v1244 = vpop.f32.mrf.mxu0
        %1245 = vdwg.mxu0
        %s1246 = scalar_lea.vmem %s2, 64
        %v1247 = vld [vmem:[%s1246] sm:$0xff]
        %v1248 = vld [vmem:[%s1246 + $0x8] sm:$0xff]
        %v1249 = vld [vmem:[%s1246 + $0x10] sm:$0xff]
        %v1250 = vld [vmem:[%s1246 + $0x18] sm:$0xff]
        %v1251 = vld [vmem:[%s6 + $0x2] sm:$0x1]
        %v1252 = vlaneseq
        %v1253 = vshrl.u32 %v1252, 7
        %v1254 = vsub.s32 0, %v1253
        %v1255 = vrot.slane %v1251, %v1254
        %1256 = vmatprep.subr.mxu0 0.0
        %1257 = vmatpush1.msra.mxu0 0.0
        %1258 = vmatprep.subr.mxu0 0.0
        %1259 = vmatpush1.msra.mxu0 0.0
        %1260 = vmatprep.subr.mxu0 0.0
        %1261 = vmatpush1.msra.mxu0 0.0
        %1262 = vmatprep.subr.mxu0 0.0
        %1263 = vmatpush1.msra.mxu0 0.0
        %1264 = vmatprep.subr.mxu0 0.0
        %1265 = vmatpush1.msra.mxu0 0.0
        %1266 = vmatprep.subr.mxu0 0.0
        %1267 = vmatpush1.msra.mxu0 0.0
        %1268 = vmatprep.subr.mxu0 0.0
        %1269 = vmatpush1.msra.mxu0 0.0
        %1270 = vmatprep.subr.mxu0 0.0
        %1271 = vmatpush1.msra.mxu0 0.0
        %1272 = vmatprep.subr.mxu0 0.0
        %1273 = vmatpush1.msra.mxu0 0.0
        %1274 = vmatprep.subr.mxu0 0.0
        %1275 = vmatpush1.msra.mxu0 0.0
        %1276 = vmatprep.subr.mxu0 0.0
        %1277 = vmatpush1.msra.mxu0 0.0
        %1278 = vmatprep.subr.mxu0 0.0
        %1279 = vmatpush1.msra.mxu0 0.0
        %1280 = vmatprep.subr.mxu0 0.0
        %1281 = vmatpush1.msra.mxu0 %v1250
        %1282 = vmatprep.subr.mxu0 0.0
        %1283 = vmatpush1.msra.mxu0 %v1249
        %1284 = vmatprep.subr.mxu0 0.0
        %1285 = vmatpush1.msra.mxu0 %v1248
        %1286 = vmatprep.subr.mxu0 0.0
        %1287 = vmatpush1.msra.mxu0 %v1247
        %1288 = vmatprep.subr.mxu0 0.0
        %1289 = vmatpush2.msra.mxu0 0.0
        %1290 = vmatprep.subr.mxu0 0.0
        %1291 = vmatpush2.msra.mxu0 0.0
        %1292 = vmatprep.subr.mxu0 0.0
        %1293 = vmatpush2.msra.mxu0 0.0
        %1294 = vmatprep.subr.mxu0 0.0
        %1295 = vmatpush2.msra.mxu0 0.0
        %1296 = vmatprep.subr.mxu0 0.0
        %1297 = vmatpush2.msra.mxu0 0.0
        %1298 = vmatprep.subr.mxu0 0.0
        %1299 = vmatpush2.msra.mxu0 0.0
        %1300 = vmatprep.subr.mxu0 0.0
        %1301 = vmatpush2.msra.mxu0 0.0
        %1302 = vmatprep.subr.mxu0 0.0
        %1303 = vmatpush2.msra.mxu0 0.0
        %1304 = vmatprep.subr.mxu0 0.0
        %1305 = vmatpush2.msra.mxu0 0.0
        %1306 = vmatprep.subr.mxu0 0.0
        %1307 = vmatpush2.msra.mxu0 0.0
        %1308 = vmatprep.subr.mxu0 0.0
        %1309 = vmatpush2.msra.mxu0 0.0
        %1310 = vmatprep.subr.mxu0 0.0
        %1311 = vmatpush2.msra.mxu0 0.0
        %1312 = vmatprep.subr.mxu0 0.0
        %1313 = vmatpush2.msra.mxu0 0.0
        %1314 = vmatprep.subr.mxu0 0.0
        %1315 = vmatpush2.msra.mxu0 0.0
        %1316 = vmatprep.subr.mxu0 0.0
        %1317 = vmatpush2.msra.mxu0 0.0
        %1318 = vmatprep.subr.mxu0 0.0
        %1319 = vmatpush2.msra.mxu0 0.0
        %1320 = vmatprep.mubr.f32.mxu0 0.0
        %1321 = vmatmul.mubr.f32.gmra.mxu0 %v304
        %v1322 = vpop.f32.mrf.mxu0
        %v1323 = vadd.f32 %v1255, %v1322
        %v1324 = vpop.f32.mrf.mxu0
        %1325 = vdwg.mxu0
        %s1326 = scalar_lea.vmem %s2, 192
        %v1327 = vld [vmem:[%s1326] sm:$0xff]
        %v1328 = vld [vmem:[%s1326 + $0x8] sm:$0xff]
        %v1329 = vld [vmem:[%s1326 + $0x10] sm:$0xff]
        %v1330 = vld [vmem:[%s1326 + $0x18] sm:$0xff]
        %v1331 = vld [vmem:[%s6 + $0x6] sm:$0x1]
        %v1332 = vlaneseq
        %v1333 = vshrl.u32 %v1332, 7
        %v1334 = vsub.s32 0, %v1333
        %v1335 = vrot.slane %v1331, %v1334
        %1336 = vmatprep.subr.mxu0 0.0
        %1337 = vmatpush1.msra.mxu0 0.0
        %1338 = vmatprep.subr.mxu0 0.0
        %1339 = vmatpush1.msra.mxu0 0.0
        %1340 = vmatprep.subr.mxu0 0.0
        %1341 = vmatpush1.msra.mxu0 0.0
        %1342 = vmatprep.subr.mxu0 0.0
        %1343 = vmatpush1.msra.mxu0 0.0
        %1344 = vmatprep.subr.mxu0 0.0
        %1345 = vmatpush1.msra.mxu0 0.0
        %1346 = vmatprep.subr.mxu0 0.0
        %1347 = vmatpush1.msra.mxu0 0.0
        %1348 = vmatprep.subr.mxu0 0.0
        %1349 = vmatpush1.msra.mxu0 0.0
        %1350 = vmatprep.subr.mxu0 0.0
        %1351 = vmatpush1.msra.mxu0 0.0
        %1352 = vmatprep.subr.mxu0 0.0
        %1353 = vmatpush1.msra.mxu0 0.0
        %1354 = vmatprep.subr.mxu0 0.0
        %1355 = vmatpush1.msra.mxu0 0.0
        %1356 = vmatprep.subr.mxu0 0.0
        %1357 = vmatpush1.msra.mxu0 0.0
        %1358 = vmatprep.subr.mxu0 0.0
        %1359 = vmatpush1.msra.mxu0 0.0
        %1360 = vmatprep.subr.mxu0 0.0
        %1361 = vmatpush1.msra.mxu0 %v1330
        %1362 = vmatprep.subr.mxu0 0.0
        %1363 = vmatpush1.msra.mxu0 %v1329
        %1364 = vmatprep.subr.mxu0 0.0
        %1365 = vmatpush1.msra.mxu0 %v1328
        %1366 = vmatprep.subr.mxu0 0.0
        %1367 = vmatpush1.msra.mxu0 %v1327
        %1368 = vmatprep.subr.mxu0 0.0
        %1369 = vmatpush2.msra.mxu0 0.0
        %1370 = vmatprep.subr.mxu0 0.0
        %1371 = vmatpush2.msra.mxu0 0.0
        %1372 = vmatprep.subr.mxu0 0.0
        %1373 = vmatpush2.msra.mxu0 0.0
        %1374 = vmatprep.subr.mxu0 0.0
        %1375 = vmatpush2.msra.mxu0 0.0
        %1376 = vmatprep.subr.mxu0 0.0
        %1377 = vmatpush2.msra.mxu0 0.0
        %1378 = vmatprep.subr.mxu0 0.0
        %1379 = vmatpush2.msra.mxu0 0.0
        %1380 = vmatprep.subr.mxu0 0.0
        %1381 = vmatpush2.msra.mxu0 0.0
        %1382 = vmatprep.subr.mxu0 0.0
        %1383 = vmatpush2.msra.mxu0 0.0
        %1384 = vmatprep.subr.mxu0 0.0
        %1385 = vmatpush2.msra.mxu0 0.0
        %1386 = vmatprep.subr.mxu0 0.0
        %1387 = vmatpush2.msra.mxu0 0.0
        %1388 = vmatprep.subr.mxu0 0.0
        %1389 = vmatpush2.msra.mxu0 0.0
        %1390 = vmatprep.subr.mxu0 0.0
        %1391 = vmatpush2.msra.mxu0 0.0
        %1392 = vmatprep.subr.mxu0 0.0
        %1393 = vmatpush2.msra.mxu0 0.0
        %1394 = vmatprep.subr.mxu0 0.0
        %1395 = vmatpush2.msra.mxu0 0.0
        %1396 = vmatprep.subr.mxu0 0.0
        %1397 = vmatpush2.msra.mxu0 0.0
        %1398 = vmatprep.subr.mxu0 0.0
        %1399 = vmatpush2.msra.mxu0 0.0
        %1400 = vmatprep.mubr.f32.mxu0 0.0
        %1401 = vmatmul.mubr.f32.gmra.mxu0 %v304
        %v1402 = vpop.f32.mrf.mxu0
        %v1403 = vadd.f32 %v1335, %v1402
        %v1404 = vpop.f32.mrf.mxu0
        %1405 = vdwg.mxu0
        %s1406 = scalar_lea.vmem %s2, 320
        %v1407 = vld [vmem:[%s1406] sm:$0xff]
        %v1408 = vld [vmem:[%s1406 + $0x8] sm:$0xff]
        %v1409 = vld [vmem:[%s1406 + $0x10] sm:$0xff]
        %v1410 = vld [vmem:[%s1406 + $0x18] sm:$0xff]
        %v1411 = vld [vmem:[%s6 + $0xa] sm:$0x1]
        %v1412 = vlaneseq
        %v1413 = vshrl.u32 %v1412, 7
        %v1414 = vsub.s32 0, %v1413
        %v1415 = vrot.slane %v1411, %v1414
        %1416 = vmatprep.subr.mxu0 0.0
        %1417 = vmatpush1.msra.mxu0 0.0
        %1418 = vmatprep.subr.mxu0 0.0
        %1419 = vmatpush1.msra.mxu0 0.0
        %1420 = vmatprep.subr.mxu0 0.0
        %1421 = vmatpush1.msra.mxu0 0.0
        %1422 = vmatprep.subr.mxu0 0.0
        %1423 = vmatpush1.msra.mxu0 0.0
        %1424 = vmatprep.subr.mxu0 0.0
        %1425 = vmatpush1.msra.mxu0 0.0
        %1426 = vmatprep.subr.mxu0 0.0
        %1427 = vmatpush1.msra.mxu0 0.0
        %1428 = vmatprep.subr.mxu0 0.0
        %1429 = vmatpush1.msra.mxu0 0.0
        %1430 = vmatprep.subr.mxu0 0.0
        %1431 = vmatpush1.msra.mxu0 0.0
        %1432 = vmatprep.subr.mxu0 0.0
        %1433 = vmatpush1.msra.mxu0 0.0
        %1434 = vmatprep.subr.mxu0 0.0
        %1435 = vmatpush1.msra.mxu0 0.0
        %1436 = vmatprep.subr.mxu0 0.0
        %1437 = vmatpush1.msra.mxu0 0.0
        %1438 = vmatprep.subr.mxu0 0.0
        %1439 = vmatpush1.msra.mxu0 0.0
        %1440 = vmatprep.subr.mxu0 0.0
        %1441 = vmatpush1.msra.mxu0 %v1410
        %1442 = vmatprep.subr.mxu0 0.0
        %1443 = vmatpush1.msra.mxu0 %v1409
        %1444 = vmatprep.subr.mxu0 0.0
        %1445 = vmatpush1.msra.mxu0 %v1408
        %1446 = vmatprep.subr.mxu0 0.0
        %1447 = vmatpush1.msra.mxu0 %v1407
        %1448 = vmatprep.subr.mxu0 0.0
        %1449 = vmatpush2.msra.mxu0 0.0
        %1450 = vmatprep.subr.mxu0 0.0
        %1451 = vmatpush2.msra.mxu0 0.0
        %1452 = vmatprep.subr.mxu0 0.0
        %1453 = vmatpush2.msra.mxu0 0.0
        %1454 = vmatprep.subr.mxu0 0.0
        %1455 = vmatpush2.msra.mxu0 0.0
        %1456 = vmatprep.subr.mxu0 0.0
        %1457 = vmatpush2.msra.mxu0 0.0
        %1458 = vmatprep.subr.mxu0 0.0
        %1459 = vmatpush2.msra.mxu0 0.0
        %1460 = vmatprep.subr.mxu0 0.0
        %1461 = vmatpush2.msra.mxu0 0.0
        %1462 = vmatprep.subr.mxu0 0.0
        %1463 = vmatpush2.msra.mxu0 0.0
        %1464 = vmatprep.subr.mxu0 0.0
        %1465 = vmatpush2.msra.mxu0 0.0
        %1466 = vmatprep.subr.mxu0 0.0
        %1467 = vmatpush2.msra.mxu0 0.0
        %1468 = vmatprep.subr.mxu0 0.0
        %1469 = vmatpush2.msra.mxu0 0.0
        %1470 = vmatprep.subr.mxu0 0.0
        %1471 = vmatpush2.msra.mxu0 0.0
        %1472 = vmatprep.subr.mxu0 0.0
        %1473 = vmatpush2.msra.mxu0 0.0
        %1474 = vmatprep.subr.mxu0 0.0
        %1475 = vmatpush2.msra.mxu0 0.0
        %1476 = vmatprep.subr.mxu0 0.0
        %1477 = vmatpush2.msra.mxu0 0.0
        %1478 = vmatprep.subr.mxu0 0.0
        %1479 = vmatpush2.msra.mxu0 0.0
        %1480 = vmatprep.mubr.f32.mxu0 0.0
        %1481 = vmatmul.mubr.f32.gmra.mxu0 %v304
        %v1482 = vpop.f32.mrf.mxu0
        %v1483 = vadd.f32 %v1415, %v1482
        %v1484 = vpop.f32.mrf.mxu0
        %1485 = vdwg.mxu0
        %v1487 = vsel %vm536, %v1323, 0
        %v1490 = vsel %vm536, %v1403, 0
        %1492 = vmatprep.subr.mxu0 0.0
        %1493 = vmatpush1.xpose.msra.mxu0 0.0
        %1494 = vmatprep.subr.mxu0 0.0
        %1495 = vmatpush1.xpose.msra.mxu0 0.0
        %1496 = vmatprep.subr.mxu0 0.0
        %1497 = vmatpush1.xpose.msra.mxu0 0.0
        %1498 = vmatprep.subr.mxu0 0.0
        %1499 = vmatpush1.xpose.msra.mxu0 0.0
        %1500 = vmatprep.subr.mxu0 0.0
        %1501 = vmatpush1.xpose.msra.mxu0 0.0
        %1502 = vmatprep.subr.mxu0 0.0
        %1503 = vmatpush1.xpose.msra.mxu0 0.0
        %1504 = vmatprep.subr.mxu0 0.0
        %1505 = vmatpush1.xpose.msra.mxu0 0.0
        %1506 = vmatprep.subr.mxu0 0.0
        %1507 = vmatpush1.xpose.msra.mxu0 0.0
        %1508 = vmatprep.subr.mxu0 0.0
        %1509 = vmatpush1.xpose.msra.mxu0 0.0
        %1510 = vmatprep.subr.mxu0 0.0
        %1511 = vmatpush1.xpose.msra.mxu0 0.0
        %1512 = vmatprep.subr.mxu0 0.0
        %1513 = vmatpush1.xpose.msra.mxu0 0.0
        %1514 = vmatprep.subr.mxu0 0.0
        %1515 = vmatpush1.xpose.msra.mxu0 0.0
        %1516 = vmatprep.subr.mxu0 0.0
        %1517 = vmatpush1.xpose.msra.mxu0 0.0
        %1518 = vmatprep.subr.mxu0 0.0
        %1519 = vmatpush1.xpose.msra.mxu0 0.0
        %1520 = vmatprep.subr.mxu0 0.0
        %1521 = vmatpush1.xpose.msra.mxu0 0.0
        %1522 = vmatprep.subr.mxu0 0.0
        %1523 = vmatpush1.xpose.msra.mxu0 %v1490
        %1524 = vmatprep.subr.mxu0 0.0
        %1525 = vmatpush2.xpose.msra.mxu0 0.0
        %1526 = vmatprep.subr.mxu0 0.0
        %1527 = vmatpush2.xpose.msra.mxu0 0.0
        %1528 = vmatprep.subr.mxu0 0.0
        %1529 = vmatpush2.xpose.msra.mxu0 0.0
        %1530 = vmatprep.subr.mxu0 0.0
        %1531 = vmatpush2.xpose.msra.mxu0 0.0
        %1532 = vmatprep.subr.mxu0 0.0
        %1533 = vmatpush2.xpose.msra.mxu0 0.0
        %1534 = vmatprep.subr.mxu0 0.0
        %1535 = vmatpush2.xpose.msra.mxu0 0.0
        %1536 = vmatprep.subr.mxu0 0.0
        %1537 = vmatpush2.xpose.msra.mxu0 0.0
        %1538 = vmatprep.subr.mxu0 0.0
        %1539 = vmatpush2.xpose.msra.mxu0 0.0
        %1540 = vmatprep.subr.mxu0 0.0
        %1541 = vmatpush2.xpose.msra.mxu0 0.0
        %1542 = vmatprep.subr.mxu0 0.0
        %1543 = vmatpush2.xpose.msra.mxu0 0.0
        %1544 = vmatprep.subr.mxu0 0.0
        %1545 = vmatpush2.xpose.msra.mxu0 0.0
        %1546 = vmatprep.subr.mxu0 0.0
        %1547 = vmatpush2.xpose.msra.mxu0 0.0
        %1548 = vmatprep.subr.mxu0 0.0
        %1549 = vmatpush2.xpose.msra.mxu0 0.0
        %1550 = vmatprep.subr.mxu0 0.0
        %1551 = vmatpush2.xpose.msra.mxu0 0.0
        %1552 = vmatprep.subr.mxu0 0.0
        %1553 = vmatpush2.xpose.msra.mxu0 0.0
        %1554 = vmatprep.subr.mxu0 0.0
        %1555 = vmatpush2.xpose.msra.mxu0 0.0
        %1556 = vmatprep.mubr.f32.mxu0 0.0
        %1557 = vmatmul.mubr.f32.gmra.mxu0 %v1487
        %v1558 = vpop.f32.mrf.mxu0
        %v1559 = vadd.f32 0.0, %v1558
        %v1560 = vpop.f32.mrf.mxu0
        %1561 = vdwg.mxu0
        %v1562 = vsel %vm536, %v1559, -inf
        %1563 = vmax.xlane.f32.xlu0 %v1562
        %v1564 = vpop.xlane.xlu0 %1563
        %v1565 = vsub.f32 %v1559, %v1564
        %v1566 = vmul.f32 %v1565, 1.442695
        %v1567 = vpow.pop %v1566
        %v1568 = vsel %vm536, %v1567, 0.0
        %1569 = vadd.xlane.f32.xlu0 %v1568
        %v1570 = vpop.xlane.xlu0 %1569
        %v1571 = vrcp.pop %v1570
        %v1572 = vmul.f32 %v1567, %v1571
        %v1574 = vsel %vm536, %v1572, 0
        %1576 = vmatprep.subr.mxu0 0.0
        %1577 = vmatpush1.msra.mxu0 0.0
        %1578 = vmatprep.subr.mxu0 0.0
        %1579 = vmatpush1.msra.mxu0 0.0
        %1580 = vmatprep.subr.mxu0 0.0
        %1581 = vmatpush1.msra.mxu0 0.0
        %1582 = vmatprep.subr.mxu0 0.0
        %1583 = vmatpush1.msra.mxu0 0.0
        %1584 = vmatprep.subr.mxu0 0.0
        %1585 = vmatpush1.msra.mxu0 0.0
        %1586 = vmatprep.subr.mxu0 0.0
        %1587 = vmatpush1.msra.mxu0 0.0
        %1588 = vmatprep.subr.mxu0 0.0
        %1589 = vmatpush1.msra.mxu0 0.0
        %1590 = vmatprep.subr.mxu0 0.0
        %1591 = vmatpush1.msra.mxu0 0.0
        %1592 = vmatprep.subr.mxu0 0.0
        %1593 = vmatpush1.msra.mxu0 0.0
        %1594 = vmatprep.subr.mxu0 0.0
        %1595 = vmatpush1.msra.mxu0 0.0
        %1596 = vmatprep.subr.mxu0 0.0
        %1597 = vmatpush1.msra.mxu0 0.0
        %1598 = vmatprep.subr.mxu0 0.0
        %1599 = vmatpush1.msra.mxu0 0.0
        %1600 = vmatprep.subr.mxu0 0.0
        %1601 = vmatpush1.msra.mxu0 0.0
        %1602 = vmatprep.subr.mxu0 0.0
        %1603 = vmatpush1.msra.mxu0 0.0
        %1604 = vmatprep.subr.mxu0 0.0
        %1605 = vmatpush1.msra.mxu0 0.0
        %1606 = vmatprep.subr.mxu0 0.0
        %1607 = vmatpush1.msra.mxu0 %v1483
        %1608 = vmatprep.subr.mxu0 0.0
        %1609 = vmatpush2.msra.mxu0 0.0
        %1610 = vmatprep.subr.mxu0 0.0
        %1611 = vmatpush2.msra.mxu0 0.0
        %1612 = vmatprep.subr.mxu0 0.0
        %1613 = vmatpush2.msra.mxu0 0.0
        %1614 = vmatprep.subr.mxu0 0.0
        %1615 = vmatpush2.msra.mxu0 0.0
        %1616 = vmatprep.subr.mxu0 0.0
        %1617 = vmatpush2.msra.mxu0 0.0
        %1618 = vmatprep.subr.mxu0 0.0
        %1619 = vmatpush2.msra.mxu0 0.0
        %1620 = vmatprep.subr.mxu0 0.0
        %1621 = vmatpush2.msra.mxu0 0.0
        %1622 = vmatprep.subr.mxu0 0.0
        %1623 = vmatpush2.msra.mxu0 0.0
        %1624 = vmatprep.subr.mxu0 0.0
        %1625 = vmatpush2.msra.mxu0 0.0
        %1626 = vmatprep.subr.mxu0 0.0
        %1627 = vmatpush2.msra.mxu0 0.0
        %1628 = vmatprep.subr.mxu0 0.0
        %1629 = vmatpush2.msra.mxu0 0.0
        %1630 = vmatprep.subr.mxu0 0.0
        %1631 = vmatpush2.msra.mxu0 0.0
        %1632 = vmatprep.subr.mxu0 0.0
        %1633 = vmatpush2.msra.mxu0 0.0
        %1634 = vmatprep.subr.mxu0 0.0
        %1635 = vmatpush2.msra.mxu0 0.0
        %1636 = vmatprep.subr.mxu0 0.0
        %1637 = vmatpush2.msra.mxu0 0.0
        %1638 = vmatprep.subr.mxu0 0.0
        %1639 = vmatpush2.msra.mxu0 0.0
        %1640 = vmatprep.mubr.f32.mxu0 0.0
        %1641 = vmatmul.mubr.f32.gmra.mxu0 %v1574
        %v1642 = vpop.f32.mrf.mxu0
        %v1643 = vadd.f32 0.0, %v1642
        %v1644 = vpop.f32.mrf.mxu0
        %1645 = vdwg.mxu0
        %s1646 = scalar_lea.vmem %s3, 16
        %v1647 = vld [vmem:[%s1646] sm:$0xff]
        %v1649 = vsel %vm536, %v1643, 0
        %1651 = vmatprep.subr.mxu0 0.0
        %1652 = vmatpush1.msra.mxu0 0.0
        %1653 = vmatprep.subr.mxu0 0.0
        %1654 = vmatpush1.msra.mxu0 0.0
        %1655 = vmatprep.subr.mxu0 0.0
        %1656 = vmatpush1.msra.mxu0 0.0
        %1657 = vmatprep.subr.mxu0 0.0
        %1658 = vmatpush1.msra.mxu0 0.0
        %1659 = vmatprep.subr.mxu0 0.0
        %1660 = vmatpush1.msra.mxu0 0.0
        %1661 = vmatprep.subr.mxu0 0.0
        %1662 = vmatpush1.msra.mxu0 0.0
        %1663 = vmatprep.subr.mxu0 0.0
        %1664 = vmatpush1.msra.mxu0 0.0
        %1665 = vmatprep.subr.mxu0 0.0
        %1666 = vmatpush1.msra.mxu0 0.0
        %1667 = vmatprep.subr.mxu0 0.0
        %1668 = vmatpush1.msra.mxu0 0.0
        %1669 = vmatprep.subr.mxu0 0.0
        %1670 = vmatpush1.msra.mxu0 0.0
        %1671 = vmatprep.subr.mxu0 0.0
        %1672 = vmatpush1.msra.mxu0 0.0
        %1673 = vmatprep.subr.mxu0 0.0
        %1674 = vmatpush1.msra.mxu0 0.0
        %1675 = vmatprep.subr.mxu0 0.0
        %1676 = vmatpush1.msra.mxu0 0.0
        %1677 = vmatprep.subr.mxu0 0.0
        %1678 = vmatpush1.msra.mxu0 0.0
        %1679 = vmatprep.subr.mxu0 0.0
        %1680 = vmatpush1.msra.mxu0 0.0
        %1681 = vmatprep.subr.mxu0 0.0
        %1682 = vmatpush1.msra.mxu0 %v1647
        %1683 = vmatprep.subr.mxu0 0.0
        %1684 = vmatpush2.msra.mxu0 0.0
        %1685 = vmatprep.subr.mxu0 0.0
        %1686 = vmatpush2.msra.mxu0 0.0
        %1687 = vmatprep.subr.mxu0 0.0
        %1688 = vmatpush2.msra.mxu0 0.0
        %1689 = vmatprep.subr.mxu0 0.0
        %1690 = vmatpush2.msra.mxu0 0.0
        %1691 = vmatprep.subr.mxu0 0.0
        %1692 = vmatpush2.msra.mxu0 0.0
        %1693 = vmatprep.subr.mxu0 0.0
        %1694 = vmatpush2.msra.mxu0 0.0
        %1695 = vmatprep.subr.mxu0 0.0
        %1696 = vmatpush2.msra.mxu0 0.0
        %1697 = vmatprep.subr.mxu0 0.0
        %1698 = vmatpush2.msra.mxu0 0.0
        %1699 = vmatprep.subr.mxu0 0.0
        %1700 = vmatpush2.msra.mxu0 0.0
        %1701 = vmatprep.subr.mxu0 0.0
        %1702 = vmatpush2.msra.mxu0 0.0
        %1703 = vmatprep.subr.mxu0 0.0
        %1704 = vmatpush2.msra.mxu0 0.0
        %1705 = vmatprep.subr.mxu0 0.0
        %1706 = vmatpush2.msra.mxu0 0.0
        %1707 = vmatprep.subr.mxu0 0.0
        %1708 = vmatpush2.msra.mxu0 0.0
        %1709 = vmatprep.subr.mxu0 0.0
        %1710 = vmatpush2.msra.mxu0 0.0
        %1711 = vmatprep.subr.mxu0 0.0
        %1712 = vmatpush2.msra.mxu0 0.0
        %1713 = vmatprep.subr.mxu0 0.0
        %1714 = vmatpush2.msra.mxu0 0.0
        %1715 = vmatprep.mubr.f32.mxu0 0.0
        %1716 = vmatmul.mubr.f32.gmra.mxu0 %v1649
        %v1717 = vpop.f32.mrf.mxu0
        %v1718 = vadd.f32 0.0, %v1717
        %v1719 = vpop.f32.mrf.mxu0
        %1720 = vdwg.mxu0
        %v1721 = vadd.f32 %v1243, %v1718
        %s1722 = scalar_lea.vmem %s2, 96
        %v1723 = vld [vmem:[%s1722] sm:$0xff]
        %v1724 = vld [vmem:[%s1722 + $0x8] sm:$0xff]
        %v1725 = vld [vmem:[%s1722 + $0x10] sm:$0xff]
        %v1726 = vld [vmem:[%s1722 + $0x18] sm:$0xff]
        %v1727 = vld [vmem:[%s6 + $0x3] sm:$0x1]
        %v1728 = vlaneseq
        %v1729 = vshrl.u32 %v1728, 7
        %v1730 = vsub.s32 0, %v1729
        %v1731 = vrot.slane %v1727, %v1730
        %1732 = vmatprep.subr.mxu0 0.0
        %1733 = vmatpush1.msra.mxu0 0.0
        %1734 = vmatprep.subr.mxu0 0.0
        %1735 = vmatpush1.msra.mxu0 0.0
        %1736 = vmatprep.subr.mxu0 0.0
        %1737 = vmatpush1.msra.mxu0 0.0
        %1738 = vmatprep.subr.mxu0 0.0
        %1739 = vmatpush1.msra.mxu0 0.0
        %1740 = vmatprep.subr.mxu0 0.0
        %1741 = vmatpush1.msra.mxu0 0.0
        %1742 = vmatprep.subr.mxu0 0.0
        %1743 = vmatpush1.msra.mxu0 0.0
        %1744 = vmatprep.subr.mxu0 0.0
        %1745 = vmatpush1.msra.mxu0 0.0
        %1746 = vmatprep.subr.mxu0 0.0
        %1747 = vmatpush1.msra.mxu0 0.0
        %1748 = vmatprep.subr.mxu0 0.0
        %1749 = vmatpush1.msra.mxu0 0.0
        %1750 = vmatprep.subr.mxu0 0.0
        %1751 = vmatpush1.msra.mxu0 0.0
        %1752 = vmatprep.subr.mxu0 0.0
        %1753 = vmatpush1.msra.mxu0 0.0
        %1754 = vmatprep.subr.mxu0 0.0
        %1755 = vmatpush1.msra.mxu0 0.0
        %1756 = vmatprep.subr.mxu0 0.0
        %1757 = vmatpush1.msra.mxu0 %v1726
        %1758 = vmatprep.subr.mxu0 0.0
        %1759 = vmatpush1.msra.mxu0 %v1725
        %1760 = vmatprep.subr.mxu0 0.0
        %1761 = vmatpush1.msra.mxu0 %v1724
        %1762 = vmatprep.subr.mxu0 0.0
        %1763 = vmatpush1.msra.mxu0 %v1723
        %1764 = vmatprep.subr.mxu0 0.0
        %1765 = vmatpush2.msra.mxu0 0.0
        %1766 = vmatprep.subr.mxu0 0.0
        %1767 = vmatpush2.msra.mxu0 0.0
        %1768 = vmatprep.subr.mxu0 0.0
        %1769 = vmatpush2.msra.mxu0 0.0
        %1770 = vmatprep.subr.mxu0 0.0
        %1771 = vmatpush2.msra.mxu0 0.0
        %1772 = vmatprep.subr.mxu0 0.0
        %1773 = vmatpush2.msra.mxu0 0.0
        %1774 = vmatprep.subr.mxu0 0.0
        %1775 = vmatpush2.msra.mxu0 0.0
        %1776 = vmatprep.subr.mxu0 0.0
        %1777 = vmatpush2.msra.mxu0 0.0
        %1778 = vmatprep.subr.mxu0 0.0
        %1779 = vmatpush2.msra.mxu0 0.0
        %1780 = vmatprep.subr.mxu0 0.0
        %1781 = vmatpush2.msra.mxu0 0.0
        %1782 = vmatprep.subr.mxu0 0.0
        %1783 = vmatpush2.msra.mxu0 0.0
        %1784 = vmatprep.subr.mxu0 0.0
        %1785 = vmatpush2.msra.mxu0 0.0
        %1786 = vmatprep.subr.mxu0 0.0
        %1787 = vmatpush2.msra.mxu0 0.0
        %1788 = vmatprep.subr.mxu0 0.0
        %1789 = vmatpush2.msra.mxu0 0.0
        %1790 = vmatprep.subr.mxu0 0.0
        %1791 = vmatpush2.msra.mxu0 0.0
        %1792 = vmatprep.subr.mxu0 0.0
        %1793 = vmatpush2.msra.mxu0 0.0
        %1794 = vmatprep.subr.mxu0 0.0
        %1795 = vmatpush2.msra.mxu0 0.0
        %1796 = vmatprep.mubr.f32.mxu0 0.0
        %1797 = vmatmul.mubr.f32.gmra.mxu0 %v304
        %v1798 = vpop.f32.mrf.mxu0
        %v1799 = vadd.f32 %v1731, %v1798
        %v1800 = vpop.f32.mrf.mxu0
        %1801 = vdwg.mxu0
        %s1802 = scalar_lea.vmem %s2, 224
        %v1803 = vld [vmem:[%s1802] sm:$0xff]
        %v1804 = vld [vmem:[%s1802 + $0x8] sm:$0xff]
        %v1805 = vld [vmem:[%s1802 + $0x10] sm:$0xff]
        %v1806 = vld [vmem:[%s1802 + $0x18] sm:$0xff]
        %v1807 = vld [vmem:[%s6 + $0x7] sm:$0x1]
        %v1808 = vlaneseq
        %v1809 = vshrl.u32 %v1808, 7
        %v1810 = vsub.s32 0, %v1809
        %v1811 = vrot.slane %v1807, %v1810
        %1812 = vmatprep.subr.mxu0 0.0
        %1813 = vmatpush1.msra.mxu0 0.0
        %1814 = vmatprep.subr.mxu0 0.0
        %1815 = vmatpush1.msra.mxu0 0.0
        %1816 = vmatprep.subr.mxu0 0.0
        %1817 = vmatpush1.msra.mxu0 0.0
        %1818 = vmatprep.subr.mxu0 0.0
        %1819 = vmatpush1.msra.mxu0 0.0
        %1820 = vmatprep.subr.mxu0 0.0
        %1821 = vmatpush1.msra.mxu0 0.0
        %1822 = vmatprep.subr.mxu0 0.0
        %1823 = vmatpush1.msra.mxu0 0.0
        %1824 = vmatprep.subr.mxu0 0.0
        %1825 = vmatpush1.msra.mxu0 0.0
        %1826 = vmatprep.subr.mxu0 0.0
        %1827 = vmatpush1.msra.mxu0 0.0
        %1828 = vmatprep.subr.mxu0 0.0
        %1829 = vmatpush1.msra.mxu0 0.0
        %1830 = vmatprep.subr.mxu0 0.0
        %1831 = vmatpush1.msra.mxu0 0.0
        %1832 = vmatprep.subr.mxu0 0.0
        %1833 = vmatpush1.msra.mxu0 0.0
        %1834 = vmatprep.subr.mxu0 0.0
        %1835 = vmatpush1.msra.mxu0 0.0
        %1836 = vmatprep.subr.mxu0 0.0
        %1837 = vmatpush1.msra.mxu0 %v1806
        %1838 = vmatprep.subr.mxu0 0.0
        %1839 = vmatpush1.msra.mxu0 %v1805
        %1840 = vmatprep.subr.mxu0 0.0
        %1841 = vmatpush1.msra.mxu0 %v1804
        %1842 = vmatprep.subr.mxu0 0.0
        %1843 = vmatpush1.msra.mxu0 %v1803
        %1844 = vmatprep.subr.mxu0 0.0
        %1845 = vmatpush2.msra.mxu0 0.0
        %1846 = vmatprep.subr.mxu0 0.0
        %1847 = vmatpush2.msra.mxu0 0.0
        %1848 = vmatprep.subr.mxu0 0.0
        %1849 = vmatpush2.msra.mxu0 0.0
        %1850 = vmatprep.subr.mxu0 0.0
        %1851 = vmatpush2.msra.mxu0 0.0
        %1852 = vmatprep.subr.mxu0 0.0
        %1853 = vmatpush2.msra.mxu0 0.0
        %1854 = vmatprep.subr.mxu0 0.0
        %1855 = vmatpush2.msra.mxu0 0.0
        %1856 = vmatprep.subr.mxu0 0.0
        %1857 = vmatpush2.msra.mxu0 0.0
        %1858 = vmatprep.subr.mxu0 0.0
        %1859 = vmatpush2.msra.mxu0 0.0
        %1860 = vmatprep.subr.mxu0 0.0
        %1861 = vmatpush2.msra.mxu0 0.0
        %1862 = vmatprep.subr.mxu0 0.0
        %1863 = vmatpush2.msra.mxu0 0.0
        %1864 = vmatprep.subr.mxu0 0.0
        %1865 = vmatpush2.msra.mxu0 0.0
        %1866 = vmatprep.subr.mxu0 0.0
        %1867 = vmatpush2.msra.mxu0 0.0
        %1868 = vmatprep.subr.mxu0 0.0
        %1869 = vmatpush2.msra.mxu0 0.0
        %1870 = vmatprep.subr.mxu0 0.0
        %1871 = vmatpush2.msra.mxu0 0.0
        %1872 = vmatprep.subr.mxu0 0.0
        %1873 = vmatpush2.msra.mxu0 0.0
        %1874 = vmatprep.subr.mxu0 0.0
        %1875 = vmatpush2.msra.mxu0 0.0
        %1876 = vmatprep.mubr.f32.mxu0 0.0
        %1877 = vmatmul.mubr.f32.gmra.mxu0 %v304
        %v1878 = vpop.f32.mrf.mxu0
        %v1879 = vadd.f32 %v1811, %v1878
        %v1880 = vpop.f32.mrf.mxu0
        %1881 = vdwg.mxu0
        %s1882 = scalar_lea.vmem %s2, 352
        %v1883 = vld [vmem:[%s1882] sm:$0xff]
        %v1884 = vld [vmem:[%s1882 + $0x8] sm:$0xff]
        %v1885 = vld [vmem:[%s1882 + $0x10] sm:$0xff]
        %v1886 = vld [vmem:[%s1882 + $0x18] sm:$0xff]
        %v1887 = vld [vmem:[%s6 + $0xb] sm:$0x1]
        %v1888 = vlaneseq
        %v1889 = vshrl.u32 %v1888, 7
        %v1890 = vsub.s32 0, %v1889
        %v1891 = vrot.slane %v1887, %v1890
        %1892 = vmatprep.subr.mxu0 0.0
        %1893 = vmatpush1.msra.mxu0 0.0
        %1894 = vmatprep.subr.mxu0 0.0
        %1895 = vmatpush1.msra.mxu0 0.0
        %1896 = vmatprep.subr.mxu0 0.0
        %1897 = vmatpush1.msra.mxu0 0.0
        %1898 = vmatprep.subr.mxu0 0.0
        %1899 = vmatpush1.msra.mxu0 0.0
        %1900 = vmatprep.subr.mxu0 0.0
        %1901 = vmatpush1.msra.mxu0 0.0
        %1902 = vmatprep.subr.mxu0 0.0
        %1903 = vmatpush1.msra.mxu0 0.0
        %1904 = vmatprep.subr.mxu0 0.0
        %1905 = vmatpush1.msra.mxu0 0.0
        %1906 = vmatprep.subr.mxu0 0.0
        %1907 = vmatpush1.msra.mxu0 0.0
        %1908 = vmatprep.subr.mxu0 0.0
        %1909 = vmatpush1.msra.mxu0 0.0
        %1910 = vmatprep.subr.mxu0 0.0
        %1911 = vmatpush1.msra.mxu0 0.0
        %1912 = vmatprep.subr.mxu0 0.0
        %1913 = vmatpush1.msra.mxu0 0.0
        %1914 = vmatprep.subr.mxu0 0.0
        %1915 = vmatpush1.msra.mxu0 0.0
        %1916 = vmatprep.subr.mxu0 0.0
        %1917 = vmatpush1.msra.mxu0 %v1886
        %1918 = vmatprep.subr.mxu0 0.0
        %1919 = vmatpush1.msra.mxu0 %v1885
        %1920 = vmatprep.subr.mxu0 0.0
        %1921 = vmatpush1.msra.mxu0 %v1884
        %1922 = vmatprep.subr.mxu0 0.0
        %1923 = vmatpush1.msra.mxu0 %v1883
        %1924 = vmatprep.subr.mxu0 0.0
        %1925 = vmatpush2.msra.mxu0 0.0
        %1926 = vmatprep.subr.mxu0 0.0
        %1927 = vmatpush2.msra.mxu0 0.0
        %1928 = vmatprep.subr.mxu0 0.0
        %1929 = vmatpush2.msra.mxu0 0.0
        %1930 = vmatprep.subr.mxu0 0.0
        %1931 = vmatpush2.msra.mxu0 0.0
        %1932 = vmatprep.subr.mxu0 0.0
        %1933 = vmatpush2.msra.mxu0 0.0
        %1934 = vmatprep.subr.mxu0 0.0
        %1935 = vmatpush2.msra.mxu0 0.0
        %1936 = vmatprep.subr.mxu0 0.0
        %1937 = vmatpush2.msra.mxu0 0.0
        %1938 = vmatprep.subr.mxu0 0.0
        %1939 = vmatpush2.msra.mxu0 0.0
        %1940 = vmatprep.subr.mxu0 0.0
        %1941 = vmatpush2.msra.mxu0 0.0
        %1942 = vmatprep.subr.mxu0 0.0
        %1943 = vmatpush2.msra.mxu0 0.0
        %1944 = vmatprep.subr.mxu0 0.0
        %1945 = vmatpush2.msra.mxu0 0.0
        %1946 = vmatprep.subr.mxu0 0.0
        %1947 = vmatpush2.msra.mxu0 0.0
        %1948 = vmatprep.subr.mxu0 0.0
        %1949 = vmatpush2.msra.mxu0 0.0
        %1950 = vmatprep.subr.mxu0 0.0
        %1951 = vmatpush2.msra.mxu0 0.0
        %1952 = vmatprep.subr.mxu0 0.0
        %1953 = vmatpush2.msra.mxu0 0.0
        %1954 = vmatprep.subr.mxu0 0.0
        %1955 = vmatpush2.msra.mxu0 0.0
        %1956 = vmatprep.mubr.f32.mxu0 0.0
        %1957 = vmatmul.mubr.f32.gmra.mxu0 %v304
        %v1958 = vpop.f32.mrf.mxu0
        %v1959 = vadd.f32 %v1891, %v1958
        %v1960 = vpop.f32.mrf.mxu0
        %1961 = vdwg.mxu0
        %v1963 = vsel %vm536, %v1799, 0
        %v1966 = vsel %vm536, %v1879, 0
        %1968 = vmatprep.subr.mxu0 0.0
        %1969 = vmatpush1.xpose.msra.mxu0 0.0
        %1970 = vmatprep.subr.mxu0 0.0
        %1971 = vmatpush1.xpose.msra.mxu0 0.0
        %1972 = vmatprep.subr.mxu0 0.0
        %1973 = vmatpush1.xpose.msra.mxu0 0.0
        %1974 = vmatprep.subr.mxu0 0.0
        %1975 = vmatpush1.xpose.msra.mxu0 0.0
        %1976 = vmatprep.subr.mxu0 0.0
        %1977 = vmatpush1.xpose.msra.mxu0 0.0
        %1978 = vmatprep.subr.mxu0 0.0
        %1979 = vmatpush1.xpose.msra.mxu0 0.0
        %1980 = vmatprep.subr.mxu0 0.0
        %1981 = vmatpush1.xpose.msra.mxu0 0.0
        %1982 = vmatprep.subr.mxu0 0.0
        %1983 = vmatpush1.xpose.msra.mxu0 0.0
        %1984 = vmatprep.subr.mxu0 0.0
        %1985 = vmatpush1.xpose.msra.mxu0 0.0
        %1986 = vmatprep.subr.mxu0 0.0
        %1987 = vmatpush1.xpose.msra.mxu0 0.0
        %1988 = vmatprep.subr.mxu0 0.0
        %1989 = vmatpush1.xpose.msra.mxu0 0.0
        %1990 = vmatprep.subr.mxu0 0.0
        %1991 = vmatpush1.xpose.msra.mxu0 0.0
        %1992 = vmatprep.subr.mxu0 0.0
        %1993 = vmatpush1.xpose.msra.mxu0 0.0
        %1994 = vmatprep.subr.mxu0 0.0
        %1995 = vmatpush1.xpose.msra.mxu0 0.0
        %1996 = vmatprep.subr.mxu0 0.0
        %1997 = vmatpush1.xpose.msra.mxu0 0.0
        %1998 = vmatprep.subr.mxu0 0.0
        %1999 = vmatpush1.xpose.msra.mxu0 %v1966
        %2000 = vmatprep.subr.mxu0 0.0
        %2001 = vmatpush2.xpose.msra.mxu0 0.0
        %2002 = vmatprep.subr.mxu0 0.0
        %2003 = vmatpush2.xpose.msra.mxu0 0.0
        %2004 = vmatprep.subr.mxu0 0.0
        %2005 = vmatpush2.xpose.msra.mxu0 0.0
        %2006 = vmatprep.subr.mxu0 0.0
        %2007 = vmatpush2.xpose.msra.mxu0 0.0
        %2008 = vmatprep.subr.mxu0 0.0
        %2009 = vmatpush2.xpose.msra.mxu0 0.0
        %2010 = vmatprep.subr.mxu0 0.0
        %2011 = vmatpush2.xpose.msra.mxu0 0.0
        %2012 = vmatprep.subr.mxu0 0.0
        %2013 = vmatpush2.xpose.msra.mxu0 0.0
        %2014 = vmatprep.subr.mxu0 0.0
        %2015 = vmatpush2.xpose.msra.mxu0 0.0
        %2016 = vmatprep.subr.mxu0 0.0
        %2017 = vmatpush2.xpose.msra.mxu0 0.0
        %2018 = vmatprep.subr.mxu0 0.0
        %2019 = vmatpush2.xpose.msra.mxu0 0.0
        %2020 = vmatprep.subr.mxu0 0.0
        %2021 = vmatpush2.xpose.msra.mxu0 0.0
        %2022 = vmatprep.subr.mxu0 0.0
        %2023 = vmatpush2.xpose.msra.mxu0 0.0
        %2024 = vmatprep.subr.mxu0 0.0
        %2025 = vmatpush2.xpose.msra.mxu0 0.0
        %2026 = vmatprep.subr.mxu0 0.0
        %2027 = vmatpush2.xpose.msra.mxu0 0.0
        %2028 = vmatprep.subr.mxu0 0.0
        %2029 = vmatpush2.xpose.msra.mxu0 0.0
        %2030 = vmatprep.subr.mxu0 0.0
        %2031 = vmatpush2.xpose.msra.mxu0 0.0
        %2032 = vmatprep.mubr.f32.mxu0 0.0
        %2033 = vmatmul.mubr.f32.gmra.mxu0 %v1963
        %v2034 = vpop.f32.mrf.mxu0
        %v2035 = vadd.f32 0.0, %v2034
        %v2036 = vpop.f32.mrf.mxu0
        %2037 = vdwg.mxu0
        %v2038 = vsel %vm536, %v2035, -inf
        %2039 = vmax.xlane.f32.xlu0 %v2038
        %v2040 = vpop.xlane.xlu0 %2039
        %v2041 = vsub.f32 %v2035, %v2040
        %v2042 = vmul.f32 %v2041, 1.442695
        %v2043 = vpow.pop %v2042
        %v2044 = vsel %vm536, %v2043, 0.0
        %2045 = vadd.xlane.f32.xlu0 %v2044
        %v2046 = vpop.xlane.xlu0 %2045
        %v2047 = vrcp.pop %v2046
        %v2048 = vmul.f32 %v2043, %v2047
        %v2050 = vsel %vm536, %v2048, 0
        %2052 = vmatprep.subr.mxu0 0.0
        %2053 = vmatpush1.msra.mxu0 0.0
        %2054 = vmatprep.subr.mxu0 0.0
        %2055 = vmatpush1.msra.mxu0 0.0
        %2056 = vmatprep.subr.mxu0 0.0
        %2057 = vmatpush1.msra.mxu0 0.0
        %2058 = vmatprep.subr.mxu0 0.0
        %2059 = vmatpush1.msra.mxu0 0.0
        %2060 = vmatprep.subr.mxu0 0.0
        %2061 = vmatpush1.msra.mxu0 0.0
        %2062 = vmatprep.subr.mxu0 0.0
        %2063 = vmatpush1.msra.mxu0 0.0
        %2064 = vmatprep.subr.mxu0 0.0
        %2065 = vmatpush1.msra.mxu0 0.0
        %2066 = vmatprep.subr.mxu0 0.0
        %2067 = vmatpush1.msra.mxu0 0.0
        %2068 = vmatprep.subr.mxu0 0.0
        %2069 = vmatpush1.msra.mxu0 0.0
        %2070 = vmatprep.subr.mxu0 0.0
        %2071 = vmatpush1.msra.mxu0 0.0
        %2072 = vmatprep.subr.mxu0 0.0
        %2073 = vmatpush1.msra.mxu0 0.0
        %2074 = vmatprep.subr.mxu0 0.0
        %2075 = vmatpush1.msra.mxu0 0.0
        %2076 = vmatprep.subr.mxu0 0.0
        %2077 = vmatpush1.msra.mxu0 0.0
        %2078 = vmatprep.subr.mxu0 0.0
        %2079 = vmatpush1.msra.mxu0 0.0
        %2080 = vmatprep.subr.mxu0 0.0
        %2081 = vmatpush1.msra.mxu0 0.0
        %2082 = vmatprep.subr.mxu0 0.0
        %2083 = vmatpush1.msra.mxu0 %v1959
        %2084 = vmatprep.subr.mxu0 0.0
        %2085 = vmatpush2.msra.mxu0 0.0
        %2086 = vmatprep.subr.mxu0 0.0
        %2087 = vmatpush2.msra.mxu0 0.0
        %2088 = vmatprep.subr.mxu0 0.0
        %2089 = vmatpush2.msra.mxu0 0.0
        %2090 = vmatprep.subr.mxu0 0.0
        %2091 = vmatpush2.msra.mxu0 0.0
        %2092 = vmatprep.subr.mxu0 0.0
        %2093 = vmatpush2.msra.mxu0 0.0
        %2094 = vmatprep.subr.mxu0 0.0
        %2095 = vmatpush2.msra.mxu0 0.0
        %2096 = vmatprep.subr.mxu0 0.0
        %2097 = vmatpush2.msra.mxu0 0.0
        %2098 = vmatprep.subr.mxu0 0.0
        %2099 = vmatpush2.msra.mxu0 0.0
        %2100 = vmatprep.subr.mxu0 0.0
        %2101 = vmatpush2.msra.mxu0 0.0
        %2102 = vmatprep.subr.mxu0 0.0
        %2103 = vmatpush2.msra.mxu0 0.0
        %2104 = vmatprep.subr.mxu0 0.0
        %2105 = vmatpush2.msra.mxu0 0.0
        %2106 = vmatprep.subr.mxu0 0.0
        %2107 = vmatpush2.msra.mxu0 0.0
        %2108 = vmatprep.subr.mxu0 0.0
        %2109 = vmatpush2.msra.mxu0 0.0
        %2110 = vmatprep.subr.mxu0 0.0
        %2111 = vmatpush2.msra.mxu0 0.0
        %2112 = vmatprep.subr.mxu0 0.0
        %2113 = vmatpush2.msra.mxu0 0.0
        %2114 = vmatprep.subr.mxu0 0.0
        %2115 = vmatpush2.msra.mxu0 0.0
        %2116 = vmatprep.mubr.f32.mxu0 0.0
        %2117 = vmatmul.mubr.f32.gmra.mxu0 %v2050
        %v2118 = vpop.f32.mrf.mxu0
        %v2119 = vadd.f32 0.0, %v2118
        %v2120 = vpop.f32.mrf.mxu0
        %2121 = vdwg.mxu0
        %s2122 = scalar_lea.vmem %s3, 24
        %v2123 = vld [vmem:[%s2122] sm:$0xff]
        %v2125 = vsel %vm536, %v2119, 0
        %2127 = vmatprep.subr.mxu0 0.0
        %2128 = vmatpush1.msra.mxu0 0.0
        %2129 = vmatprep.subr.mxu0 0.0
        %2130 = vmatpush1.msra.mxu0 0.0
        %2131 = vmatprep.subr.mxu0 0.0
        %2132 = vmatpush1.msra.mxu0 0.0
        %2133 = vmatprep.subr.mxu0 0.0
        %2134 = vmatpush1.msra.mxu0 0.0
        %2135 = vmatprep.subr.mxu0 0.0
        %2136 = vmatpush1.msra.mxu0 0.0
        %2137 = vmatprep.subr.mxu0 0.0
        %2138 = vmatpush1.msra.mxu0 0.0
        %2139 = vmatprep.subr.mxu0 0.0
        %2140 = vmatpush1.msra.mxu0 0.0
        %2141 = vmatprep.subr.mxu0 0.0
        %2142 = vmatpush1.msra.mxu0 0.0
        %2143 = vmatprep.subr.mxu0 0.0
        %2144 = vmatpush1.msra.mxu0 0.0
        %2145 = vmatprep.subr.mxu0 0.0
        %2146 = vmatpush1.msra.mxu0 0.0
        %2147 = vmatprep.subr.mxu0 0.0
        %2148 = vmatpush1.msra.mxu0 0.0
        %2149 = vmatprep.subr.mxu0 0.0
        %2150 = vmatpush1.msra.mxu0 0.0
        %2151 = vmatprep.subr.mxu0 0.0
        %2152 = vmatpush1.msra.mxu0 0.0
        %2153 = vmatprep.subr.mxu0 0.0
        %2154 = vmatpush1.msra.mxu0 0.0
        %2155 = vmatprep.subr.mxu0 0.0
        %2156 = vmatpush1.msra.mxu0 0.0
        %2157 = vmatprep.subr.mxu0 0.0
        %2158 = vmatpush1.msra.mxu0 %v2123
        %2159 = vmatprep.subr.mxu0 0.0
        %2160 = vmatpush2.msra.mxu0 0.0
        %2161 = vmatprep.subr.mxu0 0.0
        %2162 = vmatpush2.msra.mxu0 0.0
        %2163 = vmatprep.subr.mxu0 0.0
        %2164 = vmatpush2.msra.mxu0 0.0
        %2165 = vmatprep.subr.mxu0 0.0
        %2166 = vmatpush2.msra.mxu0 0.0
        %2167 = vmatprep.subr.mxu0 0.0
        %2168 = vmatpush2.msra.mxu0 0.0
        %2169 = vmatprep.subr.mxu0 0.0
        %2170 = vmatpush2.msra.mxu0 0.0
        %2171 = vmatprep.subr.mxu0 0.0
        %2172 = vmatpush2.msra.mxu0 0.0
        %2173 = vmatprep.subr.mxu0 0.0
        %2174 = vmatpush2.msra.mxu0 0.0
        %2175 = vmatprep.subr.mxu0 0.0
        %2176 = vmatpush2.msra.mxu0 0.0
        %2177 = vmatprep.subr.mxu0 0.0
        %2178 = vmatpush2.msra.mxu0 0.0
        %2179 = vmatprep.subr.mxu0 0.0
        %2180 = vmatpush2.msra.mxu0 0.0
        %2181 = vmatprep.subr.mxu0 0.0
        %2182 = vmatpush2.msra.mxu0 0.0
        %2183 = vmatprep.subr.mxu0 0.0
        %2184 = vmatpush2.msra.mxu0 0.0
        %2185 = vmatprep.subr.mxu0 0.0
        %2186 = vmatpush2.msra.mxu0 0.0
        %2187 = vmatprep.subr.mxu0 0.0
        %2188 = vmatpush2.msra.mxu0 0.0
        %2189 = vmatprep.subr.mxu0 0.0
        %2190 = vmatpush2.msra.mxu0 0.0
        %2191 = vmatprep.mubr.f32.mxu0 0.0
        %2192 = vmatmul.mubr.f32.gmra.mxu0 %v2125
        %v2193 = vpop.f32.mrf.mxu0
        %v2194 = vadd.f32 0.0, %v2193
        %v2195 = vpop.f32.mrf.mxu0
        %2196 = vdwg.mxu0
        %v2197 = vadd.f32 %v1721, %v2194
        %v2198 = vld [vmem:[%s6 + $0x18] sm:$0x1]
        %v2199 = vlaneseq
        %v2200 = vshrl.u32 %v2199, 7
        %v2201 = vsub.s32 0, %v2200
        %v2202 = vrot.slane %v2198, %v2201
        %v2203 = vadd.f32 %v2197, %v2202
        %v2204 = vadd.f32 %v291, %v2203
        %v2205 = vld [vmem:[%s6 + $0x1c] sm:$0x1]
        %v2206 = vld [vmem:[%s6 + $0x1d] sm:$0x1]
        %v2207 = vsel %vm302, %v2204, 0.0
        %2208 = vadd.xlane.f32.xlu0 %v2207
        %v2209 = vpop.xlane.xlu0 %2208
        %v2210 = vrcp.pop 32.0
        %v2211 = vmul.f32 %v2209, %v2210
        %v2212 = vsub.f32 %v2204, %v2211
        %v2213 = vmul.f32 %v2212, %v2212
        %v2214 = vsel %vm302, %v2213, 0.0
        %2215 = vadd.xlane.f32.xlu0 %v2214
        %v2216 = vpop.xlane.xlu0 %2215
        %v2217 = vmul.f32 %v2216, %v2210
        %v2218 = vadd.f32 %v2217, 1e-05
        %v2219 = vrsqrt.pop %v2218
        %v2220 = vmul.f32 %v2212, %v2219
        %v2221 = vlaneseq
        %v2222 = vshrl.u32 %v2221, 7
        %v2223 = vsub.s32 0, %v2222
        %v2224 = vrot.slane %v2205, %v2223
        %v2225 = vmul.f32 %v2220, %v2224
        %v2226 = vlaneseq
        %v2227 = vshrl.u32 %v2226, 7
        %v2228 = vsub.s32 0, %v2227
        %v2229 = vrot.slane %v2206, %v2228
        %v2230 = vadd.f32 %v2225, %v2229
        %s2231 = scalar_lea.vmem %s2, 384
        %v2232 = vld [vmem:[%s2231] sm:$0xff]
        %v2233 = vld [vmem:[%s2231 + $0x8] sm:$0xff]
        %v2234 = vld [vmem:[%s2231 + $0x10] sm:$0xff]
        %v2235 = vld [vmem:[%s2231 + $0x18] sm:$0xff]
        %v2236 = vld [vmem:[%s6 + $0xc] sm:$0x1]
        %v2237 = vlaneseq
        %v2238 = vshrl.u32 %v2237, 7
        %v2239 = vsub.s32 0, %v2238
        %v2240 = vrot.slane %v2236, %v2239
        %v2242 = vsel %vm302, %v2230, 0
        %2244 = vmatprep.subr.mxu0 0.0
        %2245 = vmatpush1.msra.mxu0 0.0
        %2246 = vmatprep.subr.mxu0 0.0
        %2247 = vmatpush1.msra.mxu0 0.0
        %2248 = vmatprep.subr.mxu0 0.0
        %2249 = vmatpush1.msra.mxu0 0.0
        %2250 = vmatprep.subr.mxu0 0.0
        %2251 = vmatpush1.msra.mxu0 0.0
        %2252 = vmatprep.subr.mxu0 0.0
        %2253 = vmatpush1.msra.mxu0 0.0
        %2254 = vmatprep.subr.mxu0 0.0
        %2255 = vmatpush1.msra.mxu0 0.0
        %2256 = vmatprep.subr.mxu0 0.0
        %2257 = vmatpush1.msra.mxu0 0.0
        %2258 = vmatprep.subr.mxu0 0.0
        %2259 = vmatpush1.msra.mxu0 0.0
        %2260 = vmatprep.subr.mxu0 0.0
        %2261 = vmatpush1.msra.mxu0 0.0
        %2262 = vmatprep.subr.mxu0 0.0
        %2263 = vmatpush1.msra.mxu0 0.0
        %2264 = vmatprep.subr.mxu0 0.0
        %2265 = vmatpush1.msra.mxu0 0.0
        %2266 = vmatprep.subr.mxu0 0.0
        %2267 = vmatpush1.msra.mxu0 0.0
        %2268 = vmatprep.subr.mxu0 0.0
        %2269 = vmatpush1.msra.mxu0 %v2235
        %2270 = vmatprep.subr.mxu0 0.0
        %2271 = vmatpush1.msra.mxu0 %v2234
        %2272 = vmatprep.subr.mxu0 0.0
        %2273 = vmatpush1.msra.mxu0 %v2233
        %2274 = vmatprep.subr.mxu0 0.0
        %2275 = vmatpush1.msra.mxu0 %v2232
        %2276 = vmatprep.subr.mxu0 0.0
        %2277 = vmatpush2.msra.mxu0 0.0
        %2278 = vmatprep.subr.mxu0 0.0
        %2279 = vmatpush2.msra.mxu0 0.0
        %2280 = vmatprep.subr.mxu0 0.0
        %2281 = vmatpush2.msra.mxu0 0.0
        %2282 = vmatprep.subr.mxu0 0.0
        %2283 = vmatpush2.msra.mxu0 0.0
        %2284 = vmatprep.subr.mxu0 0.0
        %2285 = vmatpush2.msra.mxu0 0.0
        %2286 = vmatprep.subr.mxu0 0.0
        %2287 = vmatpush2.msra.mxu0 0.0
        %2288 = vmatprep.subr.mxu0 0.0
        %2289 = vmatpush2.msra.mxu0 0.0
        %2290 = vmatprep.subr.mxu0 0.0
        %2291 = vmatpush2.msra.mxu0 0.0
        %2292 = vmatprep.subr.mxu0 0.0
        %2293 = vmatpush2.msra.mxu0 0.0
        %2294 = vmatprep.subr.mxu0 0.0
        %2295 = vmatpush2.msra.mxu0 0.0
        %2296 = vmatprep.subr.mxu0 0.0
        %2297 = vmatpush2.msra.mxu0 0.0
        %2298 = vmatprep.subr.mxu0 0.0
        %2299 = vmatpush2.msra.mxu0 0.0
        %2300 = vmatprep.subr.mxu0 0.0
        %2301 = vmatpush2.msra.mxu0 0.0
        %2302 = vmatprep.subr.mxu0 0.0
        %2303 = vmatpush2.msra.mxu0 0.0
        %2304 = vmatprep.subr.mxu0 0.0
        %2305 = vmatpush2.msra.mxu0 0.0
        %2306 = vmatprep.subr.mxu0 0.0
        %2307 = vmatpush2.msra.mxu0 0.0
        %2308 = vmatprep.mubr.f32.mxu0 0.0
        %2309 = vmatmul.mubr.f32.gmra.mxu0 %v2242
        %v2310 = vpop.f32.mrf.mxu0
        %v2311 = vadd.f32 %v2240, %v2310
        %v2312 = vpop.f32.mrf.mxu0
        %2313 = vdwg.mxu0
        %s2314 = scalar_lea.vmem %s2, 512
        %v2315 = vld [vmem:[%s2314] sm:$0xff]
        %v2316 = vld [vmem:[%s2314 + $0x8] sm:$0xff]
        %v2317 = vld [vmem:[%s2314 + $0x10] sm:$0xff]
        %v2318 = vld [vmem:[%s2314 + $0x18] sm:$0xff]
        %v2319 = vld [vmem:[%s6 + $0x10] sm:$0x1]
        %v2320 = vlaneseq
        %v2321 = vshrl.u32 %v2320, 7
        %v2322 = vsub.s32 0, %v2321
        %v2323 = vrot.slane %v2319, %v2322
        %v2325 = vsel %vm302, %v292, 0
        %2327 = vmatprep.subr.mxu0 0.0
        %2328 = vmatpush1.msra.mxu0 0.0
        %2329 = vmatprep.subr.mxu0 0.0
        %2330 = vmatpush1.msra.mxu0 0.0
        %2331 = vmatprep.subr.mxu0 0.0
        %2332 = vmatpush1.msra.mxu0 0.0
        %2333 = vmatprep.subr.mxu0 0.0
        %2334 = vmatpush1.msra.mxu0 0.0
        %2335 = vmatprep.subr.mxu0 0.0
        %2336 = vmatpush1.msra.mxu0 0.0
        %2337 = vmatprep.subr.mxu0 0.0
        %2338 = vmatpush1.msra.mxu0 0.0
        %2339 = vmatprep.subr.mxu0 0.0
        %2340 = vmatpush1.msra.mxu0 0.0
        %2341 = vmatprep.subr.mxu0 0.0
        %2342 = vmatpush1.msra.mxu0 0.0
        %2343 = vmatprep.subr.mxu0 0.0
        %2344 = vmatpush1.msra.mxu0 0.0
        %2345 = vmatprep.subr.mxu0 0.0
        %2346 = vmatpush1.msra.mxu0 0.0
        %2347 = vmatprep.subr.mxu0 0.0
        %2348 = vmatpush1.msra.mxu0 0.0
        %2349 = vmatprep.subr.mxu0 0.0
        %2350 = vmatpush1.msra.mxu0 0.0
        %2351 = vmatprep.subr.mxu0 0.0
        %2352 = vmatpush1.msra.mxu0 %v2318
        %2353 = vmatprep.subr.mxu0 0.0
        %2354 = vmatpush1.msra.mxu0 %v2317
        %2355 = vmatprep.subr.mxu0 0.0
        %2356 = vmatpush1.msra.mxu0 %v2316
        %2357 = vmatprep.subr.mxu0 0.0
        %2358 = vmatpush1.msra.mxu0 %v2315
        %2359 = vmatprep.subr.mxu0 0.0
        %2360 = vmatpush2.msra.mxu0 0.0
        %2361 = vmatprep.subr.mxu0 0.0
        %2362 = vmatpush2.msra.mxu0 0.0
        %2363 = vmatprep.subr.mxu0 0.0
        %2364 = vmatpush2.msra.mxu0 0.0
        %2365 = vmatprep.subr.mxu0 0.0
        %2366 = vmatpush2.msra.mxu0 0.0
        %2367 = vmatprep.subr.mxu0 0.0
        %2368 = vmatpush2.msra.mxu0 0.0
        %2369 = vmatprep.subr.mxu0 0.0
        %2370 = vmatpush2.msra.mxu0 0.0
        %2371 = vmatprep.subr.mxu0 0.0
        %2372 = vmatpush2.msra.mxu0 0.0
        %2373 = vmatprep.subr.mxu0 0.0
        %2374 = vmatpush2.msra.mxu0 0.0
        %2375 = vmatprep.subr.mxu0 0.0
        %2376 = vmatpush2.msra.mxu0 0.0
        %2377 = vmatprep.subr.mxu0 0.0
        %2378 = vmatpush2.msra.mxu0 0.0
        %2379 = vmatprep.subr.mxu0 0.0
        %2380 = vmatpush2.msra.mxu0 0.0
        %2381 = vmatprep.subr.mxu0 0.0
        %2382 = vmatpush2.msra.mxu0 0.0
        %2383 = vmatprep.subr.mxu0 0.0
        %2384 = vmatpush2.msra.mxu0 0.0
        %2385 = vmatprep.subr.mxu0 0.0
        %2386 = vmatpush2.msra.mxu0 0.0
        %2387 = vmatprep.subr.mxu0 0.0
        %2388 = vmatpush2.msra.mxu0 0.0
        %2389 = vmatprep.subr.mxu0 0.0
        %2390 = vmatpush2.msra.mxu0 0.0
        %2391 = vmatprep.mubr.f32.mxu0 0.0
        %2392 = vmatmul.mubr.f32.gmra.mxu0 %v2325
        %v2393 = vpop.f32.mrf.mxu0
        %v2394 = vadd.f32 %v2323, %v2393
        %v2395 = vpop.f32.mrf.mxu0
        %2396 = vdwg.mxu0
        %s2397 = scalar_lea.vmem %s2, 640
        %v2398 = vld [vmem:[%s2397] sm:$0xff]
        %v2399 = vld [vmem:[%s2397 + $0x8] sm:$0xff]
        %v2400 = vld [vmem:[%s2397 + $0x10] sm:$0xff]
        %v2401 = vld [vmem:[%s2397 + $0x18] sm:$0xff]
        %v2402 = vld [vmem:[%s6 + $0x14] sm:$0x1]
        %v2403 = vlaneseq
        %v2404 = vshrl.u32 %v2403, 7
        %v2405 = vsub.s32 0, %v2404
        %v2406 = vrot.slane %v2402, %v2405
        %2407 = vmatprep.subr.mxu0 0.0
        %2408 = vmatpush1.msra.mxu0 0.0
        %2409 = vmatprep.subr.mxu0 0.0
        %2410 = vmatpush1.msra.mxu0 0.0
        %2411 = vmatprep.subr.mxu0 0.0
        %2412 = vmatpush1.msra.mxu0 0.0
        %2413 = vmatprep.subr.mxu0 0.0
        %2414 = vmatpush1.msra.mxu0 0.0
        %2415 = vmatprep.subr.mxu0 0.0
        %2416 = vmatpush1.msra.mxu0 0.0
        %2417 = vmatprep.subr.mxu0 0.0
        %2418 = vmatpush1.msra.mxu0 0.0
        %2419 = vmatprep.subr.mxu0 0.0
        %2420 = vmatpush1.msra.mxu0 0.0
        %2421 = vmatprep.subr.mxu0 0.0
        %2422 = vmatpush1.msra.mxu0 0.0
        %2423 = vmatprep.subr.mxu0 0.0
        %2424 = vmatpush1.msra.mxu0 0.0
        %2425 = vmatprep.subr.mxu0 0.0
        %2426 = vmatpush1.msra.mxu0 0.0
        %2427 = vmatprep.subr.mxu0 0.0
        %2428 = vmatpush1.msra.mxu0 0.0
        %2429 = vmatprep.subr.mxu0 0.0
        %2430 = vmatpush1.msra.mxu0 0.0
        %2431 = vmatprep.subr.mxu0 0.0
        %2432 = vmatpush1.msra.mxu0 %v2401
        %2433 = vmatprep.subr.mxu0 0.0
        %2434 = vmatpush1.msra.mxu0 %v2400
        %2435 = vmatprep.subr.mxu0 0.0
        %2436 = vmatpush1.msra.mxu0 %v2399
        %2437 = vmatprep.subr.mxu0 0.0
        %2438 = vmatpush1.msra.mxu0 %v2398
        %2439 = vmatprep.subr.mxu0 0.0
        %2440 = vmatpush2.msra.mxu0 0.0
        %2441 = vmatprep.subr.mxu0 0.0
        %2442 = vmatpush2.msra.mxu0 0.0
        %2443 = vmatprep.subr.mxu0 0.0
        %2444 = vmatpush2.msra.mxu0 0.0
        %2445 = vmatprep.subr.mxu0 0.0
        %2446 = vmatpush2.msra.mxu0 0.0
        %2447 = vmatprep.subr.mxu0 0.0
        %2448 = vmatpush2.msra.mxu0 0.0
        %2449 = vmatprep.subr.mxu0 0.0
        %2450 = vmatpush2.msra.mxu0 0.0
        %2451 = vmatprep.subr.mxu0 0.0
        %2452 = vmatpush2.msra.mxu0 0.0
        %2453 = vmatprep.subr.mxu0 0.0
        %2454 = vmatpush2.msra.mxu0 0.0
        %2455 = vmatprep.subr.mxu0 0.0
        %2456 = vmatpush2.msra.mxu0 0.0
        %2457 = vmatprep.subr.mxu0 0.0
        %2458 = vmatpush2.msra.mxu0 0.0
        %2459 = vmatprep.subr.mxu0 0.0
        %2460 = vmatpush2.msra.mxu0 0.0
        %2461 = vmatprep.subr.mxu0 0.0
        %2462 = vmatpush2.msra.mxu0 0.0
        %2463 = vmatprep.subr.mxu0 0.0
        %2464 = vmatpush2.msra.mxu0 0.0
        %2465 = vmatprep.subr.mxu0 0.0
        %2466 = vmatpush2.msra.mxu0 0.0
        %2467 = vmatprep.subr.mxu0 0.0
        %2468 = vmatpush2.msra.mxu0 0.0
        %2469 = vmatprep.subr.mxu0 0.0
        %2470 = vmatpush2.msra.mxu0 0.0
        %2471 = vmatprep.mubr.f32.mxu0 0.0
        %2472 = vmatmul.mubr.f32.gmra.mxu0 %v2325
        %v2473 = vpop.f32.mrf.mxu0
        %v2474 = vadd.f32 %v2406, %v2473
        %v2475 = vpop.f32.mrf.mxu0
        %2476 = vdwg.mxu0
        %v2478 = vsel %vm536, %v2311, 0
        %v2481 = vsel %vm536, %v2394, 0
        %2483 = vmatprep.subr.mxu0 0.0
        %2484 = vmatpush1.xpose.msra.mxu0 0.0
        %2485 = vmatprep.subr.mxu0 0.0
        %2486 = vmatpush1.xpose.msra.mxu0 0.0
        %2487 = vmatprep.subr.mxu0 0.0
        %2488 = vmatpush1.xpose.msra.mxu0 0.0
        %2489 = vmatprep.subr.mxu0 0.0
        %2490 = vmatpush1.xpose.msra.mxu0 0.0
        %2491 = vmatprep.subr.mxu0 0.0
        %2492 = vmatpush1.xpose.msra.mxu0 0.0
        %2493 = vmatprep.subr.mxu0 0.0
        %2494 = vmatpush1.xpose.msra.mxu0 0.0
        %2495 = vmatprep.subr.mxu0 0.0
        %2496 = vmatpush1.xpose.msra.mxu0 0.0
        %2497 = vmatprep.subr.mxu0 0.0
        %2498 = vmatpush1.xpose.msra.mxu0 0.0
        %2499 = vmatprep.subr.mxu0 0.0
        %2500 = vmatpush1.xpose.msra.mxu0 0.0
        %2501 = vmatprep.subr.mxu0 0.0
        %2502 = vmatpush1.xpose.msra.mxu0 0.0
        %2503 = vmatprep.subr.mxu0 0.0
        %2504 = vmatpush1.xpose.msra.mxu0 0.0
        %2505 = vmatprep.subr.mxu0 0.0
        %2506 = vmatpush1.xpose.msra.mxu0 0.0
        %2507 = vmatprep.subr.mxu0 0.0
        %2508 = vmatpush1.xpose.msra.mxu0 0.0
        %2509 = vmatprep.subr.mxu0 0.0
        %2510 = vmatpush1.xpose.msra.mxu0 0.0
        %2511 = vmatprep.subr.mxu0 0.0
        %2512 = vmatpush1.xpose.msra.mxu0 0.0
        %2513 = vmatprep.subr.mxu0 0.0
        %2514 = vmatpush1.xpose.msra.mxu0 %v2481
        %2515 = vmatprep.subr.mxu0 0.0
        %2516 = vmatpush2.xpose.msra.mxu0 0.0
        %2517 = vmatprep.subr.mxu0 0.0
        %2518 = vmatpush2.xpose.msra.mxu0 0.0
        %2519 = vmatprep.subr.mxu0 0.0
        %2520 = vmatpush2.xpose.msra.mxu0 0.0
        %2521 = vmatprep.subr.mxu0 0.0
        %2522 = vmatpush2.xpose.msra.mxu0 0.0
        %2523 = vmatprep.subr.mxu0 0.0
        %2524 = vmatpush2.xpose.msra.mxu0 0.0
        %2525 = vmatprep.subr.mxu0 0.0
        %2526 = vmatpush2.xpose.msra.mxu0 0.0
        %2527 = vmatprep.subr.mxu0 0.0
        %2528 = vmatpush2.xpose.msra.mxu0 0.0
        %2529 = vmatprep.subr.mxu0 0.0
        %2530 = vmatpush2.xpose.msra.mxu0 0.0
        %2531 = vmatprep.subr.mxu0 0.0
        %2532 = vmatpush2.xpose.msra.mxu0 0.0
        %2533 = vmatprep.subr.mxu0 0.0
        %2534 = vmatpush2.xpose.msra.mxu0 0.0
        %2535 = vmatprep.subr.mxu0 0.0
        %2536 = vmatpush2.xpose.msra.mxu0 0.0
        %2537 = vmatprep.subr.mxu0 0.0
        %2538 = vmatpush2.xpose.msra.mxu0 0.0
        %2539 = vmatprep.subr.mxu0 0.0
        %2540 = vmatpush2.xpose.msra.mxu0 0.0
        %2541 = vmatprep.subr.mxu0 0.0
        %2542 = vmatpush2.xpose.msra.mxu0 0.0
        %2543 = vmatprep.subr.mxu0 0.0
        %2544 = vmatpush2.xpose.msra.mxu0 0.0
        %2545 = vmatprep.subr.mxu0 0.0
        %2546 = vmatpush2.xpose.msra.mxu0 0.0
        %2547 = vmatprep.mubr.f32.mxu0 0.0
        %2548 = vmatmul.mubr.f32.gmra.mxu0 %v2478
        %v2549 = vpop.f32.mrf.mxu0
        %v2550 = vadd.f32 0.0, %v2549
        %v2551 = vpop.f32.mrf.mxu0
        %2552 = vdwg.mxu0
        %v2553 = vsel %vm536, %v2550, -inf
        %2554 = vmax.xlane.f32.xlu0 %v2553
        %v2555 = vpop.xlane.xlu0 %2554
        %v2556 = vsub.f32 %v2550, %v2555
        %v2557 = vmul.f32 %v2556, 1.442695
        %v2558 = vpow.pop %v2557
        %v2559 = vsel %vm536, %v2558, 0.0
        %2560 = vadd.xlane.f32.xlu0 %v2559
        %v2561 = vpop.xlane.xlu0 %2560
        %v2562 = vrcp.pop %v2561
        %v2563 = vmul.f32 %v2558, %v2562
        %v2565 = vsel %vm536, %v2563, 0
        %2567 = vmatprep.subr.mxu0 0.0
        %2568 = vmatpush1.msra.mxu0 0.0
        %2569 = vmatprep.subr.mxu0 0.0
        %2570 = vmatpush1.msra.mxu0 0.0
        %2571 = vmatprep.subr.mxu0 0.0
        %2572 = vmatpush1.msra.mxu0 0.0
        %2573 = vmatprep.subr.mxu0 0.0
        %2574 = vmatpush1.msra.mxu0 0.0
        %2575 = vmatprep.subr.mxu0 0.0
        %2576 = vmatpush1.msra.mxu0 0.0
        %2577 = vmatprep.subr.mxu0 0.0
        %2578 = vmatpush1.msra.mxu0 0.0
        %2579 = vmatprep.subr.mxu0 0.0
        %2580 = vmatpush1.msra.mxu0 0.0
        %2581 = vmatprep.subr.mxu0 0.0
        %2582 = vmatpush1.msra.mxu0 0.0
        %2583 = vmatprep.subr.mxu0 0.0
        %2584 = vmatpush1.msra.mxu0 0.0
        %2585 = vmatprep.subr.mxu0 0.0
        %2586 = vmatpush1.msra.mxu0 0.0
        %2587 = vmatprep.subr.mxu0 0.0
        %2588 = vmatpush1.msra.mxu0 0.0
        %2589 = vmatprep.subr.mxu0 0.0
        %2590 = vmatpush1.msra.mxu0 0.0
        %2591 = vmatprep.subr.mxu0 0.0
        %2592 = vmatpush1.msra.mxu0 0.0
        %2593 = vmatprep.subr.mxu0 0.0
        %2594 = vmatpush1.msra.mxu0 0.0
        %2595 = vmatprep.subr.mxu0 0.0
        %2596 = vmatpush1.msra.mxu0 0.0
        %2597 = vmatprep.subr.mxu0 0.0
        %2598 = vmatpush1.msra.mxu0 %v2474
        %2599 = vmatprep.subr.mxu0 0.0
        %2600 = vmatpush2.msra.mxu0 0.0
        %2601 = vmatprep.subr.mxu0 0.0
        %2602 = vmatpush2.msra.mxu0 0.0
        %2603 = vmatprep.subr.mxu0 0.0
        %2604 = vmatpush2.msra.mxu0 0.0
        %2605 = vmatprep.subr.mxu0 0.0
        %2606 = vmatpush2.msra.mxu0 0.0
        %2607 = vmatprep.subr.mxu0 0.0
        %2608 = vmatpush2.msra.mxu0 0.0
        %2609 = vmatprep.subr.mxu0 0.0
        %2610 = vmatpush2.msra.mxu0 0.0
        %2611 = vmatprep.subr.mxu0 0.0
        %2612 = vmatpush2.msra.mxu0 0.0
        %2613 = vmatprep.subr.mxu0 0.0
        %2614 = vmatpush2.msra.mxu0 0.0
        %2615 = vmatprep.subr.mxu0 0.0
        %2616 = vmatpush2.msra.mxu0 0.0
        %2617 = vmatprep.subr.mxu0 0.0
        %2618 = vmatpush2.msra.mxu0 0.0
        %2619 = vmatprep.subr.mxu0 0.0
        %2620 = vmatpush2.msra.mxu0 0.0
        %2621 = vmatprep.subr.mxu0 0.0
        %2622 = vmatpush2.msra.mxu0 0.0
        %2623 = vmatprep.subr.mxu0 0.0
        %2624 = vmatpush2.msra.mxu0 0.0
        %2625 = vmatprep.subr.mxu0 0.0
        %2626 = vmatpush2.msra.mxu0 0.0
        %2627 = vmatprep.subr.mxu0 0.0
        %2628 = vmatpush2.msra.mxu0 0.0
        %2629 = vmatprep.subr.mxu0 0.0
        %2630 = vmatpush2.msra.mxu0 0.0
        %2631 = vmatprep.mubr.f32.mxu0 0.0
        %2632 = vmatmul.mubr.f32.gmra.mxu0 %v2565
        %v2633 = vpop.f32.mrf.mxu0
        %v2634 = vadd.f32 0.0, %v2633
        %v2635 = vpop.f32.mrf.mxu0
        %2636 = vdwg.mxu0
        %s2637 = scalar_lea.vmem %s3, 32
        %v2638 = vld [vmem:[%s2637] sm:$0xff]
        %s2639 = scalar_lea.vmem %s2, 416
        %v2640 = vld [vmem:[%s2639] sm:$0xff]
        %v2641 = vld [vmem:[%s2639 + $0x8] sm:$0xff]
        %v2642 = vld [vmem:[%s2639 + $0x10] sm:$0xff]
        %v2643 = vld [vmem:[%s2639 + $0x18] sm:$0xff]
        %v2644 = vld [vmem:[%s6 + $0xd] sm:$0x1]
        %v2645 = vlaneseq
        %v2646 = vshrl.u32 %v2645, 7
        %v2647 = vsub.s32 0, %v2646
        %v2648 = vrot.slane %v2644, %v2647
        %2649 = vmatprep.subr.mxu0 0.0
        %2650 = vmatpush1.msra.mxu0 0.0
        %2651 = vmatprep.subr.mxu0 0.0
        %2652 = vmatpush1.msra.mxu0 0.0
        %2653 = vmatprep.subr.mxu0 0.0
        %2654 = vmatpush1.msra.mxu0 0.0
        %2655 = vmatprep.subr.mxu0 0.0
        %2656 = vmatpush1.msra.mxu0 0.0
        %2657 = vmatprep.subr.mxu0 0.0
        %2658 = vmatpush1.msra.mxu0 0.0
        %2659 = vmatprep.subr.mxu0 0.0
        %2660 = vmatpush1.msra.mxu0 0.0
        %2661 = vmatprep.subr.mxu0 0.0
        %2662 = vmatpush1.msra.mxu0 0.0
        %2663 = vmatprep.subr.mxu0 0.0
        %2664 = vmatpush1.msra.mxu0 0.0
        %2665 = vmatprep.subr.mxu0 0.0
        %2666 = vmatpush1.msra.mxu0 0.0
        %2667 = vmatprep.subr.mxu0 0.0
        %2668 = vmatpush1.msra.mxu0 0.0
        %2669 = vmatprep.subr.mxu0 0.0
        %2670 = vmatpush1.msra.mxu0 0.0
        %2671 = vmatprep.subr.mxu0 0.0
        %2672 = vmatpush1.msra.mxu0 0.0
        %2673 = vmatprep.subr.mxu0 0.0
        %2674 = vmatpush1.msra.mxu0 %v2643
        %2675 = vmatprep.subr.mxu0 0.0
        %2676 = vmatpush1.msra.mxu0 %v2642
        %2677 = vmatprep.subr.mxu0 0.0
        %2678 = vmatpush1.msra.mxu0 %v2641
        %2679 = vmatprep.subr.mxu0 0.0
        %2680 = vmatpush1.msra.mxu0 %v2640
        %2681 = vmatprep.subr.mxu0 0.0
        %2682 = vmatpush2.msra.mxu0 0.0
        %2683 = vmatprep.subr.mxu0 0.0
        %2684 = vmatpush2.msra.mxu0 0.0
        %2685 = vmatprep.subr.mxu0 0.0
        %2686 = vmatpush2.msra.mxu0 0.0
        %2687 = vmatprep.subr.mxu0 0.0
        %2688 = vmatpush2.msra.mxu0 0.0
        %2689 = vmatprep.subr.mxu0 0.0
        %2690 = vmatpush2.msra.mxu0 0.0
        %2691 = vmatprep.subr.mxu0 0.0
        %2692 = vmatpush2.msra.mxu0 0.0
        %2693 = vmatprep.subr.mxu0 0.0
        %2694 = vmatpush2.msra.mxu0 0.0
        %2695 = vmatprep.subr.mxu0 0.0
        %2696 = vmatpush2.msra.mxu0 0.0
        %2697 = vmatprep.subr.mxu0 0.0
        %2698 = vmatpush2.msra.mxu0 0.0
        %2699 = vmatprep.subr.mxu0 0.0
        %2700 = vmatpush2.msra.mxu0 0.0
        %2701 = vmatprep.subr.mxu0 0.0
        %2702 = vmatpush2.msra.mxu0 0.0
        %2703 = vmatprep.subr.mxu0 0.0
        %2704 = vmatpush2.msra.mxu0 0.0
        %2705 = vmatprep.subr.mxu0 0.0
        %2706 = vmatpush2.msra.mxu0 0.0
        %2707 = vmatprep.subr.mxu0 0.0
        %2708 = vmatpush2.msra.mxu0 0.0
        %2709 = vmatprep.subr.mxu0 0.0
        %2710 = vmatpush2.msra.mxu0 0.0
        %2711 = vmatprep.subr.mxu0 0.0
        %2712 = vmatpush2.msra.mxu0 0.0
        %2713 = vmatprep.mubr.f32.mxu0 0.0
        %2714 = vmatmul.mubr.f32.gmra.mxu0 %v2242
        %v2715 = vpop.f32.mrf.mxu0
        %v2716 = vadd.f32 %v2648, %v2715
        %v2717 = vpop.f32.mrf.mxu0
        %2718 = vdwg.mxu0
        %s2719 = scalar_lea.vmem %s2, 544
        %v2720 = vld [vmem:[%s2719] sm:$0xff]
        %v2721 = vld [vmem:[%s2719 + $0x8] sm:$0xff]
        %v2722 = vld [vmem:[%s2719 + $0x10] sm:$0xff]
        %v2723 = vld [vmem:[%s2719 + $0x18] sm:$0xff]
        %v2724 = vld [vmem:[%s6 + $0x11] sm:$0x1]
        %v2725 = vlaneseq
        %v2726 = vshrl.u32 %v2725, 7
        %v2727 = vsub.s32 0, %v2726
        %v2728 = vrot.slane %v2724, %v2727
        %2729 = vmatprep.subr.mxu0 0.0
        %2730 = vmatpush1.msra.mxu0 0.0
        %2731 = vmatprep.subr.mxu0 0.0
        %2732 = vmatpush1.msra.mxu0 0.0
        %2733 = vmatprep.subr.mxu0 0.0
        %2734 = vmatpush1.msra.mxu0 0.0
        %2735 = vmatprep.subr.mxu0 0.0
        %2736 = vmatpush1.msra.mxu0 0.0
        %2737 = vmatprep.subr.mxu0 0.0
        %2738 = vmatpush1.msra.mxu0 0.0
        %2739 = vmatprep.subr.mxu0 0.0
        %2740 = vmatpush1.msra.mxu0 0.0
        %2741 = vmatprep.subr.mxu0 0.0
        %2742 = vmatpush1.msra.mxu0 0.0
        %2743 = vmatprep.subr.mxu0 0.0
        %2744 = vmatpush1.msra.mxu0 0.0
        %2745 = vmatprep.subr.mxu0 0.0
        %2746 = vmatpush1.msra.mxu0 0.0
        %2747 = vmatprep.subr.mxu0 0.0
        %2748 = vmatpush1.msra.mxu0 0.0
        %2749 = vmatprep.subr.mxu0 0.0
        %2750 = vmatpush1.msra.mxu0 0.0
        %2751 = vmatprep.subr.mxu0 0.0
        %2752 = vmatpush1.msra.mxu0 0.0
        %2753 = vmatprep.subr.mxu0 0.0
        %2754 = vmatpush1.msra.mxu0 %v2723
        %2755 = vmatprep.subr.mxu0 0.0
        %2756 = vmatpush1.msra.mxu0 %v2722
        %2757 = vmatprep.subr.mxu0 0.0
        %2758 = vmatpush1.msra.mxu0 %v2721
        %2759 = vmatprep.subr.mxu0 0.0
        %2760 = vmatpush1.msra.mxu0 %v2720
        %2761 = vmatprep.subr.mxu0 0.0
        %2762 = vmatpush2.msra.mxu0 0.0
        %2763 = vmatprep.subr.mxu0 0.0
        %2764 = vmatpush2.msra.mxu0 0.0
        %2765 = vmatprep.subr.mxu0 0.0
        %2766 = vmatpush2.msra.mxu0 0.0
        %2767 = vmatprep.subr.mxu0 0.0
        %2768 = vmatpush2.msra.mxu0 0.0
        %2769 = vmatprep.subr.mxu0 0.0
        %2770 = vmatpush2.msra.mxu0 0.0
        %2771 = vmatprep.subr.mxu0 0.0
        %2772 = vmatpush2.msra.mxu0 0.0
        %2773 = vmatprep.subr.mxu0 0.0
        %2774 = vmatpush2.msra.mxu0 0.0
        %2775 = vmatprep.subr.mxu0 0.0
        %2776 = vmatpush2.msra.mxu0 0.0
        %2777 = vmatprep.subr.mxu0 0.0
        %2778 = vmatpush2.msra.mxu0 0.0
        %2779 = vmatprep.subr.mxu0 0.0
        %2780 = vmatpush2.msra.mxu0 0.0
        %2781 = vmatprep.subr.mxu0 0.0
        %2782 = vmatpush2.msra.mxu0 0.0
        %2783 = vmatprep.subr.mxu0 0.0
        %2784 = vmatpush2.msra.mxu0 0.0
        %2785 = vmatprep.subr.mxu0 0.0
        %2786 = vmatpush2.msra.mxu0 0.0
        %2787 = vmatprep.subr.mxu0 0.0
        %2788 = vmatpush2.msra.mxu0 0.0
        %2789 = vmatprep.subr.mxu0 0.0
        %2790 = vmatpush2.msra.mxu0 0.0
        %2791 = vmatprep.subr.mxu0 0.0
        %2792 = vmatpush2.msra.mxu0 0.0
        %2793 = vmatprep.mubr.f32.mxu0 0.0
        %2794 = vmatmul.mubr.f32.gmra.mxu0 %v2325
        %v2795 = vpop.f32.mrf.mxu0
        %v2796 = vadd.f32 %v2728, %v2795
        %v2797 = vpop.f32.mrf.mxu0
        %2798 = vdwg.mxu0
        %s2799 = scalar_lea.vmem %s2, 672
        %v2800 = vld [vmem:[%s2799] sm:$0xff]
        %v2801 = vld [vmem:[%s2799 + $0x8] sm:$0xff]
        %v2802 = vld [vmem:[%s2799 + $0x10] sm:$0xff]
        %v2803 = vld [vmem:[%s2799 + $0x18] sm:$0xff]
        %v2804 = vld [vmem:[%s6 + $0x15] sm:$0x1]
        %v2805 = vlaneseq
        %v2806 = vshrl.u32 %v2805, 7
        %v2807 = vsub.s32 0, %v2806
        %v2808 = vrot.slane %v2804, %v2807
        %2809 = vmatprep.subr.mxu0 0.0
        %2810 = vmatpush1.msra.mxu0 0.0
        %2811 = vmatprep.subr.mxu0 0.0
        %2812 = vmatpush1.msra.mxu0 0.0
        %2813 = vmatprep.subr.mxu0 0.0
        %2814 = vmatpush1.msra.mxu0 0.0
        %2815 = vmatprep.subr.mxu0 0.0
        %2816 = vmatpush1.msra.mxu0 0.0
        %2817 = vmatprep.subr.mxu0 0.0
        %2818 = vmatpush1.msra.mxu0 0.0
        %2819 = vmatprep.subr.mxu0 0.0
        %2820 = vmatpush1.msra.mxu0 0.0
        %2821 = vmatprep.subr.mxu0 0.0
        %2822 = vmatpush1.msra.mxu0 0.0
        %2823 = vmatprep.subr.mxu0 0.0
        %2824 = vmatpush1.msra.mxu0 0.0
        %2825 = vmatprep.subr.mxu0 0.0
        %2826 = vmatpush1.msra.mxu0 0.0
        %2827 = vmatprep.subr.mxu0 0.0
        %2828 = vmatpush1.msra.mxu0 0.0
        %2829 = vmatprep.subr.mxu0 0.0
        %2830 = vmatpush1.msra.mxu0 0.0
        %2831 = vmatprep.subr.mxu0 0.0
        %2832 = vmatpush1.msra.mxu0 0.0
        %2833 = vmatprep.subr.mxu0 0.0
        %2834 = vmatpush1.msra.mxu0 %v2803
        %2835 = vmatprep.subr.mxu0 0.0
        %2836 = vmatpush1.msra.mxu0 %v2802
        %2837 = vmatprep.subr.mxu0 0.0
        %2838 = vmatpush1.msra.mxu0 %v2801
        %2839 = vmatprep.subr.mxu0 0.0
        %2840 = vmatpush1.msra.mxu0 %v2800
        %2841 = vmatprep.subr.mxu0 0.0
        %2842 = vmatpush2.msra.mxu0 0.0
        %2843 = vmatprep.subr.mxu0 0.0
        %2844 = vmatpush2.msra.mxu0 0.0
        %2845 = vmatprep.subr.mxu0 0.0
        %2846 = vmatpush2.msra.mxu0 0.0
        %2847 = vmatprep.subr.mxu0 0.0
        %2848 = vmatpush2.msra.mxu0 0.0
        %2849 = vmatprep.subr.mxu0 0.0
        %2850 = vmatpush2.msra.mxu0 0.0
        %2851 = vmatprep.subr.mxu0 0.0
        %2852 = vmatpush2.msra.mxu0 0.0
        %2853 = vmatprep.subr.mxu0 0.0
        %2854 = vmatpush2.msra.mxu0 0.0
        %2855 = vmatprep.subr.mxu0 0.0
        %2856 = vmatpush2.msra.mxu0 0.0
        %2857 = vmatprep.subr.mxu0 0.0
        %2858 = vmatpush2.msra.mxu0 0.0
        %2859 = vmatprep.subr.mxu0 0.0
        %2860 = vmatpush2.msra.mxu0 0.0
        %2861 = vmatprep.subr.mxu0 0.0
        %2862 = vmatpush2.msra.mxu0 0.0
        %2863 = vmatprep.subr.mxu0 0.0
        %2864 = vmatpush2.msra.mxu0 0.0
        %2865 = vmatprep.subr.mxu0 0.0
        %2866 = vmatpush2.msra.mxu0 0.0
        %2867 = vmatprep.subr.mxu0 0.0
        %2868 = vmatpush2.msra.mxu0 0.0
        %2869 = vmatprep.subr.mxu0 0.0
        %2870 = vmatpush2.msra.mxu0 0.0
        %2871 = vmatprep.subr.mxu0 0.0
        %2872 = vmatpush2.msra.mxu0 0.0
        %2873 = vmatprep.mubr.f32.mxu0 0.0
        %2874 = vmatmul.mubr.f32.gmra.mxu0 %v2325
        %v2875 = vpop.f32.mrf.mxu0
        %v2876 = vadd.f32 %v2808, %v2875
        %v2877 = vpop.f32.mrf.mxu0
        %2878 = vdwg.mxu0
        %v2880 = vsel %vm536, %v2716, 0
        %v2883 = vsel %vm536, %v2796, 0
        %2885 = vmatprep.subr.mxu0 0.0
        %2886 = vmatpush1.xpose.msra.mxu0 0.0
        %2887 = vmatprep.subr.mxu0 0.0
        %2888 = vmatpush1.xpose.msra.mxu0 0.0
        %2889 = vmatprep.subr.mxu0 0.0
        %2890 = vmatpush1.xpose.msra.mxu0 0.0
        %2891 = vmatprep.subr.mxu0 0.0
        %2892 = vmatpush1.xpose.msra.mxu0 0.0
        %2893 = vmatprep.subr.mxu0 0.0
        %2894 = vmatpush1.xpose.msra.mxu0 0.0
        %2895 = vmatprep.subr.mxu0 0.0
        %2896 = vmatpush1.xpose.msra.mxu0 0.0
        %2897 = vmatprep.subr.mxu0 0.0
        %2898 = vmatpush1.xpose.msra.mxu0 0.0
        %2899 = vmatprep.subr.mxu0 0.0
        %2900 = vmatpush1.xpose.msra.mxu0 0.0
        %2901 = vmatprep.subr.mxu0 0.0
        %2902 = vmatpush1.xpose.msra.mxu0 0.0
        %2903 = vmatprep.subr.mxu0 0.0
        %2904 = vmatpush1.xpose.msra.mxu0 0.0
        %2905 = vmatprep.subr.mxu0 0.0
        %2906 = vmatpush1.xpose.msra.mxu0 0.0
        %2907 = vmatprep.subr.mxu0 0.0
        %2908 = vmatpush1.xpose.msra.mxu0 0.0
        %2909 = vmatprep.subr.mxu0 0.0
        %2910 = vmatpush1.xpose.msra.mxu0 0.0
        %2911 = vmatprep.subr.mxu0 0.0
        %2912 = vmatpush1.xpose.msra.mxu0 0.0
        %2913 = vmatprep.subr.mxu0 0.0
        %2914 = vmatpush1.xpose.msra.mxu0 0.0
        %2915 = vmatprep.subr.mxu0 0.0
        %2916 = vmatpush1.xpose.msra.mxu0 %v2883
        %2917 = vmatprep.subr.mxu0 0.0
        %2918 = vmatpush2.xpose.msra.mxu0 0.0
        %2919 = vmatprep.subr.mxu0 0.0
        %2920 = vmatpush2.xpose.msra.mxu0 0.0
        %2921 = vmatprep.subr.mxu0 0.0
        %2922 = vmatpush2.xpose.msra.mxu0 0.0
        %2923 = vmatprep.subr.mxu0 0.0
        %2924 = vmatpush2.xpose.msra.mxu0 0.0
        %2925 = vmatprep.subr.mxu0 0.0
        %2926 = vmatpush2.xpose.msra.mxu0 0.0
        %2927 = vmatprep.subr.mxu0 0.0
        %2928 = vmatpush2.xpose.msra.mxu0 0.0
        %2929 = vmatprep.subr.mxu0 0.0
        %2930 = vmatpush2.xpose.msra.mxu0 0.0
        %2931 = vmatprep.subr.mxu0 0.0
        %2932 = vmatpush2.xpose.msra.mxu0 0.0
        %2933 = vmatprep.subr.mxu0 0.0
        %2934 = vmatpush2.xpose.msra.mxu0 0.0
        %2935 = vmatprep.subr.mxu0 0.0
        %2936 = vmatpush2.xpose.msra.mxu0 0.0
        %2937 = vmatprep.subr.mxu0 0.0
        %2938 = vmatpush2.xpose.msra.mxu0 0.0
        %2939 = vmatprep.subr.mxu0 0.0
        %2940 = vmatpush2.xpose.msra.mxu0 0.0
        %2941 = vmatprep.subr.mxu0 0.0
        %2942 = vmatpush2.xpose.msra.mxu0 0.0
        %2943 = vmatprep.subr.mxu0 0.0
        %2944 = vmatpush2.xpose.msra.mxu0 0.0
        %2945 = vmatprep.subr.mxu0 0.0
        %2946 = vmatpush2.xpose.msra.mxu0 0.0
        %2947 = vmatprep.subr.mxu0 0.0
        %2948 = vmatpush2.xpose.msra.mxu0 0.0
        %2949 = vmatprep.mubr.f32.mxu0 0.0
        %2950 = vmatmul.mubr.f32.gmra.mxu0 %v2880
        %v2951 = vpop.f32.mrf.mxu0
        %v2952 = vadd.f32 0.0, %v2951
        %v2953 = vpop.f32.mrf.mxu0
        %2954 = vdwg.mxu0
        %v2955 = vsel %vm536, %v2952, -inf
        %2956 = vmax.xlane.f32.xlu0 %v2955
        %v2957 = vpop.xlane.xlu0 %2956
        %v2958 = vsub.f32 %v2952, %v2957
        %v2959 = vmul.f32 %v2958, 1.442695
        %v2960 = vpow.pop %v2959
        %v2961 = vsel %vm536, %v2960, 0.0
        %2962 = vadd.xlane.f32.xlu0 %v2961
        %v2963 = vpop.xlane.xlu0 %2962
        %v2964 = vrcp.pop %v2963
        %v2965 = vmul.f32 %v2960, %v2964
        %v2967 = vsel %vm536, %v2965, 0
        %2969 = vmatprep.subr.mxu0 0.0
        %2970 = vmatpush1.msra.mxu0 0.0
        %2971 = vmatprep.subr.mxu0 0.0
        %2972 = vmatpush1.msra.mxu0 0.0
        %2973 = vmatprep.subr.mxu0 0.0
        %2974 = vmatpush1.msra.mxu0 0.0
        %2975 = vmatprep.subr.mxu0 0.0
        %2976 = vmatpush1.msra.mxu0 0.0
        %2977 = vmatprep.subr.mxu0 0.0
        %2978 = vmatpush1.msra.mxu0 0.0
        %2979 = vmatprep.subr.mxu0 0.0
        %2980 = vmatpush1.msra.mxu0 0.0
        %2981 = vmatprep.subr.mxu0 0.0
        %2982 = vmatpush1.msra.mxu0 0.0
        %2983 = vmatprep.subr.mxu0 0.0
        %2984 = vmatpush1.msra.mxu0 0.0
        %2985 = vmatprep.subr.mxu0 0.0
        %2986 = vmatpush1.msra.mxu0 0.0
        %2987 = vmatprep.subr.mxu0 0.0
        %2988 = vmatpush1.msra.mxu0 0.0
        %2989 = vmatprep.subr.mxu0 0.0
        %2990 = vmatpush1.msra.mxu0 0.0
        %2991 = vmatprep.subr.mxu0 0.0
        %2992 = vmatpush1.msra.mxu0 0.0
        %2993 = vmatprep.subr.mxu0 0.0
        %2994 = vmatpush1.msra.mxu0 0.0
        %2995 = vmatprep.subr.mxu0 0.0
        %2996 = vmatpush1.msra.mxu0 0.0
        %2997 = vmatprep.subr.mxu0 0.0
        %2998 = vmatpush1.msra.mxu0 0.0
        %2999 = vmatprep.subr.mxu0 0.0
        %3000 = vmatpush1.msra.mxu0 %v2876
        %3001 = vmatprep.subr.mxu0 0.0
        %3002 = vmatpush2.msra.mxu0 0.0
        %3003 = vmatprep.subr.mxu0 0.0
        %3004 = vmatpush2.msra.mxu0 0.0
        %3005 = vmatprep.subr.mxu0 0.0
        %3006 = vmatpush2.msra.mxu0 0.0
        %3007 = vmatprep.subr.mxu0 0.0
        %3008 = vmatpush2.msra.mxu0 0.0
        %3009 = vmatprep.subr.mxu0 0.0
        %3010 = vmatpush2.msra.mxu0 0.0
        %3011 = vmatprep.subr.mxu0 0.0
        %3012 = vmatpush2.msra.mxu0 0.0
        %3013 = vmatprep.subr.mxu0 0.0
        %3014 = vmatpush2.msra.mxu0 0.0
        %3015 = vmatprep.subr.mxu0 0.0
        %3016 = vmatpush2.msra.mxu0 0.0
        %3017 = vmatprep.subr.mxu0 0.0
        %3018 = vmatpush2.msra.mxu0 0.0
        %3019 = vmatprep.subr.mxu0 0.0
        %3020 = vmatpush2.msra.mxu0 0.0
        %3021 = vmatprep.subr.mxu0 0.0
        %3022 = vmatpush2.msra.mxu0 0.0
        %3023 = vmatprep.subr.mxu0 0.0
        %3024 = vmatpush2.msra.mxu0 0.0
        %3025 = vmatprep.subr.mxu0 0.0
        %3026 = vmatpush2.msra.mxu0 0.0
        %3027 = vmatprep.subr.mxu0 0.0
        %3028 = vmatpush2.msra.mxu0 0.0
        %3029 = vmatprep.subr.mxu0 0.0
        %3030 = vmatpush2.msra.mxu0 0.0
        %3031 = vmatprep.subr.mxu0 0.0
        %3032 = vmatpush2.msra.mxu0 0.0
        %3033 = vmatprep.mubr.f32.mxu0 0.0
        %3034 = vmatmul.mubr.f32.gmra.mxu0 %v2967
        %v3035 = vpop.f32.mrf.mxu0
        %v3036 = vadd.f32 0.0, %v3035
        %v3037 = vpop.f32.mrf.mxu0
        %3038 = vdwg.mxu0
        %s3039 = scalar_lea.vmem %s3, 40
        %v3040 = vld [vmem:[%s3039] sm:$0xff]
        %v3042 = vsel %vm536, %v3036, 0
        %3044 = vmatprep.subr.mxu0 0.0
        %3045 = vmatpush1.msra.mxu0 0.0
        %3046 = vmatprep.subr.mxu0 0.0
        %3047 = vmatpush1.msra.mxu0 0.0
        %3048 = vmatprep.subr.mxu0 0.0
        %3049 = vmatpush1.msra.mxu0 0.0
        %3050 = vmatprep.subr.mxu0 0.0
        %3051 = vmatpush1.msra.mxu0 0.0
        %3052 = vmatprep.subr.mxu0 0.0
        %3053 = vmatpush1.msra.mxu0 0.0
        %3054 = vmatprep.subr.mxu0 0.0
        %3055 = vmatpush1.msra.mxu0 0.0
        %3056 = vmatprep.subr.mxu0 0.0
        %3057 = vmatpush1.msra.mxu0 0.0
        %3058 = vmatprep.subr.mxu0 0.0
        %3059 = vmatpush1.msra.mxu0 0.0
        %3060 = vmatprep.subr.mxu0 0.0
        %3061 = vmatpush1.msra.mxu0 0.0
        %3062 = vmatprep.subr.mxu0 0.0
        %3063 = vmatpush1.msra.mxu0 0.0
        %3064 = vmatprep.subr.mxu0 0.0
        %3065 = vmatpush1.msra.mxu0 0.0
        %3066 = vmatprep.subr.mxu0 0.0
        %3067 = vmatpush1.msra.mxu0 0.0
        %3068 = vmatprep.subr.mxu0 0.0
        %3069 = vmatpush1.msra.mxu0 0.0
        %3070 = vmatprep.subr.mxu0 0.0
        %3071 = vmatpush1.msra.mxu0 0.0
        %3072 = vmatprep.subr.mxu0 0.0
        %3073 = vmatpush1.msra.mxu0 0.0
        %3074 = vmatprep.subr.mxu0 0.0
        %3075 = vmatpush1.msra.mxu0 %v3040
        %3076 = vmatprep.subr.mxu0 0.0
        %3077 = vmatpush2.msra.mxu0 0.0
        %3078 = vmatprep.subr.mxu0 0.0
        %3079 = vmatpush2.msra.mxu0 0.0
        %3080 = vmatprep.subr.mxu0 0.0
        %3081 = vmatpush2.msra.mxu0 0.0
        %3082 = vmatprep.subr.mxu0 0.0
        %3083 = vmatpush2.msra.mxu0 0.0
        %3084 = vmatprep.subr.mxu0 0.0
        %3085 = vmatpush2.msra.mxu0 0.0
        %3086 = vmatprep.subr.mxu0 0.0
        %3087 = vmatpush2.msra.mxu0 0.0
        %3088 = vmatprep.subr.mxu0 0.0
        %3089 = vmatpush2.msra.mxu0 0.0
        %3090 = vmatprep.subr.mxu0 0.0
        %3091 = vmatpush2.msra.mxu0 0.0
        %3092 = vmatprep.subr.mxu0 0.0
        %3093 = vmatpush2.msra.mxu0 0.0
        %3094 = vmatprep.subr.mxu0 0.0
        %3095 = vmatpush2.msra.mxu0 0.0
        %3096 = vmatprep.subr.mxu0 0.0
        %3097 = vmatpush2.msra.mxu0 0.0
        %3098 = vmatprep.subr.mxu0 0.0
        %3099 = vmatpush2.msra.mxu0 0.0
        %3100 = vmatprep.subr.mxu0 0.0
        %3101 = vmatpush2.msra.mxu0 0.0
        %3102 = vmatprep.subr.mxu0 0.0
        %3103 = vmatpush2.msra.mxu0 0.0
        %3104 = vmatprep.subr.mxu0 0.0
        %3105 = vmatpush2.msra.mxu0 0.0
        %3106 = vmatprep.subr.mxu0 0.0
        %3107 = vmatpush2.msra.mxu0 0.0
        %3108 = vmatprep.mubr.f32.mxu0 0.0
        %3109 = vmatmul.mubr.f32.gmra.mxu0 %v3042
        %v3110 = vpop.f32.mrf.mxu0
        %v3111 = vadd.f32 0.0, %v3110
        %v3112 = vpop.f32.mrf.mxu0
        %3113 = vdwg.mxu0
        %v3115 = vsel %vm536, %v2634, 0
        %3117 = vmatprep.subr.mxu0 0.0
        %3118 = vmatpush1.msra.mxu0 0.0
        %3119 = vmatprep.subr.mxu0 0.0
        %3120 = vmatpush1.msra.mxu0 0.0
        %3121 = vmatprep.subr.mxu0 0.0
        %3122 = vmatpush1.msra.mxu0 0.0
        %3123 = vmatprep.subr.mxu0 0.0
        %3124 = vmatpush1.msra.mxu0 0.0
        %3125 = vmatprep.subr.mxu0 0.0
        %3126 = vmatpush1.msra.mxu0 0.0
        %3127 = vmatprep.subr.mxu0 0.0
        %3128 = vmatpush1.msra.mxu0 0.0
        %3129 = vmatprep.subr.mxu0 0.0
        %3130 = vmatpush1.msra.mxu0 0.0
        %3131 = vmatprep.subr.mxu0 0.0
        %3132 = vmatpush1.msra.mxu0 0.0
        %3133 = vmatprep.subr.mxu0 0.0
        %3134 = vmatpush1.msra.mxu0 0.0
        %3135 = vmatprep.subr.mxu0 0.0
        %3136 = vmatpush1.msra.mxu0 0.0
        %3137 = vmatprep.subr.mxu0 0.0
        %3138 = vmatpush1.msra.mxu0 0.0
        %3139 = vmatprep.subr.mxu0 0.0
        %3140 = vmatpush1.msra.mxu0 0.0
        %3141 = vmatprep.subr.mxu0 0.0
        %3142 = vmatpush1.msra.mxu0 0.0
        %3143 = vmatprep.subr.mxu0 0.0
        %3144 = vmatpush1.msra.mxu0 0.0
        %3145 = vmatprep.subr.mxu0 0.0
        %3146 = vmatpush1.msra.mxu0 0.0
        %3147 = vmatprep.subr.mxu0 0.0
        %3148 = vmatpush1.msra.mxu0 %v2638
        %3149 = vmatprep.subr.mxu0 0.0
        %3150 = vmatpush2.msra.mxu0 0.0
        %3151 = vmatprep.subr.mxu0 0.0
        %3152 = vmatpush2.msra.mxu0 0.0
        %3153 = vmatprep.subr.mxu0 0.0
        %3154 = vmatpush2.msra.mxu0 0.0
        %3155 = vmatprep.subr.mxu0 0.0
        %3156 = vmatpush2.msra.mxu0 0.0
        %3157 = vmatprep.subr.mxu0 0.0
        %3158 = vmatpush2.msra.mxu0 0.0
        %3159 = vmatprep.subr.mxu0 0.0
        %3160 = vmatpush2.msra.mxu0 0.0
        %3161 = vmatprep.subr.mxu0 0.0
        %3162 = vmatpush2.msra.mxu0 0.0
        %3163 = vmatprep.subr.mxu0 0.0
        %3164 = vmatpush2.msra.mxu0 0.0
        %3165 = vmatprep.subr.mxu0 0.0
        %3166 = vmatpush2.msra.mxu0 0.0
        %3167 = vmatprep.subr.mxu0 0.0
        %3168 = vmatpush2.msra.mxu0 0.0
        %3169 = vmatprep.subr.mxu0 0.0
        %3170 = vmatpush2.msra.mxu0 0.0
        %3171 = vmatprep.subr.mxu0 0.0
        %3172 = vmatpush2.msra.mxu0 0.0
        %3173 = vmatprep.subr.mxu0 0.0
        %3174 = vmatpush2.msra.mxu0 0.0
        %3175 = vmatprep.subr.mxu0 0.0
        %3176 = vmatpush2.msra.mxu0 0.0
        %3177 = vmatprep.subr.mxu0 0.0
        %3178 = vmatpush2.msra.mxu0 0.0
        %3179 = vmatprep.subr.mxu0 0.0
        %3180 = vmatpush2.msra.mxu0 0.0
        %3181 = vmatprep.mubr.f32.mxu0 0.0
        %3182 = vmatmul.mubr.f32.gmra.mxu0 %v3115
        %v3183 = vpop.f32.mrf.mxu0
        %v3184 = vadd.f32 %v3111, %v3183
        %v3185 = vpop.f32.mrf.mxu0
        %3186 = vdwg.mxu0
        %s3187 = scalar_lea.vmem %s2, 448
        %v3188 = vld [vmem:[%s3187] sm:$0xff]
        %v3189 = vld [vmem:[%s3187 + $0x8] sm:$0xff]
        %v3190 = vld [vmem:[%s3187 + $0x10] sm:$0xff]
        %v3191 = vld [vmem:[%s3187 + $0x18] sm:$0xff]
        %v3192 = vld [vmem:[%s6 + $0xe] sm:$0x1]
        %v3193 = vlaneseq
        %v3194 = vshrl.u32 %v3193, 7
        %v3195 = vsub.s32 0, %v3194
        %v3196 = vrot.slane %v3192, %v3195
        %3197 = vmatprep.subr.mxu0 0.0
        %3198 = vmatpush1.msra.mxu0 0.0
        %3199 = vmatprep.subr.mxu0 0.0
        %3200 = vmatpush1.msra.mxu0 0.0
        %3201 = vmatprep.subr.mxu0 0.0
        %3202 = vmatpush1.msra.mxu0 0.0
        %3203 = vmatprep.subr.mxu0 0.0
        %3204 = vmatpush1.msra.mxu0 0.0
        %3205 = vmatprep.subr.mxu0 0.0
        %3206 = vmatpush1.msra.mxu0 0.0
        %3207 = vmatprep.subr.mxu0 0.0
        %3208 = vmatpush1.msra.mxu0 0.0
        %3209 = vmatprep.subr.mxu0 0.0
        %3210 = vmatpush1.msra.mxu0 0.0
        %3211 = vmatprep.subr.mxu0 0.0
        %3212 = vmatpush1.msra.mxu0 0.0
        %3213 = vmatprep.subr.mxu0 0.0
        %3214 = vmatpush1.msra.mxu0 0.0
        %3215 = vmatprep.subr.mxu0 0.0
        %3216 = vmatpush1.msra.mxu0 0.0
        %3217 = vmatprep.subr.mxu0 0.0
        %3218 = vmatpush1.msra.mxu0 0.0
        %3219 = vmatprep.subr.mxu0 0.0
        %3220 = vmatpush1.msra.mxu0 0.0
        %3221 = vmatprep.subr.mxu0 0.0
        %3222 = vmatpush1.msra.mxu0 %v3191
        %3223 = vmatprep.subr.mxu0 0.0
        %3224 = vmatpush1.msra.mxu0 %v3190
        %3225 = vmatprep.subr.mxu0 0.0
        %3226 = vmatpush1.msra.mxu0 %v3189
        %3227 = vmatprep.subr.mxu0 0.0
        %3228 = vmatpush1.msra.mxu0 %v3188
        %3229 = vmatprep.subr.mxu0 0.0
        %3230 = vmatpush2.msra.mxu0 0.0
        %3231 = vmatprep.subr.mxu0 0.0
        %3232 = vmatpush2.msra.mxu0 0.0
        %3233 = vmatprep.subr.mxu0 0.0
        %3234 = vmatpush2.msra.mxu0 0.0
        %3235 = vmatprep.subr.mxu0 0.0
        %3236 = vmatpush2.msra.mxu0 0.0
        %3237 = vmatprep.subr.mxu0 0.0
        %3238 = vmatpush2.msra.mxu0 0.0
        %3239 = vmatprep.subr.mxu0 0.0
        %3240 = vmatpush2.msra.mxu0 0.0
        %3241 = vmatprep.subr.mxu0 0.0
        %3242 = vmatpush2.msra.mxu0 0.0
        %3243 = vmatprep.subr.mxu0 0.0
        %3244 = vmatpush2.msra.mxu0 0.0
        %3245 = vmatprep.subr.mxu0 0.0
        %3246 = vmatpush2.msra.mxu0 0.0
        %3247 = vmatprep.subr.mxu0 0.0
        %3248 = vmatpush2.msra.mxu0 0.0
        %3249 = vmatprep.subr.mxu0 0.0
        %3250 = vmatpush2.msra.mxu0 0.0
        %3251 = vmatprep.subr.mxu0 0.0
        %3252 = vmatpush2.msra.mxu0 0.0
        %3253 = vmatprep.subr.mxu0 0.0
        %3254 = vmatpush2.msra.mxu0 0.0
        %3255 = vmatprep.subr.mxu0 0.0
        %3256 = vmatpush2.msra.mxu0 0.0
        %3257 = vmatprep.subr.mxu0 0.0
        %3258 = vmatpush2.msra.mxu0 0.0
        %3259 = vmatprep.subr.mxu0 0.0
        %3260 = vmatpush2.msra.mxu0 0.0
        %3261 = vmatprep.mubr.f32.mxu0 0.0
        %3262 = vmatmul.mubr.f32.gmra.mxu0 %v2242
        %v3263 = vpop.f32.mrf.mxu0
        %v3264 = vadd.f32 %v3196, %v3263
        %v3265 = vpop.f32.mrf.mxu0
        %3266 = vdwg.mxu0
        %s3267 = scalar_lea.vmem %s2, 576
        %v3268 = vld [vmem:[%s3267] sm:$0xff]
        %v3269 = vld [vmem:[%s3267 + $0x8] sm:$0xff]
        %v3270 = vld [vmem:[%s3267 + $0x10] sm:$0xff]
        %v3271 = vld [vmem:[%s3267 + $0x18] sm:$0xff]
        %v3272 = vld [vmem:[%s6 + $0x12] sm:$0x1]
        %v3273 = vlaneseq
        %v3274 = vshrl.u32 %v3273, 7
        %v3275 = vsub.s32 0, %v3274
        %v3276 = vrot.slane %v3272, %v3275
        %3277 = vmatprep.subr.mxu0 0.0
        %3278 = vmatpush1.msra.mxu0 0.0
        %3279 = vmatprep.subr.mxu0 0.0
        %3280 = vmatpush1.msra.mxu0 0.0
        %3281 = vmatprep.subr.mxu0 0.0
        %3282 = vmatpush1.msra.mxu0 0.0
        %3283 = vmatprep.subr.mxu0 0.0
        %3284 = vmatpush1.msra.mxu0 0.0
        %3285 = vmatprep.subr.mxu0 0.0
        %3286 = vmatpush1.msra.mxu0 0.0
        %3287 = vmatprep.subr.mxu0 0.0
        %3288 = vmatpush1.msra.mxu0 0.0
        %3289 = vmatprep.subr.mxu0 0.0
        %3290 = vmatpush1.msra.mxu0 0.0
        %3291 = vmatprep.subr.mxu0 0.0
        %3292 = vmatpush1.msra.mxu0 0.0
        %3293 = vmatprep.subr.mxu0 0.0
        %3294 = vmatpush1.msra.mxu0 0.0
        %3295 = vmatprep.subr.mxu0 0.0
        %3296 = vmatpush1.msra.mxu0 0.0
        %3297 = vmatprep.subr.mxu0 0.0
        %3298 = vmatpush1.msra.mxu0 0.0
        %3299 = vmatprep.subr.mxu0 0.0
        %3300 = vmatpush1.msra.mxu0 0.0
        %3301 = vmatprep.subr.mxu0 0.0
        %3302 = vmatpush1.msra.mxu0 %v3271
        %3303 = vmatprep.subr.mxu0 0.0
        %3304 = vmatpush1.msra.mxu0 %v3270
        %3305 = vmatprep.subr.mxu0 0.0
        %3306 = vmatpush1.msra.mxu0 %v3269
        %3307 = vmatprep.subr.mxu0 0.0
        %3308 = vmatpush1.msra.mxu0 %v3268
        %3309 = vmatprep.subr.mxu0 0.0
        %3310 = vmatpush2.msra.mxu0 0.0
        %3311 = vmatprep.subr.mxu0 0.0
        %3312 = vmatpush2.msra.mxu0 0.0
        %3313 = vmatprep.subr.mxu0 0.0
        %3314 = vmatpush2.msra.mxu0 0.0
        %3315 = vmatprep.subr.mxu0 0.0
        %3316 = vmatpush2.msra.mxu0 0.0
        %3317 = vmatprep.subr.mxu0 0.0
        %3318 = vmatpush2.msra.mxu0 0.0
        %3319 = vmatprep.subr.mxu0 0.0
        %3320 = vmatpush2.msra.mxu0 0.0
        %3321 = vmatprep.subr.mxu0 0.0
        %3322 = vmatpush2.msra.mxu0 0.0
        %3323 = vmatprep.subr.mxu0 0.0
        %3324 = vmatpush2.msra.mxu0 0.0
        %3325 = vmatprep.subr.mxu0 0.0
        %3326 = vmatpush2.msra.mxu0 0.0
        %3327 = vmatprep.subr.mxu0 0.0
        %3328 = vmatpush2.msra.mxu0 0.0
        %3329 = vmatprep.subr.mxu0 0.0
        %3330 = vmatpush2.msra.mxu0 0.0
        %3331 = vmatprep.subr.mxu0 0.0
        %3332 = vmatpush2.msra.mxu0 0.0
        %3333 = vmatprep.subr.mxu0 0.0
        %3334 = vmatpush2.msra.mxu0 0.0
        %3335 = vmatprep.subr.mxu0 0.0
        %3336 = vmatpush2.msra.mxu0 0.0
        %3337 = vmatprep.subr.mxu0 0.0
        %3338 = vmatpush2.msra.mxu0 0.0
        %3339 = vmatprep.subr.mxu0 0.0
        %3340 = vmatpush2.msra.mxu0 0.0
        %3341 = vmatprep.mubr.f32.mxu0 0.0
        %3342 = vmatmul.mubr.f32.gmra.mxu0 %v2325
        %v3343 = vpop.f32.mrf.mxu0
        %v3344 = vadd.f32 %v3276, %v3343
        %v3345 = vpop.f32.mrf.mxu0
        %3346 = vdwg.mxu0
        %s3347 = scalar_lea.vmem %s2, 704
        %v3348 = vld [vmem:[%s3347] sm:$0xff]
        %v3349 = vld [vmem:[%s3347 + $0x8] sm:$0xff]
        %v3350 = vld [vmem:[%s3347 + $0x10] sm:$0xff]
        %v3351 = vld [vmem:[%s3347 + $0x18] sm:$0xff]
        %v3352 = vld [vmem:[%s6 + $0x16] sm:$0x1]
        %v3353 = vlaneseq
        %v3354 = vshrl.u32 %v3353, 7
        %v3355 = vsub.s32 0, %v3354
        %v3356 = vrot.slane %v3352, %v3355
        %3357 = vmatprep.subr.mxu0 0.0
        %3358 = vmatpush1.msra.mxu0 0.0
        %3359 = vmatprep.subr.mxu0 0.0
        %3360 = vmatpush1.msra.mxu0 0.0
        %3361 = vmatprep.subr.mxu0 0.0
        %3362 = vmatpush1.msra.mxu0 0.0
        %3363 = vmatprep.subr.mxu0 0.0
        %3364 = vmatpush1.msra.mxu0 0.0
        %3365 = vmatprep.subr.mxu0 0.0
        %3366 = vmatpush1.msra.mxu0 0.0
        %3367 = vmatprep.subr.mxu0 0.0
        %3368 = vmatpush1.msra.mxu0 0.0
        %3369 = vmatprep.subr.mxu0 0.0
        %3370 = vmatpush1.msra.mxu0 0.0
        %3371 = vmatprep.subr.mxu0 0.0
        %3372 = vmatpush1.msra.mxu0 0.0
        %3373 = vmatprep.subr.mxu0 0.0
        %3374 = vmatpush1.msra.mxu0 0.0
        %3375 = vmatprep.subr.mxu0 0.0
        %3376 = vmatpush1.msra.mxu0 0.0
        %3377 = vmatprep.subr.mxu0 0.0
        %3378 = vmatpush1.msra.mxu0 0.0
        %3379 = vmatprep.subr.mxu0 0.0
        %3380 = vmatpush1.msra.mxu0 0.0
        %3381 = vmatprep.subr.mxu0 0.0
        %3382 = vmatpush1.msra.mxu0 %v3351
        %3383 = vmatprep.subr.mxu0 0.0
        %3384 = vmatpush1.msra.mxu0 %v3350
        %3385 = vmatprep.subr.mxu0 0.0
        %3386 = vmatpush1.msra.mxu0 %v3349
        %3387 = vmatprep.subr.mxu0 0.0
        %3388 = vmatpush1.msra.mxu0 %v3348
        %3389 = vmatprep.subr.mxu0 0.0
        %3390 = vmatpush2.msra.mxu0 0.0
        %3391 = vmatprep.subr.mxu0 0.0
        %3392 = vmatpush2.msra.mxu0 0.0
        %3393 = vmatprep.subr.mxu0 0.0
        %3394 = vmatpush2.msra.mxu0 0.0
        %3395 = vmatprep.subr.mxu0 0.0
        %3396 = vmatpush2.msra.mxu0 0.0
        %3397 = vmatprep.subr.mxu0 0.0
        %3398 = vmatpush2.msra.mxu0 0.0
        %3399 = vmatprep.subr.mxu0 0.0
        %3400 = vmatpush2.msra.mxu0 0.0
        %3401 = vmatprep.subr.mxu0 0.0
        %3402 = vmatpush2.msra.mxu0 0.0
        %3403 = vmatprep.subr.mxu0 0.0
        %3404 = vmatpush2.msra.mxu0 0.0
        %3405 = vmatprep.subr.mxu0 0.0
        %3406 = vmatpush2.msra.mxu0 0.0
        %3407 = vmatprep.subr.mxu0 0.0
        %3408 = vmatpush2.msra.mxu0 0.0
        %3409 = vmatprep.subr.mxu0 0.0
        %3410 = vmatpush2.msra.mxu0 0.0
        %3411 = vmatprep.subr.mxu0 0.0
        %3412 = vmatpush2.msra.mxu0 0.0
        %3413 = vmatprep.subr.mxu0 0.0
        %3414 = vmatpush2.msra.mxu0 0.0
        %3415 = vmatprep.subr.mxu0 0.0
        %3416 = vmatpush2.msra.mxu0 0.0
        %3417 = vmatprep.subr.mxu0 0.0
        %3418 = vmatpush2.msra.mxu0 0.0
        %3419 = vmatprep.subr.mxu0 0.0
        %3420 = vmatpush2.msra.mxu0 0.0
        %3421 = vmatprep.mubr.f32.mxu0 0.0
        %3422 = vmatmul.mubr.f32.gmra.mxu0 %v2325
        %v3423 = vpop.f32.mrf.mxu0
        %v3424 = vadd.f32 %v3356, %v3423
        %v3425 = vpop.f32.mrf.mxu0
        %3426 = vdwg.mxu0
        %v3428 = vsel %vm536, %v3264, 0
        %v3431 = vsel %vm536, %v3344, 0
        %3433 = vmatprep.subr.mxu0 0.0
        %3434 = vmatpush1.xpose.msra.mxu0 0.0
        %3435 = vmatprep.subr.mxu0 0.0
        %3436 = vmatpush1.xpose.msra.mxu0 0.0
        %3437 = vmatprep.subr.mxu0 0.0
        %3438 = vmatpush1.xpose.msra.mxu0 0.0
        %3439 = vmatprep.subr.mxu0 0.0
        %3440 = vmatpush1.xpose.msra.mxu0 0.0
        %3441 = vmatprep.subr.mxu0 0.0
        %3442 = vmatpush1.xpose.msra.mxu0 0.0
        %3443 = vmatprep.subr.mxu0 0.0
        %3444 = vmatpush1.xpose.msra.mxu0 0.0
        %3445 = vmatprep.subr.mxu0 0.0
        %3446 = vmatpush1.xpose.msra.mxu0 0.0
        %3447 = vmatprep.subr.mxu0 0.0
        %3448 = vmatpush1.xpose.msra.mxu0 0.0
        %3449 = vmatprep.subr.mxu0 0.0
        %3450 = vmatpush1.xpose.msra.mxu0 0.0
        %3451 = vmatprep.subr.mxu0 0.0
        %3452 = vmatpush1.xpose.msra.mxu0 0.0
        %3453 = vmatprep.subr.mxu0 0.0
        %3454 = vmatpush1.xpose.msra.mxu0 0.0
        %3455 = vmatprep.subr.mxu0 0.0
        %3456 = vmatpush1.xpose.msra.mxu0 0.0
        %3457 = vmatprep.subr.mxu0 0.0
        %3458 = vmatpush1.xpose.msra.mxu0 0.0
        %3459 = vmatprep.subr.mxu0 0.0
        %3460 = vmatpush1.xpose.msra.mxu0 0.0
        %3461 = vmatprep.subr.mxu0 0.0
        %3462 = vmatpush1.xpose.msra.mxu0 0.0
        %3463 = vmatprep.subr.mxu0 0.0
        %3464 = vmatpush1.xpose.msra.mxu0 %v3431
        %3465 = vmatprep.subr.mxu0 0.0
        %3466 = vmatpush2.xpose.msra.mxu0 0.0
        %3467 = vmatprep.subr.mxu0 0.0
        %3468 = vmatpush2.xpose.msra.mxu0 0.0
        %3469 = vmatprep.subr.mxu0 0.0
        %3470 = vmatpush2.xpose.msra.mxu0 0.0
        %3471 = vmatprep.subr.mxu0 0.0
        %3472 = vmatpush2.xpose.msra.mxu0 0.0
        %3473 = vmatprep.subr.mxu0 0.0
        %3474 = vmatpush2.xpose.msra.mxu0 0.0
        %3475 = vmatprep.subr.mxu0 0.0
        %3476 = vmatpush2.xpose.msra.mxu0 0.0
        %3477 = vmatprep.subr.mxu0 0.0
        %3478 = vmatpush2.xpose.msra.mxu0 0.0
        %3479 = vmatprep.subr.mxu0 0.0
        %3480 = vmatpush2.xpose.msra.mxu0 0.0
        %3481 = vmatprep.subr.mxu0 0.0
        %3482 = vmatpush2.xpose.msra.mxu0 0.0
        %3483 = vmatprep.subr.mxu0 0.0
        %3484 = vmatpush2.xpose.msra.mxu0 0.0
        %3485 = vmatprep.subr.mxu0 0.0
        %3486 = vmatpush2.xpose.msra.mxu0 0.0
        %3487 = vmatprep.subr.mxu0 0.0
        %3488 = vmatpush2.xpose.msra.mxu0 0.0
        %3489 = vmatprep.subr.mxu0 0.0
        %3490 = vmatpush2.xpose.msra.mxu0 0.0
        %3491 = vmatprep.subr.mxu0 0.0
        %3492 = vmatpush2.xpose.msra.mxu0 0.0
        %3493 = vmatprep.subr.mxu0 0.0
        %3494 = vmatpush2.xpose.msra.mxu0 0.0
        %3495 = vmatprep.subr.mxu0 0.0
        %3496 = vmatpush2.xpose.msra.mxu0 0.0
        %3497 = vmatprep.mubr.f32.mxu0 0.0
        %3498 = vmatmul.mubr.f32.gmra.mxu0 %v3428
        %v3499 = vpop.f32.mrf.mxu0
        %v3500 = vadd.f32 0.0, %v3499
        %v3501 = vpop.f32.mrf.mxu0
        %3502 = vdwg.mxu0
        %v3503 = vsel %vm536, %v3500, -inf
        %3504 = vmax.xlane.f32.xlu0 %v3503
        %v3505 = vpop.xlane.xlu0 %3504
        %v3506 = vsub.f32 %v3500, %v3505
        %v3507 = vmul.f32 %v3506, 1.442695
        %v3508 = vpow.pop %v3507
        %v3509 = vsel %vm536, %v3508, 0.0
        %3510 = vadd.xlane.f32.xlu0 %v3509
        %v3511 = vpop.xlane.xlu0 %3510
        %v3512 = vrcp.pop %v3511
        %v3513 = vmul.f32 %v3508, %v3512
        %v3515 = vsel %vm536, %v3513, 0
        %3517 = vmatprep.subr.mxu0 0.0
        %3518 = vmatpush1.msra.mxu0 0.0
        %3519 = vmatprep.subr.mxu0 0.0
        %3520 = vmatpush1.msra.mxu0 0.0
        %3521 = vmatprep.subr.mxu0 0.0
        %3522 = vmatpush1.msra.mxu0 0.0
        %3523 = vmatprep.subr.mxu0 0.0
        %3524 = vmatpush1.msra.mxu0 0.0
        %3525 = vmatprep.subr.mxu0 0.0
        %3526 = vmatpush1.msra.mxu0 0.0
        %3527 = vmatprep.subr.mxu0 0.0
        %3528 = vmatpush1.msra.mxu0 0.0
        %3529 = vmatprep.subr.mxu0 0.0
        %3530 = vmatpush1.msra.mxu0 0.0
        %3531 = vmatprep.subr.mxu0 0.0
        %3532 = vmatpush1.msra.mxu0 0.0
        %3533 = vmatprep.subr.mxu0 0.0
        %3534 = vmatpush1.msra.mxu0 0.0
        %3535 = vmatprep.subr.mxu0 0.0
        %3536 = vmatpush1.msra.mxu0 0.0
        %3537 = vmatprep.subr.mxu0 0.0
        %3538 = vmatpush1.msra.mxu0 0.0
        %3539 = vmatprep.subr.mxu0 0.0
        %3540 = vmatpush1.msra.mxu0 0.0
        %3541 = vmatprep.subr.mxu0 0.0
        %3542 = vmatpush1.msra.mxu0 0.0
        %3543 = vmatprep.subr.mxu0 0.0
        %3544 = vmatpush1.msra.mxu0 0.0
        %3545 = vmatprep.subr.mxu0 0.0
        %3546 = vmatpush1.msra.mxu0 0.0
        %3547 = vmatprep.subr.mxu0 0.0
        %3548 = vmatpush1.msra.mxu0 %v3424
        %3549 = vmatprep.subr.mxu0 0.0
        %3550 = vmatpush2.msra.mxu0 0.0
        %3551 = vmatprep.subr.mxu0 0.0
        %3552 = vmatpush2.msra.mxu0 0.0
        %3553 = vmatprep.subr.mxu0 0.0
        %3554 = vmatpush2.msra.mxu0 0.0
        %3555 = vmatprep.subr.mxu0 0.0
        %3556 = vmatpush2.msra.mxu0 0.0
        %3557 = vmatprep.subr.mxu0 0.0
        %3558 = vmatpush2.msra.mxu0 0.0
        %3559 = vmatprep.subr.mxu0 0.0
        %3560 = vmatpush2.msra.mxu0 0.0
        %3561 = vmatprep.subr.mxu0 0.0
        %3562 = vmatpush2.msra.mxu0 0.0
        %3563 = vmatprep.subr.mxu0 0.0
        %3564 = vmatpush2.msra.mxu0 0.0
        %3565 = vmatprep.subr.mxu0 0.0
        %3566 = vmatpush2.msra.mxu0 0.0
        %3567 = vmatprep.subr.mxu0 0.0
        %3568 = vmatpush2.msra.mxu0 0.0
        %3569 = vmatprep.subr.mxu0 0.0
        %3570 = vmatpush2.msra.mxu0 0.0
        %3571 = vmatprep.subr.mxu0 0.0
        %3572 = vmatpush2.msra.mxu0 0.0
        %3573 = vmatprep.subr.mxu0 0.0
        %3574 = vmatpush2.msra.mxu0 0.0
        %3575 = vmatprep.subr.mxu0 0.0
        %3576 = vmatpush2.msra.mxu0 0.0
        %3577 = vmatprep.subr.mxu0 0.0
        %3578 = vmatpush2.msra.mxu0 0.0
        %3579 = vmatprep.subr.mxu0 0.0
        %3580 = vmatpush2.msra.mxu0 0.0
        %3581 = vmatprep.mubr.f32.mxu0 0.0
        %3582 = vmatmul.mubr.f32.gmra.mxu0 %v3515
        %v3583 = vpop.f32.mrf.mxu0
        %v3584 = vadd.f32 0.0, %v3583
        %v3585 = vpop.f32.mrf.mxu0
        %3586 = vdwg.mxu0
        %s3587 = scalar_lea.vmem %s3, 48
        %v3588 = vld [vmem:[%s3587] sm:$0xff]
        %v3590 = vsel %vm536, %v3584, 0
        %3592 = vmatprep.subr.mxu0 0.0
        %3593 = vmatpush1.msra.mxu0 0.0
        %3594 = vmatprep.subr.mxu0 0.0
        %3595 = vmatpush1.msra.mxu0 0.0
        %3596 = vmatprep.subr.mxu0 0.0
        %3597 = vmatpush1.msra.mxu0 0.0
        %3598 = vmatprep.subr.mxu0 0.0
        %3599 = vmatpush1.msra.mxu0 0.0
        %3600 = vmatprep.subr.mxu0 0.0
        %3601 = vmatpush1.msra.mxu0 0.0
        %3602 = vmatprep.subr.mxu0 0.0
        %3603 = vmatpush1.msra.mxu0 0.0
        %3604 = vmatprep.subr.mxu0 0.0
        %3605 = vmatpush1.msra.mxu0 0.0
        %3606 = vmatprep.subr.mxu0 0.0
        %3607 = vmatpush1.msra.mxu0 0.0
        %3608 = vmatprep.subr.mxu0 0.0
        %3609 = vmatpush1.msra.mxu0 0.0
        %3610 = vmatprep.subr.mxu0 0.0
        %3611 = vmatpush1.msra.mxu0 0.0
        %3612 = vmatprep.subr.mxu0 0.0
        %3613 = vmatpush1.msra.mxu0 0.0
        %3614 = vmatprep.subr.mxu0 0.0
        %3615 = vmatpush1.msra.mxu0 0.0
        %3616 = vmatprep.subr.mxu0 0.0
        %3617 = vmatpush1.msra.mxu0 0.0
        %3618 = vmatprep.subr.mxu0 0.0
        %3619 = vmatpush1.msra.mxu0 0.0
        %3620 = vmatprep.subr.mxu0 0.0
        %3621 = vmatpush1.msra.mxu0 0.0
        %3622 = vmatprep.subr.mxu0 0.0
        %3623 = vmatpush1.msra.mxu0 %v3588
        %3624 = vmatprep.subr.mxu0 0.0
        %3625 = vmatpush2.msra.mxu0 0.0
        %3626 = vmatprep.subr.mxu0 0.0
        %3627 = vmatpush2.msra.mxu0 0.0
        %3628 = vmatprep.subr.mxu0 0.0
        %3629 = vmatpush2.msra.mxu0 0.0
        %3630 = vmatprep.subr.mxu0 0.0
        %3631 = vmatpush2.msra.mxu0 0.0
        %3632 = vmatprep.subr.mxu0 0.0
        %3633 = vmatpush2.msra.mxu0 0.0
        %3634 = vmatprep.subr.mxu0 0.0
        %3635 = vmatpush2.msra.mxu0 0.0
        %3636 = vmatprep.subr.mxu0 0.0
        %3637 = vmatpush2.msra.mxu0 0.0
        %3638 = vmatprep.subr.mxu0 0.0
        %3639 = vmatpush2.msra.mxu0 0.0
        %3640 = vmatprep.subr.mxu0 0.0
        %3641 = vmatpush2.msra.mxu0 0.0
        %3642 = vmatprep.subr.mxu0 0.0
        %3643 = vmatpush2.msra.mxu0 0.0
        %3644 = vmatprep.subr.mxu0 0.0
        %3645 = vmatpush2.msra.mxu0 0.0
        %3646 = vmatprep.subr.mxu0 0.0
        %3647 = vmatpush2.msra.mxu0 0.0
        %3648 = vmatprep.subr.mxu0 0.0
        %3649 = vmatpush2.msra.mxu0 0.0
        %3650 = vmatprep.subr.mxu0 0.0
        %3651 = vmatpush2.msra.mxu0 0.0
        %3652 = vmatprep.subr.mxu0 0.0
        %3653 = vmatpush2.msra.mxu0 0.0
        %3654 = vmatprep.subr.mxu0 0.0
        %3655 = vmatpush2.msra.mxu0 0.0
        %3656 = vmatprep.mubr.f32.mxu0 0.0
        %3657 = vmatmul.mubr.f32.gmra.mxu0 %v3590
        %v3658 = vpop.f32.mrf.mxu0
        %v3659 = vadd.f32 0.0, %v3658
        %v3660 = vpop.f32.mrf.mxu0
        %3661 = vdwg.mxu0
        %v3662 = vadd.f32 %v3184, %v3659
        %s3663 = scalar_lea.vmem %s2, 480
        %v3664 = vld [vmem:[%s3663] sm:$0xff]
        %v3665 = vld [vmem:[%s3663 + $0x8] sm:$0xff]
        %v3666 = vld [vmem:[%s3663 + $0x10] sm:$0xff]
        %v3667 = vld [vmem:[%s3663 + $0x18] sm:$0xff]
        %v3668 = vld [vmem:[%s6 + $0xf] sm:$0x1]
        %v3669 = vlaneseq
        %v3670 = vshrl.u32 %v3669, 7
        %v3671 = vsub.s32 0, %v3670
        %v3672 = vrot.slane %v3668, %v3671
        %3673 = vmatprep.subr.mxu0 0.0
        %3674 = vmatpush1.msra.mxu0 0.0
        %3675 = vmatprep.subr.mxu0 0.0
        %3676 = vmatpush1.msra.mxu0 0.0
        %3677 = vmatprep.subr.mxu0 0.0
        %3678 = vmatpush1.msra.mxu0 0.0
        %3679 = vmatprep.subr.mxu0 0.0
        %3680 = vmatpush1.msra.mxu0 0.0
        %3681 = vmatprep.subr.mxu0 0.0
        %3682 = vmatpush1.msra.mxu0 0.0
        %3683 = vmatprep.subr.mxu0 0.0
        %3684 = vmatpush1.msra.mxu0 0.0
        %3685 = vmatprep.subr.mxu0 0.0
        %3686 = vmatpush1.msra.mxu0 0.0
        %3687 = vmatprep.subr.mxu0 0.0
        %3688 = vmatpush1.msra.mxu0 0.0
        %3689 = vmatprep.subr.mxu0 0.0
        %3690 = vmatpush1.msra.mxu0 0.0
        %3691 = vmatprep.subr.mxu0 0.0
        %3692 = vmatpush1.msra.mxu0 0.0
        %3693 = vmatprep.subr.mxu0 0.0
        %3694 = vmatpush1.msra.mxu0 0.0
        %3695 = vmatprep.subr.mxu0 0.0
        %3696 = vmatpush1.msra.mxu0 0.0
        %3697 = vmatprep.subr.mxu0 0.0
        %3698 = vmatpush1.msra.mxu0 %v3667
        %3699 = vmatprep.subr.mxu0 0.0
        %3700 = vmatpush1.msra.mxu0 %v3666
        %3701 = vmatprep.subr.mxu0 0.0
        %3702 = vmatpush1.msra.mxu0 %v3665
        %3703 = vmatprep.subr.mxu0 0.0
        %3704 = vmatpush1.msra.mxu0 %v3664
        %3705 = vmatprep.subr.mxu0 0.0
        %3706 = vmatpush2.msra.mxu0 0.0
        %3707 = vmatprep.subr.mxu0 0.0
        %3708 = vmatpush2.msra.mxu0 0.0
        %3709 = vmatprep.subr.mxu0 0.0
        %3710 = vmatpush2.msra.mxu0 0.0
        %3711 = vmatprep.subr.mxu0 0.0
        %3712 = vmatpush2.msra.mxu0 0.0
        %3713 = vmatprep.subr.mxu0 0.0
        %3714 = vmatpush2.msra.mxu0 0.0
        %3715 = vmatprep.subr.mxu0 0.0
        %3716 = vmatpush2.msra.mxu0 0.0
        %3717 = vmatprep.subr.mxu0 0.0
        %3718 = vmatpush2.msra.mxu0 0.0
        %3719 = vmatprep.subr.mxu0 0.0
        %3720 = vmatpush2.msra.mxu0 0.0
        %3721 = vmatprep.subr.mxu0 0.0
        %3722 = vmatpush2.msra.mxu0 0.0
        %3723 = vmatprep.subr.mxu0 0.0
        %3724 = vmatpush2.msra.mxu0 0.0
        %3725 = vmatprep.subr.mxu0 0.0
        %3726 = vmatpush2.msra.mxu0 0.0
        %3727 = vmatprep.subr.mxu0 0.0
        %3728 = vmatpush2.msra.mxu0 0.0
        %3729 = vmatprep.subr.mxu0 0.0
        %3730 = vmatpush2.msra.mxu0 0.0
        %3731 = vmatprep.subr.mxu0 0.0
        %3732 = vmatpush2.msra.mxu0 0.0
        %3733 = vmatprep.subr.mxu0 0.0
        %3734 = vmatpush2.msra.mxu0 0.0
        %3735 = vmatprep.subr.mxu0 0.0
        %3736 = vmatpush2.msra.mxu0 0.0
        %3737 = vmatprep.mubr.f32.mxu0 0.0
        %3738 = vmatmul.mubr.f32.gmra.mxu0 %v2242
        %v3739 = vpop.f32.mrf.mxu0
        %v3740 = vadd.f32 %v3672, %v3739
        %v3741 = vpop.f32.mrf.mxu0
        %3742 = vdwg.mxu0
        %s3743 = scalar_lea.vmem %s2, 608
        %v3744 = vld [vmem:[%s3743] sm:$0xff]
        %v3745 = vld [vmem:[%s3743 + $0x8] sm:$0xff]
        %v3746 = vld [vmem:[%s3743 + $0x10] sm:$0xff]
        %v3747 = vld [vmem:[%s3743 + $0x18] sm:$0xff]
        %v3748 = vld [vmem:[%s6 + $0x13] sm:$0x1]
        %v3749 = vlaneseq
        %v3750 = vshrl.u32 %v3749, 7
        %v3751 = vsub.s32 0, %v3750
        %v3752 = vrot.slane %v3748, %v3751
        %3753 = vmatprep.subr.mxu0 0.0
        %3754 = vmatpush1.msra.mxu0 0.0
        %3755 = vmatprep.subr.mxu0 0.0
        %3756 = vmatpush1.msra.mxu0 0.0
        %3757 = vmatprep.subr.mxu0 0.0
        %3758 = vmatpush1.msra.mxu0 0.0
        %3759 = vmatprep.subr.mxu0 0.0
        %3760 = vmatpush1.msra.mxu0 0.0
        %3761 = vmatprep.subr.mxu0 0.0
        %3762 = vmatpush1.msra.mxu0 0.0
        %3763 = vmatprep.subr.mxu0 0.0
        %3764 = vmatpush1.msra.mxu0 0.0
        %3765 = vmatprep.subr.mxu0 0.0
        %3766 = vmatpush1.msra.mxu0 0.0
        %3767 = vmatprep.subr.mxu0 0.0
        %3768 = vmatpush1.msra.mxu0 0.0
        %3769 = vmatprep.subr.mxu0 0.0
        %3770 = vmatpush1.msra.mxu0 0.0
        %3771 = vmatprep.subr.mxu0 0.0
        %3772 = vmatpush1.msra.mxu0 0.0
        %3773 = vmatprep.subr.mxu0 0.0
        %3774 = vmatpush1.msra.mxu0 0.0
        %3775 = vmatprep.subr.mxu0 0.0
        %3776 = vmatpush1.msra.mxu0 0.0
        %3777 = vmatprep.subr.mxu0 0.0
        %3778 = vmatpush1.msra.mxu0 %v3747
        %3779 = vmatprep.subr.mxu0 0.0
        %3780 = vmatpush1.msra.mxu0 %v3746
        %3781 = vmatprep.subr.mxu0 0.0
        %3782 = vmatpush1.msra.mxu0 %v3745
        %3783 = vmatprep.subr.mxu0 0.0
        %3784 = vmatpush1.msra.mxu0 %v3744
        %3785 = vmatprep.subr.mxu0 0.0
        %3786 = vmatpush2.msra.mxu0 0.0
        %3787 = vmatprep.subr.mxu0 0.0
        %3788 = vmatpush2.msra.mxu0 0.0
        %3789 = vmatprep.subr.mxu0 0.0
        %3790 = vmatpush2.msra.mxu0 0.0
        %3791 = vmatprep.subr.mxu0 0.0
        %3792 = vmatpush2.msra.mxu0 0.0
        %3793 = vmatprep.subr.mxu0 0.0
        %3794 = vmatpush2.msra.mxu0 0.0
        %3795 = vmatprep.subr.mxu0 0.0
        %3796 = vmatpush2.msra.mxu0 0.0
        %3797 = vmatprep.subr.mxu0 0.0
        %3798 = vmatpush2.msra.mxu0 0.0
        %3799 = vmatprep.subr.mxu0 0.0
        %3800 = vmatpush2.msra.mxu0 0.0
        %3801 = vmatprep.subr.mxu0 0.0
        %3802 = vmatpush2.msra.mxu0 0.0
        %3803 = vmatprep.subr.mxu0 0.0
        %3804 = vmatpush2.msra.mxu0 0.0
        %3805 = vmatprep.subr.mxu0 0.0
        %3806 = vmatpush2.msra.mxu0 0.0
        %3807 = vmatprep.subr.mxu0 0.0
        %3808 = vmatpush2.msra.mxu0 0.0
        %3809 = vmatprep.subr.mxu0 0.0
        %3810 = vmatpush2.msra.mxu0 0.0
        %3811 = vmatprep.subr.mxu0 0.0
        %3812 = vmatpush2.msra.mxu0 0.0
        %3813 = vmatprep.subr.mxu0 0.0
        %3814 = vmatpush2.msra.mxu0 0.0
        %3815 = vmatprep.subr.mxu0 0.0
        %3816 = vmatpush2.msra.mxu0 0.0
        %3817 = vmatprep.mubr.f32.mxu0 0.0
        %3818 = vmatmul.mubr.f32.gmra.mxu0 %v2325
        %v3819 = vpop.f32.mrf.mxu0
        %v3820 = vadd.f32 %v3752, %v3819
        %v3821 = vpop.f32.mrf.mxu0
        %3822 = vdwg.mxu0
        %s3823 = scalar_lea.vmem %s2, 736
        %v3824 = vld [vmem:[%s3823] sm:$0xff]
        %v3825 = vld [vmem:[%s3823 + $0x8] sm:$0xff]
        %v3826 = vld [vmem:[%s3823 + $0x10] sm:$0xff]
        %v3827 = vld [vmem:[%s3823 + $0x18] sm:$0xff]
        %v3828 = vld [vmem:[%s6 + $0x17] sm:$0x1]
        %v3829 = vlaneseq
        %v3830 = vshrl.u32 %v3829, 7
        %v3831 = vsub.s32 0, %v3830
        %v3832 = vrot.slane %v3828, %v3831
        %3833 = vmatprep.subr.mxu0 0.0
        %3834 = vmatpush1.msra.mxu0 0.0
        %3835 = vmatprep.subr.mxu0 0.0
        %3836 = vmatpush1.msra.mxu0 0.0
        %3837 = vmatprep.subr.mxu0 0.0
        %3838 = vmatpush1.msra.mxu0 0.0
        %3839 = vmatprep.subr.mxu0 0.0
        %3840 = vmatpush1.msra.mxu0 0.0
        %3841 = vmatprep.subr.mxu0 0.0
        %3842 = vmatpush1.msra.mxu0 0.0
        %3843 = vmatprep.subr.mxu0 0.0
        %3844 = vmatpush1.msra.mxu0 0.0
        %3845 = vmatprep.subr.mxu0 0.0
        %3846 = vmatpush1.msra.mxu0 0.0
        %3847 = vmatprep.subr.mxu0 0.0
        %3848 = vmatpush1.msra.mxu0 0.0
        %3849 = vmatprep.subr.mxu0 0.0
        %3850 = vmatpush1.msra.mxu0 0.0
        %3851 = vmatprep.subr.mxu0 0.0
        %3852 = vmatpush1.msra.mxu0 0.0
        %3853 = vmatprep.subr.mxu0 0.0
        %3854 = vmatpush1.msra.mxu0 0.0
        %3855 = vmatprep.subr.mxu0 0.0
        %3856 = vmatpush1.msra.mxu0 0.0
        %3857 = vmatprep.subr.mxu0 0.0
        %3858 = vmatpush1.msra.mxu0 %v3827
        %3859 = vmatprep.subr.mxu0 0.0
        %3860 = vmatpush1.msra.mxu0 %v3826
        %3861 = vmatprep.subr.mxu0 0.0
        %3862 = vmatpush1.msra.mxu0 %v3825
        %3863 = vmatprep.subr.mxu0 0.0
        %3864 = vmatpush1.msra.mxu0 %v3824
        %3865 = vmatprep.subr.mxu0 0.0
        %3866 = vmatpush2.msra.mxu0 0.0
        %3867 = vmatprep.subr.mxu0 0.0
        %3868 = vmatpush2.msra.mxu0 0.0
        %3869 = vmatprep.subr.mxu0 0.0
        %3870 = vmatpush2.msra.mxu0 0.0
        %3871 = vmatprep.subr.mxu0 0.0
        %3872 = vmatpush2.msra.mxu0 0.0
        %3873 = vmatprep.subr.mxu0 0.0
        %3874 = vmatpush2.msra.mxu0 0.0
        %3875 = vmatprep.subr.mxu0 0.0
        %3876 = vmatpush2.msra.mxu0 0.0
        %3877 = vmatprep.subr.mxu0 0.0
        %3878 = vmatpush2.msra.mxu0 0.0
        %3879 = vmatprep.subr.mxu0 0.0
        %3880 = vmatpush2.msra.mxu0 0.0
        %3881 = vmatprep.subr.mxu0 0.0
        %3882 = vmatpush2.msra.mxu0 0.0
        %3883 = vmatprep.subr.mxu0 0.0
        %3884 = vmatpush2.msra.mxu0 0.0
        %3885 = vmatprep.subr.mxu0 0.0
        %3886 = vmatpush2.msra.mxu0 0.0
        %3887 = vmatprep.subr.mxu0 0.0
        %3888 = vmatpush2.msra.mxu0 0.0
        %3889 = vmatprep.subr.mxu0 0.0
        %3890 = vmatpush2.msra.mxu0 0.0
        %3891 = vmatprep.subr.mxu0 0.0
        %3892 = vmatpush2.msra.mxu0 0.0
        %3893 = vmatprep.subr.mxu0 0.0
        %3894 = vmatpush2.msra.mxu0 0.0
        %3895 = vmatprep.subr.mxu0 0.0
        %3896 = vmatpush2.msra.mxu0 0.0
        %3897 = vmatprep.mubr.f32.mxu0 0.0
        %3898 = vmatmul.mubr.f32.gmra.mxu0 %v2325
        %v3899 = vpop.f32.mrf.mxu0
        %v3900 = vadd.f32 %v3832, %v3899
        %v3901 = vpop.f32.mrf.mxu0
        %3902 = vdwg.mxu0
        %v3904 = vsel %vm536, %v3740, 0
        %v3907 = vsel %vm536, %v3820, 0
        %3909 = vmatprep.subr.mxu0 0.0
        %3910 = vmatpush1.xpose.msra.mxu0 0.0
        %3911 = vmatprep.subr.mxu0 0.0
        %3912 = vmatpush1.xpose.msra.mxu0 0.0
        %3913 = vmatprep.subr.mxu0 0.0
        %3914 = vmatpush1.xpose.msra.mxu0 0.0
        %3915 = vmatprep.subr.mxu0 0.0
        %3916 = vmatpush1.xpose.msra.mxu0 0.0
        %3917 = vmatprep.subr.mxu0 0.0
        %3918 = vmatpush1.xpose.msra.mxu0 0.0
        %3919 = vmatprep.subr.mxu0 0.0
        %3920 = vmatpush1.xpose.msra.mxu0 0.0
        %3921 = vmatprep.subr.mxu0 0.0
        %3922 = vmatpush1.xpose.msra.mxu0 0.0
        %3923 = vmatprep.subr.mxu0 0.0
        %3924 = vmatpush1.xpose.msra.mxu0 0.0
        %3925 = vmatprep.subr.mxu0 0.0
        %3926 = vmatpush1.xpose.msra.mxu0 0.0
        %3927 = vmatprep.subr.mxu0 0.0
        %3928 = vmatpush1.xpose.msra.mxu0 0.0
        %3929 = vmatprep.subr.mxu0 0.0
        %3930 = vmatpush1.xpose.msra.mxu0 0.0
        %3931 = vmatprep.subr.mxu0 0.0
        %3932 = vmatpush1.xpose.msra.mxu0 0.0
        %3933 = vmatprep.subr.mxu0 0.0
        %3934 = vmatpush1.xpose.msra.mxu0 0.0
        %3935 = vmatprep.subr.mxu0 0.0
        %3936 = vmatpush1.xpose.msra.mxu0 0.0
        %3937 = vmatprep.subr.mxu0 0.0
        %3938 = vmatpush1.xpose.msra.mxu0 0.0
        %3939 = vmatprep.subr.mxu0 0.0
        %3940 = vmatpush1.xpose.msra.mxu0 %v3907
        %3941 = vmatprep.subr.mxu0 0.0
        %3942 = vmatpush2.xpose.msra.mxu0 0.0
        %3943 = vmatprep.subr.mxu0 0.0
        %3944 = vmatpush2.xpose.msra.mxu0 0.0
        %3945 = vmatprep.subr.mxu0 0.0
        %3946 = vmatpush2.xpose.msra.mxu0 0.0
        %3947 = vmatprep.subr.mxu0 0.0
        %3948 = vmatpush2.xpose.msra.mxu0 0.0
        %3949 = vmatprep.subr.mxu0 0.0
        %3950 = vmatpush2.xpose.msra.mxu0 0.0
        %3951 = vmatprep.subr.mxu0 0.0
        %3952 = vmatpush2.xpose.msra.mxu0 0.0
        %3953 = vmatprep.subr.mxu0 0.0
        %3954 = vmatpush2.xpose.msra.mxu0 0.0
        %3955 = vmatprep.subr.mxu0 0.0
        %3956 = vmatpush2.xpose.msra.mxu0 0.0
        %3957 = vmatprep.subr.mxu0 0.0
        %3958 = vmatpush2.xpose.msra.mxu0 0.0
        %3959 = vmatprep.subr.mxu0 0.0
        %3960 = vmatpush2.xpose.msra.mxu0 0.0
        %3961 = vmatprep.subr.mxu0 0.0
        %3962 = vmatpush2.xpose.msra.mxu0 0.0
        %3963 = vmatprep.subr.mxu0 0.0
        %3964 = vmatpush2.xpose.msra.mxu0 0.0
        %3965 = vmatprep.subr.mxu0 0.0
        %3966 = vmatpush2.xpose.msra.mxu0 0.0
        %3967 = vmatprep.subr.mxu0 0.0
        %3968 = vmatpush2.xpose.msra.mxu0 0.0
        %3969 = vmatprep.subr.mxu0 0.0
        %3970 = vmatpush2.xpose.msra.mxu0 0.0
        %3971 = vmatprep.subr.mxu0 0.0
        %3972 = vmatpush2.xpose.msra.mxu0 0.0
        %3973 = vmatprep.mubr.f32.mxu0 0.0
        %3974 = vmatmul.mubr.f32.gmra.mxu0 %v3904
        %v3975 = vpop.f32.mrf.mxu0
        %v3976 = vadd.f32 0.0, %v3975
        %v3977 = vpop.f32.mrf.mxu0
        %3978 = vdwg.mxu0
        %v3979 = vsel %vm536, %v3976, -inf
        %3980 = vmax.xlane.f32.xlu0 %v3979
        %v3981 = vpop.xlane.xlu0 %3980
        %v3982 = vsub.f32 %v3976, %v3981
        %v3983 = vmul.f32 %v3982, 1.442695
        %v3984 = vpow.pop %v3983
        %v3985 = vsel %vm536, %v3984, 0.0
        %3986 = vadd.xlane.f32.xlu0 %v3985
        %v3987 = vpop.xlane.xlu0 %3986
        %v3988 = vrcp.pop %v3987
        %v3989 = vmul.f32 %v3984, %v3988
        %v3991 = vsel %vm536, %v3989, 0
        %3993 = vmatprep.subr.mxu0 0.0
        %3994 = vmatpush1.msra.mxu0 0.0
        %3995 = vmatprep.subr.mxu0 0.0
        %3996 = vmatpush1.msra.mxu0 0.0
        %3997 = vmatprep.subr.mxu0 0.0
        %3998 = vmatpush1.msra.mxu0 0.0
        %3999 = vmatprep.subr.mxu0 0.0
        %4000 = vmatpush1.msra.mxu0 0.0
        %4001 = vmatprep.subr.mxu0 0.0
        %4002 = vmatpush1.msra.mxu0 0.0
        %4003 = vmatprep.subr.mxu0 0.0
        %4004 = vmatpush1.msra.mxu0 0.0
        %4005 = vmatprep.subr.mxu0 0.0
        %4006 = vmatpush1.msra.mxu0 0.0
        %4007 = vmatprep.subr.mxu0 0.0
        %4008 = vmatpush1.msra.mxu0 0.0
        %4009 = vmatprep.subr.mxu0 0.0
        %4010 = vmatpush1.msra.mxu0 0.0
        %4011 = vmatprep.subr.mxu0 0.0
        %4012 = vmatpush1.msra.mxu0 0.0
        %4013 = vmatprep.subr.mxu0 0.0
        %4014 = vmatpush1.msra.mxu0 0.0
        %4015 = vmatprep.subr.mxu0 0.0
        %4016 = vmatpush1.msra.mxu0 0.0
        %4017 = vmatprep.subr.mxu0 0.0
        %4018 = vmatpush1.msra.mxu0 0.0
        %4019 = vmatprep.subr.mxu0 0.0
        %4020 = vmatpush1.msra.mxu0 0.0
        %4021 = vmatprep.subr.mxu0 0.0
        %4022 = vmatpush1.msra.mxu0 0.0
        %4023 = vmatprep.subr.mxu0 0.0
        %4024 = vmatpush1.msra.mxu0 %v3900
        %4025 = vmatprep.subr.mxu0 0.0
        %4026 = vmatpush2.msra.mxu0 0.0
        %4027 = vmatprep.subr.mxu0 0.0
        %4028 = vmatpush2.msra.mxu0 0.0
        %4029 = vmatprep.subr.mxu0 0.0
        %4030 = vmatpush2.msra.mxu0 0.0
        %4031 = vmatprep.subr.mxu0 0.0
        %4032 = vmatpush2.msra.mxu0 0.0
        %4033 = vmatprep.subr.mxu0 0.0
        %4034 = vmatpush2.msra.mxu0 0.0
        %4035 = vmatprep.subr.mxu0 0.0
        %4036 = vmatpush2.msra.mxu0 0.0
        %4037 = vmatprep.subr.mxu0 0.0
        %4038 = vmatpush2.msra.mxu0 0.0
        %4039 = vmatprep.subr.mxu0 0.0
        %4040 = vmatpush2.msra.mxu0 0.0
        %4041 = vmatprep.subr.mxu0 0.0
        %4042 = vmatpush2.msra.mxu0 0.0
        %4043 = vmatprep.subr.mxu0 0.0
        %4044 = vmatpush2.msra.mxu0 0.0
        %4045 = vmatprep.subr.mxu0 0.0
        %4046 = vmatpush2.msra.mxu0 0.0
        %4047 = vmatprep.subr.mxu0 0.0
        %4048 = vmatpush2.msra.mxu0 0.0
        %4049 = vmatprep.subr.mxu0 0.0
        %4050 = vmatpush2.msra.mxu0 0.0
        %4051 = vmatprep.subr.mxu0 0.0
        %4052 = vmatpush2.msra.mxu0 0.0
        %4053 = vmatprep.subr.mxu0 0.0
        %4054 = vmatpush2.msra.mxu0 0.0
        %4055 = vmatprep.subr.mxu0 0.0
        %4056 = vmatpush2.msra.mxu0 0.0
        %4057 = vmatprep.mubr.f32.mxu0 0.0
        %4058 = vmatmul.mubr.f32.gmra.mxu0 %v3991
        %v4059 = vpop.f32.mrf.mxu0
        %v4060 = vadd.f32 0.0, %v4059
        %v4061 = vpop.f32.mrf.mxu0
        %4062 = vdwg.mxu0
        %s4063 = scalar_lea.vmem %s3, 56
        %v4064 = vld [vmem:[%s4063] sm:$0xff]
        %v4066 = vsel %vm536, %v4060, 0
        %4068 = vmatprep.subr.mxu0 0.0
        %4069 = vmatpush1.msra.mxu0 0.0
        %4070 = vmatprep.subr.mxu0 0.0
        %4071 = vmatpush1.msra.mxu0 0.0
        %4072 = vmatprep.subr.mxu0 0.0
        %4073 = vmatpush1.msra.mxu0 0.0
        %4074 = vmatprep.subr.mxu0 0.0
        %4075 = vmatpush1.msra.mxu0 0.0
        %4076 = vmatprep.subr.mxu0 0.0
        %4077 = vmatpush1.msra.mxu0 0.0
        %4078 = vmatprep.subr.mxu0 0.0
        %4079 = vmatpush1.msra.mxu0 0.0
        %4080 = vmatprep.subr.mxu0 0.0
        %4081 = vmatpush1.msra.mxu0 0.0
        %4082 = vmatprep.subr.mxu0 0.0
        %4083 = vmatpush1.msra.mxu0 0.0
        %4084 = vmatprep.subr.mxu0 0.0
        %4085 = vmatpush1.msra.mxu0 0.0
        %4086 = vmatprep.subr.mxu0 0.0
        %4087 = vmatpush1.msra.mxu0 0.0
        %4088 = vmatprep.subr.mxu0 0.0
        %4089 = vmatpush1.msra.mxu0 0.0
        %4090 = vmatprep.subr.mxu0 0.0
        %4091 = vmatpush1.msra.mxu0 0.0
        %4092 = vmatprep.subr.mxu0 0.0
        %4093 = vmatpush1.msra.mxu0 0.0
        %4094 = vmatprep.subr.mxu0 0.0
        %4095 = vmatpush1.msra.mxu0 0.0
        %4096 = vmatprep.subr.mxu0 0.0
        %4097 = vmatpush1.msra.mxu0 0.0
        %4098 = vmatprep.subr.mxu0 0.0
        %4099 = vmatpush1.msra.mxu0 %v4064
        %4100 = vmatprep.subr.mxu0 0.0
        %4101 = vmatpush2.msra.mxu0 0.0
        %4102 = vmatprep.subr.mxu0 0.0
        %4103 = vmatpush2.msra.mxu0 0.0
        %4104 = vmatprep.subr.mxu0 0.0
        %4105 = vmatpush2.msra.mxu0 0.0
        %4106 = vmatprep.subr.mxu0 0.0
        %4107 = vmatpush2.msra.mxu0 0.0
        %4108 = vmatprep.subr.mxu0 0.0
        %4109 = vmatpush2.msra.mxu0 0.0
        %4110 = vmatprep.subr.mxu0 0.0
        %4111 = vmatpush2.msra.mxu0 0.0
        %4112 = vmatprep.subr.mxu0 0.0
        %4113 = vmatpush2.msra.mxu0 0.0
        %4114 = vmatprep.subr.mxu0 0.0
        %4115 = vmatpush2.msra.mxu0 0.0
        %4116 = vmatprep.subr.mxu0 0.0
        %4117 = vmatpush2.msra.mxu0 0.0
        %4118 = vmatprep.subr.mxu0 0.0
        %4119 = vmatpush2.msra.mxu0 0.0
        %4120 = vmatprep.subr.mxu0 0.0
        %4121 = vmatpush2.msra.mxu0 0.0
        %4122 = vmatprep.subr.mxu0 0.0
        %4123 = vmatpush2.msra.mxu0 0.0
        %4124 = vmatprep.subr.mxu0 0.0
        %4125 = vmatpush2.msra.mxu0 0.0
        %4126 = vmatprep.subr.mxu0 0.0
        %4127 = vmatpush2.msra.mxu0 0.0
        %4128 = vmatprep.subr.mxu0 0.0
        %4129 = vmatpush2.msra.mxu0 0.0
        %4130 = vmatprep.subr.mxu0 0.0
        %4131 = vmatpush2.msra.mxu0 0.0
        %4132 = vmatprep.mubr.f32.mxu0 0.0
        %4133 = vmatmul.mubr.f32.gmra.mxu0 %v4066
        %v4134 = vpop.f32.mrf.mxu0
        %v4135 = vadd.f32 0.0, %v4134
        %v4136 = vpop.f32.mrf.mxu0
        %4137 = vdwg.mxu0
        %v4138 = vadd.f32 %v3662, %v4135
        %v4139 = vld [vmem:[%s6 + $0x19] sm:$0x1]
        %v4140 = vlaneseq
        %v4141 = vshrl.u32 %v4140, 7
        %v4142 = vsub.s32 0, %v4141
        %v4143 = vrot.slane %v4139, %v4142
        %v4144 = vadd.f32 %v4138, %v4143
        %v4145 = vadd.f32 %v2230, %v4144
        %v4146 = vld [vmem:[%s6 + $0x1e] sm:$0x1]
        %v4147 = vld [vmem:[%s6 + $0x1f] sm:$0x1]
        %v4148 = vsel %vm302, %v4145, 0.0
        %4149 = vadd.xlane.f32.xlu0 %v4148
        %v4150 = vpop.xlane.xlu0 %4149
        %v4151 = vmul.f32 %v4150, %v2210
        %v4152 = vsub.f32 %v4145, %v4151
        %v4153 = vmul.f32 %v4152, %v4152
        %v4154 = vsel %vm302, %v4153, 0.0
        %4155 = vadd.xlane.f32.xlu0 %v4154
        %v4156 = vpop.xlane.xlu0 %4155
        %v4157 = vmul.f32 %v4156, %v2210
        %v4158 = vadd.f32 %v4157, 1e-05
        %v4159 = vrsqrt.pop %v4158
        %v4160 = vmul.f32 %v4152, %v4159
        %v4161 = vlaneseq
        %v4162 = vshrl.u32 %v4161, 7
        %v4163 = vsub.s32 0, %v4162
        %v4164 = vrot.slane %v4146, %v4163
        %v4165 = vmul.f32 %v4160, %v4164
        %v4166 = vlaneseq
        %v4167 = vshrl.u32 %v4166, 7
        %v4168 = vsub.s32 0, %v4167
        %v4169 = vrot.slane %v4147, %v4168
        %v4170 = vadd.f32 %v4165, %v4169
        %v4171 = vld [vmem:[%s4] sm:$0xff]
        %v4172 = vld [vmem:[%s4 + $0x8] sm:$0xff]
        %v4173 = vld [vmem:[%s4 + $0x10] sm:$0xff]
        %v4174 = vld [vmem:[%s4 + $0x18] sm:$0xff]
        %v4175 = vld [vmem:[%s6 + $0x1a] sm:$0x1]
        %v4176 = vlaneseq
        %v4177 = vshrl.u32 %v4176, 7
        %v4178 = vsub.s32 0, %v4177
        %v4179 = vrot.slane %v4175, %v4178
        %v4181 = vsel %vm302, %v4170, 0
        %4183 = vmatprep.subr.mxu0 0.0
        %4184 = vmatpush1.msra.mxu0 0.0
        %4185 = vmatprep.subr.mxu0 0.0
        %4186 = vmatpush1.msra.mxu0 0.0
        %4187 = vmatprep.subr.mxu0 0.0
        %4188 = vmatpush1.msra.mxu0 0.0
        %4189 = vmatprep.subr.mxu0 0.0
        %4190 = vmatpush1.msra.mxu0 0.0
        %4191 = vmatprep.subr.mxu0 0.0
        %4192 = vmatpush1.msra.mxu0 0.0
        %4193 = vmatprep.subr.mxu0 0.0
        %4194 = vmatpush1.msra.mxu0 0.0
        %4195 = vmatprep.subr.mxu0 0.0
        %4196 = vmatpush1.msra.mxu0 0.0
        %4197 = vmatprep.subr.mxu0 0.0
        %4198 = vmatpush1.msra.mxu0 0.0
        %4199 = vmatprep.subr.mxu0 0.0
        %4200 = vmatpush1.msra.mxu0 0.0
        %4201 = vmatprep.subr.mxu0 0.0
        %4202 = vmatpush1.msra.mxu0 0.0
        %4203 = vmatprep.subr.mxu0 0.0
        %4204 = vmatpush1.msra.mxu0 0.0
        %4205 = vmatprep.subr.mxu0 0.0
        %4206 = vmatpush1.msra.mxu0 0.0
        %4207 = vmatprep.subr.mxu0 0.0
        %4208 = vmatpush1.msra.mxu0 %v4174
        %4209 = vmatprep.subr.mxu0 0.0
        %4210 = vmatpush1.msra.mxu0 %v4173
        %4211 = vmatprep.subr.mxu0 0.0
        %4212 = vmatpush1.msra.mxu0 %v4172
        %4213 = vmatprep.subr.mxu0 0.0
        %4214 = vmatpush1.msra.mxu0 %v4171
        %4215 = vmatprep.subr.mxu0 0.0
        %4216 = vmatpush2.msra.mxu0 0.0
        %4217 = vmatprep.subr.mxu0 0.0
        %4218 = vmatpush2.msra.mxu0 0.0
        %4219 = vmatprep.subr.mxu0 0.0
        %4220 = vmatpush2.msra.mxu0 0.0
        %4221 = vmatprep.subr.mxu0 0.0
        %4222 = vmatpush2.msra.mxu0 0.0
        %4223 = vmatprep.subr.mxu0 0.0
        %4224 = vmatpush2.msra.mxu0 0.0
        %4225 = vmatprep.subr.mxu0 0.0
        %4226 = vmatpush2.msra.mxu0 0.0
        %4227 = vmatprep.subr.mxu0 0.0
        %4228 = vmatpush2.msra.mxu0 0.0
        %4229 = vmatprep.subr.mxu0 0.0
        %4230 = vmatpush2.msra.mxu0 0.0
        %4231 = vmatprep.subr.mxu0 0.0
        %4232 = vmatpush2.msra.mxu0 0.0
        %4233 = vmatprep.subr.mxu0 0.0
        %4234 = vmatpush2.msra.mxu0 0.0
        %4235 = vmatprep.subr.mxu0 0.0
        %4236 = vmatpush2.msra.mxu0 0.0
        %4237 = vmatprep.subr.mxu0 0.0
        %4238 = vmatpush2.msra.mxu0 0.0
        %4239 = vmatprep.subr.mxu0 0.0
        %4240 = vmatpush2.msra.mxu0 0.0
        %4241 = vmatprep.subr.mxu0 0.0
        %4242 = vmatpush2.msra.mxu0 0.0
        %4243 = vmatprep.subr.mxu0 0.0
        %4244 = vmatpush2.msra.mxu0 0.0
        %4245 = vmatprep.subr.mxu0 0.0
        %4246 = vmatpush2.msra.mxu0 0.0
        %4247 = vmatprep.mubr.f32.mxu0 0.0
        %4248 = vmatmul.mubr.f32.gmra.mxu0 %v4181
        %v4249 = vpop.f32.mrf.mxu0
        %v4250 = vadd.f32 %v4179, %v4249
        %v4251 = vpop.f32.mrf.mxu0
        %4252 = vdwg.mxu0
        %v4253 = vmax.f32 %v4250, 0.0
        %v4254 = vld [vmem:[%s5] sm:$0xff]
        %v4255 = vld [vmem:[%s5 + $0x8] sm:$0xff]
        %v4256 = vld [vmem:[%s5 + $0x10] sm:$0xff]
        %v4257 = vld [vmem:[%s5 + $0x18] sm:$0xff]
        %v4258 = vld [vmem:[%s5 + $0x20] sm:$0xff]
        %v4259 = vld [vmem:[%s5 + $0x28] sm:$0xff]
        %v4260 = vld [vmem:[%s5 + $0x30] sm:$0xff]
        %v4261 = vld [vmem:[%s5 + $0x38] sm:$0xff]
        %v4262 = vld [vmem:[%s6 + $0x1b] sm:$0x1]
        %v4263 = vlaneseq
        %v4264 = vshrl.u32 %v4263, 7
        %v4265 = vsub.s32 0, %v4264
        %v4266 = vrot.slane %v4262, %v4265
        %vm4267 = vcmask 523264
        %v4269 = vsel %vm4267, %v4253, 0
        %4271 = vmatprep.subr.mxu0 0.0
        %4272 = vmatpush1.msra.mxu0 0.0
        %4273 = vmatprep.subr.mxu0 0.0
        %4274 = vmatpush1.msra.mxu0 0.0
        %4275 = vmatprep.subr.mxu0 0.0
        %4276 = vmatpush1.msra.mxu0 0.0
        %4277 = vmatprep.subr.mxu0 0.0
        %4278 = vmatpush1.msra.mxu0 0.0
        %4279 = vmatprep.subr.mxu0 0.0
        %4280 = vmatpush1.msra.mxu0 0.0
        %4281 = vmatprep.subr.mxu0 0.0
        %4282 = vmatpush1.msra.mxu0 0.0
        %4283 = vmatprep.subr.mxu0 0.0
        %4284 = vmatpush1.msra.mxu0 0.0
        %4285 = vmatprep.subr.mxu0 0.0
        %4286 = vmatpush1.msra.mxu0 0.0
        %4287 = vmatprep.subr.mxu0 0.0
        %4288 = vmatpush1.msra.mxu0 %v4261
        %4289 = vmatprep.subr.mxu0 0.0
        %4290 = vmatpush1.msra.mxu0 %v4260
        %4291 = vmatprep.subr.mxu0 0.0
        %4292 = vmatpush1.msra.mxu0 %v4259
        %4293 = vmatprep.subr.mxu0 0.0
        %4294 = vmatpush1.msra.mxu0 %v4258
        %4295 = vmatprep.subr.mxu0 0.0
        %4296 = vmatpush1.msra.mxu0 %v4257
        %4297 = vmatprep.subr.mxu0 0.0
        %4298 = vmatpush1.msra.mxu0 %v4256
        %4299 = vmatprep.subr.mxu0 0.0
        %4300 = vmatpush1.msra.mxu0 %v4255
        %4301 = vmatprep.subr.mxu0 0.0
        %4302 = vmatpush1.msra.mxu0 %v4254
        %4303 = vmatprep.subr.mxu0 0.0
        %4304 = vmatpush2.msra.mxu0 0.0
        %4305 = vmatprep.subr.mxu0 0.0
        %4306 = vmatpush2.msra.mxu0 0.0
        %4307 = vmatprep.subr.mxu0 0.0
        %4308 = vmatpush2.msra.mxu0 0.0
        %4309 = vmatprep.subr.mxu0 0.0
        %4310 = vmatpush2.msra.mxu0 0.0
        %4311 = vmatprep.subr.mxu0 0.0
        %4312 = vmatpush2.msra.mxu0 0.0
        %4313 = vmatprep.subr.mxu0 0.0
        %4314 = vmatpush2.msra.mxu0 0.0
        %4315 = vmatprep.subr.mxu0 0.0
        %4316 = vmatpush2.msra.mxu0 0.0
        %4317 = vmatprep.subr.mxu0 0.0
        %4318 = vmatpush2.msra.mxu0 0.0
        %4319 = vmatprep.subr.mxu0 0.0
        %4320 = vmatpush2.msra.mxu0 0.0
        %4321 = vmatprep.subr.mxu0 0.0
        %4322 = vmatpush2.msra.mxu0 0.0
        %4323 = vmatprep.subr.mxu0 0.0
        %4324 = vmatpush2.msra.mxu0 0.0
        %4325 = vmatprep.subr.mxu0 0.0
        %4326 = vmatpush2.msra.mxu0 0.0
        %4327 = vmatprep.subr.mxu0 0.0
        %4328 = vmatpush2.msra.mxu0 0.0
        %4329 = vmatprep.subr.mxu0 0.0
        %4330 = vmatpush2.msra.mxu0 0.0
        %4331 = vmatprep.subr.mxu0 0.0
        %4332 = vmatpush2.msra.mxu0 0.0
        %4333 = vmatprep.subr.mxu0 0.0
        %4334 = vmatpush2.msra.mxu0 0.0
        %4335 = vmatprep.mubr.f32.mxu0 0.0
        %4336 = vmatmul.mubr.f32.gmra.mxu0 %v4269
        %v4337 = vpop.f32.mrf.mxu0
        %v4338 = vadd.f32 %v4266, %v4337
        %v4339 = vpop.f32.mrf.mxu0
        %4340 = vdwg.mxu0
        %v4341 = vadd.f32 %v4170, %v4338
        %v4342 = vld [vmem:[%s6 + $0x20] sm:$0x1]
        %v4343 = vld [vmem:[%s6 + $0x21] sm:$0x1]
        %v4344 = vsel %vm302, %v4341, 0.0
        %4345 = vadd.xlane.f32.xlu0 %v4344
        %v4346 = vpop.xlane.xlu0 %4345
        %v4347 = vmul.f32 %v4346, %v2210
        %v4348 = vsub.f32 %v4341, %v4347
        %v4349 = vmul.f32 %v4348, %v4348
        %v4350 = vsel %vm302, %v4349, 0.0
        %4351 = vadd.xlane.f32.xlu0 %v4350
        %v4352 = vpop.xlane.xlu0 %4351
        %v4353 = vmul.f32 %v4352, %v2210
        %v4354 = vadd.f32 %v4353, 1e-05
        %v4355 = vrsqrt.pop %v4354
        %v4356 = vmul.f32 %v4348, %v4355
        %v4357 = vlaneseq
        %v4358 = vshrl.u32 %v4357, 7
        %v4359 = vsub.s32 0, %v4358
        %v4360 = vrot.slane %v4342, %v4359
        %v4361 = vmul.f32 %v4356, %v4360
        %v4362 = vlaneseq
        %v4363 = vshrl.u32 %v4362, 7
        %v4364 = vsub.s32 0, %v4363
        %v4365 = vrot.slane %v4343, %v4364
        %v4366 = vadd.f32 %v4361, %v4365
        %v4368 = vsel %vm302, %v4366, 0
        %4370 = vmatprep.subr.mxu0 0.0
        %4371 = vmatpush1.msra.mxu0 0.0
        %4372 = vmatprep.subr.mxu0 0.0
        %4373 = vmatpush1.msra.mxu0 0.0
        %4374 = vmatprep.subr.mxu0 0.0
        %4375 = vmatpush1.msra.mxu0 0.0
        %4376 = vmatprep.subr.mxu0 0.0
        %4377 = vmatpush1.msra.mxu0 0.0
        %4378 = vmatprep.subr.mxu0 0.0
        %4379 = vmatpush1.msra.mxu0 0.0
        %4380 = vmatprep.subr.mxu0 0.0
        %4381 = vmatpush1.msra.mxu0 0.0
        %4382 = vmatprep.subr.mxu0 0.0
        %4383 = vmatpush1.msra.mxu0 0.0
        %4384 = vmatprep.subr.mxu0 0.0
        %4385 = vmatpush1.msra.mxu0 0.0
        %4386 = vmatprep.subr.mxu0 0.0
        %4387 = vmatpush1.msra.mxu0 0.0
        %4388 = vmatprep.subr.mxu0 0.0
        %4389 = vmatpush1.msra.mxu0 0.0
        %4390 = vmatprep.subr.mxu0 0.0
        %4391 = vmatpush1.msra.mxu0 0.0
        %4392 = vmatprep.subr.mxu0 0.0
        %4393 = vmatpush1.msra.mxu0 0.0
        %4394 = vmatprep.subr.mxu0 0.0
        %4395 = vmatpush1.msra.mxu0 %v296
        %4396 = vmatprep.subr.mxu0 0.0
        %4397 = vmatpush1.msra.mxu0 %v295
        %4398 = vmatprep.subr.mxu0 0.0
        %4399 = vmatpush1.msra.mxu0 %v294
        %4400 = vmatprep.subr.mxu0 0.0
        %4401 = vmatpush1.msra.mxu0 %v293
        %4402 = vmatprep.subr.mxu0 0.0
        %4403 = vmatpush2.msra.mxu0 0.0
        %4404 = vmatprep.subr.mxu0 0.0
        %4405 = vmatpush2.msra.mxu0 0.0
        %4406 = vmatprep.subr.mxu0 0.0
        %4407 = vmatpush2.msra.mxu0 0.0
        %4408 = vmatprep.subr.mxu0 0.0
        %4409 = vmatpush2.msra.mxu0 0.0
        %4410 = vmatprep.subr.mxu0 0.0
        %4411 = vmatpush2.msra.mxu0 0.0
        %4412 = vmatprep.subr.mxu0 0.0
        %4413 = vmatpush2.msra.mxu0 0.0
        %4414 = vmatprep.subr.mxu0 0.0
        %4415 = vmatpush2.msra.mxu0 0.0
        %4416 = vmatprep.subr.mxu0 0.0
        %4417 = vmatpush2.msra.mxu0 0.0
        %4418 = vmatprep.subr.mxu0 0.0
        %4419 = vmatpush2.msra.mxu0 0.0
        %4420 = vmatprep.subr.mxu0 0.0
        %4421 = vmatpush2.msra.mxu0 0.0
        %4422 = vmatprep.subr.mxu0 0.0
        %4423 = vmatpush2.msra.mxu0 0.0
        %4424 = vmatprep.subr.mxu0 0.0
        %4425 = vmatpush2.msra.mxu0 0.0
        %4426 = vmatprep.subr.mxu0 0.0
        %4427 = vmatpush2.msra.mxu0 0.0
        %4428 = vmatprep.subr.mxu0 0.0
        %4429 = vmatpush2.msra.mxu0 0.0
        %4430 = vmatprep.subr.mxu0 0.0
        %4431 = vmatpush2.msra.mxu0 0.0
        %4432 = vmatprep.subr.mxu0 0.0
        %4433 = vmatpush2.msra.mxu0 0.0
        %4434 = vmatprep.mubr.f32.mxu0 0.0
        %4435 = vmatmul.mubr.f32.gmra.mxu0 %v4368
        %v4436 = vpop.f32.mrf.mxu0
        %v4437 = vadd.f32 %v301, %v4436
        %v4438 = vpop.f32.mrf.mxu0
        %4439 = vdwg.mxu0
        %4440 = vmatprep.subr.mxu0 0.0
        %4441 = vmatpush1.msra.mxu0 0.0
        %4442 = vmatprep.subr.mxu0 0.0
        %4443 = vmatpush1.msra.mxu0 0.0
        %4444 = vmatprep.subr.mxu0 0.0
        %4445 = vmatpush1.msra.mxu0 0.0
        %4446 = vmatprep.subr.mxu0 0.0
        %4447 = vmatpush1.msra.mxu0 0.0
        %4448 = vmatprep.subr.mxu0 0.0
        %4449 = vmatpush1.msra.mxu0 0.0
        %4450 = vmatprep.subr.mxu0 0.0
        %4451 = vmatpush1.msra.mxu0 0.0
        %4452 = vmatprep.subr.mxu0 0.0
        %4453 = vmatpush1.msra.mxu0 0.0
        %4454 = vmatprep.subr.mxu0 0.0
        %4455 = vmatpush1.msra.mxu0 0.0
        %4456 = vmatprep.subr.mxu0 0.0
        %4457 = vmatpush1.msra.mxu0 0.0
        %4458 = vmatprep.subr.mxu0 0.0
        %4459 = vmatpush1.msra.mxu0 0.0
        %4460 = vmatprep.subr.mxu0 0.0
        %4461 = vmatpush1.msra.mxu0 0.0
        %4462 = vmatprep.subr.mxu0 0.0
        %4463 = vmatpush1.msra.mxu0 0.0
        %4464 = vmatprep.subr.mxu0 0.0
        %4465 = vmatpush1.msra.mxu0 %v380
        %4466 = vmatprep.subr.mxu0 0.0
        %4467 = vmatpush1.msra.mxu0 %v379
        %4468 = vmatprep.subr.mxu0 0.0
        %4469 = vmatpush1.msra.mxu0 %v378
        %4470 = vmatprep.subr.mxu0 0.0
        %4471 = vmatpush1.msra.mxu0 %v377
        %4472 = vmatprep.subr.mxu0 0.0
        %4473 = vmatpush2.msra.mxu0 0.0
        %4474 = vmatprep.subr.mxu0 0.0
        %4475 = vmatpush2.msra.mxu0 0.0
        %4476 = vmatprep.subr.mxu0 0.0
        %4477 = vmatpush2.msra.mxu0 0.0
        %4478 = vmatprep.subr.mxu0 0.0
        %4479 = vmatpush2.msra.mxu0 0.0
        %4480 = vmatprep.subr.mxu0 0.0
        %4481 = vmatpush2.msra.mxu0 0.0
        %4482 = vmatprep.subr.mxu0 0.0
        %4483 = vmatpush2.msra.mxu0 0.0
        %4484 = vmatprep.subr.mxu0 0.0
        %4485 = vmatpush2.msra.mxu0 0.0
        %4486 = vmatprep.subr.mxu0 0.0
        %4487 = vmatpush2.msra.mxu0 0.0
        %4488 = vmatprep.subr.mxu0 0.0
        %4489 = vmatpush2.msra.mxu0 0.0
        %4490 = vmatprep.subr.mxu0 0.0
        %4491 = vmatpush2.msra.mxu0 0.0
        %4492 = vmatprep.subr.mxu0 0.0
        %4493 = vmatpush2.msra.mxu0 0.0
        %4494 = vmatprep.subr.mxu0 0.0
        %4495 = vmatpush2.msra.mxu0 0.0
        %4496 = vmatprep.subr.mxu0 0.0
        %4497 = vmatpush2.msra.mxu0 0.0
        %4498 = vmatprep.subr.mxu0 0.0
        %4499 = vmatpush2.msra.mxu0 0.0
        %4500 = vmatprep.subr.mxu0 0.0
        %4501 = vmatpush2.msra.mxu0 0.0
        %4502 = vmatprep.subr.mxu0 0.0
        %4503 = vmatpush2.msra.mxu0 0.0
        %4504 = vmatprep.mubr.f32.mxu0 0.0
        %4505 = vmatmul.mubr.f32.gmra.mxu0 %v4368
        %v4506 = vpop.f32.mrf.mxu0
        %v4507 = vadd.f32 %v385, %v4506
        %v4508 = vpop.f32.mrf.mxu0
        %4509 = vdwg.mxu0
        %4510 = vmatprep.subr.mxu0 0.0
        %4511 = vmatpush1.msra.mxu0 0.0
        %4512 = vmatprep.subr.mxu0 0.0
        %4513 = vmatpush1.msra.mxu0 0.0
        %4514 = vmatprep.subr.mxu0 0.0
        %4515 = vmatpush1.msra.mxu0 0.0
        %4516 = vmatprep.subr.mxu0 0.0
        %4517 = vmatpush1.msra.mxu0 0.0
        %4518 = vmatprep.subr.mxu0 0.0
        %4519 = vmatpush1.msra.mxu0 0.0
        %4520 = vmatprep.subr.mxu0 0.0
        %4521 = vmatpush1.msra.mxu0 0.0
        %4522 = vmatprep.subr.mxu0 0.0
        %4523 = vmatpush1.msra.mxu0 0.0
        %4524 = vmatprep.subr.mxu0 0.0
        %4525 = vmatpush1.msra.mxu0 0.0
        %4526 = vmatprep.subr.mxu0 0.0
        %4527 = vmatpush1.msra.mxu0 0.0
        %4528 = vmatprep.subr.mxu0 0.0
        %4529 = vmatpush1.msra.mxu0 0.0
        %4530 = vmatprep.subr.mxu0 0.0
        %4531 = vmatpush1.msra.mxu0 0.0
        %4532 = vmatprep.subr.mxu0 0.0
        %4533 = vmatpush1.msra.mxu0 0.0
        %4534 = vmatprep.subr.mxu0 0.0
        %4535 = vmatpush1.msra.mxu0 %v460
        %4536 = vmatprep.subr.mxu0 0.0
        %4537 = vmatpush1.msra.mxu0 %v459
        %4538 = vmatprep.subr.mxu0 0.0
        %4539 = vmatpush1.msra.mxu0 %v458
        %4540 = vmatprep.subr.mxu0 0.0
        %4541 = vmatpush1.msra.mxu0 %v457
        %4542 = vmatprep.subr.mxu0 0.0
        %4543 = vmatpush2.msra.mxu0 0.0
        %4544 = vmatprep.subr.mxu0 0.0
        %4545 = vmatpush2.msra.mxu0 0.0
        %4546 = vmatprep.subr.mxu0 0.0
        %4547 = vmatpush2.msra.mxu0 0.0
        %4548 = vmatprep.subr.mxu0 0.0
        %4549 = vmatpush2.msra.mxu0 0.0
        %4550 = vmatprep.subr.mxu0 0.0
        %4551 = vmatpush2.msra.mxu0 0.0
        %4552 = vmatprep.subr.mxu0 0.0
        %4553 = vmatpush2.msra.mxu0 0.0
        %4554 = vmatprep.subr.mxu0 0.0
        %4555 = vmatpush2.msra.mxu0 0.0
        %4556 = vmatprep.subr.mxu0 0.0
        %4557 = vmatpush2.msra.mxu0 0.0
        %4558 = vmatprep.subr.mxu0 0.0
        %4559 = vmatpush2.msra.mxu0 0.0
        %4560 = vmatprep.subr.mxu0 0.0
        %4561 = vmatpush2.msra.mxu0 0.0
        %4562 = vmatprep.subr.mxu0 0.0
        %4563 = vmatpush2.msra.mxu0 0.0
        %4564 = vmatprep.subr.mxu0 0.0
        %4565 = vmatpush2.msra.mxu0 0.0
        %4566 = vmatprep.subr.mxu0 0.0
        %4567 = vmatpush2.msra.mxu0 0.0
        %4568 = vmatprep.subr.mxu0 0.0
        %4569 = vmatpush2.msra.mxu0 0.0
        %4570 = vmatprep.subr.mxu0 0.0
        %4571 = vmatpush2.msra.mxu0 0.0
        %4572 = vmatprep.subr.mxu0 0.0
        %4573 = vmatpush2.msra.mxu0 0.0
        %4574 = vmatprep.mubr.f32.mxu0 0.0
        %4575 = vmatmul.mubr.f32.gmra.mxu0 %v4368
        %v4576 = vpop.f32.mrf.mxu0
        %v4577 = vadd.f32 %v465, %v4576
        %v4578 = vpop.f32.mrf.mxu0
        %4579 = vdwg.mxu0
        %v4581 = vsel %vm536, %v4437, 0
        %v4584 = vsel %vm536, %v4507, 0
        %4586 = vmatprep.subr.mxu0 0.0
        %4587 = vmatpush1.xpose.msra.mxu0 0.0
        %4588 = vmatprep.subr.mxu0 0.0
        %4589 = vmatpush1.xpose.msra.mxu0 0.0
        %4590 = vmatprep.subr.mxu0 0.0
        %4591 = vmatpush1.xpose.msra.mxu0 0.0
        %4592 = vmatprep.subr.mxu0 0.0
        %4593 = vmatpush1.xpose.msra.mxu0 0.0
        %4594 = vmatprep.subr.mxu0 0.0
        %4595 = vmatpush1.xpose.msra.mxu0 0.0
        %4596 = vmatprep.subr.mxu0 0.0
        %4597 = vmatpush1.xpose.msra.mxu0 0.0
        %4598 = vmatprep.subr.mxu0 0.0
        %4599 = vmatpush1.xpose.msra.mxu0 0.0
        %4600 = vmatprep.subr.mxu0 0.0
        %4601 = vmatpush1.xpose.msra.mxu0 0.0
        %4602 = vmatprep.subr.mxu0 0.0
        %4603 = vmatpush1.xpose.msra.mxu0 0.0
        %4604 = vmatprep.subr.mxu0 0.0
        %4605 = vmatpush1.xpose.msra.mxu0 0.0
        %4606 = vmatprep.subr.mxu0 0.0
        %4607 = vmatpush1.xpose.msra.mxu0 0.0
        %4608 = vmatprep.subr.mxu0 0.0
        %4609 = vmatpush1.xpose.msra.mxu0 0.0
        %4610 = vmatprep.subr.mxu0 0.0
        %4611 = vmatpush1.xpose.msra.mxu0 0.0
        %4612 = vmatprep.subr.mxu0 0.0
        %4613 = vmatpush1.xpose.msra.mxu0 0.0
        %4614 = vmatprep.subr.mxu0 0.0
        %4615 = vmatpush1.xpose.msra.mxu0 0.0
        %4616 = vmatprep.subr.mxu0 0.0
        %4617 = vmatpush1.xpose.msra.mxu0 %v4584
        %4618 = vmatprep.subr.mxu0 0.0
        %4619 = vmatpush2.xpose.msra.mxu0 0.0
        %4620 = vmatprep.subr.mxu0 0.0
        %4621 = vmatpush2.xpose.msra.mxu0 0.0
        %4622 = vmatprep.subr.mxu0 0.0
        %4623 = vmatpush2.xpose.msra.mxu0 0.0
        %4624 = vmatprep.subr.mxu0 0.0
        %4625 = vmatpush2.xpose.msra.mxu0 0.0
        %4626 = vmatprep.subr.mxu0 0.0
        %4627 = vmatpush2.xpose.msra.mxu0 0.0
        %4628 = vmatprep.subr.mxu0 0.0
        %4629 = vmatpush2.xpose.msra.mxu0 0.0
        %4630 = vmatprep.subr.mxu0 0.0
        %4631 = vmatpush2.xpose.msra.mxu0 0.0
        %4632 = vmatprep.subr.mxu0 0.0
        %4633 = vmatpush2.xpose.msra.mxu0 0.0
        %4634 = vmatprep.subr.mxu0 0.0
        %4635 = vmatpush2.xpose.msra.mxu0 0.0
        %4636 = vmatprep.subr.mxu0 0.0
        %4637 = vmatpush2.xpose.msra.mxu0 0.0
        %4638 = vmatprep.subr.mxu0 0.0
        %4639 = vmatpush2.xpose.msra.mxu0 0.0
        %4640 = vmatprep.subr.mxu0 0.0
        %4641 = vmatpush2.xpose.msra.mxu0 0.0
        %4642 = vmatprep.subr.mxu0 0.0
        %4643 = vmatpush2.xpose.msra.mxu0 0.0
        %4644 = vmatprep.subr.mxu0 0.0
        %4645 = vmatpush2.xpose.msra.mxu0 0.0
        %4646 = vmatprep.subr.mxu0 0.0
        %4647 = vmatpush2.xpose.msra.mxu0 0.0
        %4648 = vmatprep.subr.mxu0 0.0
        %4649 = vmatpush2.xpose.msra.mxu0 0.0
        %4650 = vmatprep.mubr.f32.mxu0 0.0
        %4651 = vmatmul.mubr.f32.gmra.mxu0 %v4581
        %v4652 = vpop.f32.mrf.mxu0
        %v4653 = vadd.f32 0.0, %v4652
        %v4654 = vpop.f32.mrf.mxu0
        %4655 = vdwg.mxu0
        %v4656 = vsel %vm536, %v4653, -inf
        %4657 = vmax.xlane.f32.xlu0 %v4656
        %v4658 = vpop.xlane.xlu0 %4657
        %v4659 = vsub.f32 %v4653, %v4658
        %v4660 = vmul.f32 %v4659, 1.442695
        %v4661 = vpow.pop %v4660
        %v4662 = vsel %vm536, %v4661, 0.0
        %4663 = vadd.xlane.f32.xlu0 %v4662
        %v4664 = vpop.xlane.xlu0 %4663
        %v4665 = vrcp.pop %v4664
        %v4666 = vmul.f32 %v4661, %v4665
        %v4668 = vsel %vm536, %v4666, 0
        %4670 = vmatprep.subr.mxu0 0.0
        %4671 = vmatpush1.msra.mxu0 0.0
        %4672 = vmatprep.subr.mxu0 0.0
        %4673 = vmatpush1.msra.mxu0 0.0
        %4674 = vmatprep.subr.mxu0 0.0
        %4675 = vmatpush1.msra.mxu0 0.0
        %4676 = vmatprep.subr.mxu0 0.0
        %4677 = vmatpush1.msra.mxu0 0.0
        %4678 = vmatprep.subr.mxu0 0.0
        %4679 = vmatpush1.msra.mxu0 0.0
        %4680 = vmatprep.subr.mxu0 0.0
        %4681 = vmatpush1.msra.mxu0 0.0
        %4682 = vmatprep.subr.mxu0 0.0
        %4683 = vmatpush1.msra.mxu0 0.0
        %4684 = vmatprep.subr.mxu0 0.0
        %4685 = vmatpush1.msra.mxu0 0.0
        %4686 = vmatprep.subr.mxu0 0.0
        %4687 = vmatpush1.msra.mxu0 0.0
        %4688 = vmatprep.subr.mxu0 0.0
        %4689 = vmatpush1.msra.mxu0 0.0
        %4690 = vmatprep.subr.mxu0 0.0
        %4691 = vmatpush1.msra.mxu0 0.0
        %4692 = vmatprep.subr.mxu0 0.0
        %4693 = vmatpush1.msra.mxu0 0.0
        %4694 = vmatprep.subr.mxu0 0.0
        %4695 = vmatpush1.msra.mxu0 0.0
        %4696 = vmatprep.subr.mxu0 0.0
        %4697 = vmatpush1.msra.mxu0 0.0
        %4698 = vmatprep.subr.mxu0 0.0
        %4699 = vmatpush1.msra.mxu0 0.0
        %4700 = vmatprep.subr.mxu0 0.0
        %4701 = vmatpush1.msra.mxu0 %v4577
        %4702 = vmatprep.subr.mxu0 0.0
        %4703 = vmatpush2.msra.mxu0 0.0
        %4704 = vmatprep.subr.mxu0 0.0
        %4705 = vmatpush2.msra.mxu0 0.0
        %4706 = vmatprep.subr.mxu0 0.0
        %4707 = vmatpush2.msra.mxu0 0.0
        %4708 = vmatprep.subr.mxu0 0.0
        %4709 = vmatpush2.msra.mxu0 0.0
        %4710 = vmatprep.subr.mxu0 0.0
        %4711 = vmatpush2.msra.mxu0 0.0
        %4712 = vmatprep.subr.mxu0 0.0
        %4713 = vmatpush2.msra.mxu0 0.0
        %4714 = vmatprep.subr.mxu0 0.0
        %4715 = vmatpush2.msra.mxu0 0.0
        %4716 = vmatprep.subr.mxu0 0.0
        %4717 = vmatpush2.msra.mxu0 0.0
        %4718 = vmatprep.subr.mxu0 0.0
        %4719 = vmatpush2.msra.mxu0 0.0
        %4720 = vmatprep.subr.mxu0 0.0
        %4721 = vmatpush2.msra.mxu0 0.0
        %4722 = vmatprep.subr.mxu0 0.0
        %4723 = vmatpush2.msra.mxu0 0.0
        %4724 = vmatprep.subr.mxu0 0.0
        %4725 = vmatpush2.msra.mxu0 0.0
        %4726 = vmatprep.subr.mxu0 0.0
        %4727 = vmatpush2.msra.mxu0 0.0
        %4728 = vmatprep.subr.mxu0 0.0
        %4729 = vmatpush2.msra.mxu0 0.0
        %4730 = vmatprep.subr.mxu0 0.0
        %4731 = vmatpush2.msra.mxu0 0.0
        %4732 = vmatprep.subr.mxu0 0.0
        %4733 = vmatpush2.msra.mxu0 0.0
        %4734 = vmatprep.mubr.f32.mxu0 0.0
        %4735 = vmatmul.mubr.f32.gmra.mxu0 %v4668
        %v4736 = vpop.f32.mrf.mxu0
        %v4737 = vadd.f32 0.0, %v4736
        %v4738 = vpop.f32.mrf.mxu0
        %4739 = vdwg.mxu0
        %4740 = vmatprep.subr.mxu0 0.0
        %4741 = vmatpush1.msra.mxu0 0.0
        %4742 = vmatprep.subr.mxu0 0.0
        %4743 = vmatpush1.msra.mxu0 0.0
        %4744 = vmatprep.subr.mxu0 0.0
        %4745 = vmatpush1.msra.mxu0 0.0
        %4746 = vmatprep.subr.mxu0 0.0
        %4747 = vmatpush1.msra.mxu0 0.0
        %4748 = vmatprep.subr.mxu0 0.0
        %4749 = vmatpush1.msra.mxu0 0.0
        %4750 = vmatprep.subr.mxu0 0.0
        %4751 = vmatpush1.msra.mxu0 0.0
        %4752 = vmatprep.subr.mxu0 0.0
        %4753 = vmatpush1.msra.mxu0 0.0
        %4754 = vmatprep.subr.mxu0 0.0
        %4755 = vmatpush1.msra.mxu0 0.0
        %4756 = vmatprep.subr.mxu0 0.0
        %4757 = vmatpush1.msra.mxu0 0.0
        %4758 = vmatprep.subr.mxu0 0.0
        %4759 = vmatpush1.msra.mxu0 0.0
        %4760 = vmatprep.subr.mxu0 0.0
        %4761 = vmatpush1.msra.mxu0 0.0
        %4762 = vmatprep.subr.mxu0 0.0
        %4763 = vmatpush1.msra.mxu0 0.0
        %4764 = vmatprep.subr.mxu0 0.0
        %4765 = vmatpush1.msra.mxu0 %v702
        %4766 = vmatprep.subr.mxu0 0.0
        %4767 = vmatpush1.msra.mxu0 %v701
        %4768 = vmatprep.subr.mxu0 0.0
        %4769 = vmatpush1.msra.mxu0 %v700
        %4770 = vmatprep.subr.mxu0 0.0
        %4771 = vmatpush1.msra.mxu0 %v699
        %4772 = vmatprep.subr.mxu0 0.0
        %4773 = vmatpush2.msra.mxu0 0.0
        %4774 = vmatprep.subr.mxu0 0.0
        %4775 = vmatpush2.msra.mxu0 0.0
        %4776 = vmatprep.subr.mxu0 0.0
        %4777 = vmatpush2.msra.mxu0 0.0
        %4778 = vmatprep.subr.mxu0 0.0
        %4779 = vmatpush2.msra.mxu0 0.0
        %4780 = vmatprep.subr.mxu0 0.0
        %4781 = vmatpush2.msra.mxu0 0.0
        %4782 = vmatprep.subr.mxu0 0.0
        %4783 = vmatpush2.msra.mxu0 0.0
        %4784 = vmatprep.subr.mxu0 0.0
        %4785 = vmatpush2.msra.mxu0 0.0
        %4786 = vmatprep.subr.mxu0 0.0
        %4787 = vmatpush2.msra.mxu0 0.0
        %4788 = vmatprep.subr.mxu0 0.0
        %4789 = vmatpush2.msra.mxu0 0.0
        %4790 = vmatprep.subr.mxu0 0.0
        %4791 = vmatpush2.msra.mxu0 0.0
        %4792 = vmatprep.subr.mxu0 0.0
        %4793 = vmatpush2.msra.mxu0 0.0
        %4794 = vmatprep.subr.mxu0 0.0
        %4795 = vmatpush2.msra.mxu0 0.0
        %4796 = vmatprep.subr.mxu0 0.0
        %4797 = vmatpush2.msra.mxu0 0.0
        %4798 = vmatprep.subr.mxu0 0.0
        %4799 = vmatpush2.msra.mxu0 0.0
        %4800 = vmatprep.subr.mxu0 0.0
        %4801 = vmatpush2.msra.mxu0 0.0
        %4802 = vmatprep.subr.mxu0 0.0
        %4803 = vmatpush2.msra.mxu0 0.0
        %4804 = vmatprep.mubr.f32.mxu0 0.0
        %4805 = vmatmul.mubr.f32.gmra.mxu0 %v4368
        %v4806 = vpop.f32.mrf.mxu0
        %v4807 = vadd.f32 %v707, %v4806
        %v4808 = vpop.f32.mrf.mxu0
        %4809 = vdwg.mxu0
        %4810 = vmatprep.subr.mxu0 0.0
        %4811 = vmatpush1.msra.mxu0 0.0
        %4812 = vmatprep.subr.mxu0 0.0
        %4813 = vmatpush1.msra.mxu0 0.0
        %4814 = vmatprep.subr.mxu0 0.0
        %4815 = vmatpush1.msra.mxu0 0.0
        %4816 = vmatprep.subr.mxu0 0.0
        %4817 = vmatpush1.msra.mxu0 0.0
        %4818 = vmatprep.subr.mxu0 0.0
        %4819 = vmatpush1.msra.mxu0 0.0
        %4820 = vmatprep.subr.mxu0 0.0
        %4821 = vmatpush1.msra.mxu0 0.0
        %4822 = vmatprep.subr.mxu0 0.0
        %4823 = vmatpush1.msra.mxu0 0.0
        %4824 = vmatprep.subr.mxu0 0.0
        %4825 = vmatpush1.msra.mxu0 0.0
        %4826 = vmatprep.subr.mxu0 0.0
        %4827 = vmatpush1.msra.mxu0 0.0
        %4828 = vmatprep.subr.mxu0 0.0
        %4829 = vmatpush1.msra.mxu0 0.0
        %4830 = vmatprep.subr.mxu0 0.0
        %4831 = vmatpush1.msra.mxu0 0.0
        %4832 = vmatprep.subr.mxu0 0.0
        %4833 = vmatpush1.msra.mxu0 0.0
        %4834 = vmatprep.subr.mxu0 0.0
        %4835 = vmatpush1.msra.mxu0 %v782
        %4836 = vmatprep.subr.mxu0 0.0
        %4837 = vmatpush1.msra.mxu0 %v781
        %4838 = vmatprep.subr.mxu0 0.0
        %4839 = vmatpush1.msra.mxu0 %v780
        %4840 = vmatprep.subr.mxu0 0.0
        %4841 = vmatpush1.msra.mxu0 %v779
        %4842 = vmatprep.subr.mxu0 0.0
        %4843 = vmatpush2.msra.mxu0 0.0
        %4844 = vmatprep.subr.mxu0 0.0
        %4845 = vmatpush2.msra.mxu0 0.0
        %4846 = vmatprep.subr.mxu0 0.0
        %4847 = vmatpush2.msra.mxu0 0.0
        %4848 = vmatprep.subr.mxu0 0.0
        %4849 = vmatpush2.msra.mxu0 0.0
        %4850 = vmatprep.subr.mxu0 0.0
        %4851 = vmatpush2.msra.mxu0 0.0
        %4852 = vmatprep.subr.mxu0 0.0
        %4853 = vmatpush2.msra.mxu0 0.0
        %4854 = vmatprep.subr.mxu0 0.0
        %4855 = vmatpush2.msra.mxu0 0.0
        %4856 = vmatprep.subr.mxu0 0.0
        %4857 = vmatpush2.msra.mxu0 0.0
        %4858 = vmatprep.subr.mxu0 0.0
        %4859 = vmatpush2.msra.mxu0 0.0
        %4860 = vmatprep.subr.mxu0 0.0
        %4861 = vmatpush2.msra.mxu0 0.0
        %4862 = vmatprep.subr.mxu0 0.0
        %4863 = vmatpush2.msra.mxu0 0.0
        %4864 = vmatprep.subr.mxu0 0.0
        %4865 = vmatpush2.msra.mxu0 0.0
        %4866 = vmatprep.subr.mxu0 0.0
        %4867 = vmatpush2.msra.mxu0 0.0
        %4868 = vmatprep.subr.mxu0 0.0
        %4869 = vmatpush2.msra.mxu0 0.0
        %4870 = vmatprep.subr.mxu0 0.0
        %4871 = vmatpush2.msra.mxu0 0.0
        %4872 = vmatprep.subr.mxu0 0.0
        %4873 = vmatpush2.msra.mxu0 0.0
        %4874 = vmatprep.mubr.f32.mxu0 0.0
        %4875 = vmatmul.mubr.f32.gmra.mxu0 %v4368
        %v4876 = vpop.f32.mrf.mxu0
        %v4877 = vadd.f32 %v787, %v4876
        %v4878 = vpop.f32.mrf.mxu0
        %4879 = vdwg.mxu0
        %4880 = vmatprep.subr.mxu0 0.0
        %4881 = vmatpush1.msra.mxu0 0.0
        %4882 = vmatprep.subr.mxu0 0.0
        %4883 = vmatpush1.msra.mxu0 0.0
        %4884 = vmatprep.subr.mxu0 0.0
        %4885 = vmatpush1.msra.mxu0 0.0
        %4886 = vmatprep.subr.mxu0 0.0
        %4887 = vmatpush1.msra.mxu0 0.0
        %4888 = vmatprep.subr.mxu0 0.0
        %4889 = vmatpush1.msra.mxu0 0.0
        %4890 = vmatprep.subr.mxu0 0.0
        %4891 = vmatpush1.msra.mxu0 0.0
        %4892 = vmatprep.subr.mxu0 0.0
        %4893 = vmatpush1.msra.mxu0 0.0
        %4894 = vmatprep.subr.mxu0 0.0
        %4895 = vmatpush1.msra.mxu0 0.0
        %4896 = vmatprep.subr.mxu0 0.0
        %4897 = vmatpush1.msra.mxu0 0.0
        %4898 = vmatprep.subr.mxu0 0.0
        %4899 = vmatpush1.msra.mxu0 0.0
        %4900 = vmatprep.subr.mxu0 0.0
        %4901 = vmatpush1.msra.mxu0 0.0
        %4902 = vmatprep.subr.mxu0 0.0
        %4903 = vmatpush1.msra.mxu0 0.0
        %4904 = vmatprep.subr.mxu0 0.0
        %4905 = vmatpush1.msra.mxu0 %v862
        %4906 = vmatprep.subr.mxu0 0.0
        %4907 = vmatpush1.msra.mxu0 %v861
        %4908 = vmatprep.subr.mxu0 0.0
        %4909 = vmatpush1.msra.mxu0 %v860
        %4910 = vmatprep.subr.mxu0 0.0
        %4911 = vmatpush1.msra.mxu0 %v859
        %4912 = vmatprep.subr.mxu0 0.0
        %4913 = vmatpush2.msra.mxu0 0.0
        %4914 = vmatprep.subr.mxu0 0.0
        %4915 = vmatpush2.msra.mxu0 0.0
        %4916 = vmatprep.subr.mxu0 0.0
        %4917 = vmatpush2.msra.mxu0 0.0
        %4918 = vmatprep.subr.mxu0 0.0
        %4919 = vmatpush2.msra.mxu0 0.0
        %4920 = vmatprep.subr.mxu0 0.0
        %4921 = vmatpush2.msra.mxu0 0.0
        %4922 = vmatprep.subr.mxu0 0.0
        %4923 = vmatpush2.msra.mxu0 0.0
        %4924 = vmatprep.subr.mxu0 0.0
        %4925 = vmatpush2.msra.mxu0 0.0
        %4926 = vmatprep.subr.mxu0 0.0
        %4927 = vmatpush2.msra.mxu0 0.0
        %4928 = vmatprep.subr.mxu0 0.0
        %4929 = vmatpush2.msra.mxu0 0.0
        %4930 = vmatprep.subr.mxu0 0.0
        %4931 = vmatpush2.msra.mxu0 0.0
        %4932 = vmatprep.subr.mxu0 0.0
        %4933 = vmatpush2.msra.mxu0 0.0
        %4934 = vmatprep.subr.mxu0 0.0
        %4935 = vmatpush2.msra.mxu0 0.0
        %4936 = vmatprep.subr.mxu0 0.0
        %4937 = vmatpush2.msra.mxu0 0.0
        %4938 = vmatprep.subr.mxu0 0.0
        %4939 = vmatpush2.msra.mxu0 0.0
        %4940 = vmatprep.subr.mxu0 0.0
        %4941 = vmatpush2.msra.mxu0 0.0
        %4942 = vmatprep.subr.mxu0 0.0
        %4943 = vmatpush2.msra.mxu0 0.0
        %4944 = vmatprep.mubr.f32.mxu0 0.0
        %4945 = vmatmul.mubr.f32.gmra.mxu0 %v4368
        %v4946 = vpop.f32.mrf.mxu0
        %v4947 = vadd.f32 %v867, %v4946
        %v4948 = vpop.f32.mrf.mxu0
        %4949 = vdwg.mxu0
        %v4951 = vsel %vm536, %v4807, 0
        %v4954 = vsel %vm536, %v4877, 0
        %4956 = vmatprep.subr.mxu0 0.0
        %4957 = vmatpush1.xpose.msra.mxu0 0.0
        %4958 = vmatprep.subr.mxu0 0.0
        %4959 = vmatpush1.xpose.msra.mxu0 0.0
        %4960 = vmatprep.subr.mxu0 0.0
        %4961 = vmatpush1.xpose.msra.mxu0 0.0
        %4962 = vmatprep.subr.mxu0 0.0
        %4963 = vmatpush1.xpose.msra.mxu0 0.0
        %4964 = vmatprep.subr.mxu0 0.0
        %4965 = vmatpush1.xpose.msra.mxu0 0.0
        %4966 = vmatprep.subr.mxu0 0.0
        %4967 = vmatpush1.xpose.msra.mxu0 0.0
        %4968 = vmatprep.subr.mxu0 0.0
        %4969 = vmatpush1.xpose.msra.mxu0 0.0
        %4970 = vmatprep.subr.mxu0 0.0
        %4971 = vmatpush1.xpose.msra.mxu0 0.0
        %4972 = vmatprep.subr.mxu0 0.0
        %4973 = vmatpush1.xpose.msra.mxu0 0.0
        %4974 = vmatprep.subr.mxu0 0.0
        %4975 = vmatpush1.xpose.msra.mxu0 0.0
        %4976 = vmatprep.subr.mxu0 0.0
        %4977 = vmatpush1.xpose.msra.mxu0 0.0
        %4978 = vmatprep.subr.mxu0 0.0
        %4979 = vmatpush1.xpose.msra.mxu0 0.0
        %4980 = vmatprep.subr.mxu0 0.0
        %4981 = vmatpush1.xpose.msra.mxu0 0.0
        %4982 = vmatprep.subr.mxu0 0.0
        %4983 = vmatpush1.xpose.msra.mxu0 0.0
        %4984 = vmatprep.subr.mxu0 0.0
        %4985 = vmatpush1.xpose.msra.mxu0 0.0
        %4986 = vmatprep.subr.mxu0 0.0
        %4987 = vmatpush1.xpose.msra.mxu0 %v4954
        %4988 = vmatprep.subr.mxu0 0.0
        %4989 = vmatpush2.xpose.msra.mxu0 0.0
        %4990 = vmatprep.subr.mxu0 0.0
        %4991 = vmatpush2.xpose.msra.mxu0 0.0
        %4992 = vmatprep.subr.mxu0 0.0
        %4993 = vmatpush2.xpose.msra.mxu0 0.0
        %4994 = vmatprep.subr.mxu0 0.0
        %4995 = vmatpush2.xpose.msra.mxu0 0.0
        %4996 = vmatprep.subr.mxu0 0.0
        %4997 = vmatpush2.xpose.msra.mxu0 0.0
        %4998 = vmatprep.subr.mxu0 0.0
        %4999 = vmatpush2.xpose.msra.mxu0 0.0
        %5000 = vmatprep.subr.mxu0 0.0
        %5001 = vmatpush2.xpose.msra.mxu0 0.0
        %5002 = vmatprep.subr.mxu0 0.0
        %5003 = vmatpush2.xpose.msra.mxu0 0.0
        %5004 = vmatprep.subr.mxu0 0.0
        %5005 = vmatpush2.xpose.msra.mxu0 0.0
        %5006 = vmatprep.subr.mxu0 0.0
        %5007 = vmatpush2.xpose.msra.mxu0 0.0
        %5008 = vmatprep.subr.mxu0 0.0
        %5009 = vmatpush2.xpose.msra.mxu0 0.0
        %5010 = vmatprep.subr.mxu0 0.0
        %5011 = vmatpush2.xpose.msra.mxu0 0.0
        %5012 = vmatprep.subr.mxu0 0.0
        %5013 = vmatpush2.xpose.msra.mxu0 0.0
        %5014 = vmatprep.subr.mxu0 0.0
        %5015 = vmatpush2.xpose.msra.mxu0 0.0
        %5016 = vmatprep.subr.mxu0 0.0
        %5017 = vmatpush2.xpose.msra.mxu0 0.0
        %5018 = vmatprep.subr.mxu0 0.0
        %5019 = vmatpush2.xpose.msra.mxu0 0.0
        %5020 = vmatprep.mubr.f32.mxu0 0.0
        %5021 = vmatmul.mubr.f32.gmra.mxu0 %v4951
        %v5022 = vpop.f32.mrf.mxu0
        %v5023 = vadd.f32 0.0, %v5022
        %v5024 = vpop.f32.mrf.mxu0
        %5025 = vdwg.mxu0
        %v5026 = vsel %vm536, %v5023, -inf
        %5027 = vmax.xlane.f32.xlu0 %v5026
        %v5028 = vpop.xlane.xlu0 %5027
        %v5029 = vsub.f32 %v5023, %v5028
        %v5030 = vmul.f32 %v5029, 1.442695
        %v5031 = vpow.pop %v5030
        %v5032 = vsel %vm536, %v5031, 0.0
        %5033 = vadd.xlane.f32.xlu0 %v5032
        %v5034 = vpop.xlane.xlu0 %5033
        %v5035 = vrcp.pop %v5034
        %v5036 = vmul.f32 %v5031, %v5035
        %v5038 = vsel %vm536, %v5036, 0
        %5040 = vmatprep.subr.mxu0 0.0
        %5041 = vmatpush1.msra.mxu0 0.0
        %5042 = vmatprep.subr.mxu0 0.0
        %5043 = vmatpush1.msra.mxu0 0.0
        %5044 = vmatprep.subr.mxu0 0.0
        %5045 = vmatpush1.msra.mxu0 0.0
        %5046 = vmatprep.subr.mxu0 0.0
        %5047 = vmatpush1.msra.mxu0 0.0
        %5048 = vmatprep.subr.mxu0 0.0
        %5049 = vmatpush1.msra.mxu0 0.0
        %5050 = vmatprep.subr.mxu0 0.0
        %5051 = vmatpush1.msra.mxu0 0.0
        %5052 = vmatprep.subr.mxu0 0.0
        %5053 = vmatpush1.msra.mxu0 0.0
        %5054 = vmatprep.subr.mxu0 0.0
        %5055 = vmatpush1.msra.mxu0 0.0
        %5056 = vmatprep.subr.mxu0 0.0
        %5057 = vmatpush1.msra.mxu0 0.0
        %5058 = vmatprep.subr.mxu0 0.0
        %5059 = vmatpush1.msra.mxu0 0.0
        %5060 = vmatprep.subr.mxu0 0.0
        %5061 = vmatpush1.msra.mxu0 0.0
        %5062 = vmatprep.subr.mxu0 0.0
        %5063 = vmatpush1.msra.mxu0 0.0
        %5064 = vmatprep.subr.mxu0 0.0
        %5065 = vmatpush1.msra.mxu0 0.0
        %5066 = vmatprep.subr.mxu0 0.0
        %5067 = vmatpush1.msra.mxu0 0.0
        %5068 = vmatprep.subr.mxu0 0.0
        %5069 = vmatpush1.msra.mxu0 0.0
        %5070 = vmatprep.subr.mxu0 0.0
        %5071 = vmatpush1.msra.mxu0 %v4947
        %5072 = vmatprep.subr.mxu0 0.0
        %5073 = vmatpush2.msra.mxu0 0.0
        %5074 = vmatprep.subr.mxu0 0.0
        %5075 = vmatpush2.msra.mxu0 0.0
        %5076 = vmatprep.subr.mxu0 0.0
        %5077 = vmatpush2.msra.mxu0 0.0
        %5078 = vmatprep.subr.mxu0 0.0
        %5079 = vmatpush2.msra.mxu0 0.0
        %5080 = vmatprep.subr.mxu0 0.0
        %5081 = vmatpush2.msra.mxu0 0.0
        %5082 = vmatprep.subr.mxu0 0.0
        %5083 = vmatpush2.msra.mxu0 0.0
        %5084 = vmatprep.subr.mxu0 0.0
        %5085 = vmatpush2.msra.mxu0 0.0
        %5086 = vmatprep.subr.mxu0 0.0
        %5087 = vmatpush2.msra.mxu0 0.0
        %5088 = vmatprep.subr.mxu0 0.0
        %5089 = vmatpush2.msra.mxu0 0.0
        %5090 = vmatprep.subr.mxu0 0.0
        %5091 = vmatpush2.msra.mxu0 0.0
        %5092 = vmatprep.subr.mxu0 0.0
        %5093 = vmatpush2.msra.mxu0 0.0
        %5094 = vmatprep.subr.mxu0 0.0
        %5095 = vmatpush2.msra.mxu0 0.0
        %5096 = vmatprep.subr.mxu0 0.0
        %5097 = vmatpush2.msra.mxu0 0.0
        %5098 = vmatprep.subr.mxu0 0.0
        %5099 = vmatpush2.msra.mxu0 0.0
        %5100 = vmatprep.subr.mxu0 0.0
        %5101 = vmatpush2.msra.mxu0 0.0
        %5102 = vmatprep.subr.mxu0 0.0
        %5103 = vmatpush2.msra.mxu0 0.0
        %5104 = vmatprep.mubr.f32.mxu0 0.0
        %5105 = vmatmul.mubr.f32.gmra.mxu0 %v5038
        %v5106 = vpop.f32.mrf.mxu0
        %v5107 = vadd.f32 0.0, %v5106
        %v5108 = vpop.f32.mrf.mxu0
        %5109 = vdwg.mxu0
        %v5111 = vsel %vm536, %v5107, 0
        %5113 = vmatprep.subr.mxu0 0.0
        %5114 = vmatpush1.msra.mxu0 0.0
        %5115 = vmatprep.subr.mxu0 0.0
        %5116 = vmatpush1.msra.mxu0 0.0
        %5117 = vmatprep.subr.mxu0 0.0
        %5118 = vmatpush1.msra.mxu0 0.0
        %5119 = vmatprep.subr.mxu0 0.0
        %5120 = vmatpush1.msra.mxu0 0.0
        %5121 = vmatprep.subr.mxu0 0.0
        %5122 = vmatpush1.msra.mxu0 0.0
        %5123 = vmatprep.subr.mxu0 0.0
        %5124 = vmatpush1.msra.mxu0 0.0
        %5125 = vmatprep.subr.mxu0 0.0
        %5126 = vmatpush1.msra.mxu0 0.0
        %5127 = vmatprep.subr.mxu0 0.0
        %5128 = vmatpush1.msra.mxu0 0.0
        %5129 = vmatprep.subr.mxu0 0.0
        %5130 = vmatpush1.msra.mxu0 0.0
        %5131 = vmatprep.subr.mxu0 0.0
        %5132 = vmatpush1.msra.mxu0 0.0
        %5133 = vmatprep.subr.mxu0 0.0
        %5134 = vmatpush1.msra.mxu0 0.0
        %5135 = vmatprep.subr.mxu0 0.0
        %5136 = vmatpush1.msra.mxu0 0.0
        %5137 = vmatprep.subr.mxu0 0.0
        %5138 = vmatpush1.msra.mxu0 0.0
        %5139 = vmatprep.subr.mxu0 0.0
        %5140 = vmatpush1.msra.mxu0 0.0
        %5141 = vmatprep.subr.mxu0 0.0
        %5142 = vmatpush1.msra.mxu0 0.0
        %5143 = vmatprep.subr.mxu0 0.0
        %5144 = vmatpush1.msra.mxu0 %v1099
        %5145 = vmatprep.subr.mxu0 0.0
        %5146 = vmatpush2.msra.mxu0 0.0
        %5147 = vmatprep.subr.mxu0 0.0
        %5148 = vmatpush2.msra.mxu0 0.0
        %5149 = vmatprep.subr.mxu0 0.0
        %5150 = vmatpush2.msra.mxu0 0.0
        %5151 = vmatprep.subr.mxu0 0.0
        %5152 = vmatpush2.msra.mxu0 0.0
        %5153 = vmatprep.subr.mxu0 0.0
        %5154 = vmatpush2.msra.mxu0 0.0
        %5155 = vmatprep.subr.mxu0 0.0
        %5156 = vmatpush2.msra.mxu0 0.0
        %5157 = vmatprep.subr.mxu0 0.0
        %5158 = vmatpush2.msra.mxu0 0.0
        %5159 = vmatprep.subr.mxu0 0.0
        %5160 = vmatpush2.msra.mxu0 0.0
        %5161 = vmatprep.subr.mxu0 0.0
        %5162 = vmatpush2.msra.mxu0 0.0
        %5163 = vmatprep.subr.mxu0 0.0
        %5164 = vmatpush2.msra.mxu0 0.0
        %5165 = vmatprep.subr.mxu0 0.0
        %5166 = vmatpush2.msra.mxu0 0.0
        %5167 = vmatprep.subr.mxu0 0.0
        %5168 = vmatpush2.msra.mxu0 0.0
        %5169 = vmatprep.subr.mxu0 0.0
        %5170 = vmatpush2.msra.mxu0 0.0
        %5171 = vmatprep.subr.mxu0 0.0
        %5172 = vmatpush2.msra.mxu0 0.0
        %5173 = vmatprep.subr.mxu0 0.0
        %5174 = vmatpush2.msra.mxu0 0.0
        %5175 = vmatprep.subr.mxu0 0.0
        %5176 = vmatpush2.msra.mxu0 0.0
        %5177 = vmatprep.mubr.f32.mxu0 0.0
        %5178 = vmatmul.mubr.f32.gmra.mxu0 %v5111
        %v5179 = vpop.f32.mrf.mxu0
        %v5180 = vadd.f32 0.0, %v5179
        %v5181 = vpop.f32.mrf.mxu0
        %5182 = vdwg.mxu0
        %v5184 = vsel %vm536, %v4737, 0
        %5186 = vmatprep.subr.mxu0 0.0
        %5187 = vmatpush1.msra.mxu0 0.0
        %5188 = vmatprep.subr.mxu0 0.0
        %5189 = vmatpush1.msra.mxu0 0.0
        %5190 = vmatprep.subr.mxu0 0.0
        %5191 = vmatpush1.msra.mxu0 0.0
        %5192 = vmatprep.subr.mxu0 0.0
        %5193 = vmatpush1.msra.mxu0 0.0
        %5194 = vmatprep.subr.mxu0 0.0
        %5195 = vmatpush1.msra.mxu0 0.0
        %5196 = vmatprep.subr.mxu0 0.0
        %5197 = vmatpush1.msra.mxu0 0.0
        %5198 = vmatprep.subr.mxu0 0.0
        %5199 = vmatpush1.msra.mxu0 0.0
        %5200 = vmatprep.subr.mxu0 0.0
        %5201 = vmatpush1.msra.mxu0 0.0
        %5202 = vmatprep.subr.mxu0 0.0
        %5203 = vmatpush1.msra.mxu0 0.0
        %5204 = vmatprep.subr.mxu0 0.0
        %5205 = vmatpush1.msra.mxu0 0.0
        %5206 = vmatprep.subr.mxu0 0.0
        %5207 = vmatpush1.msra.mxu0 0.0
        %5208 = vmatprep.subr.mxu0 0.0
        %5209 = vmatpush1.msra.mxu0 0.0
        %5210 = vmatprep.subr.mxu0 0.0
        %5211 = vmatpush1.msra.mxu0 0.0
        %5212 = vmatprep.subr.mxu0 0.0
        %5213 = vmatpush1.msra.mxu0 0.0
        %5214 = vmatprep.subr.mxu0 0.0
        %5215 = vmatpush1.msra.mxu0 0.0
        %5216 = vmatprep.subr.mxu0 0.0
        %5217 = vmatpush1.msra.mxu0 %v697
        %5218 = vmatprep.subr.mxu0 0.0
        %5219 = vmatpush2.msra.mxu0 0.0
        %5220 = vmatprep.subr.mxu0 0.0
        %5221 = vmatpush2.msra.mxu0 0.0
        %5222 = vmatprep.subr.mxu0 0.0
        %5223 = vmatpush2.msra.mxu0 0.0
        %5224 = vmatprep.subr.mxu0 0.0
        %5225 = vmatpush2.msra.mxu0 0.0
        %5226 = vmatprep.subr.mxu0 0.0
        %5227 = vmatpush2.msra.mxu0 0.0
        %5228 = vmatprep.subr.mxu0 0.0
        %5229 = vmatpush2.msra.mxu0 0.0
        %5230 = vmatprep.subr.mxu0 0.0
        %5231 = vmatpush2.msra.mxu0 0.0
        %5232 = vmatprep.subr.mxu0 0.0
        %5233 = vmatpush2.msra.mxu0 0.0
        %5234 = vmatprep.subr.mxu0 0.0
        %5235 = vmatpush2.msra.mxu0 0.0
        %5236 = vmatprep.subr.mxu0 0.0
        %5237 = vmatpush2.msra.mxu0 0.0
        %5238 = vmatprep.subr.mxu0 0.0
        %5239 = vmatpush2.msra.mxu0 0.0
        %5240 = vmatprep.subr.mxu0 0.0
        %5241 = vmatpush2.msra.mxu0 0.0
        %5242 = vmatprep.subr.mxu0 0.0
        %5243 = vmatpush2.msra.mxu0 0.0
        %5244 = vmatprep.subr.mxu0 0.0
        %5245 = vmatpush2.msra.mxu0 0.0
        %5246 = vmatprep.subr.mxu0 0.0
        %5247 = vmatpush2.msra.mxu0 0.0
        %5248 = vmatprep.subr.mxu0 0.0
        %5249 = vmatpush2.msra.mxu0 0.0
        %5250 = vmatprep.mubr.f32.mxu0 0.0
        %5251 = vmatmul.mubr.f32.gmra.mxu0 %v5184
        %v5252 = vpop.f32.mrf.mxu0
        %v5253 = vadd.f32 %v5180, %v5252
        %v5254 = vpop.f32.mrf.mxu0
        %5255 = vdwg.mxu0
        %5256 = vmatprep.subr.mxu0 0.0
        %5257 = vmatpush1.msra.mxu0 0.0
        %5258 = vmatprep.subr.mxu0 0.0
        %5259 = vmatpush1.msra.mxu0 0.0
        %5260 = vmatprep.subr.mxu0 0.0
        %5261 = vmatpush1.msra.mxu0 0.0
        %5262 = vmatprep.subr.mxu0 0.0
        %5263 = vmatpush1.msra.mxu0 0.0
        %5264 = vmatprep.subr.mxu0 0.0
        %5265 = vmatpush1.msra.mxu0 0.0
        %5266 = vmatprep.subr.mxu0 0.0
        %5267 = vmatpush1.msra.mxu0 0.0
        %5268 = vmatprep.subr.mxu0 0.0
        %5269 = vmatpush1.msra.mxu0 0.0
        %5270 = vmatprep.subr.mxu0 0.0
        %5271 = vmatpush1.msra.mxu0 0.0
        %5272 = vmatprep.subr.mxu0 0.0
        %5273 = vmatpush1.msra.mxu0 0.0
        %5274 = vmatprep.subr.mxu0 0.0
        %5275 = vmatpush1.msra.mxu0 0.0
        %5276 = vmatprep.subr.mxu0 0.0
        %5277 = vmatpush1.msra.mxu0 0.0
        %5278 = vmatprep.subr.mxu0 0.0
        %5279 = vmatpush1.msra.mxu0 0.0
        %5280 = vmatprep.subr.mxu0 0.0
        %5281 = vmatpush1.msra.mxu0 %v1250
        %5282 = vmatprep.subr.mxu0 0.0
        %5283 = vmatpush1.msra.mxu0 %v1249
        %5284 = vmatprep.subr.mxu0 0.0
        %5285 = vmatpush1.msra.mxu0 %v1248
        %5286 = vmatprep.subr.mxu0 0.0
        %5287 = vmatpush1.msra.mxu0 %v1247
        %5288 = vmatprep.subr.mxu0 0.0
        %5289 = vmatpush2.msra.mxu0 0.0
        %5290 = vmatprep.subr.mxu0 0.0
        %5291 = vmatpush2.msra.mxu0 0.0
        %5292 = vmatprep.subr.mxu0 0.0
        %5293 = vmatpush2.msra.mxu0 0.0
        %5294 = vmatprep.subr.mxu0 0.0
        %5295 = vmatpush2.msra.mxu0 0.0
        %5296 = vmatprep.subr.mxu0 0.0
        %5297 = vmatpush2.msra.mxu0 0.0
        %5298 = vmatprep.subr.mxu0 0.0
        %5299 = vmatpush2.msra.mxu0 0.0
        %5300 = vmatprep.subr.mxu0 0.0
        %5301 = vmatpush2.msra.mxu0 0.0
        %5302 = vmatprep.subr.mxu0 0.0
        %5303 = vmatpush2.msra.mxu0 0.0
        %5304 = vmatprep.subr.mxu0 0.0
        %5305 = vmatpush2.msra.mxu0 0.0
        %5306 = vmatprep.subr.mxu0 0.0
        %5307 = vmatpush2.msra.mxu0 0.0
        %5308 = vmatprep.subr.mxu0 0.0
        %5309 = vmatpush2.msra.mxu0 0.0
        %5310 = vmatprep.subr.mxu0 0.0
        %5311 = vmatpush2.msra.mxu0 0.0
        %5312 = vmatprep.subr.mxu0 0.0
        %5313 = vmatpush2.msra.mxu0 0.0
        %5314 = vmatprep.subr.mxu0 0.0
        %5315 = vmatpush2.msra.mxu0 0.0
        %5316 = vmatprep.subr.mxu0 0.0
        %5317 = vmatpush2.msra.mxu0 0.0
        %5318 = vmatprep.subr.mxu0 0.0
        %5319 = vmatpush2.msra.mxu0 0.0
        %5320 = vmatprep.mubr.f32.mxu0 0.0
        %5321 = vmatmul.mubr.f32.gmra.mxu0 %v4368
        %v5322 = vpop.f32.mrf.mxu0
        %v5323 = vadd.f32 %v1255, %v5322
        %v5324 = vpop.f32.mrf.mxu0
        %5325 = vdwg.mxu0
        %5326 = vmatprep.subr.mxu0 0.0
        %5327 = vmatpush1.msra.mxu0 0.0
        %5328 = vmatprep.subr.mxu0 0.0
        %5329 = vmatpush1.msra.mxu0 0.0
        %5330 = vmatprep.subr.mxu0 0.0
        %5331 = vmatpush1.msra.mxu0 0.0
        %5332 = vmatprep.subr.mxu0 0.0
        %5333 = vmatpush1.msra.mxu0 0.0
        %5334 = vmatprep.subr.mxu0 0.0
        %5335 = vmatpush1.msra.mxu0 0.0
        %5336 = vmatprep.subr.mxu0 0.0
        %5337 = vmatpush1.msra.mxu0 0.0
        %5338 = vmatprep.subr.mxu0 0.0
        %5339 = vmatpush1.msra.mxu0 0.0
        %5340 = vmatprep.subr.mxu0 0.0
        %5341 = vmatpush1.msra.mxu0 0.0
        %5342 = vmatprep.subr.mxu0 0.0
        %5343 = vmatpush1.msra.mxu0 0.0
        %5344 = vmatprep.subr.mxu0 0.0
        %5345 = vmatpush1.msra.mxu0 0.0
        %5346 = vmatprep.subr.mxu0 0.0
        %5347 = vmatpush1.msra.mxu0 0.0
        %5348 = vmatprep.subr.mxu0 0.0
        %5349 = vmatpush1.msra.mxu0 0.0
        %5350 = vmatprep.subr.mxu0 0.0
        %5351 = vmatpush1.msra.mxu0 %v1330
        %5352 = vmatprep.subr.mxu0 0.0
        %5353 = vmatpush1.msra.mxu0 %v1329
        %5354 = vmatprep.subr.mxu0 0.0
        %5355 = vmatpush1.msra.mxu0 %v1328
        %5356 = vmatprep.subr.mxu0 0.0
        %5357 = vmatpush1.msra.mxu0 %v1327
        %5358 = vmatprep.subr.mxu0 0.0
        %5359 = vmatpush2.msra.mxu0 0.0
        %5360 = vmatprep.subr.mxu0 0.0
        %5361 = vmatpush2.msra.mxu0 0.0
        %5362 = vmatprep.subr.mxu0 0.0
        %5363 = vmatpush2.msra.mxu0 0.0
        %5364 = vmatprep.subr.mxu0 0.0
        %5365 = vmatpush2.msra.mxu0 0.0
        %5366 = vmatprep.subr.mxu0 0.0
        %5367 = vmatpush2.msra.mxu0 0.0
        %5368 = vmatprep.subr.mxu0 0.0
        %5369 = vmatpush2.msra.mxu0 0.0
        %5370 = vmatprep.subr.mxu0 0.0
        %5371 = vmatpush2.msra.mxu0 0.0
        %5372 = vmatprep.subr.mxu0 0.0
        %5373 = vmatpush2.msra.mxu0 0.0
        %5374 = vmatprep.subr.mxu0 0.0
        %5375 = vmatpush2.msra.mxu0 0.0
        %5376 = vmatprep.subr.mxu0 0.0
        %5377 = vmatpush2.msra.mxu0 0.0
        %5378 = vmatprep.subr.mxu0 0.0
        %5379 = vmatpush2.msra.mxu0 0.0
        %5380 = vmatprep.subr.mxu0 0.0
        %5381 = vmatpush2.msra.mxu0 0.0
        %5382 = vmatprep.subr.mxu0 0.0
        %5383 = vmatpush2.msra.mxu0 0.0
        %5384 = vmatprep.subr.mxu0 0.0
        %5385 = vmatpush2.msra.mxu0 0.0
        %5386 = vmatprep.subr.mxu0 0.0
        %5387 = vmatpush2.msra.mxu0 0.0
        %5388 = vmatprep.subr.mxu0 0.0
        %5389 = vmatpush2.msra.mxu0 0.0
        %5390 = vmatprep.mubr.f32.mxu0 0.0
        %5391 = vmatmul.mubr.f32.gmra.mxu0 %v4368
        %v5392 = vpop.f32.mrf.mxu0
        %v5393 = vadd.f32 %v1335, %v5392
        %v5394 = vpop.f32.mrf.mxu0
        %5395 = vdwg.mxu0
        %5396 = vmatprep.subr.mxu0 0.0
        %5397 = vmatpush1.msra.mxu0 0.0
        %5398 = vmatprep.subr.mxu0 0.0
        %5399 = vmatpush1.msra.mxu0 0.0
        %5400 = vmatprep.subr.mxu0 0.0
        %5401 = vmatpush1.msra.mxu0 0.0
        %5402 = vmatprep.subr.mxu0 0.0
        %5403 = vmatpush1.msra.mxu0 0.0
        %5404 = vmatprep.subr.mxu0 0.0
        %5405 = vmatpush1.msra.mxu0 0.0
        %5406 = vmatprep.subr.mxu0 0.0
        %5407 = vmatpush1.msra.mxu0 0.0
        %5408 = vmatprep.subr.mxu0 0.0
        %5409 = vmatpush1.msra.mxu0 0.0
        %5410 = vmatprep.subr.mxu0 0.0
        %5411 = vmatpush1.msra.mxu0 0.0
        %5412 = vmatprep.subr.mxu0 0.0
        %5413 = vmatpush1.msra.mxu0 0.0
        %5414 = vmatprep.subr.mxu0 0.0
        %5415 = vmatpush1.msra.mxu0 0.0
        %5416 = vmatprep.subr.mxu0 0.0
        %5417 = vmatpush1.msra.mxu0 0.0
        %5418 = vmatprep.subr.mxu0 0.0
        %5419 = vmatpush1.msra.mxu0 0.0
        %5420 = vmatprep.subr.mxu0 0.0
        %5421 = vmatpush1.msra.mxu0 %v1410
        %5422 = vmatprep.subr.mxu0 0.0
        %5423 = vmatpush1.msra.mxu0 %v1409
        %5424 = vmatprep.subr.mxu0 0.0
        %5425 = vmatpush1.msra.mxu0 %v1408
        %5426 = vmatprep.subr.mxu0 0.0
        %5427 = vmatpush1.msra.mxu0 %v1407
        %5428 = vmatprep.subr.mxu0 0.0
        %5429 = vmatpush2.msra.mxu0 0.0
        %5430 = vmatprep.subr.mxu0 0.0
        %5431 = vmatpush2.msra.mxu0 0.0
        %5432 = vmatprep.subr.mxu0 0.0
        %5433 = vmatpush2.msra.mxu0 0.0
        %5434 = vmatprep.subr.mxu0 0.0
        %5435 = vmatpush2.msra.mxu0 0.0
        %5436 = vmatprep.subr.mxu0 0.0
        %5437 = vmatpush2.msra.mxu0 0.0
        %5438 = vmatprep.subr.mxu0 0.0
        %5439 = vmatpush2.msra.mxu0 0.0
        %5440 = vmatprep.subr.mxu0 0.0
        %5441 = vmatpush2.msra.mxu0 0.0
        %5442 = vmatprep.subr.mxu0 0.0
        %5443 = vmatpush2.msra.mxu0 0.0
        %5444 = vmatprep.subr.mxu0 0.0
        %5445 = vmatpush2.msra.mxu0 0.0
        %5446 = vmatprep.subr.mxu0 0.0
        %5447 = vmatpush2.msra.mxu0 0.0
        %5448 = vmatprep.subr.mxu0 0.0
        %5449 = vmatpush2.msra.mxu0 0.0
        %5450 = vmatprep.subr.mxu0 0.0
        %5451 = vmatpush2.msra.mxu0 0.0
        %5452 = vmatprep.subr.mxu0 0.0
        %5453 = vmatpush2.msra.mxu0 0.0
        %5454 = vmatprep.subr.mxu0 0.0
        %5455 = vmatpush2.msra.mxu0 0.0
        %5456 = vmatprep.subr.mxu0 0.0
        %5457 = vmatpush2.msra.mxu0 0.0
        %5458 = vmatprep.subr.mxu0 0.0
        %5459 = vmatpush2.msra.mxu0 0.0
        %5460 = vmatprep.mubr.f32.mxu0 0.0
        %5461 = vmatmul.mubr.f32.gmra.mxu0 %v4368
        %v5462 = vpop.f32.mrf.mxu0
        %v5463 = vadd.f32 %v1415, %v5462
        %v5464 = vpop.f32.mrf.mxu0
        %5465 = vdwg.mxu0
        %v5467 = vsel %vm536, %v5323, 0
        %v5470 = vsel %vm536, %v5393, 0
        %5472 = vmatprep.subr.mxu0 0.0
        %5473 = vmatpush1.xpose.msra.mxu0 0.0
        %5474 = vmatprep.subr.mxu0 0.0
        %5475 = vmatpush1.xpose.msra.mxu0 0.0
        %5476 = vmatprep.subr.mxu0 0.0
        %5477 = vmatpush1.xpose.msra.mxu0 0.0
        %5478 = vmatprep.subr.mxu0 0.0
        %5479 = vmatpush1.xpose.msra.mxu0 0.0
        %5480 = vmatprep.subr.mxu0 0.0
        %5481 = vmatpush1.xpose.msra.mxu0 0.0
        %5482 = vmatprep.subr.mxu0 0.0
        %5483 = vmatpush1.xpose.msra.mxu0 0.0
        %5484 = vmatprep.subr.mxu0 0.0
        %5485 = vmatpush1.xpose.msra.mxu0 0.0
        %5486 = vmatprep.subr.mxu0 0.0
        %5487 = vmatpush1.xpose.msra.mxu0 0.0
        %5488 = vmatprep.subr.mxu0 0.0
        %5489 = vmatpush1.xpose.msra.mxu0 0.0
        %5490 = vmatprep.subr.mxu0 0.0
        %5491 = vmatpush1.xpose.msra.mxu0 0.0
        %5492 = vmatprep.subr.mxu0 0.0
        %5493 = vmatpush1.xpose.msra.mxu0 0.0
        %5494 = vmatprep.subr.mxu0 0.0
        %5495 = vmatpush1.xpose.msra.mxu0 0.0
        %5496 = vmatprep.subr.mxu0 0.0
        %5497 = vmatpush1.xpose.msra.mxu0 0.0
        %5498 = vmatprep.subr.mxu0 0.0
        %5499 = vmatpush1.xpose.msra.mxu0 0.0
        %5500 = vmatprep.subr.mxu0 0.0
        %5501 = vmatpush1.xpose.msra.mxu0 0.0
        %5502 = vmatprep.subr.mxu0 0.0
        %5503 = vmatpush1.xpose.msra.mxu0 %v5470
        %5504 = vmatprep.subr.mxu0 0.0
        %5505 = vmatpush2.xpose.msra.mxu0 0.0
        %5506 = vmatprep.subr.mxu0 0.0
        %5507 = vmatpush2.xpose.msra.mxu0 0.0
        %5508 = vmatprep.subr.mxu0 0.0
        %5509 = vmatpush2.xpose.msra.mxu0 0.0
        %5510 = vmatprep.subr.mxu0 0.0
        %5511 = vmatpush2.xpose.msra.mxu0 0.0
        %5512 = vmatprep.subr.mxu0 0.0
        %5513 = vmatpush2.xpose.msra.mxu0 0.0
        %5514 = vmatprep.subr.mxu0 0.0
        %5515 = vmatpush2.xpose.msra.mxu0 0.0
        %5516 = vmatprep.subr.mxu0 0.0
        %5517 = vmatpush2.xpose.msra.mxu0 0.0
        %5518 = vmatprep.subr.mxu0 0.0
        %5519 = vmatpush2.xpose.msra.mxu0 0.0
        %5520 = vmatprep.subr.mxu0 0.0
        %5521 = vmatpush2.xpose.msra.mxu0 0.0
        %5522 = vmatprep.subr.mxu0 0.0
        %5523 = vmatpush2.xpose.msra.mxu0 0.0
        %5524 = vmatprep.subr.mxu0 0.0
        %5525 = vmatpush2.xpose.msra.mxu0 0.0
        %5526 = vmatprep.subr.mxu0 0.0
        %5527 = vmatpush2.xpose.msra.mxu0 0.0
        %5528 = vmatprep.subr.mxu0 0.0
        %5529 = vmatpush2.xpose.msra.mxu0 0.0
        %5530 = vmatprep.subr.mxu0 0.0
        %5531 = vmatpush2.xpose.msra.mxu0 0.0
        %5532 = vmatprep.subr.mxu0 0.0
        %5533 = vmatpush2.xpose.msra.mxu0 0.0
        %5534 = vmatprep.subr.mxu0 0.0
        %5535 = vmatpush2.xpose.msra.mxu0 0.0
        %5536 = vmatprep.mubr.f32.mxu0 0.0
        %5537 = vmatmul.mubr.f32.gmra.mxu0 %v5467
        %v5538 = vpop.f32.mrf.mxu0
        %v5539 = vadd.f32 0.0, %v5538
        %v5540 = vpop.f32.mrf.mxu0
        %5541 = vdwg.mxu0
        %v5542 = vsel %vm536, %v5539, -inf
        %5543 = vmax.xlane.f32.xlu0 %v5542
        %v5544 = vpop.xlane.xlu0 %5543
        %v5545 = vsub.f32 %v5539, %v5544
        %v5546 = vmul.f32 %v5545, 1.442695
        %v5547 = vpow.pop %v5546
        %v5548 = vsel %vm536, %v5547, 0.0
        %5549 = vadd.xlane.f32.xlu0 %v5548
        %v5550 = vpop.xlane.xlu0 %5549
        %v5551 = vrcp.pop %v5550
        %v5552 = vmul.f32 %v5547, %v5551
        %v5554 = vsel %vm536, %v5552, 0
        %5556 = vmatprep.subr.mxu0 0.0
        %5557 = vmatpush1.msra.mxu0 0.0
        %5558 = vmatprep.subr.mxu0 0.0
        %5559 = vmatpush1.msra.mxu0 0.0
        %5560 = vmatprep.subr.mxu0 0.0
        %5561 = vmatpush1.msra.mxu0 0.0
        %5562 = vmatprep.subr.mxu0 0.0
        %5563 = vmatpush1.msra.mxu0 0.0
        %5564 = vmatprep.subr.mxu0 0.0
        %5565 = vmatpush1.msra.mxu0 0.0
        %5566 = vmatprep.subr.mxu0 0.0
        %5567 = vmatpush1.msra.mxu0 0.0
        %5568 = vmatprep.subr.mxu0 0.0
        %5569 = vmatpush1.msra.mxu0 0.0
        %5570 = vmatprep.subr.mxu0 0.0
        %5571 = vmatpush1.msra.mxu0 0.0
        %5572 = vmatprep.subr.mxu0 0.0
        %5573 = vmatpush1.msra.mxu0 0.0
        %5574 = vmatprep.subr.mxu0 0.0
        %5575 = vmatpush1.msra.mxu0 0.0
        %5576 = vmatprep.subr.mxu0 0.0
        %5577 = vmatpush1.msra.mxu0 0.0
        %5578 = vmatprep.subr.mxu0 0.0
        %5579 = vmatpush1.msra.mxu0 0.0
        %5580 = vmatprep.subr.mxu0 0.0
        %5581 = vmatpush1.msra.mxu0 0.0
        %5582 = vmatprep.subr.mxu0 0.0
        %5583 = vmatpush1.msra.mxu0 0.0
        %5584 = vmatprep.subr.mxu0 0.0
        %5585 = vmatpush1.msra.mxu0 0.0
        %5586 = vmatprep.subr.mxu0 0.0
        %5587 = vmatpush1.msra.mxu0 %v5463
        %5588 = vmatprep.subr.mxu0 0.0
        %5589 = vmatpush2.msra.mxu0 0.0
        %5590 = vmatprep.subr.mxu0 0.0
        %5591 = vmatpush2.msra.mxu0 0.0
        %5592 = vmatprep.subr.mxu0 0.0
        %5593 = vmatpush2.msra.mxu0 0.0
        %5594 = vmatprep.subr.mxu0 0.0
        %5595 = vmatpush2.msra.mxu0 0.0
        %5596 = vmatprep.subr.mxu0 0.0
        %5597 = vmatpush2.msra.mxu0 0.0
        %5598 = vmatprep.subr.mxu0 0.0
        %5599 = vmatpush2.msra.mxu0 0.0
        %5600 = vmatprep.subr.mxu0 0.0
        %5601 = vmatpush2.msra.mxu0 0.0
        %5602 = vmatprep.subr.mxu0 0.0
        %5603 = vmatpush2.msra.mxu0 0.0
        %5604 = vmatprep.subr.mxu0 0.0
        %5605 = vmatpush2.msra.mxu0 0.0
        %5606 = vmatprep.subr.mxu0 0.0
        %5607 = vmatpush2.msra.mxu0 0.0
        %5608 = vmatprep.subr.mxu0 0.0
        %5609 = vmatpush2.msra.mxu0 0.0
        %5610 = vmatprep.subr.mxu0 0.0
        %5611 = vmatpush2.msra.mxu0 0.0
        %5612 = vmatprep.subr.mxu0 0.0
        %5613 = vmatpush2.msra.mxu0 0.0
        %5614 = vmatprep.subr.mxu0 0.0
        %5615 = vmatpush2.msra.mxu0 0.0
        %5616 = vmatprep.subr.mxu0 0.0
        %5617 = vmatpush2.msra.mxu0 0.0
        %5618 = vmatprep.subr.mxu0 0.0
        %5619 = vmatpush2.msra.mxu0 0.0
        %5620 = vmatprep.mubr.f32.mxu0 0.0
        %5621 = vmatmul.mubr.f32.gmra.mxu0 %v5554
        %v5622 = vpop.f32.mrf.mxu0
        %v5623 = vadd.f32 0.0, %v5622
        %v5624 = vpop.f32.mrf.mxu0
        %5625 = vdwg.mxu0
        %v5627 = vsel %vm536, %v5623, 0
        %5629 = vmatprep.subr.mxu0 0.0
        %5630 = vmatpush1.msra.mxu0 0.0
        %5631 = vmatprep.subr.mxu0 0.0
        %5632 = vmatpush1.msra.mxu0 0.0
        %5633 = vmatprep.subr.mxu0 0.0
        %5634 = vmatpush1.msra.mxu0 0.0
        %5635 = vmatprep.subr.mxu0 0.0
        %5636 = vmatpush1.msra.mxu0 0.0
        %5637 = vmatprep.subr.mxu0 0.0
        %5638 = vmatpush1.msra.mxu0 0.0
        %5639 = vmatprep.subr.mxu0 0.0
        %5640 = vmatpush1.msra.mxu0 0.0
        %5641 = vmatprep.subr.mxu0 0.0
        %5642 = vmatpush1.msra.mxu0 0.0
        %5643 = vmatprep.subr.mxu0 0.0
        %5644 = vmatpush1.msra.mxu0 0.0
        %5645 = vmatprep.subr.mxu0 0.0
        %5646 = vmatpush1.msra.mxu0 0.0
        %5647 = vmatprep.subr.mxu0 0.0
        %5648 = vmatpush1.msra.mxu0 0.0
        %5649 = vmatprep.subr.mxu0 0.0
        %5650 = vmatpush1.msra.mxu0 0.0
        %5651 = vmatprep.subr.mxu0 0.0
        %5652 = vmatpush1.msra.mxu0 0.0
        %5653 = vmatprep.subr.mxu0 0.0
        %5654 = vmatpush1.msra.mxu0 0.0
        %5655 = vmatprep.subr.mxu0 0.0
        %5656 = vmatpush1.msra.mxu0 0.0
        %5657 = vmatprep.subr.mxu0 0.0
        %5658 = vmatpush1.msra.mxu0 0.0
        %5659 = vmatprep.subr.mxu0 0.0
        %5660 = vmatpush1.msra.mxu0 %v1647
        %5661 = vmatprep.subr.mxu0 0.0
        %5662 = vmatpush2.msra.mxu0 0.0
        %5663 = vmatprep.subr.mxu0 0.0
        %5664 = vmatpush2.msra.mxu0 0.0
        %5665 = vmatprep.subr.mxu0 0.0
        %5666 = vmatpush2.msra.mxu0 0.0
        %5667 = vmatprep.subr.mxu0 0.0
        %5668 = vmatpush2.msra.mxu0 0.0
        %5669 = vmatprep.subr.mxu0 0.0
        %5670 = vmatpush2.msra.mxu0 0.0
        %5671 = vmatprep.subr.mxu0 0.0
        %5672 = vmatpush2.msra.mxu0 0.0
        %5673 = vmatprep.subr.mxu0 0.0
        %5674 = vmatpush2.msra.mxu0 0.0
        %5675 = vmatprep.subr.mxu0 0.0
        %5676 = vmatpush2.msra.mxu0 0.0
        %5677 = vmatprep.subr.mxu0 0.0
        %5678 = vmatpush2.msra.mxu0 0.0
        %5679 = vmatprep.subr.mxu0 0.0
        %5680 = vmatpush2.msra.mxu0 0.0
        %5681 = vmatprep.subr.mxu0 0.0
        %5682 = vmatpush2.msra.mxu0 0.0
        %5683 = vmatprep.subr.mxu0 0.0
        %5684 = vmatpush2.msra.mxu0 0.0
        %5685 = vmatprep.subr.mxu0 0.0
        %5686 = vmatpush2.msra.mxu0 0.0
        %5687 = vmatprep.subr.mxu0 0.0
        %5688 = vmatpush2.msra.mxu0 0.0
        %5689 = vmatprep.subr.mxu0 0.0
        %5690 = vmatpush2.msra.mxu0 0.0
        %5691 = vmatprep.subr.mxu0 0.0
        %5692 = vmatpush2.msra.mxu0 0.0
        %5693 = vmatprep.mubr.f32.mxu0 0.0
        %5694 = vmatmul.mubr.f32.gmra.mxu0 %v5627
        %v5695 = vpop.f32.mrf.mxu0
        %v5696 = vadd.f32 0.0, %v5695
        %v5697 = vpop.f32.mrf.mxu0
        %5698 = vdwg.mxu0
        %v5699 = vadd.f32 %v5253, %v5696
        %5700 = vmatprep.subr.mxu0 0.0
        %5701 = vmatpush1.msra.mxu0 0.0
        %5702 = vmatprep.subr.mxu0 0.0
        %5703 = vmatpush1.msra.mxu0 0.0
        %5704 = vmatprep.subr.mxu0 0.0
        %5705 = vmatpush1.msra.mxu0 0.0
        %5706 = vmatprep.subr.mxu0 0.0
        %5707 = vmatpush1.msra.mxu0 0.0
        %5708 = vmatprep.subr.mxu0 0.0
        %5709 = vmatpush1.msra.mxu0 0.0
        %5710 = vmatprep.subr.mxu0 0.0
        %5711 = vmatpush1.msra.mxu0 0.0
        %5712 = vmatprep.subr.mxu0 0.0
        %5713 = vmatpush1.msra.mxu0 0.0
        %5714 = vmatprep.subr.mxu0 0.0
        %5715 = vmatpush1.msra.mxu0 0.0
        %5716 = vmatprep.subr.mxu0 0.0
        %5717 = vmatpush1.msra.mxu0 0.0
        %5718 = vmatprep.subr.mxu0 0.0
        %5719 = vmatpush1.msra.mxu0 0.0
        %5720 = vmatprep.subr.mxu0 0.0
        %5721 = vmatpush1.msra.mxu0 0.0
        %5722 = vmatprep.subr.mxu0 0.0
        %5723 = vmatpush1.msra.mxu0 0.0
        %5724 = vmatprep.subr.mxu0 0.0
        %5725 = vmatpush1.msra.mxu0 %v1726
        %5726 = vmatprep.subr.mxu0 0.0
        %5727 = vmatpush1.msra.mxu0 %v1725
        %5728 = vmatprep.subr.mxu0 0.0
        %5729 = vmatpush1.msra.mxu0 %v1724
        %5730 = vmatprep.subr.mxu0 0.0
        %5731 = vmatpush1.msra.mxu0 %v1723
        %5732 = vmatprep.subr.mxu0 0.0
        %5733 = vmatpush2.msra.mxu0 0.0
        %5734 = vmatprep.subr.mxu0 0.0
        %5735 = vmatpush2.msra.mxu0 0.0
        %5736 = vmatprep.subr.mxu0 0.0
        %5737 = vmatpush2.msra.mxu0 0.0
        %5738 = vmatprep.subr.mxu0 0.0
        %5739 = vmatpush2.msra.mxu0 0.0
        %5740 = vmatprep.subr.mxu0 0.0
        %5741 = vmatpush2.msra.mxu0 0.0
        %5742 = vmatprep.subr.mxu0 0.0
        %5743 = vmatpush2.msra.mxu0 0.0
        %5744 = vmatprep.subr.mxu0 0.0
        %5745 = vmatpush2.msra.mxu0 0.0
        %5746 = vmatprep.subr.mxu0 0.0
        %5747 = vmatpush2.msra.mxu0 0.0
        %5748 = vmatprep.subr.mxu0 0.0
        %5749 = vmatpush2.msra.mxu0 0.0
        %5750 = vmatprep.subr.mxu0 0.0
        %5751 = vmatpush2.msra.mxu0 0.0
        %5752 = vmatprep.subr.mxu0 0.0
        %5753 = vmatpush2.msra.mxu0 0.0
        %5754 = vmatprep.subr.mxu0 0.0
        %5755 = vmatpush2.msra.mxu0 0.0
        %5756 = vmatprep.subr.mxu0 0.0
        %5757 = vmatpush2.msra.mxu0 0.0
        %5758 = vmatprep.subr.mxu0 0.0
        %5759 = vmatpush2.msra.mxu0 0.0
        %5760 = vmatprep.subr.mxu0 0.0
        %5761 = vmatpush2.msra.mxu0 0.0
        %5762 = vmatprep.subr.mxu0 0.0
        %5763 = vmatpush2.msra.mxu0 0.0
        %5764 = vmatprep.mubr.f32.mxu0 0.0
        %5765 = vmatmul.mubr.f32.gmra.mxu0 %v4368
        %v5766 = vpop.f32.mrf.mxu0
        %v5767 = vadd.f32 %v1731, %v5766
        %v5768 = vpop.f32.mrf.mxu0
        %5769 = vdwg.mxu0
        %5770 = vmatprep.subr.mxu0 0.0
        %5771 = vmatpush1.msra.mxu0 0.0
        %5772 = vmatprep.subr.mxu0 0.0
        %5773 = vmatpush1.msra.mxu0 0.0
        %5774 = vmatprep.subr.mxu0 0.0
        %5775 = vmatpush1.msra.mxu0 0.0
        %5776 = vmatprep.subr.mxu0 0.0
        %5777 = vmatpush1.msra.mxu0 0.0
        %5778 = vmatprep.subr.mxu0 0.0
        %5779 = vmatpush1.msra.mxu0 0.0
        %5780 = vmatprep.subr.mxu0 0.0
        %5781 = vmatpush1.msra.mxu0 0.0
        %5782 = vmatprep.subr.mxu0 0.0
        %5783 = vmatpush1.msra.mxu0 0.0
        %5784 = vmatprep.subr.mxu0 0.0
        %5785 = vmatpush1.msra.mxu0 0.0
        %5786 = vmatprep.subr.mxu0 0.0
        %5787 = vmatpush1.msra.mxu0 0.0
        %5788 = vmatprep.subr.mxu0 0.0
        %5789 = vmatpush1.msra.mxu0 0.0
        %5790 = vmatprep.subr.mxu0 0.0
        %5791 = vmatpush1.msra.mxu0 0.0
        %5792 = vmatprep.subr.mxu0 0.0
        %5793 = vmatpush1.msra.mxu0 0.0
        %5794 = vmatprep.subr.mxu0 0.0
        %5795 = vmatpush1.msra.mxu0 %v1806
        %5796 = vmatprep.subr.mxu0 0.0
        %5797 = vmatpush1.msra.mxu0 %v1805
        %5798 = vmatprep.subr.mxu0 0.0
        %5799 = vmatpush1.msra.mxu0 %v1804
        %5800 = vmatprep.subr.mxu0 0.0
        %5801 = vmatpush1.msra.mxu0 %v1803
        %5802 = vmatprep.subr.mxu0 0.0
        %5803 = vmatpush2.msra.mxu0 0.0
        %5804 = vmatprep.subr.mxu0 0.0
        %5805 = vmatpush2.msra.mxu0 0.0
        %5806 = vmatprep.subr.mxu0 0.0
        %5807 = vmatpush2.msra.mxu0 0.0
        %5808 = vmatprep.subr.mxu0 0.0
        %5809 = vmatpush2.msra.mxu0 0.0
        %5810 = vmatprep.subr.mxu0 0.0
        %5811 = vmatpush2.msra.mxu0 0.0
        %5812 = vmatprep.subr.mxu0 0.0
        %5813 = vmatpush2.msra.mxu0 0.0
        %5814 = vmatprep.subr.mxu0 0.0
        %5815 = vmatpush2.msra.mxu0 0.0
        %5816 = vmatprep.subr.mxu0 0.0
        %5817 = vmatpush2.msra.mxu0 0.0
        %5818 = vmatprep.subr.mxu0 0.0
        %5819 = vmatpush2.msra.mxu0 0.0
        %5820 = vmatprep.subr.mxu0 0.0
        %5821 = vmatpush2.msra.mxu0 0.0
        %5822 = vmatprep.subr.mxu0 0.0
        %5823 = vmatpush2.msra.mxu0 0.0
        %5824 = vmatprep.subr.mxu0 0.0
        %5825 = vmatpush2.msra.mxu0 0.0
        %5826 = vmatprep.subr.mxu0 0.0
        %5827 = vmatpush2.msra.mxu0 0.0
        %5828 = vmatprep.subr.mxu0 0.0
        %5829 = vmatpush2.msra.mxu0 0.0
        %5830 = vmatprep.subr.mxu0 0.0
        %5831 = vmatpush2.msra.mxu0 0.0
        %5832 = vmatprep.subr.mxu0 0.0
        %5833 = vmatpush2.msra.mxu0 0.0
        %5834 = vmatprep.mubr.f32.mxu0 0.0
        %5835 = vmatmul.mubr.f32.gmra.mxu0 %v4368
        %v5836 = vpop.f32.mrf.mxu0
        %v5837 = vadd.f32 %v1811, %v5836
        %v5838 = vpop.f32.mrf.mxu0
        %5839 = vdwg.mxu0
        %5840 = vmatprep.subr.mxu0 0.0
        %5841 = vmatpush1.msra.mxu0 0.0
        %5842 = vmatprep.subr.mxu0 0.0
        %5843 = vmatpush1.msra.mxu0 0.0
        %5844 = vmatprep.subr.mxu0 0.0
        %5845 = vmatpush1.msra.mxu0 0.0
        %5846 = vmatprep.subr.mxu0 0.0
        %5847 = vmatpush1.msra.mxu0 0.0
        %5848 = vmatprep.subr.mxu0 0.0
        %5849 = vmatpush1.msra.mxu0 0.0
        %5850 = vmatprep.subr.mxu0 0.0
        %5851 = vmatpush1.msra.mxu0 0.0
        %5852 = vmatprep.subr.mxu0 0.0
        %5853 = vmatpush1.msra.mxu0 0.0
        %5854 = vmatprep.subr.mxu0 0.0
        %5855 = vmatpush1.msra.mxu0 0.0
        %5856 = vmatprep.subr.mxu0 0.0
        %5857 = vmatpush1.msra.mxu0 0.0
        %5858 = vmatprep.subr.mxu0 0.0
        %5859 = vmatpush1.msra.mxu0 0.0
        %5860 = vmatprep.subr.mxu0 0.0
        %5861 = vmatpush1.msra.mxu0 0.0
        %5862 = vmatprep.subr.mxu0 0.0
        %5863 = vmatpush1.msra.mxu0 0.0
        %5864 = vmatprep.subr.mxu0 0.0
        %5865 = vmatpush1.msra.mxu0 %v1886
        %5866 = vmatprep.subr.mxu0 0.0
        %5867 = vmatpush1.msra.mxu0 %v1885
        %5868 = vmatprep.subr.mxu0 0.0
        %5869 = vmatpush1.msra.mxu0 %v1884
        %5870 = vmatprep.subr.mxu0 0.0
        %5871 = vmatpush1.msra.mxu0 %v1883
        %5872 = vmatprep.subr.mxu0 0.0
        %5873 = vmatpush2.msra.mxu0 0.0
        %5874 = vmatprep.subr.mxu0 0.0
        %5875 = vmatpush2.msra.mxu0 0.0
        %5876 = vmatprep.subr.mxu0 0.0
        %5877 = vmatpush2.msra.mxu0 0.0
        %5878 = vmatprep.subr.mxu0 0.0
        %5879 = vmatpush2.msra.mxu0 0.0
        %5880 = vmatprep.subr.mxu0 0.0
        %5881 = vmatpush2.msra.mxu0 0.0
        %5882 = vmatprep.subr.mxu0 0.0
        %5883 = vmatpush2.msra.mxu0 0.0
        %5884 = vmatprep.subr.mxu0 0.0
        %5885 = vmatpush2.msra.mxu0 0.0
        %5886 = vmatprep.subr.mxu0 0.0
        %5887 = vmatpush2.msra.mxu0 0.0
        %5888 = vmatprep.subr.mxu0 0.0
        %5889 = vmatpush2.msra.mxu0 0.0
        %5890 = vmatprep.subr.mxu0 0.0
        %5891 = vmatpush2.msra.mxu0 0.0
        %5892 = vmatprep.subr.mxu0 0.0
        %5893 = vmatpush2.msra.mxu0 0.0
        %5894 = vmatprep.subr.mxu0 0.0
        %5895 = vmatpush2.msra.mxu0 0.0
        %5896 = vmatprep.subr.mxu0 0.0
        %5897 = vmatpush2.msra.mxu0 0.0
        %5898 = vmatprep.subr.mxu0 0.0
        %5899 = vmatpush2.msra.mxu0 0.0
        %5900 = vmatprep.subr.mxu0 0.0
        %5901 = vmatpush2.msra.mxu0 0.0
        %5902 = vmatprep.subr.mxu0 0.0
        %5903 = vmatpush2.msra.mxu0 0.0
        %5904 = vmatprep.mubr.f32.mxu0 0.0
        %5905 = vmatmul.mubr.f32.gmra.mxu0 %v4368
        %v5906 = vpop.f32.mrf.mxu0
        %v5907 = vadd.f32 %v1891, %v5906
        %v5908 = vpop.f32.mrf.mxu0
        %5909 = vdwg.mxu0
        %v5911 = vsel %vm536, %v5767, 0
        %v5914 = vsel %vm536, %v5837, 0
        %5916 = vmatprep.subr.mxu0 0.0
        %5917 = vmatpush1.xpose.msra.mxu0 0.0
        %5918 = vmatprep.subr.mxu0 0.0
        %5919 = vmatpush1.xpose.msra.mxu0 0.0
        %5920 = vmatprep.subr.mxu0 0.0
        %5921 = vmatpush1.xpose.msra.mxu0 0.0
        %5922 = vmatprep.subr.mxu0 0.0
        %5923 = vmatpush1.xpose.msra.mxu0 0.0
        %5924 = vmatprep.subr.mxu0 0.0
        %5925 = vmatpush1.xpose.msra.mxu0 0.0
        %5926 = vmatprep.subr.mxu0 0.0
        %5927 = vmatpush1.xpose.msra.mxu0 0.0
        %5928 = vmatprep.subr.mxu0 0.0
        %5929 = vmatpush1.xpose.msra.mxu0 0.0
        %5930 = vmatprep.subr.mxu0 0.0
        %5931 = vmatpush1.xpose.msra.mxu0 0.0
        %5932 = vmatprep.subr.mxu0 0.0
        %5933 = vmatpush1.xpose.msra.mxu0 0.0
        %5934 = vmatprep.subr.mxu0 0.0
        %5935 = vmatpush1.xpose.msra.mxu0 0.0
        %5936 = vmatprep.subr.mxu0 0.0
        %5937 = vmatpush1.xpose.msra.mxu0 0.0
        %5938 = vmatprep.subr.mxu0 0.0
        %5939 = vmatpush1.xpose.msra.mxu0 0.0
        %5940 = vmatprep.subr.mxu0 0.0
        %5941 = vmatpush1.xpose.msra.mxu0 0.0
        %5942 = vmatprep.subr.mxu0 0.0
        %5943 = vmatpush1.xpose.msra.mxu0 0.0
        %5944 = vmatprep.subr.mxu0 0.0
        %5945 = vmatpush1.xpose.msra.mxu0 0.0
        %5946 = vmatprep.subr.mxu0 0.0
        %5947 = vmatpush1.xpose.msra.mxu0 %v5914
        %5948 = vmatprep.subr.mxu0 0.0
        %5949 = vmatpush2.xpose.msra.mxu0 0.0
        %5950 = vmatprep.subr.mxu0 0.0
        %5951 = vmatpush2.xpose.msra.mxu0 0.0
        %5952 = vmatprep.subr.mxu0 0.0
        %5953 = vmatpush2.xpose.msra.mxu0 0.0
        %5954 = vmatprep.subr.mxu0 0.0
        %5955 = vmatpush2.xpose.msra.mxu0 0.0
        %5956 = vmatprep.subr.mxu0 0.0
        %5957 = vmatpush2.xpose.msra.mxu0 0.0
        %5958 = vmatprep.subr.mxu0 0.0
        %5959 = vmatpush2.xpose.msra.mxu0 0.0
        %5960 = vmatprep.subr.mxu0 0.0
        %5961 = vmatpush2.xpose.msra.mxu0 0.0
        %5962 = vmatprep.subr.mxu0 0.0
        %5963 = vmatpush2.xpose.msra.mxu0 0.0
        %5964 = vmatprep.subr.mxu0 0.0
        %5965 = vmatpush2.xpose.msra.mxu0 0.0
        %5966 = vmatprep.subr.mxu0 0.0
        %5967 = vmatpush2.xpose.msra.mxu0 0.0
        %5968 = vmatprep.subr.mxu0 0.0
        %5969 = vmatpush2.xpose.msra.mxu0 0.0
        %5970 = vmatprep.subr.mxu0 0.0
        %5971 = vmatpush2.xpose.msra.mxu0 0.0
        %5972 = vmatprep.subr.mxu0 0.0
        %5973 = vmatpush2.xpose.msra.mxu0 0.0
        %5974 = vmatprep.subr.mxu0 0.0
        %5975 = vmatpush2.xpose.msra.mxu0 0.0
        %5976 = vmatprep.subr.mxu0 0.0
        %5977 = vmatpush2.xpose.msra.mxu0 0.0
        %5978 = vmatprep.subr.mxu0 0.0
        %5979 = vmatpush2.xpose.msra.mxu0 0.0
        %5980 = vmatprep.mubr.f32.mxu0 0.0
        %5981 = vmatmul.mubr.f32.gmra.mxu0 %v5911
        %v5982 = vpop.f32.mrf.mxu0
        %v5983 = vadd.f32 0.0, %v5982
        %v5984 = vpop.f32.mrf.mxu0
        %5985 = vdwg.mxu0
        %v5986 = vsel %vm536, %v5983, -inf
        %5987 = vmax.xlane.f32.xlu0 %v5986
        %v5988 = vpop.xlane.xlu0 %5987
        %v5989 = vsub.f32 %v5983, %v5988
        %v5990 = vmul.f32 %v5989, 1.442695
        %v5991 = vpow.pop %v5990
        %v5992 = vsel %vm536, %v5991, 0.0
        %5993 = vadd.xlane.f32.xlu0 %v5992
        %v5994 = vpop.xlane.xlu0 %5993
        %v5995 = vrcp.pop %v5994
        %v5996 = vmul.f32 %v5991, %v5995
        %v5998 = vsel %vm536, %v5996, 0
        %6000 = vmatprep.subr.mxu0 0.0
        %6001 = vmatpush1.msra.mxu0 0.0
        %6002 = vmatprep.subr.mxu0 0.0
        %6003 = vmatpush1.msra.mxu0 0.0
        %6004 = vmatprep.subr.mxu0 0.0
        %6005 = vmatpush1.msra.mxu0 0.0
        %6006 = vmatprep.subr.mxu0 0.0
        %6007 = vmatpush1.msra.mxu0 0.0
        %6008 = vmatprep.subr.mxu0 0.0
        %6009 = vmatpush1.msra.mxu0 0.0
        %6010 = vmatprep.subr.mxu0 0.0
        %6011 = vmatpush1.msra.mxu0 0.0
        %6012 = vmatprep.subr.mxu0 0.0
        %6013 = vmatpush1.msra.mxu0 0.0
        %6014 = vmatprep.subr.mxu0 0.0
        %6015 = vmatpush1.msra.mxu0 0.0
        %6016 = vmatprep.subr.mxu0 0.0
        %6017 = vmatpush1.msra.mxu0 0.0
        %6018 = vmatprep.subr.mxu0 0.0
        %6019 = vmatpush1.msra.mxu0 0.0
        %6020 = vmatprep.subr.mxu0 0.0
        %6021 = vmatpush1.msra.mxu0 0.0
        %6022 = vmatprep.subr.mxu0 0.0
        %6023 = vmatpush1.msra.mxu0 0.0
        %6024 = vmatprep.subr.mxu0 0.0
        %6025 = vmatpush1.msra.mxu0 0.0
        %6026 = vmatprep.subr.mxu0 0.0
        %6027 = vmatpush1.msra.mxu0 0.0
        %6028 = vmatprep.subr.mxu0 0.0
        %6029 = vmatpush1.msra.mxu0 0.0
        %6030 = vmatprep.subr.mxu0 0.0
        %6031 = vmatpush1.msra.mxu0 %v5907
        %6032 = vmatprep.subr.mxu0 0.0
        %6033 = vmatpush2.msra.mxu0 0.0
        %6034 = vmatprep.subr.mxu0 0.0
        %6035 = vmatpush2.msra.mxu0 0.0
        %6036 = vmatprep.subr.mxu0 0.0
        %6037 = vmatpush2.msra.mxu0 0.0
        %6038 = vmatprep.subr.mxu0 0.0
        %6039 = vmatpush2.msra.mxu0 0.0
        %6040 = vmatprep.subr.mxu0 0.0
        %6041 = vmatpush2.msra.mxu0 0.0
        %6042 = vmatprep.subr.mxu0 0.0
        %6043 = vmatpush2.msra.mxu0 0.0
        %6044 = vmatprep.subr.mxu0 0.0
        %6045 = vmatpush2.msra.mxu0 0.0
        %6046 = vmatprep.subr.mxu0 0.0
        %6047 = vmatpush2.msra.mxu0 0.0
        %6048 = vmatprep.subr.mxu0 0.0
        %6049 = vmatpush2.msra.mxu0 0.0
        %6050 = vmatprep.subr.mxu0 0.0
        %6051 = vmatpush2.msra.mxu0 0.0
        %6052 = vmatprep.subr.mxu0 0.0
        %6053 = vmatpush2.msra.mxu0 0.0
        %6054 = vmatprep.subr.mxu0 0.0
        %6055 = vmatpush2.msra.mxu0 0.0
        %6056 = vmatprep.subr.mxu0 0.0
        %6057 = vmatpush2.msra.mxu0 0.0
        %6058 = vmatprep.subr.mxu0 0.0
        %6059 = vmatpush2.msra.mxu0 0.0
        %6060 = vmatprep.subr.mxu0 0.0
        %6061 = vmatpush2.msra.mxu0 0.0
        %6062 = vmatprep.subr.mxu0 0.0
        %6063 = vmatpush2.msra.mxu0 0.0
        %6064 = vmatprep.mubr.f32.mxu0 0.0
        %6065 = vmatmul.mubr.f32.gmra.mxu0 %v5998
        %v6066 = vpop.f32.mrf.mxu0
        %v6067 = vadd.f32 0.0, %v6066
        %v6068 = vpop.f32.mrf.mxu0
        %6069 = vdwg.mxu0
        %v6071 = vsel %vm536, %v6067, 0
        %6073 = vmatprep.subr.mxu0 0.0
        %6074 = vmatpush1.msra.mxu0 0.0
        %6075 = vmatprep.subr.mxu0 0.0
        %6076 = vmatpush1.msra.mxu0 0.0
        %6077 = vmatprep.subr.mxu0 0.0
        %6078 = vmatpush1.msra.mxu0 0.0
        %6079 = vmatprep.subr.mxu0 0.0
        %6080 = vmatpush1.msra.mxu0 0.0
        %6081 = vmatprep.subr.mxu0 0.0
        %6082 = vmatpush1.msra.mxu0 0.0
        %6083 = vmatprep.subr.mxu0 0.0
        %6084 = vmatpush1.msra.mxu0 0.0
        %6085 = vmatprep.subr.mxu0 0.0
        %6086 = vmatpush1.msra.mxu0 0.0
        %6087 = vmatprep.subr.mxu0 0.0
        %6088 = vmatpush1.msra.mxu0 0.0
        %6089 = vmatprep.subr.mxu0 0.0
        %6090 = vmatpush1.msra.mxu0 0.0
        %6091 = vmatprep.subr.mxu0 0.0
        %6092 = vmatpush1.msra.mxu0 0.0
        %6093 = vmatprep.subr.mxu0 0.0
        %6094 = vmatpush1.msra.mxu0 0.0
        %6095 = vmatprep.subr.mxu0 0.0
        %6096 = vmatpush1.msra.mxu0 0.0
        %6097 = vmatprep.subr.mxu0 0.0
        %6098 = vmatpush1.msra.mxu0 0.0
        %6099 = vmatprep.subr.mxu0 0.0
        %6100 = vmatpush1.msra.mxu0 0.0
        %6101 = vmatprep.subr.mxu0 0.0
        %6102 = vmatpush1.msra.mxu0 0.0
        %6103 = vmatprep.subr.mxu0 0.0
        %6104 = vmatpush1.msra.mxu0 %v2123
        %6105 = vmatprep.subr.mxu0 0.0
        %6106 = vmatpush2.msra.mxu0 0.0
        %6107 = vmatprep.subr.mxu0 0.0
        %6108 = vmatpush2.msra.mxu0 0.0
        %6109 = vmatprep.subr.mxu0 0.0
        %6110 = vmatpush2.msra.mxu0 0.0
        %6111 = vmatprep.subr.mxu0 0.0
        %6112 = vmatpush2.msra.mxu0 0.0
        %6113 = vmatprep.subr.mxu0 0.0
        %6114 = vmatpush2.msra.mxu0 0.0
        %6115 = vmatprep.subr.mxu0 0.0
        %6116 = vmatpush2.msra.mxu0 0.0
        %6117 = vmatprep.subr.mxu0 0.0
        %6118 = vmatpush2.msra.mxu0 0.0
        %6119 = vmatprep.subr.mxu0 0.0
        %6120 = vmatpush2.msra.mxu0 0.0
        %6121 = vmatprep.subr.mxu0 0.0
        %6122 = vmatpush2.msra.mxu0 0.0
        %6123 = vmatprep.subr.mxu0 0.0
        %6124 = vmatpush2.msra.mxu0 0.0
        %6125 = vmatprep.subr.mxu0 0.0
        %6126 = vmatpush2.msra.mxu0 0.0
        %6127 = vmatprep.subr.mxu0 0.0
        %6128 = vmatpush2.msra.mxu0 0.0
        %6129 = vmatprep.subr.mxu0 0.0
        %6130 = vmatpush2.msra.mxu0 0.0
        %6131 = vmatprep.subr.mxu0 0.0
        %6132 = vmatpush2.msra.mxu0 0.0
        %6133 = vmatprep.subr.mxu0 0.0
        %6134 = vmatpush2.msra.mxu0 0.0
        %6135 = vmatprep.subr.mxu0 0.0
        %6136 = vmatpush2.msra.mxu0 0.0
        %6137 = vmatprep.mubr.f32.mxu0 0.0
        %6138 = vmatmul.mubr.f32.gmra.mxu0 %v6071
        %v6139 = vpop.f32.mrf.mxu0
        %v6140 = vadd.f32 0.0, %v6139
        %v6141 = vpop.f32.mrf.mxu0
        %6142 = vdwg.mxu0
        %v6143 = vadd.f32 %v5699, %v6140
        %v6144 = vadd.f32 %v6143, %v2202
        %v6145 = vadd.f32 %v4366, %v6144
        %v6146 = vsel %vm302, %v6145, 0.0
        %6147 = vadd.xlane.f32.xlu0 %v6146
        %v6148 = vpop.xlane.xlu0 %6147
        %v6149 = vmul.f32 %v6148, %v2210
        %v6150 = vsub.f32 %v6145, %v6149
        %v6151 = vmul.f32 %v6150, %v6150
        %v6152 = vsel %vm302, %v6151, 0.0
        %6153 = vadd.xlane.f32.xlu0 %v6152
        %v6154 = vpop.xlane.xlu0 %6153
        %v6155 = vmul.f32 %v6154, %v2210
        %v6156 = vadd.f32 %v6155, 1e-05
        %v6157 = vrsqrt.pop %v6156
        %v6158 = vmul.f32 %v6150, %v6157
        %v6159 = vmul.f32 %v6158, %v2224
        %v6160 = vadd.f32 %v6159, %v2229
        %v6162 = vsel %vm302, %v6160, 0
        %6164 = vmatprep.subr.mxu0 0.0
        %6165 = vmatpush1.msra.mxu0 0.0
        %6166 = vmatprep.subr.mxu0 0.0
        %6167 = vmatpush1.msra.mxu0 0.0
        %6168 = vmatprep.subr.mxu0 0.0
        %6169 = vmatpush1.msra.mxu0 0.0
        %6170 = vmatprep.subr.mxu0 0.0
        %6171 = vmatpush1.msra.mxu0 0.0
        %6172 = vmatprep.subr.mxu0 0.0
        %6173 = vmatpush1.msra.mxu0 0.0
        %6174 = vmatprep.subr.mxu0 0.0
        %6175 = vmatpush1.msra.mxu0 0.0
        %6176 = vmatprep.subr.mxu0 0.0
        %6177 = vmatpush1.msra.mxu0 0.0
        %6178 = vmatprep.subr.mxu0 0.0
        %6179 = vmatpush1.msra.mxu0 0.0
        %6180 = vmatprep.subr.mxu0 0.0
        %6181 = vmatpush1.msra.mxu0 0.0
        %6182 = vmatprep.subr.mxu0 0.0
        %6183 = vmatpush1.msra.mxu0 0.0
        %6184 = vmatprep.subr.mxu0 0.0
        %6185 = vmatpush1.msra.mxu0 0.0
        %6186 = vmatprep.subr.mxu0 0.0
        %6187 = vmatpush1.msra.mxu0 0.0
        %6188 = vmatprep.subr.mxu0 0.0
        %6189 = vmatpush1.msra.mxu0 %v2235
        %6190 = vmatprep.subr.mxu0 0.0
        %6191 = vmatpush1.msra.mxu0 %v2234
        %6192 = vmatprep.subr.mxu0 0.0
        %6193 = vmatpush1.msra.mxu0 %v2233
        %6194 = vmatprep.subr.mxu0 0.0
        %6195 = vmatpush1.msra.mxu0 %v2232
        %6196 = vmatprep.subr.mxu0 0.0
        %6197 = vmatpush2.msra.mxu0 0.0
        %6198 = vmatprep.subr.mxu0 0.0
        %6199 = vmatpush2.msra.mxu0 0.0
        %6200 = vmatprep.subr.mxu0 0.0
        %6201 = vmatpush2.msra.mxu0 0.0
        %6202 = vmatprep.subr.mxu0 0.0
        %6203 = vmatpush2.msra.mxu0 0.0
        %6204 = vmatprep.subr.mxu0 0.0
        %6205 = vmatpush2.msra.mxu0 0.0
        %6206 = vmatprep.subr.mxu0 0.0
        %6207 = vmatpush2.msra.mxu0 0.0
        %6208 = vmatprep.subr.mxu0 0.0
        %6209 = vmatpush2.msra.mxu0 0.0
        %6210 = vmatprep.subr.mxu0 0.0
        %6211 = vmatpush2.msra.mxu0 0.0
        %6212 = vmatprep.subr.mxu0 0.0
        %6213 = vmatpush2.msra.mxu0 0.0
        %6214 = vmatprep.subr.mxu0 0.0
        %6215 = vmatpush2.msra.mxu0 0.0
        %6216 = vmatprep.subr.mxu0 0.0
        %6217 = vmatpush2.msra.mxu0 0.0
        %6218 = vmatprep.subr.mxu0 0.0
        %6219 = vmatpush2.msra.mxu0 0.0
        %6220 = vmatprep.subr.mxu0 0.0
        %6221 = vmatpush2.msra.mxu0 0.0
        %6222 = vmatprep.subr.mxu0 0.0
        %6223 = vmatpush2.msra.mxu0 0.0
        %6224 = vmatprep.subr.mxu0 0.0
        %6225 = vmatpush2.msra.mxu0 0.0
        %6226 = vmatprep.subr.mxu0 0.0
        %6227 = vmatpush2.msra.mxu0 0.0
        %6228 = vmatprep.mubr.f32.mxu0 0.0
        %6229 = vmatmul.mubr.f32.gmra.mxu0 %v6162
        %v6230 = vpop.f32.mrf.mxu0
        %v6231 = vadd.f32 %v2240, %v6230
        %v6232 = vpop.f32.mrf.mxu0
        %6233 = vdwg.mxu0
        %v6235 = vsel %vm536, %v6231, 0
        %6237 = vmatprep.subr.mxu0 0.0
        %6238 = vmatpush1.xpose.msra.mxu0 0.0
        %6239 = vmatprep.subr.mxu0 0.0
        %6240 = vmatpush1.xpose.msra.mxu0 0.0
        %6241 = vmatprep.subr.mxu0 0.0
        %6242 = vmatpush1.xpose.msra.mxu0 0.0
        %6243 = vmatprep.subr.mxu0 0.0
        %6244 = vmatpush1.xpose.msra.mxu0 0.0
        %6245 = vmatprep.subr.mxu0 0.0
        %6246 = vmatpush1.xpose.msra.mxu0 0.0
        %6247 = vmatprep.subr.mxu0 0.0
        %6248 = vmatpush1.xpose.msra.mxu0 0.0
        %6249 = vmatprep.subr.mxu0 0.0
        %6250 = vmatpush1.xpose.msra.mxu0 0.0
        %6251 = vmatprep.subr.mxu0 0.0
        %6252 = vmatpush1.xpose.msra.mxu0 0.0
        %6253 = vmatprep.subr.mxu0 0.0
        %6254 = vmatpush1.xpose.msra.mxu0 0.0
        %6255 = vmatprep.subr.mxu0 0.0
        %6256 = vmatpush1.xpose.msra.mxu0 0.0
        %6257 = vmatprep.subr.mxu0 0.0
        %6258 = vmatpush1.xpose.msra.mxu0 0.0
        %6259 = vmatprep.subr.mxu0 0.0
        %6260 = vmatpush1.xpose.msra.mxu0 0.0
        %6261 = vmatprep.subr.mxu0 0.0
        %6262 = vmatpush1.xpose.msra.mxu0 0.0
        %6263 = vmatprep.subr.mxu0 0.0
        %6264 = vmatpush1.xpose.msra.mxu0 0.0
        %6265 = vmatprep.subr.mxu0 0.0
        %6266 = vmatpush1.xpose.msra.mxu0 0.0
        %6267 = vmatprep.subr.mxu0 0.0
        %6268 = vmatpush1.xpose.msra.mxu0 %v2481
        %6269 = vmatprep.subr.mxu0 0.0
        %6270 = vmatpush2.xpose.msra.mxu0 0.0
        %6271 = vmatprep.subr.mxu0 0.0
        %6272 = vmatpush2.xpose.msra.mxu0 0.0
        %6273 = vmatprep.subr.mxu0 0.0
        %6274 = vmatpush2.xpose.msra.mxu0 0.0
        %6275 = vmatprep.subr.mxu0 0.0
        %6276 = vmatpush2.xpose.msra.mxu0 0.0
        %6277 = vmatprep.subr.mxu0 0.0
        %6278 = vmatpush2.xpose.msra.mxu0 0.0
        %6279 = vmatprep.subr.mxu0 0.0
        %6280 = vmatpush2.xpose.msra.mxu0 0.0
        %6281 = vmatprep.subr.mxu0 0.0
        %6282 = vmatpush2.xpose.msra.mxu0 0.0
        %6283 = vmatprep.subr.mxu0 0.0
        %6284 = vmatpush2.xpose.msra.mxu0 0.0
        %6285 = vmatprep.subr.mxu0 0.0
        %6286 = vmatpush2.xpose.msra.mxu0 0.0
        %6287 = vmatprep.subr.mxu0 0.0
        %6288 = vmatpush2.xpose.msra.mxu0 0.0
        %6289 = vmatprep.subr.mxu0 0.0
        %6290 = vmatpush2.xpose.msra.mxu0 0.0
        %6291 = vmatprep.subr.mxu0 0.0
        %6292 = vmatpush2.xpose.msra.mxu0 0.0
        %6293 = vmatprep.subr.mxu0 0.0
        %6294 = vmatpush2.xpose.msra.mxu0 0.0
        %6295 = vmatprep.subr.mxu0 0.0
        %6296 = vmatpush2.xpose.msra.mxu0 0.0
        %6297 = vmatprep.subr.mxu0 0.0
        %6298 = vmatpush2.xpose.msra.mxu0 0.0
        %6299 = vmatprep.subr.mxu0 0.0
        %6300 = vmatpush2.xpose.msra.mxu0 0.0
        %6301 = vmatprep.mubr.f32.mxu0 0.0
        %6302 = vmatmul.mubr.f32.gmra.mxu0 %v6235
        %v6303 = vpop.f32.mrf.mxu0
        %v6304 = vadd.f32 0.0, %v6303
        %v6305 = vpop.f32.mrf.mxu0
        %6306 = vdwg.mxu0
        %v6307 = vsel %vm536, %v6304, -inf
        %6308 = vmax.xlane.f32.xlu0 %v6307
        %v6309 = vpop.xlane.xlu0 %6308
        %v6310 = vsub.f32 %v6304, %v6309
        %v6311 = vmul.f32 %v6310, 1.442695
        %v6312 = vpow.pop %v6311
        %v6313 = vsel %vm536, %v6312, 0.0
        %6314 = vadd.xlane.f32.xlu0 %v6313
        %v6315 = vpop.xlane.xlu0 %6314
        %v6316 = vrcp.pop %v6315
        %v6317 = vmul.f32 %v6312, %v6316
        %v6319 = vsel %vm536, %v6317, 0
        %6321 = vmatprep.subr.mxu0 0.0
        %6322 = vmatpush1.msra.mxu0 0.0
        %6323 = vmatprep.subr.mxu0 0.0
        %6324 = vmatpush1.msra.mxu0 0.0
        %6325 = vmatprep.subr.mxu0 0.0
        %6326 = vmatpush1.msra.mxu0 0.0
        %6327 = vmatprep.subr.mxu0 0.0
        %6328 = vmatpush1.msra.mxu0 0.0
        %6329 = vmatprep.subr.mxu0 0.0
        %6330 = vmatpush1.msra.mxu0 0.0
        %6331 = vmatprep.subr.mxu0 0.0
        %6332 = vmatpush1.msra.mxu0 0.0
        %6333 = vmatprep.subr.mxu0 0.0
        %6334 = vmatpush1.msra.mxu0 0.0
        %6335 = vmatprep.subr.mxu0 0.0
        %6336 = vmatpush1.msra.mxu0 0.0
        %6337 = vmatprep.subr.mxu0 0.0
        %6338 = vmatpush1.msra.mxu0 0.0
        %6339 = vmatprep.subr.mxu0 0.0
        %6340 = vmatpush1.msra.mxu0 0.0
        %6341 = vmatprep.subr.mxu0 0.0
        %6342 = vmatpush1.msra.mxu0 0.0
        %6343 = vmatprep.subr.mxu0 0.0
        %6344 = vmatpush1.msra.mxu0 0.0
        %6345 = vmatprep.subr.mxu0 0.0
        %6346 = vmatpush1.msra.mxu0 0.0
        %6347 = vmatprep.subr.mxu0 0.0
        %6348 = vmatpush1.msra.mxu0 0.0
        %6349 = vmatprep.subr.mxu0 0.0
        %6350 = vmatpush1.msra.mxu0 0.0
        %6351 = vmatprep.subr.mxu0 0.0
        %6352 = vmatpush1.msra.mxu0 %v2474
        %6353 = vmatprep.subr.mxu0 0.0
        %6354 = vmatpush2.msra.mxu0 0.0
        %6355 = vmatprep.subr.mxu0 0.0
        %6356 = vmatpush2.msra.mxu0 0.0
        %6357 = vmatprep.subr.mxu0 0.0
        %6358 = vmatpush2.msra.mxu0 0.0
        %6359 = vmatprep.subr.mxu0 0.0
        %6360 = vmatpush2.msra.mxu0 0.0
        %6361 = vmatprep.subr.mxu0 0.0
        %6362 = vmatpush2.msra.mxu0 0.0
        %6363 = vmatprep.subr.mxu0 0.0
        %6364 = vmatpush2.msra.mxu0 0.0
        %6365 = vmatprep.subr.mxu0 0.0
        %6366 = vmatpush2.msra.mxu0 0.0
        %6367 = vmatprep.subr.mxu0 0.0
        %6368 = vmatpush2.msra.mxu0 0.0
        %6369 = vmatprep.subr.mxu0 0.0
        %6370 = vmatpush2.msra.mxu0 0.0
        %6371 = vmatprep.subr.mxu0 0.0
        %6372 = vmatpush2.msra.mxu0 0.0
        %6373 = vmatprep.subr.mxu0 0.0
        %6374 = vmatpush2.msra.mxu0 0.0
        %6375 = vmatprep.subr.mxu0 0.0
        %6376 = vmatpush2.msra.mxu0 0.0
        %6377 = vmatprep.subr.mxu0 0.0
        %6378 = vmatpush2.msra.mxu0 0.0
        %6379 = vmatprep.subr.mxu0 0.0
        %6380 = vmatpush2.msra.mxu0 0.0
        %6381 = vmatprep.subr.mxu0 0.0
        %6382 = vmatpush2.msra.mxu0 0.0
        %6383 = vmatprep.subr.mxu0 0.0
        %6384 = vmatpush2.msra.mxu0 0.0
        %6385 = vmatprep.mubr.f32.mxu0 0.0
        %6386 = vmatmul.mubr.f32.gmra.mxu0 %v6319
        %v6387 = vpop.f32.mrf.mxu0
        %v6388 = vadd.f32 0.0, %v6387
        %v6389 = vpop.f32.mrf.mxu0
        %6390 = vdwg.mxu0
        %6391 = vmatprep.subr.mxu0 0.0
        %6392 = vmatpush1.msra.mxu0 0.0
        %6393 = vmatprep.subr.mxu0 0.0
        %6394 = vmatpush1.msra.mxu0 0.0
        %6395 = vmatprep.subr.mxu0 0.0
        %6396 = vmatpush1.msra.mxu0 0.0
        %6397 = vmatprep.subr.mxu0 0.0
        %6398 = vmatpush1.msra.mxu0 0.0
        %6399 = vmatprep.subr.mxu0 0.0
        %6400 = vmatpush1.msra.mxu0 0.0
        %6401 = vmatprep.subr.mxu0 0.0
        %6402 = vmatpush1.msra.mxu0 0.0
        %6403 = vmatprep.subr.mxu0 0.0
        %6404 = vmatpush1.msra.mxu0 0.0
        %6405 = vmatprep.subr.mxu0 0.0
        %6406 = vmatpush1.msra.mxu0 0.0
        %6407 = vmatprep.subr.mxu0 0.0
        %6408 = vmatpush1.msra.mxu0 0.0
        %6409 = vmatprep.subr.mxu0 0.0
        %6410 = vmatpush1.msra.mxu0 0.0
        %6411 = vmatprep.subr.mxu0 0.0
        %6412 = vmatpush1.msra.mxu0 0.0
        %6413 = vmatprep.subr.mxu0 0.0
        %6414 = vmatpush1.msra.mxu0 0.0
        %6415 = vmatprep.subr.mxu0 0.0
        %6416 = vmatpush1.msra.mxu0 %v2643
        %6417 = vmatprep.subr.mxu0 0.0
        %6418 = vmatpush1.msra.mxu0 %v2642
        %6419 = vmatprep.subr.mxu0 0.0
        %6420 = vmatpush1.msra.mxu0 %v2641
        %6421 = vmatprep.subr.mxu0 0.0
        %6422 = vmatpush1.msra.mxu0 %v2640
        %6423 = vmatprep.subr.mxu0 0.0
        %6424 = vmatpush2.msra.mxu0 0.0
        %6425 = vmatprep.subr.mxu0 0.0
        %6426 = vmatpush2.msra.mxu0 0.0
        %6427 = vmatprep.subr.mxu0 0.0
        %6428 = vmatpush2.msra.mxu0 0.0
        %6429 = vmatprep.subr.mxu0 0.0
        %6430 = vmatpush2.msra.mxu0 0.0
        %6431 = vmatprep.subr.mxu0 0.0
        %6432 = vmatpush2.msra.mxu0 0.0
        %6433 = vmatprep.subr.mxu0 0.0
        %6434 = vmatpush2.msra.mxu0 0.0
        %6435 = vmatprep.subr.mxu0 0.0
        %6436 = vmatpush2.msra.mxu0 0.0
        %6437 = vmatprep.subr.mxu0 0.0
        %6438 = vmatpush2.msra.mxu0 0.0
        %6439 = vmatprep.subr.mxu0 0.0
        %6440 = vmatpush2.msra.mxu0 0.0
        %6441 = vmatprep.subr.mxu0 0.0
        %6442 = vmatpush2.msra.mxu0 0.0
        %6443 = vmatprep.subr.mxu0 0.0
        %6444 = vmatpush2.msra.mxu0 0.0
        %6445 = vmatprep.subr.mxu0 0.0
        %6446 = vmatpush2.msra.mxu0 0.0
        %6447 = vmatprep.subr.mxu0 0.0
        %6448 = vmatpush2.msra.mxu0 0.0
        %6449 = vmatprep.subr.mxu0 0.0
        %6450 = vmatpush2.msra.mxu0 0.0
        %6451 = vmatprep.subr.mxu0 0.0
        %6452 = vmatpush2.msra.mxu0 0.0
        %6453 = vmatprep.subr.mxu0 0.0
        %6454 = vmatpush2.msra.mxu0 0.0
        %6455 = vmatprep.mubr.f32.mxu0 0.0
        %6456 = vmatmul.mubr.f32.gmra.mxu0 %v6162
        %v6457 = vpop.f32.mrf.mxu0
        %v6458 = vadd.f32 %v2648, %v6457
        %v6459 = vpop.f32.mrf.mxu0
        %6460 = vdwg.mxu0
        %v6462 = vsel %vm536, %v6458, 0
        %6464 = vmatprep.subr.mxu0 0.0
        %6465 = vmatpush1.xpose.msra.mxu0 0.0
        %6466 = vmatprep.subr.mxu0 0.0
        %6467 = vmatpush1.xpose.msra.mxu0 0.0
        %6468 = vmatprep.subr.mxu0 0.0
        %6469 = vmatpush1.xpose.msra.mxu0 0.0
        %6470 = vmatprep.subr.mxu0 0.0
        %6471 = vmatpush1.xpose.msra.mxu0 0.0
        %6472 = vmatprep.subr.mxu0 0.0
        %6473 = vmatpush1.xpose.msra.mxu0 0.0
        %6474 = vmatprep.subr.mxu0 0.0
        %6475 = vmatpush1.xpose.msra.mxu0 0.0
        %6476 = vmatprep.subr.mxu0 0.0
        %6477 = vmatpush1.xpose.msra.mxu0 0.0
        %6478 = vmatprep.subr.mxu0 0.0
        %6479 = vmatpush1.xpose.msra.mxu0 0.0
        %6480 = vmatprep.subr.mxu0 0.0
        %6481 = vmatpush1.xpose.msra.mxu0 0.0
        %6482 = vmatprep.subr.mxu0 0.0
        %6483 = vmatpush1.xpose.msra.mxu0 0.0
        %6484 = vmatprep.subr.mxu0 0.0
        %6485 = vmatpush1.xpose.msra.mxu0 0.0
        %6486 = vmatprep.subr.mxu0 0.0
        %6487 = vmatpush1.xpose.msra.mxu0 0.0
        %6488 = vmatprep.subr.mxu0 0.0
        %6489 = vmatpush1.xpose.msra.mxu0 0.0
        %6490 = vmatprep.subr.mxu0 0.0
        %6491 = vmatpush1.xpose.msra.mxu0 0.0
        %6492 = vmatprep.subr.mxu0 0.0
        %6493 = vmatpush1.xpose.msra.mxu0 0.0
        %6494 = vmatprep.subr.mxu0 0.0
        %6495 = vmatpush1.xpose.msra.mxu0 %v2883
        %6496 = vmatprep.subr.mxu0 0.0
        %6497 = vmatpush2.xpose.msra.mxu0 0.0
        %6498 = vmatprep.subr.mxu0 0.0
        %6499 = vmatpush2.xpose.msra.mxu0 0.0
        %6500 = vmatprep.subr.mxu0 0.0
        %6501 = vmatpush2.xpose.msra.mxu0 0.0
        %6502 = vmatprep.subr.mxu0 0.0
        %6503 = vmatpush2.xpose.msra.mxu0 0.0
        %6504 = vmatprep.subr.mxu0 0.0
        %6505 = vmatpush2.xpose.msra.mxu0 0.0
        %6506 = vmatprep.subr.mxu0 0.0
        %6507 = vmatpush2.xpose.msra.mxu0 0.0
        %6508 = vmatprep.subr.mxu0 0.0
        %6509 = vmatpush2.xpose.msra.mxu0 0.0
        %6510 = vmatprep.subr.mxu0 0.0
        %6511 = vmatpush2.xpose.msra.mxu0 0.0
        %6512 = vmatprep.subr.mxu0 0.0
        %6513 = vmatpush2.xpose.msra.mxu0 0.0
        %6514 = vmatprep.subr.mxu0 0.0
        %6515 = vmatpush2.xpose.msra.mxu0 0.0
        %6516 = vmatprep.subr.mxu0 0.0
        %6517 = vmatpush2.xpose.msra.mxu0 0.0
        %6518 = vmatprep.subr.mxu0 0.0
        %6519 = vmatpush2.xpose.msra.mxu0 0.0
        %6520 = vmatprep.subr.mxu0 0.0
        %6521 = vmatpush2.xpose.msra.mxu0 0.0
        %6522 = vmatprep.subr.mxu0 0.0
        %6523 = vmatpush2.xpose.msra.mxu0 0.0
        %6524 = vmatprep.subr.mxu0 0.0
        %6525 = vmatpush2.xpose.msra.mxu0 0.0
        %6526 = vmatprep.subr.mxu0 0.0
        %6527 = vmatpush2.xpose.msra.mxu0 0.0
        %6528 = vmatprep.mubr.f32.mxu0 0.0
        %6529 = vmatmul.mubr.f32.gmra.mxu0 %v6462
        %v6530 = vpop.f32.mrf.mxu0
        %v6531 = vadd.f32 0.0, %v6530
        %v6532 = vpop.f32.mrf.mxu0
        %6533 = vdwg.mxu0
        %v6534 = vsel %vm536, %v6531, -inf
        %6535 = vmax.xlane.f32.xlu0 %v6534
        %v6536 = vpop.xlane.xlu0 %6535
        %v6537 = vsub.f32 %v6531, %v6536
        %v6538 = vmul.f32 %v6537, 1.442695
        %v6539 = vpow.pop %v6538
        %v6540 = vsel %vm536, %v6539, 0.0
        %6541 = vadd.xlane.f32.xlu0 %v6540
        %v6542 = vpop.xlane.xlu0 %6541
        %v6543 = vrcp.pop %v6542
        %v6544 = vmul.f32 %v6539, %v6543
        %v6546 = vsel %vm536, %v6544, 0
        %6548 = vmatprep.subr.mxu0 0.0
        %6549 = vmatpush1.msra.mxu0 0.0
        %6550 = vmatprep.subr.mxu0 0.0
        %6551 = vmatpush1.msra.mxu0 0.0
        %6552 = vmatprep.subr.mxu0 0.0
        %6553 = vmatpush1.msra.mxu0 0.0
        %6554 = vmatprep.subr.mxu0 0.0
        %6555 = vmatpush1.msra.mxu0 0.0
        %6556 = vmatprep.subr.mxu0 0.0
        %6557 = vmatpush1.msra.mxu0 0.0
        %6558 = vmatprep.subr.mxu0 0.0
        %6559 = vmatpush1.msra.mxu0 0.0
        %6560 = vmatprep.subr.mxu0 0.0
        %6561 = vmatpush1.msra.mxu0 0.0
        %6562 = vmatprep.subr.mxu0 0.0
        %6563 = vmatpush1.msra.mxu0 0.0
        %6564 = vmatprep.subr.mxu0 0.0
        %6565 = vmatpush1.msra.mxu0 0.0
        %6566 = vmatprep.subr.mxu0 0.0
        %6567 = vmatpush1.msra.mxu0 0.0
        %6568 = vmatprep.subr.mxu0 0.0
        %6569 = vmatpush1.msra.mxu0 0.0
        %6570 = vmatprep.subr.mxu0 0.0
        %6571 = vmatpush1.msra.mxu0 0.0
        %6572 = vmatprep.subr.mxu0 0.0
        %6573 = vmatpush1.msra.mxu0 0.0
        %6574 = vmatprep.subr.mxu0 0.0
        %6575 = vmatpush1.msra.mxu0 0.0
        %6576 = vmatprep.subr.mxu0 0.0
        %6577 = vmatpush1.msra.mxu0 0.0
        %6578 = vmatprep.subr.mxu0 0.0
        %6579 = vmatpush1.msra.mxu0 %v2876
        %6580 = vmatprep.subr.mxu0 0.0
        %6581 = vmatpush2.msra.mxu0 0.0
        %6582 = vmatprep.subr.mxu0 0.0
        %6583 = vmatpush2.msra.mxu0 0.0
        %6584 = vmatprep.subr.mxu0 0.0
        %6585 = vmatpush2.msra.mxu0 0.0
        %6586 = vmatprep.subr.mxu0 0.0
        %6587 = vmatpush2.msra.mxu0 0.0
        %6588 = vmatprep.subr.mxu0 0.0
        %6589 = vmatpush2.msra.mxu0 0.0
        %6590 = vmatprep.subr.mxu0 0.0
        %6591 = vmatpush2.msra.mxu0 0.0
        %6592 = vmatprep.subr.mxu0 0.0
        %6593 = vmatpush2.msra.mxu0 0.0
        %6594 = vmatprep.subr.mxu0 0.0
        %6595 = vmatpush2.msra.mxu0 0.0
        %6596 = vmatprep.subr.mxu0 0.0
        %6597 = vmatpush2.msra.mxu0 0.0
        %6598 = vmatprep.subr.mxu0 0.0
        %6599 = vmatpush2.msra.mxu0 0.0
        %6600 = vmatprep.subr.mxu0 0.0
        %6601 = vmatpush2.msra.mxu0 0.0
        %6602 = vmatprep.subr.mxu0 0.0
        %6603 = vmatpush2.msra.mxu0 0.0
        %6604 = vmatprep.subr.mxu0 0.0
        %6605 = vmatpush2.msra.mxu0 0.0
        %6606 = vmatprep.subr.mxu0 0.0
        %6607 = vmatpush2.msra.mxu0 0.0
        %6608 = vmatprep.subr.mxu0 0.0
        %6609 = vmatpush2.msra.mxu0 0.0
        %6610 = vmatprep.subr.mxu0 0.0
        %6611 = vmatpush2.msra.mxu0 0.0
        %6612 = vmatprep.mubr.f32.mxu0 0.0
        %6613 = vmatmul.mubr.f32.gmra.mxu0 %v6546
        %v6614 = vpop.f32.mrf.mxu0
        %v6615 = vadd.f32 0.0, %v6614
        %v6616 = vpop.f32.mrf.mxu0
        %6617 = vdwg.mxu0
        %v6619 = vsel %vm536, %v6615, 0
        %6621 = vmatprep.subr.mxu0 0.0
        %6622 = vmatpush1.msra.mxu0 0.0
        %6623 = vmatprep.subr.mxu0 0.0
        %6624 = vmatpush1.msra.mxu0 0.0
        %6625 = vmatprep.subr.mxu0 0.0
        %6626 = vmatpush1.msra.mxu0 0.0
        %6627 = vmatprep.subr.mxu0 0.0
        %6628 = vmatpush1.msra.mxu0 0.0
        %6629 = vmatprep.subr.mxu0 0.0
        %6630 = vmatpush1.msra.mxu0 0.0
        %6631 = vmatprep.subr.mxu0 0.0
        %6632 = vmatpush1.msra.mxu0 0.0
        %6633 = vmatprep.subr.mxu0 0.0
        %6634 = vmatpush1.msra.mxu0 0.0
        %6635 = vmatprep.subr.mxu0 0.0
        %6636 = vmatpush1.msra.mxu0 0.0
        %6637 = vmatprep.subr.mxu0 0.0
        %6638 = vmatpush1.msra.mxu0 0.0
        %6639 = vmatprep.subr.mxu0 0.0
        %6640 = vmatpush1.msra.mxu0 0.0
        %6641 = vmatprep.subr.mxu0 0.0
        %6642 = vmatpush1.msra.mxu0 0.0
        %6643 = vmatprep.subr.mxu0 0.0
        %6644 = vmatpush1.msra.mxu0 0.0
        %6645 = vmatprep.subr.mxu0 0.0
        %6646 = vmatpush1.msra.mxu0 0.0
        %6647 = vmatprep.subr.mxu0 0.0
        %6648 = vmatpush1.msra.mxu0 0.0
        %6649 = vmatprep.subr.mxu0 0.0
        %6650 = vmatpush1.msra.mxu0 0.0
        %6651 = vmatprep.subr.mxu0 0.0
        %6652 = vmatpush1.msra.mxu0 %v3040
        %6653 = vmatprep.subr.mxu0 0.0
        %6654 = vmatpush2.msra.mxu0 0.0
        %6655 = vmatprep.subr.mxu0 0.0
        %6656 = vmatpush2.msra.mxu0 0.0
        %6657 = vmatprep.subr.mxu0 0.0
        %6658 = vmatpush2.msra.mxu0 0.0
        %6659 = vmatprep.subr.mxu0 0.0
        %6660 = vmatpush2.msra.mxu0 0.0
        %6661 = vmatprep.subr.mxu0 0.0
        %6662 = vmatpush2.msra.mxu0 0.0
        %6663 = vmatprep.subr.mxu0 0.0
        %6664 = vmatpush2.msra.mxu0 0.0
        %6665 = vmatprep.subr.mxu0 0.0
        %6666 = vmatpush2.msra.mxu0 0.0
        %6667 = vmatprep.subr.mxu0 0.0
        %6668 = vmatpush2.msra.mxu0 0.0
        %6669 = vmatprep.subr.mxu0 0.0
        %6670 = vmatpush2.msra.mxu0 0.0
        %6671 = vmatprep.subr.mxu0 0.0
        %6672 = vmatpush2.msra.mxu0 0.0
        %6673 = vmatprep.subr.mxu0 0.0
        %6674 = vmatpush2.msra.mxu0 0.0
        %6675 = vmatprep.subr.mxu0 0.0
        %6676 = vmatpush2.msra.mxu0 0.0
        %6677 = vmatprep.subr.mxu0 0.0
        %6678 = vmatpush2.msra.mxu0 0.0
        %6679 = vmatprep.subr.mxu0 0.0
        %6680 = vmatpush2.msra.mxu0 0.0
        %6681 = vmatprep.subr.mxu0 0.0
        %6682 = vmatpush2.msra.mxu0 0.0
        %6683 = vmatprep.subr.mxu0 0.0
        %6684 = vmatpush2.msra.mxu0 0.0
        %6685 = vmatprep.mubr.f32.mxu0 0.0
        %6686 = vmatmul.mubr.f32.gmra.mxu0 %v6619
        %v6687 = vpop.f32.mrf.mxu0
        %v6688 = vadd.f32 0.0, %v6687
        %v6689 = vpop.f32.mrf.mxu0
        %6690 = vdwg.mxu0
        %v6692 = vsel %vm536, %v6388, 0
        %6694 = vmatprep.subr.mxu0 0.0
        %6695 = vmatpush1.msra.mxu0 0.0
        %6696 = vmatprep.subr.mxu0 0.0
        %6697 = vmatpush1.msra.mxu0 0.0
        %6698 = vmatprep.subr.mxu0 0.0
        %6699 = vmatpush1.msra.mxu0 0.0
        %6700 = vmatprep.subr.mxu0 0.0
        %6701 = vmatpush1.msra.mxu0 0.0
        %6702 = vmatprep.subr.mxu0 0.0
        %6703 = vmatpush1.msra.mxu0 0.0
        %6704 = vmatprep.subr.mxu0 0.0
        %6705 = vmatpush1.msra.mxu0 0.0
        %6706 = vmatprep.subr.mxu0 0.0
        %6707 = vmatpush1.msra.mxu0 0.0
        %6708 = vmatprep.subr.mxu0 0.0
        %6709 = vmatpush1.msra.mxu0 0.0
        %6710 = vmatprep.subr.mxu0 0.0
        %6711 = vmatpush1.msra.mxu0 0.0
        %6712 = vmatprep.subr.mxu0 0.0
        %6713 = vmatpush1.msra.mxu0 0.0
        %6714 = vmatprep.subr.mxu0 0.0
        %6715 = vmatpush1.msra.mxu0 0.0
        %6716 = vmatprep.subr.mxu0 0.0
        %6717 = vmatpush1.msra.mxu0 0.0
        %6718 = vmatprep.subr.mxu0 0.0
        %6719 = vmatpush1.msra.mxu0 0.0
        %6720 = vmatprep.subr.mxu0 0.0
        %6721 = vmatpush1.msra.mxu0 0.0
        %6722 = vmatprep.subr.mxu0 0.0
        %6723 = vmatpush1.msra.mxu0 0.0
        %6724 = vmatprep.subr.mxu0 0.0
        %6725 = vmatpush1.msra.mxu0 %v2638
        %6726 = vmatprep.subr.mxu0 0.0
        %6727 = vmatpush2.msra.mxu0 0.0
        %6728 = vmatprep.subr.mxu0 0.0
        %6729 = vmatpush2.msra.mxu0 0.0
        %6730 = vmatprep.subr.mxu0 0.0
        %6731 = vmatpush2.msra.mxu0 0.0
        %6732 = vmatprep.subr.mxu0 0.0
        %6733 = vmatpush2.msra.mxu0 0.0
        %6734 = vmatprep.subr.mxu0 0.0
        %6735 = vmatpush2.msra.mxu0 0.0
        %6736 = vmatprep.subr.mxu0 0.0
        %6737 = vmatpush2.msra.mxu0 0.0
        %6738 = vmatprep.subr.mxu0 0.0
        %6739 = vmatpush2.msra.mxu0 0.0
        %6740 = vmatprep.subr.mxu0 0.0
        %6741 = vmatpush2.msra.mxu0 0.0
        %6742 = vmatprep.subr.mxu0 0.0
        %6743 = vmatpush2.msra.mxu0 0.0
        %6744 = vmatprep.subr.mxu0 0.0
        %6745 = vmatpush2.msra.mxu0 0.0
        %6746 = vmatprep.subr.mxu0 0.0
        %6747 = vmatpush2.msra.mxu0 0.0
        %6748 = vmatprep.subr.mxu0 0.0
        %6749 = vmatpush2.msra.mxu0 0.0
        %6750 = vmatprep.subr.mxu0 0.0
        %6751 = vmatpush2.msra.mxu0 0.0
        %6752 = vmatprep.subr.mxu0 0.0
        %6753 = vmatpush2.msra.mxu0 0.0
        %6754 = vmatprep.subr.mxu0 0.0
        %6755 = vmatpush2.msra.mxu0 0.0
        %6756 = vmatprep.subr.mxu0 0.0
        %6757 = vmatpush2.msra.mxu0 0.0
        %6758 = vmatprep.mubr.f32.mxu0 0.0
        %6759 = vmatmul.mubr.f32.gmra.mxu0 %v6692
        %v6760 = vpop.f32.mrf.mxu0
        %v6761 = vadd.f32 %v6688, %v6760
        %v6762 = vpop.f32.mrf.mxu0
        %6763 = vdwg.mxu0
        %6764 = vmatprep.subr.mxu0 0.0
        %6765 = vmatpush1.msra.mxu0 0.0
        %6766 = vmatprep.subr.mxu0 0.0
        %6767 = vmatpush1.msra.mxu0 0.0
        %6768 = vmatprep.subr.mxu0 0.0
        %6769 = vmatpush1.msra.mxu0 0.0
        %6770 = vmatprep.subr.mxu0 0.0
        %6771 = vmatpush1.msra.mxu0 0.0
        %6772 = vmatprep.subr.mxu0 0.0
        %6773 = vmatpush1.msra.mxu0 0.0
        %6774 = vmatprep.subr.mxu0 0.0
        %6775 = vmatpush1.msra.mxu0 0.0
        %6776 = vmatprep.subr.mxu0 0.0
        %6777 = vmatpush1.msra.mxu0 0.0
        %6778 = vmatprep.subr.mxu0 0.0
        %6779 = vmatpush1.msra.mxu0 0.0
        %6780 = vmatprep.subr.mxu0 0.0
        %6781 = vmatpush1.msra.mxu0 0.0
        %6782 = vmatprep.subr.mxu0 0.0
        %6783 = vmatpush1.msra.mxu0 0.0
        %6784 = vmatprep.subr.mxu0 0.0
        %6785 = vmatpush1.msra.mxu0 0.0
        %6786 = vmatprep.subr.mxu0 0.0
        %6787 = vmatpush1.msra.mxu0 0.0
        %6788 = vmatprep.subr.mxu0 0.0
        %6789 = vmatpush1.msra.mxu0 %v3191
        %6790 = vmatprep.subr.mxu0 0.0
        %6791 = vmatpush1.msra.mxu0 %v3190
        %6792 = vmatprep.subr.mxu0 0.0
        %6793 = vmatpush1.msra.mxu0 %v3189
        %6794 = vmatprep.subr.mxu0 0.0
        %6795 = vmatpush1.msra.mxu0 %v3188
        %6796 = vmatprep.subr.mxu0 0.0
        %6797 = vmatpush2.msra.mxu0 0.0
        %6798 = vmatprep.subr.mxu0 0.0
        %6799 = vmatpush2.msra.mxu0 0.0
        %6800 = vmatprep.subr.mxu0 0.0
        %6801 = vmatpush2.msra.mxu0 0.0
        %6802 = vmatprep.subr.mxu0 0.0
        %6803 = vmatpush2.msra.mxu0 0.0
        %6804 = vmatprep.subr.mxu0 0.0
        %6805 = vmatpush2.msra.mxu0 0.0
        %6806 = vmatprep.subr.mxu0 0.0
        %6807 = vmatpush2.msra.mxu0 0.0
        %6808 = vmatprep.subr.mxu0 0.0
        %6809 = vmatpush2.msra.mxu0 0.0
        %6810 = vmatprep.subr.mxu0 0.0
        %6811 = vmatpush2.msra.mxu0 0.0
        %6812 = vmatprep.subr.mxu0 0.0
        %6813 = vmatpush2.msra.mxu0 0.0
        %6814 = vmatprep.subr.mxu0 0.0
        %6815 = vmatpush2.msra.mxu0 0.0
        %6816 = vmatprep.subr.mxu0 0.0
        %6817 = vmatpush2.msra.mxu0 0.0
        %6818 = vmatprep.subr.mxu0 0.0
        %6819 = vmatpush2.msra.mxu0 0.0
        %6820 = vmatprep.subr.mxu0 0.0
        %6821 = vmatpush2.msra.mxu0 0.0
        %6822 = vmatprep.subr.mxu0 0.0
        %6823 = vmatpush2.msra.mxu0 0.0
        %6824 = vmatprep.subr.mxu0 0.0
        %6825 = vmatpush2.msra.mxu0 0.0
        %6826 = vmatprep.subr.mxu0 0.0
        %6827 = vmatpush2.msra.mxu0 0.0
        %6828 = vmatprep.mubr.f32.mxu0 0.0
        %6829 = vmatmul.mubr.f32.gmra.mxu0 %v6162
        %v6830 = vpop.f32.mrf.mxu0
        %v6831 = vadd.f32 %v3196, %v6830
        %v6832 = vpop.f32.mrf.mxu0
        %6833 = vdwg.mxu0
        %v6835 = vsel %vm536, %v6831, 0
        %6837 = vmatprep.subr.mxu0 0.0
        %6838 = vmatpush1.xpose.msra.mxu0 0.0
        %6839 = vmatprep.subr.mxu0 0.0
        %6840 = vmatpush1.xpose.msra.mxu0 0.0
        %6841 = vmatprep.subr.mxu0 0.0
        %6842 = vmatpush1.xpose.msra.mxu0 0.0
        %6843 = vmatprep.subr.mxu0 0.0
        %6844 = vmatpush1.xpose.msra.mxu0 0.0
        %6845 = vmatprep.subr.mxu0 0.0
        %6846 = vmatpush1.xpose.msra.mxu0 0.0
        %6847 = vmatprep.subr.mxu0 0.0
        %6848 = vmatpush1.xpose.msra.mxu0 0.0
        %6849 = vmatprep.subr.mxu0 0.0
        %6850 = vmatpush1.xpose.msra.mxu0 0.0
        %6851 = vmatprep.subr.mxu0 0.0
        %6852 = vmatpush1.xpose.msra.mxu0 0.0
        %6853 = vmatprep.subr.mxu0 0.0
        %6854 = vmatpush1.xpose.msra.mxu0 0.0
        %6855 = vmatprep.subr.mxu0 0.0
        %6856 = vmatpush1.xpose.msra.mxu0 0.0
        %6857 = vmatprep.subr.mxu0 0.0
        %6858 = vmatpush1.xpose.msra.mxu0 0.0
        %6859 = vmatprep.subr.mxu0 0.0
        %6860 = vmatpush1.xpose.msra.mxu0 0.0
        %6861 = vmatprep.subr.mxu0 0.0
        %6862 = vmatpush1.xpose.msra.mxu0 0.0
        %6863 = vmatprep.subr.mxu0 0.0
        %6864 = vmatpush1.xpose.msra.mxu0 0.0
        %6865 = vmatprep.subr.mxu0 0.0
        %6866 = vmatpush1.xpose.msra.mxu0 0.0
        %6867 = vmatprep.subr.mxu0 0.0
        %6868 = vmatpush1.xpose.msra.mxu0 %v3431
        %6869 = vmatprep.subr.mxu0 0.0
        %6870 = vmatpush2.xpose.msra.mxu0 0.0
        %6871 = vmatprep.subr.mxu0 0.0
        %6872 = vmatpush2.xpose.msra.mxu0 0.0
        %6873 = vmatprep.subr.mxu0 0.0
        %6874 = vmatpush2.xpose.msra.mxu0 0.0
        %6875 = vmatprep.subr.mxu0 0.0
        %6876 = vmatpush2.xpose.msra.mxu0 0.0
        %6877 = vmatprep.subr.mxu0 0.0
        %6878 = vmatpush2.xpose.msra.mxu0 0.0
        %6879 = vmatprep.subr.mxu0 0.0
        %6880 = vmatpush2.xpose.msra.mxu0 0.0
        %6881 = vmatprep.subr.mxu0 0.0
        %6882 = vmatpush2.xpose.msra.mxu0 0.0
        %6883 = vmatprep.subr.mxu0 0.0
        %6884 = vmatpush2.xpose.msra.mxu0 0.0
        %6885 = vmatprep.subr.mxu0 0.0
        %6886 = vmatpush2.xpose.msra.mxu0 0.0
        %6887 = vmatprep.subr.mxu0 0.0
        %6888 = vmatpush2.xpose.msra.mxu0 0.0
        %6889 = vmatprep.subr.mxu0 0.0
        %6890 = vmatpush2.xpose.msra.mxu0 0.0
        %6891 = vmatprep.subr.mxu0 0.0
        %6892 = vmatpush2.xpose.msra.mxu0 0.0
        %6893 = vmatprep.subr.mxu0 0.0
        %6894 = vmatpush2.xpose.msra.mxu0 0.0
        %6895 = vmatprep.subr.mxu0 0.0
        %6896 = vmatpush2.xpose.msra.mxu0 0.0
        %6897 = vmatprep.subr.mxu0 0.0
        %6898 = vmatpush2.xpose.msra.mxu0 0.0
        %6899 = vmatprep.subr.mxu0 0.0
        %6900 = vmatpush2.xpose.msra.mxu0 0.0
        %6901 = vmatprep.mubr.f32.mxu0 0.0
        %6902 = vmatmul.mubr.f32.gmra.mxu0 %v6835
        %v6903 = vpop.f32.mrf.mxu0
        %v6904 = vadd.f32 0.0, %v6903
        %v6905 = vpop.f32.mrf.mxu0
        %6906 = vdwg.mxu0
        %v6907 = vsel %vm536, %v6904, -inf
        %6908 = vmax.xlane.f32.xlu0 %v6907
        %v6909 = vpop.xlane.xlu0 %6908
        %v6910 = vsub.f32 %v6904, %v6909
        %v6911 = vmul.f32 %v6910, 1.442695
        %v6912 = vpow.pop %v6911
        %v6913 = vsel %vm536, %v6912, 0.0
        %6914 = vadd.xlane.f32.xlu0 %v6913
        %v6915 = vpop.xlane.xlu0 %6914
        %v6916 = vrcp.pop %v6915
        %v6917 = vmul.f32 %v6912, %v6916
        %v6919 = vsel %vm536, %v6917, 0
        %6921 = vmatprep.subr.mxu0 0.0
        %6922 = vmatpush1.msra.mxu0 0.0
        %6923 = vmatprep.subr.mxu0 0.0
        %6924 = vmatpush1.msra.mxu0 0.0
        %6925 = vmatprep.subr.mxu0 0.0
        %6926 = vmatpush1.msra.mxu0 0.0
        %6927 = vmatprep.subr.mxu0 0.0
        %6928 = vmatpush1.msra.mxu0 0.0
        %6929 = vmatprep.subr.mxu0 0.0
        %6930 = vmatpush1.msra.mxu0 0.0
        %6931 = vmatprep.subr.mxu0 0.0
        %6932 = vmatpush1.msra.mxu0 0.0
        %6933 = vmatprep.subr.mxu0 0.0
        %6934 = vmatpush1.msra.mxu0 0.0
        %6935 = vmatprep.subr.mxu0 0.0
        %6936 = vmatpush1.msra.mxu0 0.0
        %6937 = vmatprep.subr.mxu0 0.0
        %6938 = vmatpush1.msra.mxu0 0.0
        %6939 = vmatprep.subr.mxu0 0.0
        %6940 = vmatpush1.msra.mxu0 0.0
        %6941 = vmatprep.subr.mxu0 0.0
        %6942 = vmatpush1.msra.mxu0 0.0
        %6943 = vmatprep.subr.mxu0 0.0
        %6944 = vmatpush1.msra.mxu0 0.0
        %6945 = vmatprep.subr.mxu0 0.0
        %6946 = vmatpush1.msra.mxu0 0.0
        %6947 = vmatprep.subr.mxu0 0.0
        %6948 = vmatpush1.msra.mxu0 0.0
        %6949 = vmatprep.subr.mxu0 0.0
        %6950 = vmatpush1.msra.mxu0 0.0
        %6951 = vmatprep.subr.mxu0 0.0
        %6952 = vmatpush1.msra.mxu0 %v3424
        %6953 = vmatprep.subr.mxu0 0.0
        %6954 = vmatpush2.msra.mxu0 0.0
        %6955 = vmatprep.subr.mxu0 0.0
        %6956 = vmatpush2.msra.mxu0 0.0
        %6957 = vmatprep.subr.mxu0 0.0
        %6958 = vmatpush2.msra.mxu0 0.0
        %6959 = vmatprep.subr.mxu0 0.0
        %6960 = vmatpush2.msra.mxu0 0.0
        %6961 = vmatprep.subr.mxu0 0.0
        %6962 = vmatpush2.msra.mxu0 0.0
        %6963 = vmatprep.subr.mxu0 0.0
        %6964 = vmatpush2.msra.mxu0 0.0
        %6965 = vmatprep.subr.mxu0 0.0
        %6966 = vmatpush2.msra.mxu0 0.0
        %6967 = vmatprep.subr.mxu0 0.0
        %6968 = vmatpush2.msra.mxu0 0.0
        %6969 = vmatprep.subr.mxu0 0.0
        %6970 = vmatpush2.msra.mxu0 0.0
        %6971 = vmatprep.subr.mxu0 0.0
        %6972 = vmatpush2.msra.mxu0 0.0
        %6973 = vmatprep.subr.mxu0 0.0
        %6974 = vmatpush2.msra.mxu0 0.0
        %6975 = vmatprep.subr.mxu0 0.0
        %6976 = vmatpush2.msra.mxu0 0.0
        %6977 = vmatprep.subr.mxu0 0.0
        %6978 = vmatpush2.msra.mxu0 0.0
        %6979 = vmatprep.subr.mxu0 0.0
        %6980 = vmatpush2.msra.mxu0 0.0
        %6981 = vmatprep.subr.mxu0 0.0
        %6982 = vmatpush2.msra.mxu0 0.0
        %6983 = vmatprep.subr.mxu0 0.0
        %6984 = vmatpush2.msra.mxu0 0.0
        %6985 = vmatprep.mubr.f32.mxu0 0.0
        %6986 = vmatmul.mubr.f32.gmra.mxu0 %v6919
        %v6987 = vpop.f32.mrf.mxu0
        %v6988 = vadd.f32 0.0, %v6987
        %v6989 = vpop.f32.mrf.mxu0
        %6990 = vdwg.mxu0
        %v6992 = vsel %vm536, %v6988, 0
        %6994 = vmatprep.subr.mxu0 0.0
        %6995 = vmatpush1.msra.mxu0 0.0
        %6996 = vmatprep.subr.mxu0 0.0
        %6997 = vmatpush1.msra.mxu0 0.0
        %6998 = vmatprep.subr.mxu0 0.0
        %6999 = vmatpush1.msra.mxu0 0.0
        %7000 = vmatprep.subr.mxu0 0.0
        %7001 = vmatpush1.msra.mxu0 0.0
        %7002 = vmatprep.subr.mxu0 0.0
        %7003 = vmatpush1.msra.mxu0 0.0
        %7004 = vmatprep.subr.mxu0 0.0
        %7005 = vmatpush1.msra.mxu0 0.0
        %7006 = vmatprep.subr.mxu0 0.0
        %7007 = vmatpush1.msra.mxu0 0.0
        %7008 = vmatprep.subr.mxu0 0.0
        %7009 = vmatpush1.msra.mxu0 0.0
        %7010 = vmatprep.subr.mxu0 0.0
        %7011 = vmatpush1.msra.mxu0 0.0
        %7012 = vmatprep.subr.mxu0 0.0
        %7013 = vmatpush1.msra.mxu0 0.0
        %7014 = vmatprep.subr.mxu0 0.0
        %7015 = vmatpush1.msra.mxu0 0.0
        %7016 = vmatprep.subr.mxu0 0.0
        %7017 = vmatpush1.msra.mxu0 0.0
        %7018 = vmatprep.subr.mxu0 0.0
        %7019 = vmatpush1.msra.mxu0 0.0
        %7020 = vmatprep.subr.mxu0 0.0
        %7021 = vmatpush1.msra.mxu0 0.0
        %7022 = vmatprep.subr.mxu0 0.0
        %7023 = vmatpush1.msra.mxu0 0.0
        %7024 = vmatprep.subr.mxu0 0.0
        %7025 = vmatpush1.msra.mxu0 %v3588
        %7026 = vmatprep.subr.mxu0 0.0
        %7027 = vmatpush2.msra.mxu0 0.0
        %7028 = vmatprep.subr.mxu0 0.0
        %7029 = vmatpush2.msra.mxu0 0.0
        %7030 = vmatprep.subr.mxu0 0.0
        %7031 = vmatpush2.msra.mxu0 0.0
        %7032 = vmatprep.subr.mxu0 0.0
        %7033 = vmatpush2.msra.mxu0 0.0
        %7034 = vmatprep.subr.mxu0 0.0
        %7035 = vmatpush2.msra.mxu0 0.0
        %7036 = vmatprep.subr.mxu0 0.0
        %7037 = vmatpush2.msra.mxu0 0.0
        %7038 = vmatprep.subr.mxu0 0.0
        %7039 = vmatpush2.msra.mxu0 0.0
        %7040 = vmatprep.subr.mxu0 0.0
        %7041 = vmatpush2.msra.mxu0 0.0
        %7042 = vmatprep.subr.mxu0 0.0
        %7043 = vmatpush2.msra.mxu0 0.0
        %7044 = vmatprep.subr.mxu0 0.0
        %7045 = vmatpush2.msra.mxu0 0.0
        %7046 = vmatprep.subr.mxu0 0.0
        %7047 = vmatpush2.msra.mxu0 0.0
        %7048 = vmatprep.subr.mxu0 0.0
        %7049 = vmatpush2.msra.mxu0 0.0
        %7050 = vmatprep.subr.mxu0 0.0
        %7051 = vmatpush2.msra.mxu0 0.0
        %7052 = vmatprep.subr.mxu0 0.0
        %7053 = vmatpush2.msra.mxu0 0.0
        %7054 = vmatprep.subr.mxu0 0.0
        %7055 = vmatpush2.msra.mxu0 0.0
        %7056 = vmatprep.subr.mxu0 0.0
        %7057 = vmatpush2.msra.mxu0 0.0
        %7058 = vmatprep.mubr.f32.mxu0 0.0
        %7059 = vmatmul.mubr.f32.gmra.mxu0 %v6992
        %v7060 = vpop.f32.mrf.mxu0
        %v7061 = vadd.f32 0.0, %v7060
        %v7062 = vpop.f32.mrf.mxu0
        %7063 = vdwg.mxu0
        %v7064 = vadd.f32 %v6761, %v7061
        %7065 = vmatprep.subr.mxu0 0.0
        %7066 = vmatpush1.msra.mxu0 0.0
        %7067 = vmatprep.subr.mxu0 0.0
        %7068 = vmatpush1.msra.mxu0 0.0
        %7069 = vmatprep.subr.mxu0 0.0
        %7070 = vmatpush1.msra.mxu0 0.0
        %7071 = vmatprep.subr.mxu0 0.0
        %7072 = vmatpush1.msra.mxu0 0.0
        %7073 = vmatprep.subr.mxu0 0.0
        %7074 = vmatpush1.msra.mxu0 0.0
        %7075 = vmatprep.subr.mxu0 0.0
        %7076 = vmatpush1.msra.mxu0 0.0
        %7077 = vmatprep.subr.mxu0 0.0
        %7078 = vmatpush1.msra.mxu0 0.0
        %7079 = vmatprep.subr.mxu0 0.0
        %7080 = vmatpush1.msra.mxu0 0.0
        %7081 = vmatprep.subr.mxu0 0.0
        %7082 = vmatpush1.msra.mxu0 0.0
        %7083 = vmatprep.subr.mxu0 0.0
        %7084 = vmatpush1.msra.mxu0 0.0
        %7085 = vmatprep.subr.mxu0 0.0
        %7086 = vmatpush1.msra.mxu0 0.0
        %7087 = vmatprep.subr.mxu0 0.0
        %7088 = vmatpush1.msra.mxu0 0.0
        %7089 = vmatprep.subr.mxu0 0.0
        %7090 = vmatpush1.msra.mxu0 %v3667
        %7091 = vmatprep.subr.mxu0 0.0
        %7092 = vmatpush1.msra.mxu0 %v3666
        %7093 = vmatprep.subr.mxu0 0.0
        %7094 = vmatpush1.msra.mxu0 %v3665
        %7095 = vmatprep.subr.mxu0 0.0
        %7096 = vmatpush1.msra.mxu0 %v3664
        %7097 = vmatprep.subr.mxu0 0.0
        %7098 = vmatpush2.msra.mxu0 0.0
        %7099 = vmatprep.subr.mxu0 0.0
        %7100 = vmatpush2.msra.mxu0 0.0
        %7101 = vmatprep.subr.mxu0 0.0
        %7102 = vmatpush2.msra.mxu0 0.0
        %7103 = vmatprep.subr.mxu0 0.0
        %7104 = vmatpush2.msra.mxu0 0.0
        %7105 = vmatprep.subr.mxu0 0.0
        %7106 = vmatpush2.msra.mxu0 0.0
        %7107 = vmatprep.subr.mxu0 0.0
        %7108 = vmatpush2.msra.mxu0 0.0
        %7109 = vmatprep.subr.mxu0 0.0
        %7110 = vmatpush2.msra.mxu0 0.0
        %7111 = vmatprep.subr.mxu0 0.0
        %7112 = vmatpush2.msra.mxu0 0.0
        %7113 = vmatprep.subr.mxu0 0.0
        %7114 = vmatpush2.msra.mxu0 0.0
        %7115 = vmatprep.subr.mxu0 0.0
        %7116 = vmatpush2.msra.mxu0 0.0
        %7117 = vmatprep.subr.mxu0 0.0
        %7118 = vmatpush2.msra.mxu0 0.0
        %7119 = vmatprep.subr.mxu0 0.0
        %7120 = vmatpush2.msra.mxu0 0.0
        %7121 = vmatprep.subr.mxu0 0.0
        %7122 = vmatpush2.msra.mxu0 0.0
        %7123 = vmatprep.subr.mxu0 0.0
        %7124 = vmatpush2.msra.mxu0 0.0
        %7125 = vmatprep.subr.mxu0 0.0
        %7126 = vmatpush2.msra.mxu0 0.0
        %7127 = vmatprep.subr.mxu0 0.0
        %7128 = vmatpush2.msra.mxu0 0.0
        %7129 = vmatprep.mubr.f32.mxu0 0.0
        %7130 = vmatmul.mubr.f32.gmra.mxu0 %v6162
        %v7131 = vpop.f32.mrf.mxu0
        %v7132 = vadd.f32 %v3672, %v7131
        %v7133 = vpop.f32.mrf.mxu0
        %7134 = vdwg.mxu0
        %v7136 = vsel %vm536, %v7132, 0
        %7138 = vmatprep.subr.mxu0 0.0
        %7139 = vmatpush1.xpose.msra.mxu0 0.0
        %7140 = vmatprep.subr.mxu0 0.0
        %7141 = vmatpush1.xpose.msra.mxu0 0.0
        %7142 = vmatprep.subr.mxu0 0.0
        %7143 = vmatpush1.xpose.msra.mxu0 0.0
        %7144 = vmatprep.subr.mxu0 0.0
        %7145 = vmatpush1.xpose.msra.mxu0 0.0
        %7146 = vmatprep.subr.mxu0 0.0
        %7147 = vmatpush1.xpose.msra.mxu0 0.0
        %7148 = vmatprep.subr.mxu0 0.0
        %7149 = vmatpush1.xpose.msra.mxu0 0.0
        %7150 = vmatprep.subr.mxu0 0.0
        %7151 = vmatpush1.xpose.msra.mxu0 0.0
        %7152 = vmatprep.subr.mxu0 0.0
        %7153 = vmatpush1.xpose.msra.mxu0 0.0
        %7154 = vmatprep.subr.mxu0 0.0
        %7155 = vmatpush1.xpose.msra.mxu0 0.0
        %7156 = vmatprep.subr.mxu0 0.0
        %7157 = vmatpush1.xpose.msra.mxu0 0.0
        %7158 = vmatprep.subr.mxu0 0.0
        %7159 = vmatpush1.xpose.msra.mxu0 0.0
        %7160 = vmatprep.subr.mxu0 0.0
        %7161 = vmatpush1.xpose.msra.mxu0 0.0
        %7162 = vmatprep.subr.mxu0 0.0
        %7163 = vmatpush1.xpose.msra.mxu0 0.0
        %7164 = vmatprep.subr.mxu0 0.0
        %7165 = vmatpush1.xpose.msra.mxu0 0.0
        %7166 = vmatprep.subr.mxu0 0.0
        %7167 = vmatpush1.xpose.msra.mxu0 0.0
        %7168 = vmatprep.subr.mxu0 0.0
        %7169 = vmatpush1.xpose.msra.mxu0 %v3907
        %7170 = vmatprep.subr.mxu0 0.0
        %7171 = vmatpush2.xpose.msra.mxu0 0.0
        %7172 = vmatprep.subr.mxu0 0.0
        %7173 = vmatpush2.xpose.msra.mxu0 0.0
        %7174 = vmatprep.subr.mxu0 0.0
        %7175 = vmatpush2.xpose.msra.mxu0 0.0
        %7176 = vmatprep.subr.mxu0 0.0
        %7177 = vmatpush2.xpose.msra.mxu0 0.0
        %7178 = vmatprep.subr.mxu0 0.0
        %7179 = vmatpush2.xpose.msra.mxu0 0.0
        %7180 = vmatprep.subr.mxu0 0.0
        %7181 = vmatpush2.xpose.msra.mxu0 0.0
        %7182 = vmatprep.subr.mxu0 0.0
        %7183 = vmatpush2.xpose.msra.mxu0 0.0
        %7184 = vmatprep.subr.mxu0 0.0
        %7185 = vmatpush2.xpose.msra.mxu0 0.0
        %7186 = vmatprep.subr.mxu0 0.0
        %7187 = vmatpush2.xpose.msra.mxu0 0.0
        %7188 = vmatprep.subr.mxu0 0.0
        %7189 = vmatpush2.xpose.msra.mxu0 0.0
        %7190 = vmatprep.subr.mxu0 0.0
        %7191 = vmatpush2.xpose.msra.mxu0 0.0
        %7192 = vmatprep.subr.mxu0 0.0
        %7193 = vmatpush2.xpose.msra.mxu0 0.0
        %7194 = vmatprep.subr.mxu0 0.0
        %7195 = vmatpush2.xpose.msra.mxu0 0.0
        %7196 = vmatprep.subr.mxu0 0.0
        %7197 = vmatpush2.xpose.msra.mxu0 0.0
        %7198 = vmatprep.subr.mxu0 0.0
        %7199 = vmatpush2.xpose.msra.mxu0 0.0
        %7200 = vmatprep.subr.mxu0 0.0
        %7201 = vmatpush2.xpose.msra.mxu0 0.0
        %7202 = vmatprep.mubr.f32.mxu0 0.0
        %7203 = vmatmul.mubr.f32.gmra.mxu0 %v7136
        %v7204 = vpop.f32.mrf.mxu0
        %v7205 = vadd.f32 0.0, %v7204
        %v7206 = vpop.f32.mrf.mxu0
        %7207 = vdwg.mxu0
        %v7208 = vsel %vm536, %v7205, -inf
        %7209 = vmax.xlane.f32.xlu0 %v7208
        %v7210 = vpop.xlane.xlu0 %7209
        %v7211 = vsub.f32 %v7205, %v7210
        %v7212 = vmul.f32 %v7211, 1.442695
        %v7213 = vpow.pop %v7212
        %v7214 = vsel %vm536, %v7213, 0.0
        %7215 = vadd.xlane.f32.xlu0 %v7214
        %v7216 = vpop.xlane.xlu0 %7215
        %v7217 = vrcp.pop %v7216
        %v7218 = vmul.f32 %v7213, %v7217
        %v7220 = vsel %vm536, %v7218, 0
        %7222 = vmatprep.subr.mxu0 0.0
        %7223 = vmatpush1.msra.mxu0 0.0
        %7224 = vmatprep.subr.mxu0 0.0
        %7225 = vmatpush1.msra.mxu0 0.0
        %7226 = vmatprep.subr.mxu0 0.0
        %7227 = vmatpush1.msra.mxu0 0.0
        %7228 = vmatprep.subr.mxu0 0.0
        %7229 = vmatpush1.msra.mxu0 0.0
        %7230 = vmatprep.subr.mxu0 0.0
        %7231 = vmatpush1.msra.mxu0 0.0
        %7232 = vmatprep.subr.mxu0 0.0
        %7233 = vmatpush1.msra.mxu0 0.0
        %7234 = vmatprep.subr.mxu0 0.0
        %7235 = vmatpush1.msra.mxu0 0.0
        %7236 = vmatprep.subr.mxu0 0.0
        %7237 = vmatpush1.msra.mxu0 0.0
        %7238 = vmatprep.subr.mxu0 0.0
        %7239 = vmatpush1.msra.mxu0 0.0
        %7240 = vmatprep.subr.mxu0 0.0
        %7241 = vmatpush1.msra.mxu0 0.0
        %7242 = vmatprep.subr.mxu0 0.0
        %7243 = vmatpush1.msra.mxu0 0.0
        %7244 = vmatprep.subr.mxu0 0.0
        %7245 = vmatpush1.msra.mxu0 0.0
        %7246 = vmatprep.subr.mxu0 0.0
        %7247 = vmatpush1.msra.mxu0 0.0
        %7248 = vmatprep.subr.mxu0 0.0
        %7249 = vmatpush1.msra.mxu0 0.0
        %7250 = vmatprep.subr.mxu0 0.0
        %7251 = vmatpush1.msra.mxu0 0.0
        %7252 = vmatprep.subr.mxu0 0.0
        %7253 = vmatpush1.msra.mxu0 %v3900
        %7254 = vmatprep.subr.mxu0 0.0
        %7255 = vmatpush2.msra.mxu0 0.0
        %7256 = vmatprep.subr.mxu0 0.0
        %7257 = vmatpush2.msra.mxu0 0.0
        %7258 = vmatprep.subr.mxu0 0.0
        %7259 = vmatpush2.msra.mxu0 0.0
        %7260 = vmatprep.subr.mxu0 0.0
        %7261 = vmatpush2.msra.mxu0 0.0
        %7262 = vmatprep.subr.mxu0 0.0
        %7263 = vmatpush2.msra.mxu0 0.0
        %7264 = vmatprep.subr.mxu0 0.0
        %7265 = vmatpush2.msra.mxu0 0.0
        %7266 = vmatprep.subr.mxu0 0.0
        %7267 = vmatpush2.msra.mxu0 0.0
        %7268 = vmatprep.subr.mxu0 0.0
        %7269 = vmatpush2.msra.mxu0 0.0
        %7270 = vmatprep.subr.mxu0 0.0
        %7271 = vmatpush2.msra.mxu0 0.0
        %7272 = vmatprep.subr.mxu0 0.0
        %7273 = vmatpush2.msra.mxu0 0.0
        %7274 = vmatprep.subr.mxu0 0.0
        %7275 = vmatpush2.msra.mxu0 0.0
        %7276 = vmatprep.subr.mxu0 0.0
        %7277 = vmatpush2.msra.mxu0 0.0
        %7278 = vmatprep.subr.mxu0 0.0
        %7279 = vmatpush2.msra.mxu0 0.0
        %7280 = vmatprep.subr.mxu0 0.0
        %7281 = vmatpush2.msra.mxu0 0.0
        %7282 = vmatprep.subr.mxu0 0.0
        %7283 = vmatpush2.msra.mxu0 0.0
        %7284 = vmatprep.subr.mxu0 0.0
        %7285 = vmatpush2.msra.mxu0 0.0
        %7286 = vmatprep.mubr.f32.mxu0 0.0
        %7287 = vmatmul.mubr.f32.gmra.mxu0 %v7220
        %v7288 = vpop.f32.mrf.mxu0
        %v7289 = vadd.f32 0.0, %v7288
        %v7290 = vpop.f32.mrf.mxu0
        %7291 = vdwg.mxu0
        %v7293 = vsel %vm536, %v7289, 0
        %7295 = vmatprep.subr.mxu0 0.0
        %7296 = vmatpush1.msra.mxu0 0.0
        %7297 = vmatprep.subr.mxu0 0.0
        %7298 = vmatpush1.msra.mxu0 0.0
        %7299 = vmatprep.subr.mxu0 0.0
        %7300 = vmatpush1.msra.mxu0 0.0
        %7301 = vmatprep.subr.mxu0 0.0
        %7302 = vmatpush1.msra.mxu0 0.0
        %7303 = vmatprep.subr.mxu0 0.0
        %7304 = vmatpush1.msra.mxu0 0.0
        %7305 = vmatprep.subr.mxu0 0.0
        %7306 = vmatpush1.msra.mxu0 0.0
        %7307 = vmatprep.subr.mxu0 0.0
        %7308 = vmatpush1.msra.mxu0 0.0
        %7309 = vmatprep.subr.mxu0 0.0
        %7310 = vmatpush1.msra.mxu0 0.0
        %7311 = vmatprep.subr.mxu0 0.0
        %7312 = vmatpush1.msra.mxu0 0.0
        %7313 = vmatprep.subr.mxu0 0.0
        %7314 = vmatpush1.msra.mxu0 0.0
        %7315 = vmatprep.subr.mxu0 0.0
        %7316 = vmatpush1.msra.mxu0 0.0
        %7317 = vmatprep.subr.mxu0 0.0
        %7318 = vmatpush1.msra.mxu0 0.0
        %7319 = vmatprep.subr.mxu0 0.0
        %7320 = vmatpush1.msra.mxu0 0.0
        %7321 = vmatprep.subr.mxu0 0.0
        %7322 = vmatpush1.msra.mxu0 0.0
        %7323 = vmatprep.subr.mxu0 0.0
        %7324 = vmatpush1.msra.mxu0 0.0
        %7325 = vmatprep.subr.mxu0 0.0
        %7326 = vmatpush1.msra.mxu0 %v4064
        %7327 = vmatprep.subr.mxu0 0.0
        %7328 = vmatpush2.msra.mxu0 0.0
        %7329 = vmatprep.subr.mxu0 0.0
        %7330 = vmatpush2.msra.mxu0 0.0
        %7331 = vmatprep.subr.mxu0 0.0
        %7332 = vmatpush2.msra.mxu0 0.0
        %7333 = vmatprep.subr.mxu0 0.0
        %7334 = vmatpush2.msra.mxu0 0.0
        %7335 = vmatprep.subr.mxu0 0.0
        %7336 = vmatpush2.msra.mxu0 0.0
        %7337 = vmatprep.subr.mxu0 0.0
        %7338 = vmatpush2.msra.mxu0 0.0
        %7339 = vmatprep.subr.mxu0 0.0
        %7340 = vmatpush2.msra.mxu0 0.0
        %7341 = vmatprep.subr.mxu0 0.0
        %7342 = vmatpush2.msra.mxu0 0.0
        %7343 = vmatprep.subr.mxu0 0.0
        %7344 = vmatpush2.msra.mxu0 0.0
        %7345 = vmatprep.subr.mxu0 0.0
        %7346 = vmatpush2.msra.mxu0 0.0
        %7347 = vmatprep.subr.mxu0 0.0
        %7348 = vmatpush2.msra.mxu0 0.0
        %7349 = vmatprep.subr.mxu0 0.0
        %7350 = vmatpush2.msra.mxu0 0.0
        %7351 = vmatprep.subr.mxu0 0.0
        %7352 = vmatpush2.msra.mxu0 0.0
        %7353 = vmatprep.subr.mxu0 0.0
        %7354 = vmatpush2.msra.mxu0 0.0
        %7355 = vmatprep.subr.mxu0 0.0
        %7356 = vmatpush2.msra.mxu0 0.0
        %7357 = vmatprep.subr.mxu0 0.0
        %7358 = vmatpush2.msra.mxu0 0.0
        %7359 = vmatprep.mubr.f32.mxu0 0.0
        %7360 = vmatmul.mubr.f32.gmra.mxu0 %v7293
        %v7361 = vpop.f32.mrf.mxu0
        %v7362 = vadd.f32 0.0, %v7361
        %v7363 = vpop.f32.mrf.mxu0
        %7364 = vdwg.mxu0
        %v7365 = vadd.f32 %v7064, %v7362
        %v7366 = vadd.f32 %v7365, %v4143
        %v7367 = vadd.f32 %v6160, %v7366
        %v7368 = vsel %vm302, %v7367, 0.0
        %7369 = vadd.xlane.f32.xlu0 %v7368
        %v7370 = vpop.xlane.xlu0 %7369
        %v7371 = vmul.f32 %v7370, %v2210
        %v7372 = vsub.f32 %v7367, %v7371
        %v7373 = vmul.f32 %v7372, %v7372
        %v7374 = vsel %vm302, %v7373, 0.0
        %7375 = vadd.xlane.f32.xlu0 %v7374
        %v7376 = vpop.xlane.xlu0 %7375
        %v7377 = vmul.f32 %v7376, %v2210
        %v7378 = vadd.f32 %v7377, 1e-05
        %v7379 = vrsqrt.pop %v7378
        %v7380 = vmul.f32 %v7372, %v7379
        %v7381 = vmul.f32 %v7380, %v4164
        %v7382 = vadd.f32 %v7381, %v4169
        %v7384 = vsel %vm302, %v7382, 0
        %7386 = vmatprep.subr.mxu0 0.0
        %7387 = vmatpush1.msra.mxu0 0.0
        %7388 = vmatprep.subr.mxu0 0.0
        %7389 = vmatpush1.msra.mxu0 0.0
        %7390 = vmatprep.subr.mxu0 0.0
        %7391 = vmatpush1.msra.mxu0 0.0
        %7392 = vmatprep.subr.mxu0 0.0
        %7393 = vmatpush1.msra.mxu0 0.0
        %7394 = vmatprep.subr.mxu0 0.0
        %7395 = vmatpush1.msra.mxu0 0.0
        %7396 = vmatprep.subr.mxu0 0.0
        %7397 = vmatpush1.msra.mxu0 0.0
        %7398 = vmatprep.subr.mxu0 0.0
        %7399 = vmatpush1.msra.mxu0 0.0
        %7400 = vmatprep.subr.mxu0 0.0
        %7401 = vmatpush1.msra.mxu0 0.0
        %7402 = vmatprep.subr.mxu0 0.0
        %7403 = vmatpush1.msra.mxu0 0.0
        %7404 = vmatprep.subr.mxu0 0.0
        %7405 = vmatpush1.msra.mxu0 0.0
        %7406 = vmatprep.subr.mxu0 0.0
        %7407 = vmatpush1.msra.mxu0 0.0
        %7408 = vmatprep.subr.mxu0 0.0
        %7409 = vmatpush1.msra.mxu0 0.0
        %7410 = vmatprep.subr.mxu0 0.0
        %7411 = vmatpush1.msra.mxu0 %v4174
        %7412 = vmatprep.subr.mxu0 0.0
        %7413 = vmatpush1.msra.mxu0 %v4173
        %7414 = vmatprep.subr.mxu0 0.0
        %7415 = vmatpush1.msra.mxu0 %v4172
        %7416 = vmatprep.subr.mxu0 0.0
        %7417 = vmatpush1.msra.mxu0 %v4171
        %7418 = vmatprep.subr.mxu0 0.0
        %7419 = vmatpush2.msra.mxu0 0.0
        %7420 = vmatprep.subr.mxu0 0.0
        %7421 = vmatpush2.msra.mxu0 0.0
        %7422 = vmatprep.subr.mxu0 0.0
        %7423 = vmatpush2.msra.mxu0 0.0
        %7424 = vmatprep.subr.mxu0 0.0
        %7425 = vmatpush2.msra.mxu0 0.0
        %7426 = vmatprep.subr.mxu0 0.0
        %7427 = vmatpush2.msra.mxu0 0.0
        %7428 = vmatprep.subr.mxu0 0.0
        %7429 = vmatpush2.msra.mxu0 0.0
        %7430 = vmatprep.subr.mxu0 0.0
        %7431 = vmatpush2.msra.mxu0 0.0
        %7432 = vmatprep.subr.mxu0 0.0
        %7433 = vmatpush2.msra.mxu0 0.0
        %7434 = vmatprep.subr.mxu0 0.0
        %7435 = vmatpush2.msra.mxu0 0.0
        %7436 = vmatprep.subr.mxu0 0.0
        %7437 = vmatpush2.msra.mxu0 0.0
        %7438 = vmatprep.subr.mxu0 0.0
        %7439 = vmatpush2.msra.mxu0 0.0
        %7440 = vmatprep.subr.mxu0 0.0
        %7441 = vmatpush2.msra.mxu0 0.0
        %7442 = vmatprep.subr.mxu0 0.0
        %7443 = vmatpush2.msra.mxu0 0.0
        %7444 = vmatprep.subr.mxu0 0.0
        %7445 = vmatpush2.msra.mxu0 0.0
        %7446 = vmatprep.subr.mxu0 0.0
        %7447 = vmatpush2.msra.mxu0 0.0
        %7448 = vmatprep.subr.mxu0 0.0
        %7449 = vmatpush2.msra.mxu0 0.0
        %7450 = vmatprep.mubr.f32.mxu0 0.0
        %7451 = vmatmul.mubr.f32.gmra.mxu0 %v7384
        %v7452 = vpop.f32.mrf.mxu0
        %v7453 = vadd.f32 %v4179, %v7452
        %v7454 = vpop.f32.mrf.mxu0
        %7455 = vdwg.mxu0
        %v7456 = vmax.f32 %v7453, 0.0
        %v7458 = vsel %vm4267, %v7456, 0
        %7460 = vmatprep.subr.mxu0 0.0
        %7461 = vmatpush1.msra.mxu0 0.0
        %7462 = vmatprep.subr.mxu0 0.0
        %7463 = vmatpush1.msra.mxu0 0.0
        %7464 = vmatprep.subr.mxu0 0.0
        %7465 = vmatpush1.msra.mxu0 0.0
        %7466 = vmatprep.subr.mxu0 0.0
        %7467 = vmatpush1.msra.mxu0 0.0
        %7468 = vmatprep.subr.mxu0 0.0
        %7469 = vmatpush1.msra.mxu0 0.0
        %7470 = vmatprep.subr.mxu0 0.0
        %7471 = vmatpush1.msra.mxu0 0.0
        %7472 = vmatprep.subr.mxu0 0.0
        %7473 = vmatpush1.msra.mxu0 0.0
        %7474 = vmatprep.subr.mxu0 0.0
        %7475 = vmatpush1.msra.mxu0 0.0
        %7476 = vmatprep.subr.mxu0 0.0
        %7477 = vmatpush1.msra.mxu0 %v4261
        %7478 = vmatprep.subr.mxu0 0.0
        %7479 = vmatpush1.msra.mxu0 %v4260
        %7480 = vmatprep.subr.mxu0 0.0
        %7481 = vmatpush1.msra.mxu0 %v4259
        %7482 = vmatprep.subr.mxu0 0.0
        %7483 = vmatpush1.msra.mxu0 %v4258
        %7484 = vmatprep.subr.mxu0 0.0
        %7485 = vmatpush1.msra.mxu0 %v4257
        %7486 = vmatprep.subr.mxu0 0.0
        %7487 = vmatpush1.msra.mxu0 %v4256
        %7488 = vmatprep.subr.mxu0 0.0
        %7489 = vmatpush1.msra.mxu0 %v4255
        %7490 = vmatprep.subr.mxu0 0.0
        %7491 = vmatpush1.msra.mxu0 %v4254
        %7492 = vmatprep.subr.mxu0 0.0
        %7493 = vmatpush2.msra.mxu0 0.0
        %7494 = vmatprep.subr.mxu0 0.0
        %7495 = vmatpush2.msra.mxu0 0.0
        %7496 = vmatprep.subr.mxu0 0.0
        %7497 = vmatpush2.msra.mxu0 0.0
        %7498 = vmatprep.subr.mxu0 0.0
        %7499 = vmatpush2.msra.mxu0 0.0
        %7500 = vmatprep.subr.mxu0 0.0
        %7501 = vmatpush2.msra.mxu0 0.0
        %7502 = vmatprep.subr.mxu0 0.0
        %7503 = vmatpush2.msra.mxu0 0.0
        %7504 = vmatprep.subr.mxu0 0.0
        %7505 = vmatpush2.msra.mxu0 0.0
        %7506 = vmatprep.subr.mxu0 0.0
        %7507 = vmatpush2.msra.mxu0 0.0
        %7508 = vmatprep.subr.mxu0 0.0
        %7509 = vmatpush2.msra.mxu0 0.0
        %7510 = vmatprep.subr.mxu0 0.0
        %7511 = vmatpush2.msra.mxu0 0.0
        %7512 = vmatprep.subr.mxu0 0.0
        %7513 = vmatpush2.msra.mxu0 0.0
        %7514 = vmatprep.subr.mxu0 0.0
        %7515 = vmatpush2.msra.mxu0 0.0
        %7516 = vmatprep.subr.mxu0 0.0
        %7517 = vmatpush2.msra.mxu0 0.0
        %7518 = vmatprep.subr.mxu0 0.0
        %7519 = vmatpush2.msra.mxu0 0.0
        %7520 = vmatprep.subr.mxu0 0.0
        %7521 = vmatpush2.msra.mxu0 0.0
        %7522 = vmatprep.subr.mxu0 0.0
        %7523 = vmatpush2.msra.mxu0 0.0
        %7524 = vmatprep.mubr.f32.mxu0 0.0
        %7525 = vmatmul.mubr.f32.gmra.mxu0 %v7458
        %v7526 = vpop.f32.mrf.mxu0
        %v7527 = vadd.f32 %v4266, %v7526
        %v7528 = vpop.f32.mrf.mxu0
        %7529 = vdwg.mxu0
        %v7530 = vadd.f32 %v7382, %v7527
        %v7531 = vsel %vm302, %v7530, 0.0
        %7532 = vadd.xlane.f32.xlu0 %v7531
        %v7533 = vpop.xlane.xlu0 %7532
        %v7534 = vmul.f32 %v7533, %v2210
        %v7535 = vsub.f32 %v7530, %v7534
        %v7536 = vmul.f32 %v7535, %v7535
        %v7537 = vsel %vm302, %v7536, 0.0
        %7538 = vadd.xlane.f32.xlu0 %v7537
        %v7539 = vpop.xlane.xlu0 %7538
        %v7540 = vmul.f32 %v7539, %v2210
        %v7541 = vadd.f32 %v7540, 1e-05
        %v7542 = vrsqrt.pop %v7541
        %v7543 = vmul.f32 %v7535, %v7542
        %v7544 = vmul.f32 %v7543, %v4360
        %v7545 = vadd.f32 %v7544, %v4365
        %7546 = vst.msk [vmem:[%s282] sm:$0xff] %vm302, %v7545
        %s7547 = sand.u32 %s186, 1
        %s7548 = scalar_lea.sflag [#allocation3], %s7547
        %s7549 = sand.u32 %s186, 1
        %s7550 = smul.addr %s7549, 8
        %s7551 = scalar_lea.vmem [#allocation2], %s7550
        // Predicated region
        $region49: #{tpu_custom_call.1} parent=47 // pred_check
          %p7552 = pneg %p196
        $region50: #{tpu_custom_call.1} parent=47 // pred_check_branch
          %7554 = sbr.rel (%p7552) target = $region52
        $region51: #{tpu_custom_call.1} parent=47 // pred_region
          %s7556 = ssub.s32 128, 128
          %7557 = vsyncadd %s7548, %s7556
          %s7558 = smul.addr %s21, 128
          %s7559 = scalar_lea.hbm %s7, %s7558
          %s7561 = sshll.u32 %s7551, 4
          %s7562 = int_to_ptr.vmem [resolvable:$true] %s7561
          %7564 = dma.vmem_to_hbm [thread:$0]  %s7562, 128, %s7559, %s7548
        $region52: #{tpu_custom_call.1} parent=47 // pred_fallthru
          _
      $region48: #{tpu_custom_call.1} parent=5 // pred_fallthru
        _
      %p7565 = scmp.le.s32.totalorder 2, %s16
      // Predicated region
      $region53: #{tpu_custom_call.1} parent=5 // pred_check
        %p7566 = pneg %p7565
      $region54: #{tpu_custom_call.1} parent=5 // pred_check_branch
        %7568 = sbr.rel (%p7566) target = $region56
      $region55: #{tpu_custom_call.1} parent=5 // pred_region
        %s7569 = ssub.s32 %s16, 2
        // Predicated region
        $region57: #{tpu_custom_call.1} parent=55 // pred_check
          %p7570 = pneg %p202
        $region58: #{tpu_custom_call.1} parent=55 // pred_check_branch
          %7572 = sbr.rel (%p7570) target = $region60
        $region59: #{tpu_custom_call.1} parent=55 // pred_region
          %s7573 = sand.u32 %s187, 1
          %s7574 = scalar_lea.sflag [#allocation3], %s7573
          %s7575 = sand.u32 %s187, 1
          %s7576 = smul.addr %s7575, 8
          %s7577 = scalar_lea.vmem [#allocation2], %s7576
          %7578 = dma.done %s7574, 128
        $region60: #{tpu_custom_call.1} parent=55 // pred_fallthru
          _
      $region56: #{tpu_custom_call.1} parent=5 // pred_fallthru
        _
    $region6: #{tpu_custom_call.1} parent=1 // loop_footer
      %s20 = sadd.s32 1, %s16
    $region7: #{tpu_custom_call.1} parent=1 // loop_footer_branch
      %15 = sbr.rel target = $region3
    $region8: #{tpu_custom_call.1} parent=1 // loop_exit
      _
    %7579 = vsyncpa [#allocation3], 1
    %s7580 = scalar_lea.sflag [#allocation3], 1
    %7581 = vsyncpa %s7580, 1

</llo_original>
